<compile_context>
chip_gen: v5e
topology: v5e:2x2
jax: 0.10.0
libtpu: 0.0.40
codegen_flags: <defaults>
</compile_context>

<pallas_src>
import jax
import jax.numpy as jnp
from jax.experimental import pallas as pl
from jax.experimental.pallas import tpu as pltpu

EPS = 1e-5
NEG_SLOPE = 0.01
LANE = 128


def _round_up(x, m):
    return (x + m - 1) // m * m


def _leaky_relu(z):
    return jnp.where(z >= 0, z, NEG_SLOPE * z)


def _compiler_params(footprint_bytes):
    # Scoped-VMEM cap derived from the per-step footprint; clamp to 64 MiB so
    # the same choice is safe on v7x (64 MiB physical VMEM).
    limit = int(min(max(2 * footprint_bytes, 32 * 1024 * 1024),
                    64 * 1024 * 1024))
    return pltpu.CompilerParams(
        dimension_semantics=("parallel",),
        vmem_limit_bytes=limit)


# ---------------------------------------------------------------------------
# Pass 1: conv1 (3x3, zero padding) + per-image BN1 partial statistics.
# ---------------------------------------------------------------------------
def _conv1_kernel(x_ref, w_ref, b_ref, y_ref, stats_ref, pad_ref):
    """x_ref     : (1, H, W, Cin)    f32   raw input image (no channel padding)
       w_ref     : (9, Cin, Cpo)     bf16  per-tap weights (tap = kh*3 + kw)
       b_ref     : (1, Cpo)          f32   conv bias (zero in padded channels)
       y_ref     : (1, H, W, Cpo)    bf16  conv1 output
       stats_ref : (1, 2, Cpo)       f32   [per-image sum, sum of sq. deviations]
       pad_ref   : (H+2, W+2, Cin)   bf16  VMEM scratch holding the zero halo
    """
    _, h, w, ci = x_ref.shape
    co = y_ref.shape[-1]
    m = h * w

    # Zero spatial halo built in VMEM (PyTorch Conv2d padding=1); no HBM
    # padding / re-tiling of the input anywhere.
    pad_ref[...] = jnp.zeros_like(pad_ref)
    pad_ref[1:h + 1, 1:w + 1, :] = x_ref[0].astype(jnp.bfloat16)

    # 3x3 conv as 9 accumulated MXU matmuls with K = Cin: no zero-padded
    # channels are read or multiplied.
    acc = jnp.zeros((m, co), jnp.float32)
    for kh in range(3):
        for kw in range(3):
            xt = pad_ref[kh:kh + h, kw:kw + w, :].reshape(m, ci)
            acc = acc + jnp.dot(xt, w_ref[kh * 3 + kw],
                                preferred_element_type=jnp.float32)
    y = acc + b_ref[...]

    yb = y.astype(jnp.bfloat16)                  # what actually gets stored
    y_ref[...] = yb.reshape(1, h, w, co)

    # BN1 partial statistics from the stored (bf16-rounded) values.
    yf = yb.astype(jnp.float32)
    s = jnp.sum(yf, axis=0, keepdims=True)                     # (1, Cpo)
    d = yf - s / m
    m2 = jnp.sum(d * d, axis=0, keepdims=True)                 # (1, Cpo)
    stats_ref[...] = jnp.concatenate([s, m2], axis=0).reshape(1, 2, co)


def _conv1_pass(x, w_taps, b_row):
    n, h, w, cin = x.shape
    cpo = w_taps.shape[-1]
    cin_l = _round_up(cin, LANE)                 # lane-padded layout estimate
    footprint = (2 * (h * w * cin_l * 4          # x blocks (double buffered)
                      + h * w * cpo * 2          # y1 blocks
                      + 2 * cpo * 4              # stats blocks
                      + 9 * 16 * cpo * 2         # weights
                      + cpo * 4)                 # bias
                 + (h + 2) * (w + 2) * cin_l * 2)  # halo scratch
    return pl.pallas_call(
        _conv1_kernel,
        grid=(n,),
        in_specs=[
            pl.BlockSpec((1, h, w, cin), lambda i: (i, 0, 0, 0)),
            pl.BlockSpec((9, cin, cpo), lambda i: (0, 0, 0)),
            pl.BlockSpec((1, cpo), lambda i: (0, 0)),
        ],
        out_specs=[
            pl.BlockSpec((1, h, w, cpo), lambda i: (i, 0, 0, 0)),
            pl.BlockSpec((1, 2, cpo), lambda i: (i, 0, 0)),
        ],
        out_shape=[
            jax.ShapeDtypeStruct((n, h, w, cpo), jnp.bfloat16),
            jax.ShapeDtypeStruct((n, 2, cpo), jnp.float32),
        ],
        scratch_shapes=[pltpu.VMEM((h + 2, w + 2, cin), jnp.bfloat16)],
        compiler_params=_compiler_params(footprint),
    )(x, w_taps, b_row)


# ---------------------------------------------------------------------------
# Pass 2: BN1-affine + LeakyReLU + conv2 (fused) + per-image BN2 statistics.
# ---------------------------------------------------------------------------
def _conv2_kernel(y1_ref, w_ref, b_ref, scale_ref, shift_ref,
                  y2_ref, stats_ref, pad_ref, col_ref):
    """y1_ref    : (1, H, W, C)   bf16  conv1 output (C = Cpo, lane dense)
       w_ref     : (9*C, C)       bf16  tap-major flattened HWIO weights
       b_ref     : (1, C)         f32   conv bias
       scale_ref : (1, C)         f32   folded BN1 scale (gamma * rsqrt(var+eps))
       shift_ref : (1, C)         f32   folded BN1 shift (beta - mean * scale)
       y2_ref    : (1, H, W, C)   bf16  conv2 output
       stats_ref : (1, 2, C)      f32   [per-image sum, sum of sq. deviations]
       pad_ref   : (H+2, W+2, C)  bf16  zero-halo scratch
       col_ref   : (H*W, 9*C)     bf16  im2col scratch
    """
    _, h, w, ci = y1_ref.shape
    co = y2_ref.shape[-1]
    m = h * w

    # BN1 affine + LeakyReLU in f32, back to bf16 for the MXU.
    a = y1_ref[0].astype(jnp.float32) * scale_ref[...] + shift_ref[...]
    ab = _leaky_relu(a).astype(jnp.bfloat16)

    # Zero halo is applied AFTER the activation (matches PyTorch's zero
    # padding of the conv2 input), so no re-zeroing masks are needed.
    pad_ref[...] = jnp.zeros_like(pad_ref)
    pad_ref[1:h + 1, 1:w + 1, :] = ab

    # im2col: 9 lane-aligned shifted windows laid side by side, then one
    # big-K MXU matmul (M = H*W, K = 9*C, N = C) with f32 accumulation.
    for kh in range(3):
        for kw in range(3):
            t = kh * 3 + kw
            col_ref[:, t * ci:(t + 1) * ci] = (
                pad_ref[kh:kh + h, kw:kw + w, :].reshape(m, ci))
    y = jnp.dot(col_ref[...], w_ref[...],
                preferred_element_type=jnp.float32) + b_ref[...]

    yb = y.astype(jnp.bfloat16)
    y2_ref[...] = yb.reshape(1, h, w, co)

    # BN2 partial statistics from the stored (bf16-rounded) values.
    yf = yb.astype(jnp.float32)
    s = jnp.sum(yf, axis=0, keepdims=True)
    d = yf - s / m
    m2 = jnp.sum(d * d, axis=0, keepdims=True)
    stats_ref[...] = jnp.concatenate([s, m2], axis=0).reshape(1, 2, co)


def _conv2_pass(y1, w_flat, b_row, scale_row, shift_row):
    n, h, w, c = y1.shape
    footprint = (2 * (2 * h * w * c * 2          # y1 in + y2 out blocks
                      + 9 * c * c * 2            # weights
                      + 5 * c * 4)               # bias / scale / shift / stats
                 + (h + 2) * (w + 2) * c * 2     # halo scratch
                 + h * w * 9 * c * 2)            # im2col scratch
    return pl.pallas_call(
        _conv2_kernel,
        grid=(n,),
        in_specs=[
            pl.BlockSpec((1, h, w, c), lambda i: (i, 0, 0, 0)),
            pl.BlockSpec((9 * c, c), lambda i: (0, 0)),
            pl.BlockSpec((1, c), lambda i: (0, 0)),
            pl.BlockSpec((1, c), lambda i: (0, 0)),
            pl.BlockSpec((1, c), lambda i: (0, 0)),
        ],
        out_specs=[
            pl.BlockSpec((1, h, w, c), lambda i: (i, 0, 0, 0)),
            pl.BlockSpec((1, 2, c), lambda i: (i, 0, 0)),
        ],
        out_shape=[
            jax.ShapeDtypeStruct((n, h, w, c), jnp.bfloat16),
            jax.ShapeDtypeStruct((n, 2, c), jnp.float32),
        ],
        scratch_shapes=[pltpu.VMEM((h + 2, w + 2, c), jnp.bfloat16),
                        pltpu.VMEM((h * w, 9 * c), jnp.bfloat16)],
        compiler_params=_compiler_params(footprint),
    )(y1, w_flat, b_row, scale_row, shift_row)


# ---------------------------------------------------------------------------
# Pass 3: BN2-affine + LeakyReLU (elementwise), real Cout channels only.
# ---------------------------------------------------------------------------
def _bn_act_kernel(y_ref, scale_ref, shift_ref, o_ref):
    co = o_ref.shape[-1]
    z = (y_ref[0, :, :, :co].astype(jnp.float32) * scale_ref[...]
         + shift_ref[...])
    o_ref[...] = _leaky_relu(z).reshape(o_ref.shape)


def _bn_act_pass(y2, scale_row, shift_row, cout):
    n, h, w, c = y2.shape
    footprint = 2 * (h * w * c * 2 + h * w * _round_up(cout, LANE) * 4)
    return pl.pallas_call(
        _bn_act_kernel,
        grid=(n,),
        in_specs=[
            pl.BlockSpec((1, h, w, c), lambda i: (i, 0, 0, 0)),
            pl.BlockSpec((1, cout), lambda i: (0, 0)),
            pl.BlockSpec((1, cout), lambda i: (0, 0)),
        ],
        out_specs=pl.BlockSpec((1, h, w, cout), lambda i: (i, 0, 0, 0)),
        out_shape=jax.ShapeDtypeStruct((n, h, w, cout), jnp.float32),
        compiler_params=_compiler_params(footprint),
    )(y2, scale_row, shift_row)


# ---------------------------------------------------------------------------
# Wrapper helpers.
# ---------------------------------------------------------------------------
def _finalize_bn(stats, n_per_image, count, gamma_row, beta_row):
    """Combine per-image (sum, sum of squared deviations) into the folded
    training-mode BatchNorm affine (biased variance) via Chan's formula."""
    s = stats[:, 0, :]                           # (N, C)
    m2 = stats[:, 1, :]                          # (N, C)
    mean_i = s / n_per_image
    mean = jnp.sum(s, axis=0) / count
    var = (jnp.sum(m2, axis=0)
           + n_per_image * jnp.sum((mean_i - mean) ** 2, axis=0)) / count
    var = jnp.maximum(var, 0.0)
    inv = jax.lax.rsqrt(var + EPS)
    scale = gamma_row[0] * inv
    shift = beta_row[0] - mean * scale
    return scale.reshape(1, -1), shift.reshape(1, -1)


def _prep_w1(w_hwio, cpo):
    _, _, ci, co = w_hwio.shape
    w = jnp.pad(w_hwio.astype(jnp.float32),
                ((0, 0), (0, 0), (0, 0), (0, cpo - co)))
    return w.reshape(9, ci, cpo).astype(jnp.bfloat16)       # tap-major


def _prep_w2(w_hwio, cpo):
    _, _, ci, co = w_hwio.shape
    w = jnp.pad(w_hwio.astype(jnp.float32),
                ((0, 0), (0, 0), (0, cpo - ci), (0, cpo - co)))
    return w.reshape(9 * cpo, cpo).astype(jnp.bfloat16)     # tap-major flat


def _pad_row(v, width):
    return jnp.pad(v.astype(jnp.float32), (0, width - v.shape[0])).reshape(1, -1)


def double_conv_pallas(x_nchw, params):
    w1, b1, g1, be1, w2, b2, g2, be2 = params
    n, cin, h, w = x_nchw.shape
    cout = w1.shape[-1]
    cpo = _round_up(cout, LANE)       # lane-dense channel padding for y1 / y2
    m = h * w
    count = n * m

    # NHWC; no spatial or channel padding in HBM (halo is built in-kernel).
    x = jnp.transpose(x_nchw, (0, 2, 3, 1)).astype(jnp.float32)

    w1t = _prep_w1(w1, cpo)
    w2f = _prep_w2(w2, cpo)
    b1r, b2r = _pad_row(b1, cpo), _pad_row(b2, cpo)
    g1r, g2r = _pad_row(g1, cpo), _pad_row(g2, cpo)
    be1r, be2r = _pad_row(be1, cpo), _pad_row(be2, cpo)

    # Pass 1: conv1 + BN1 partial statistics.
    y1, st1 = _conv1_pass(x, w1t, b1r)
    sc1, sh1 = _finalize_bn(st1, m, count, g1r, be1r)

    # Pass 2: BN1-affine + LeakyReLU + conv2 (fused) + BN2 partial statistics.
    y2, st2 = _conv2_pass(y1, w2f, b2r, sc1, sh1)
    sc2, sh2 = _finalize_bn(st2, m, count, g2r, be2r)

    # Pass 3: BN2-affine + LeakyReLU on the real Cout channels only.
    out = _bn_act_pass(y2, sc2[:, :cout], sh2[:, :cout], cout)
    return jnp.transpose(out, (0, 3, 1, 2))          # back to NCHW (f32)


# ---------------------------------------------------------------------------
# Pure-JAX f32 reference (matches PyTorch training-mode forward).
# ---------------------------------------------------------------------------
def double_conv_ref(x_nchw, params):
    (w1, b1, g1, be1, w2, b2, g2, be2) = params
    x = jnp.transpose(x_nchw, (0, 2, 3, 1)).astype(jnp.float32)

    def conv(x, w, b):
        y = jax.lax.conv_general_dilated(
            x, w, window_strides=(1, 1), padding='SAME',
            dimension_numbers=('NHWC', 'HWIO', 'NHWC'),
            precision=jax.lax.Precision.HIGHEST)
        return y + b.reshape(1, 1, 1, -1)

    def bn_lrelu(y, g, be):
        mean = jnp.mean(y, axis=(0, 1, 2), keepdims=True)
        var = jnp.mean((y - mean) ** 2, axis=(0, 1, 2), keepdims=True)
        z = (y - mean) * jax.lax.rsqrt(var + EPS) * g.reshape(1, 1, 1, -1) \
            + be.reshape(1, 1, 1, -1)
        return jnp.where(z >= 0, z, NEG_SLOPE * z)

    y = bn_lrelu(conv(x, w1, b1), g1, be1)
    z = bn_lrelu(conv(y, w2, b2), g2, be2)
    return jnp.transpose(z, (0, 3, 1, 2))


def make_params(key, cin, cout):
    ks = jax.random.split(key, 8)
    w1 = jax.random.normal(ks[0], (3, 3, cin, cout), jnp.float32) * 0.1
    b1 = jax.random.normal(ks[1], (cout,), jnp.float32) * 0.1
    g1 = 1.0 + 0.1 * jax.random.normal(ks[2], (cout,), jnp.float32)
    be1 = 0.1 * jax.random.normal(ks[3], (cout,), jnp.float32)
    w2 = jax.random.normal(ks[4], (3, 3, cout, cout), jnp.float32) * 0.1
    b2 = jax.random.normal(ks[5], (cout,), jnp.float32) * 0.1
    g2 = 1.0 + 0.1 * jax.random.normal(ks[6], (cout,), jnp.float32)
    be2 = 0.1 * jax.random.normal(ks[7], (cout,), jnp.float32)
    return (w1, b1, g1, be1, w2, b2, g2, be2)


if __name__ == "__main__":
    key = jax.random.PRNGKey(0)
    k_x, k_p = jax.random.split(key)

    N, Cin, Cout, H, W = 2, 4, 8, 16, 16
    x = jax.random.normal(k_x, (N, Cin, H, W), jnp.float32)   # NCHW, like PyTorch
    params = make_params(k_p, Cin, Cout)

    out = jax.jit(double_conv_pallas)(x, params)
    out = jax.block_until_ready(out)

    ref = double_conv_ref(x, params)
    assert out.shape == (N, Cout, H, W)
    err = float(jnp.max(jnp.abs(out - ref)))
    # bf16 MXU matmuls + bf16 intermediate storage -> looser tolerance than f32.
    assert jnp.allclose(out, ref, rtol=5e-2, atol=5e-2), f"max abs err {err}"

    print("KERNEL_OK")
</pallas_src>

<mosaic_0001>
module attributes {stable_mosaic.version = 11 : i64} {
  func.func @_conv2_kernel(%arg0: i32, %arg1: memref<1x16x16x128xbf16, #tpu.memory_space<vmem>>, %arg2: memref<1152x128xbf16, #tpu.memory_space<vmem>>, %arg3: memref<1x128xf32, #tpu.memory_space<vmem>>, %arg4: memref<1x128xf32, #tpu.memory_space<vmem>>, %arg5: memref<1x128xf32, #tpu.memory_space<vmem>>, %arg6: memref<1x16x16x128xbf16, #tpu.memory_space<vmem>>, %arg7: memref<1x2x128xf32, #tpu.memory_space<vmem>>, %arg8: memref<18x18x128xbf16, #tpu.memory_space<vmem>>, %arg9: memref<256x1152xbf16, #tpu.memory_space<vmem>>) attributes {dimension_semantics = [#tpu.dimension_semantics<parallel>], iteration_bounds = array<i64: 2>, scalar_prefetch = 0 : i64, scratch_operands = 2 : i64, tpu.core_type = #tpu.core_type<tc>, window_params = [{transform_indices = @transform_0, window_bounds = array<i64: 1, 16, 16, 128>}, {pipeline_mode = #tpu.pipeline_mode<synchronous>, transform_indices = @transform_1, window_bounds = array<i64: 1152, 128>}, {pipeline_mode = #tpu.pipeline_mode<synchronous>, transform_indices = @transform_2, window_bounds = array<i64: 1, 128>}, {pipeline_mode = #tpu.pipeline_mode<synchronous>, transform_indices = @transform_3, window_bounds = array<i64: 1, 128>}, {pipeline_mode = #tpu.pipeline_mode<synchronous>, transform_indices = @transform_4, window_bounds = array<i64: 1, 128>}, {transform_indices = @transform_5, window_bounds = array<i64: 1, 16, 16, 128>}, {transform_indices = @transform_6, window_bounds = array<i64: 1, 2, 128>}]} {
    %c0 = arith.constant 0 : index
    %c0_0 = arith.constant 0 : index
    %c0_1 = arith.constant 0 : index
    %c0_2 = arith.constant 0 : index
    %0 = vector.load %arg1[%c0, %c0_0, %c0_1, %c0_2] : memref<1x16x16x128xbf16, #tpu.memory_space<vmem>>, vector<1x16x16x128xbf16>
    %1 = vector.shape_cast %0 : vector<1x16x16x128xbf16> to vector<16x16x128xbf16>
    %2 = arith.extf %1 : vector<16x16x128xbf16> to vector<16x16x128xf32>
    %c0_3 = arith.constant 0 : index
    %c0_4 = arith.constant 0 : index
    %3 = vector.load %arg4[%c0_3, %c0_4] : memref<1x128xf32, #tpu.memory_space<vmem>>, vector<1x128xf32>
    %4 = vector.shape_cast %3 : vector<1x128xf32> to vector<1x1x128xf32>
    %5 = vector.broadcast %4 : vector<1x1x128xf32> to vector<16x16x128xf32>
    %6 = arith.mulf %2, %5 : vector<16x16x128xf32>
    %c0_5 = arith.constant 0 : index
    %c0_6 = arith.constant 0 : index
    %7 = vector.load %arg5[%c0_5, %c0_6] : memref<1x128xf32, #tpu.memory_space<vmem>>, vector<1x128xf32>
    %8 = vector.shape_cast %7 : vector<1x128xf32> to vector<1x1x128xf32>
    %9 = vector.broadcast %8 : vector<1x1x128xf32> to vector<16x16x128xf32>
    %10 = arith.addf %6, %9 : vector<16x16x128xf32>
    %cst = arith.constant 0.000000e+00 : f32
    %11 = vector.broadcast %cst : f32 to vector<16x16x128xf32>
    %12 = arith.cmpf oge, %10, %11 : vector<16x16x128xf32>
    %cst_7 = arith.constant 0.00999999977 : f32
    %13 = vector.broadcast %cst_7 : f32 to vector<16x16x128xf32>
    %14 = arith.mulf %13, %10 : vector<16x16x128xf32>
    %15 = arith.select %12, %10, %14 : vector<16x16x128xi1>, vector<16x16x128xf32>
    %16 = arith.truncf %15 : vector<16x16x128xf32> to vector<16x16x128xbf16>
    %cst_8 = arith.constant 0.000000e+00 : bf16
    %17 = vector.broadcast %cst_8 : bf16 to vector<18x18x128xbf16>
    %c0_9 = arith.constant 0 : index
    %c0_10 = arith.constant 0 : index
    %c0_11 = arith.constant 0 : index
    %18 = vector.load %arg8[%c0_9, %c0_10, %c0_11] : memref<18x18x128xbf16, #tpu.memory_space<vmem>>, vector<18x18x128xbf16>
    tpu.vector_store %arg8[%c0_9, %c0_10, %c0_11], %17 {strides = array<i32>} : memref<18x18x128xbf16, #tpu.memory_space<vmem>>, vector<18x18x128xbf16>,
    %c1 = arith.constant 1 : index
    %c1_12 = arith.constant 1 : index
    %c0_13 = arith.constant 0 : index
    %19 = vector.load %arg8[%c1, %c1_12, %c0_13] : memref<18x18x128xbf16, #tpu.memory_space<vmem>>, vector<16x16x128xbf16>
    tpu.vector_store %arg8[%c1, %c1_12, %c0_13], %16 {strides = array<i32>} : memref<18x18x128xbf16, #tpu.memory_space<vmem>>, vector<16x16x128xbf16>,
    %c0_14 = arith.constant 0 : index
    %c0_15 = arith.constant 0 : index
    %c0_16 = arith.constant 0 : index
    %20 = vector.load %arg8[%c0_14, %c0_15, %c0_16] : memref<18x18x128xbf16, #tpu.memory_space<vmem>>, vector<16x16x128xbf16>
    %21 = vector.shape_cast %20 : vector<16x16x128xbf16> to vector<256x128xbf16>
    %c0_17 = arith.constant 0 : index
    %c0_18 = arith.constant 0 : index
    %22 = vector.load %arg9[%c0_17, %c0_18] : memref<256x1152xbf16, #tpu.memory_space<vmem>>, vector<256x128xbf16>
    tpu.vector_store %arg9[%c0_17, %c0_18], %21 {strides = array<i32>} : memref<256x1152xbf16, #tpu.memory_space<vmem>>, vector<256x128xbf16>,
    %c0_19 = arith.constant 0 : index
    %c1_20 = arith.constant 1 : index
    %c0_21 = arith.constant 0 : index
    %23 = vector.load %arg8[%c0_19, %c1_20, %c0_21] : memref<18x18x128xbf16, #tpu.memory_space<vmem>>, vector<16x16x128xbf16>
    %24 = vector.shape_cast %23 : vector<16x16x128xbf16> to vector<256x128xbf16>
    %c0_22 = arith.constant 0 : index
    %c128 = arith.constant 128 : index
    %25 = vector.load %arg9[%c0_22, %c128] : memref<256x1152xbf16, #tpu.memory_space<vmem>>, vector<256x128xbf16>
    tpu.vector_store %arg9[%c0_22, %c128], %24 {strides = array<i32>} : memref<256x1152xbf16, #tpu.memory_space<vmem>>, vector<256x128xbf16>,
    %c0_23 = arith.constant 0 : index
    %c2 = arith.constant 2 : index
    %c0_24 = arith.constant 0 : index
    %26 = vector.load %arg8[%c0_23, %c2, %c0_24] : memref<18x18x128xbf16, #tpu.memory_space<vmem>>, vector<16x16x128xbf16>
    %27 = vector.shape_cast %26 : vector<16x16x128xbf16> to vector<256x128xbf16>
    %c0_25 = arith.constant 0 : index
    %c256 = arith.constant 256 : index
    %28 = vector.load %arg9[%c0_25, %c256] : memref<256x1152xbf16, #tpu.memory_space<vmem>>, vector<256x128xbf16>
    tpu.vector_store %arg9[%c0_25, %c256], %27 {strides = array<i32>} : memref<256x1152xbf16, #tpu.memory_space<vmem>>, vector<256x128xbf16>,
    %c1_26 = arith.constant 1 : index
    %c0_27 = arith.constant 0 : index
    %c0_28 = arith.constant 0 : index
    %29 = vector.load %arg8[%c1_26, %c0_27, %c0_28] : memref<18x18x128xbf16, #tpu.memory_space<vmem>>, vector<16x16x128xbf16>
    %30 = vector.shape_cast %29 : vector<16x16x128xbf16> to vector<256x128xbf16>
    %c0_29 = arith.constant 0 : index
    %c384 = arith.constant 384 : index
    %31 = vector.load %arg9[%c0_29, %c384] : memref<256x1152xbf16, #tpu.memory_space<vmem>>, vector<256x128xbf16>
    tpu.vector_store %arg9[%c0_29, %c384], %30 {strides = array<i32>} : memref<256x1152xbf16, #tpu.memory_space<vmem>>, vector<256x128xbf16>,
    %c1_30 = arith.constant 1 : index
    %c1_31 = arith.constant 1 : index
    %c0_32 = arith.constant 0 : index
    %32 = vector.load %arg8[%c1_30, %c1_31, %c0_32] : memref<18x18x128xbf16, #tpu.memory_space<vmem>>, vector<16x16x128xbf16>
    %33 = vector.shape_cast %32 : vector<16x16x128xbf16> to vector<256x128xbf16>
    %c0_33 = arith.constant 0 : index
    %c512 = arith.constant 512 : index
    %34 = vector.load %arg9[%c0_33, %c512] : memref<256x1152xbf16, #tpu.memory_space<vmem>>, vector<256x128xbf16>
    tpu.vector_store %arg9[%c0_33, %c512], %33 {strides = array<i32>} : memref<256x1152xbf16, #tpu.memory_space<vmem>>, vector<256x128xbf16>,
    %c1_34 = arith.constant 1 : index
    %c2_35 = arith.constant 2 : index
    %c0_36 = arith.constant 0 : index
    %35 = vector.load %arg8[%c1_34, %c2_35, %c0_36] : memref<18x18x128xbf16, #tpu.memory_space<vmem>>, vector<16x16x128xbf16>
    %36 = vector.shape_cast %35 : vector<16x16x128xbf16> to vector<256x128xbf16>
    %c0_37 = arith.constant 0 : index
    %c640 = arith.constant 640 : index
    %37 = vector.load %arg9[%c0_37, %c640] : memref<256x1152xbf16, #tpu.memory_space<vmem>>, vector<256x128xbf16>
    tpu.vector_store %arg9[%c0_37, %c640], %36 {strides = array<i32>} : memref<256x1152xbf16, #tpu.memory_space<vmem>>, vector<256x128xbf16>,
    %c2_38 = arith.constant 2 : index
    %c0_39 = arith.constant 0 : index
    %c0_40 = arith.constant 0 : index
    %38 = vector.load %arg8[%c2_38, %c0_39, %c0_40] : memref<18x18x128xbf16, #tpu.memory_space<vmem>>, vector<16x16x128xbf16>
    %39 = vector.shape_cast %38 : vector<16x16x128xbf16> to vector<256x128xbf16>
    %c0_41 = arith.constant 0 : index
    %c768 = arith.constant 768 : index
    %40 = vector.load %arg9[%c0_41, %c768] : memref<256x1152xbf16, #tpu.memory_space<vmem>>, vector<256x128xbf16>
    tpu.vector_store %arg9[%c0_41, %c768], %39 {strides = array<i32>} : memref<256x1152xbf16, #tpu.memory_space<vmem>>, vector<256x128xbf16>,
    %c2_42 = arith.constant 2 : index
    %c1_43 = arith.constant 1 : index
    %c0_44 = arith.constant 0 : index
    %41 = vector.load %arg8[%c2_42, %c1_43, %c0_44] : memref<18x18x128xbf16, #tpu.memory_space<vmem>>, vector<16x16x128xbf16>
    %42 = vector.shape_cast %41 : vector<16x16x128xbf16> to vector<256x128xbf16>
    %c0_45 = arith.constant 0 : index
    %c896 = arith.constant 896 : index
    %43 = vector.load %arg9[%c0_45, %c896] : memref<256x1152xbf16, #tpu.memory_space<vmem>>, vector<256x128xbf16>
    tpu.vector_store %arg9[%c0_45, %c896], %42 {strides = array<i32>} : memref<256x1152xbf16, #tpu.memory_space<vmem>>, vector<256x128xbf16>,
    %c2_46 = arith.constant 2 : index
    %c2_47 = arith.constant 2 : index
    %c0_48 = arith.constant 0 : index
    %44 = vector.load %arg8[%c2_46, %c2_47, %c0_48] : memref<18x18x128xbf16, #tpu.memory_space<vmem>>, vector<16x16x128xbf16>
    %45 = vector.shape_cast %44 : vector<16x16x128xbf16> to vector<256x128xbf16>
    %c0_49 = arith.constant 0 : index
    %c1024 = arith.constant 1024 : index
    %46 = vector.load %arg9[%c0_49, %c1024] : memref<256x1152xbf16, #tpu.memory_space<vmem>>, vector<256x128xbf16>
    tpu.vector_store %arg9[%c0_49, %c1024], %45 {strides = array<i32>} : memref<256x1152xbf16, #tpu.memory_space<vmem>>, vector<256x128xbf16>,
    %c0_50 = arith.constant 0 : index
    %c0_51 = arith.constant 0 : index
    %47 = vector.load %arg9[%c0_50, %c0_51] : memref<256x1152xbf16, #tpu.memory_space<vmem>>, vector<256x1152xbf16>
    %c0_52 = arith.constant 0 : index
    %c0_53 = arith.constant 0 : index
    %48 = vector.load %arg2[%c0_52, %c0_53] : memref<1152x128xbf16, #tpu.memory_space<vmem>>, vector<1152x128xbf16>
    %cst_54 = arith.constant dense<0.000000e+00> : vector<256x128xf32>
    %49 = tpu.matmul %47, %48, %cst_54 {dimension_numbers = #tpu.dot_dimension_numbers<[1], [0], [0], [1], [0, 0, 1, 1], [], []>} : vector<256x1152xbf16>, vector<1152x128xbf16>, vector<256x128xf32> -> vector<256x128xf32>
    %c0_55 = arith.constant 0 : index
    %c0_56 = arith.constant 0 : index
    %50 = vector.load %arg3[%c0_55, %c0_56] : memref<1x128xf32, #tpu.memory_space<vmem>>, vector<1x128xf32>
    %51 = vector.broadcast %50 : vector<1x128xf32> to vector<256x128xf32>
    %52 = arith.addf %49, %51 : vector<256x128xf32>
    %53 = arith.truncf %52 : vector<256x128xf32> to vector<256x128xbf16>
    %54 = vector.shape_cast %53 : vector<256x128xbf16> to vector<1x16x16x128xbf16>
    %c0_57 = arith.constant 0 : index
    %c0_58 = arith.constant 0 : index
    %c0_59 = arith.constant 0 : index
    %c0_60 = arith.constant 0 : index
    %55 = vector.load %arg6[%c0_57, %c0_58, %c0_59, %c0_60] : memref<1x16x16x128xbf16, #tpu.memory_space<vmem>>, vector<1x16x16x128xbf16>
    tpu.vector_store %arg6[%c0_57, %c0_58, %c0_59, %c0_60], %54 {strides = array<i32>} : memref<1x16x16x128xbf16, #tpu.memory_space<vmem>>, vector<1x16x16x128xbf16>,
    %56 = arith.extf %53 : vector<256x128xbf16> to vector<256x128xf32>
    %cst_61 = arith.constant dense<0.000000e+00> : vector<128xf32>
    %57 = vector.multi_reduction <add>, %56, %cst_61 [0] : vector<256x128xf32> to vector<128xf32>
    %58 = vector.shape_cast %57 : vector<128xf32> to vector<1x128xf32>
    %cst_62 = arith.constant 2.560000e+02 : f32
    %59 = vector.broadcast %cst_62 : f32 to vector<1x128xf32>
    %60 = arith.divf %58, %59 : vector<1x128xf32>
    %61 = vector.broadcast %60 : vector<1x128xf32> to vector<256x128xf32>
    %62 = arith.subf %56, %61 : vector<256x128xf32>
    %63 = arith.mulf %62, %62 : vector<256x128xf32>
    %cst_63 = arith.constant dense<0.000000e+00> : vector<128xf32>
    %64 = vector.multi_reduction <add>, %63, %cst_63 [0] : vector<256x128xf32> to vector<128xf32>
    %65 = vector.shape_cast %64 : vector<128xf32> to vector<1x128xf32>
    %66 = tpu.concatenate %58, %65 in 0 : vector<1x128xf32>, vector<1x128xf32> -> vector<2x128xf32>
    %67 = vector.shape_cast %66 : vector<2x128xf32> to vector<1x2x128xf32>
    %c0_64 = arith.constant 0 : index
    %c0_65 = arith.constant 0 : index
    %c0_66 = arith.constant 0 : index
    %68 = vector.load %arg7[%c0_64, %c0_65, %c0_66] : memref<1x2x128xf32, #tpu.memory_space<vmem>>, vector<1x2x128xf32>
    tpu.vector_store %arg7[%c0_64, %c0_65, %c0_66], %67 {strides = array<i32>} : memref<1x2x128xf32, #tpu.memory_space<vmem>>, vector<1x2x128xf32>,
    return
  }
  func.func @transform_0(%arg0: i32) -> (i32, i32, i32, i32) {
    %c0_i32 = arith.constant 0 : i32
    %c0_i32_0 = arith.constant 0 : i32
    %c0_i32_1 = arith.constant 0 : i32
    %c0_i32_2 = arith.constant 0 : i32
    return %arg0, %c0_i32, %c0_i32_0, %c0_i32_1 : i32, i32, i32, i32
  }
  func.func @transform_1(%arg0: i32) -> (i32, i32) {
    %c0_i32 = arith.constant 0 : i32
    %c0_i32_0 = arith.constant 0 : i32
    %c0_i32_1 = arith.constant 0 : i32
    return %c0_i32, %c0_i32_0 : i32, i32
  }
  func.func @transform_2(%arg0: i32) -> (i32, i32) {
    %c0_i32 = arith.constant 0 : i32
    %c0_i32_0 = arith.constant 0 : i32
    %c0_i32_1 = arith.constant 0 : i32
    return %c0_i32, %c0_i32_0 : i32, i32
  }
  func.func @transform_3(%arg0: i32) -> (i32, i32) {
    %c0_i32 = arith.constant 0 : i32
    %c0_i32_0 = arith.constant 0 : i32
    %c0_i32_1 = arith.constant 0 : i32
    return %c0_i32, %c0_i32_0 : i32, i32
  }
  func.func @transform_4(%arg0: i32) -> (i32, i32) {
    %c0_i32 = arith.constant 0 : i32
    %c0_i32_0 = arith.constant 0 : i32
    %c0_i32_1 = arith.constant 0 : i32
    return %c0_i32, %c0_i32_0 : i32, i32
  }
  func.func @transform_5(%arg0: i32) -> (i32, i32, i32, i32) {
    %c0_i32 = arith.constant 0 : i32
    %c0_i32_0 = arith.constant 0 : i32
    %c0_i32_1 = arith.constant 0 : i32
    %c0_i32_2 = arith.constant 0 : i32
    return %arg0, %c0_i32, %c0_i32_0, %c0_i32_1 : i32, i32, i32, i32
  }
  func.func @transform_6(%arg0: i32) -> (i32, i32, i32) {
    %c0_i32 = arith.constant 0 : i32
    %c0_i32_0 = arith.constant 0 : i32
    %c0_i32_1 = arith.constant 0 : i32
    return %arg0, %c0_i32, %c0_i32_0 : i32, i32, i32
  }
}

module attributes {stable_mosaic.version = 11 : i64} {
  func.func @_conv1_kernel(%arg0: i32, %arg1: memref<1x16x16x4xf32, #tpu.memory_space<vmem>>, %arg2: memref<9x4x128xbf16, #tpu.memory_space<vmem>>, %arg3: memref<1x128xf32, #tpu.memory_space<vmem>>, %arg4: memref<1x16x16x128xbf16, #tpu.memory_space<vmem>>, %arg5: memref<1x2x128xf32, #tpu.memory_space<vmem>>, %arg6: memref<18x18x4xbf16, #tpu.memory_space<vmem>>) attributes {dimension_semantics = [#tpu.dimension_semantics<parallel>], iteration_bounds = array<i64: 2>, scalar_prefetch = 0 : i64, scratch_operands = 1 : i64, tpu.core_type = #tpu.core_type<tc>, window_params = [{transform_indices = @transform_0, window_bounds = array<i64: 1, 16, 16, 4>}, {pipeline_mode = #tpu.pipeline_mode<synchronous>, transform_indices = @transform_1, window_bounds = array<i64: 9, 4, 128>}, {pipeline_mode = #tpu.pipeline_mode<synchronous>, transform_indices = @transform_2, window_bounds = array<i64: 1, 128>}, {transform_indices = @transform_3, window_bounds = array<i64: 1, 16, 16, 128>}, {transform_indices = @transform_4, window_bounds = array<i64: 1, 2, 128>}]} {
    %cst = arith.constant 0.000000e+00 : bf16
    %0 = vector.broadcast %cst : bf16 to vector<18x18x4xbf16>
    %c0 = arith.constant 0 : index
    %c0_0 = arith.constant 0 : index
    %c0_1 = arith.constant 0 : index
    %1 = vector.load %arg6[%c0, %c0_0, %c0_1] : memref<18x18x4xbf16, #tpu.memory_space<vmem>>, vector<18x18x4xbf16>
    tpu.vector_store %arg6[%c0, %c0_0, %c0_1], %0 {strides = array<i32>} : memref<18x18x4xbf16, #tpu.memory_space<vmem>>, vector<18x18x4xbf16>,
    %c0_2 = arith.constant 0 : index
    %c0_3 = arith.constant 0 : index
    %c0_4 = arith.constant 0 : index
    %c0_5 = arith.constant 0 : index
    %2 = vector.load %arg1[%c0_2, %c0_3, %c0_4, %c0_5] : memref<1x16x16x4xf32, #tpu.memory_space<vmem>>, vector<1x16x16x4xf32>
    %3 = vector.shape_cast %2 : vector<1x16x16x4xf32> to vector<16x16x4xf32>
    %4 = arith.truncf %3 : vector<16x16x4xf32> to vector<16x16x4xbf16>
    %c1 = arith.constant 1 : index
    %c1_6 = arith.constant 1 : index
    %c0_7 = arith.constant 0 : index
    %5 = vector.load %arg6[%c1, %c1_6, %c0_7] : memref<18x18x4xbf16, #tpu.memory_space<vmem>>, vector<16x16x4xbf16>
    tpu.vector_store %arg6[%c1, %c1_6, %c0_7], %4 {strides = array<i32>} : memref<18x18x4xbf16, #tpu.memory_space<vmem>>, vector<16x16x4xbf16>,
    %cst_8 = arith.constant 0.000000e+00 : f32
    %6 = vector.broadcast %cst_8 : f32 to vector<256x128xf32>
    %c0_9 = arith.constant 0 : index
    %c0_10 = arith.constant 0 : index
    %c0_11 = arith.constant 0 : index
    %7 = vector.load %arg6[%c0_9, %c0_10, %c0_11] : memref<18x18x4xbf16, #tpu.memory_space<vmem>>, vector<16x16x4xbf16>
    %8 = vector.shape_cast %7 : vector<16x16x4xbf16> to vector<256x4xbf16>
    %c0_12 = arith.constant 0 : index
    %c0_13 = arith.constant 0 : index
    %c0_14 = arith.constant 0 : index
    %9 = vector.load %arg2[%c0_12, %c0_13, %c0_14] : memref<9x4x128xbf16, #tpu.memory_space<vmem>>, vector<1x4x128xbf16>
    %10 = vector.shape_cast %9 : vector<1x4x128xbf16> to vector<4x128xbf16>
    %cst_15 = arith.constant dense<0.000000e+00> : vector<256x128xf32>
    %11 = tpu.matmul %8, %10, %cst_15 {dimension_numbers = #tpu.dot_dimension_numbers<[1], [0], [0], [1], [0, 0, 1, 1], [], []>} : vector<256x4xbf16>, vector<4x128xbf16>, vector<256x128xf32> -> vector<256x128xf32>
    %12 = arith.addf %6, %11 : vector<256x128xf32>
    %c0_16 = arith.constant 0 : index
    %c1_17 = arith.constant 1 : index
    %c0_18 = arith.constant 0 : index
    %13 = vector.load %arg6[%c0_16, %c1_17, %c0_18] : memref<18x18x4xbf16, #tpu.memory_space<vmem>>, vector<16x16x4xbf16>
    %14 = vector.shape_cast %13 : vector<16x16x4xbf16> to vector<256x4xbf16>
    %c1_19 = arith.constant 1 : index
    %c0_20 = arith.constant 0 : index
    %c0_21 = arith.constant 0 : index
    %15 = vector.load %arg2[%c1_19, %c0_20, %c0_21] : memref<9x4x128xbf16, #tpu.memory_space<vmem>>, vector<1x4x128xbf16>
    %16 = vector.shape_cast %15 : vector<1x4x128xbf16> to vector<4x128xbf16>
    %cst_22 = arith.constant dense<0.000000e+00> : vector<256x128xf32>
    %17 = tpu.matmul %14, %16, %cst_22 {dimension_numbers = #tpu.dot_dimension_numbers<[1], [0], [0], [1], [0, 0, 1, 1], [], []>} : vector<256x4xbf16>, vector<4x128xbf16>, vector<256x128xf32> -> vector<256x128xf32>
    %18 = arith.addf %12, %17 : vector<256x128xf32>
    %c0_23 = arith.constant 0 : index
    %c2 = arith.constant 2 : index
    %c0_24 = arith.constant 0 : index
    %19 = vector.load %arg6[%c0_23, %c2, %c0_24] : memref<18x18x4xbf16, #tpu.memory_space<vmem>>, vector<16x16x4xbf16>
    %20 = vector.shape_cast %19 : vector<16x16x4xbf16> to vector<256x4xbf16>
    %c2_25 = arith.constant 2 : index
    %c0_26 = arith.constant 0 : index
    %c0_27 = arith.constant 0 : index
    %21 = vector.load %arg2[%c2_25, %c0_26, %c0_27] : memref<9x4x128xbf16, #tpu.memory_space<vmem>>, vector<1x4x128xbf16>
    %22 = vector.shape_cast %21 : vector<1x4x128xbf16> to vector<4x128xbf16>
    %cst_28 = arith.constant dense<0.000000e+00> : vector<256x128xf32>
    %23 = tpu.matmul %20, %22, %cst_28 {dimension_numbers = #tpu.dot_dimension_numbers<[1], [0], [0], [1], [0, 0, 1, 1], [], []>} : vector<256x4xbf16>, vector<4x128xbf16>, vector<256x128xf32> -> vector<256x128xf32>
    %24 = arith.addf %18, %23 : vector<256x128xf32>
    %c1_29 = arith.constant 1 : index
    %c0_30 = arith.constant 0 : index
    %c0_31 = arith.constant 0 : index
    %25 = vector.load %arg6[%c1_29, %c0_30, %c0_31] : memref<18x18x4xbf16, #tpu.memory_space<vmem>>, vector<16x16x4xbf16>
    %26 = vector.shape_cast %25 : vector<16x16x4xbf16> to vector<256x4xbf16>
    %c3 = arith.constant 3 : index
    %c0_32 = arith.constant 0 : index
    %c0_33 = arith.constant 0 : index
    %27 = vector.load %arg2[%c3, %c0_32, %c0_33] : memref<9x4x128xbf16, #tpu.memory_space<vmem>>, vector<1x4x128xbf16>
    %28 = vector.shape_cast %27 : vector<1x4x128xbf16> to vector<4x128xbf16>
    %cst_34 = arith.constant dense<0.000000e+00> : vector<256x128xf32>
    %29 = tpu.matmul %26, %28, %cst_34 {dimension_numbers = #tpu.dot_dimension_numbers<[1], [0], [0], [1], [0, 0, 1, 1], [], []>} : vector<256x4xbf16>, vector<4x128xbf16>, vector<256x128xf32> -> vector<256x128xf32>
    %30 = arith.addf %24, %29 : vector<256x128xf32>
    %c1_35 = arith.constant 1 : index
    %c1_36 = arith.constant 1 : index
    %c0_37 = arith.constant 0 : index
    %31 = vector.load %arg6[%c1_35, %c1_36, %c0_37] : memref<18x18x4xbf16, #tpu.memory_space<vmem>>, vector<16x16x4xbf16>
    %32 = vector.shape_cast %31 : vector<16x16x4xbf16> to vector<256x4xbf16>
    %c4 = arith.constant 4 : index
    %c0_38 = arith.constant 0 : index
    %c0_39 = arith.constant 0 : index
    %33 = vector.load %arg2[%c4, %c0_38, %c0_39] : memref<9x4x128xbf16, #tpu.memory_space<vmem>>, vector<1x4x128xbf16>
    %34 = vector.shape_cast %33 : vector<1x4x128xbf16> to vector<4x128xbf16>
    %cst_40 = arith.constant dense<0.000000e+00> : vector<256x128xf32>
    %35 = tpu.matmul %32, %34, %cst_40 {dimension_numbers = #tpu.dot_dimension_numbers<[1], [0], [0], [1], [0, 0, 1, 1], [], []>} : vector<256x4xbf16>, vector<4x128xbf16>, vector<256x128xf32> -> vector<256x128xf32>
    %36 = arith.addf %30, %35 : vector<256x128xf32>
    %c1_41 = arith.constant 1 : index
    %c2_42 = arith.constant 2 : index
    %c0_43 = arith.constant 0 : index
    %37 = vector.load %arg6[%c1_41, %c2_42, %c0_43] : memref<18x18x4xbf16, #tpu.memory_space<vmem>>, vector<16x16x4xbf16>
    %38 = vector.shape_cast %37 : vector<16x16x4xbf16> to vector<256x4xbf16>
    %c5 = arith.constant 5 : index
    %c0_44 = arith.constant 0 : index
    %c0_45 = arith.constant 0 : index
    %39 = vector.load %arg2[%c5, %c0_44, %c0_45] : memref<9x4x128xbf16, #tpu.memory_space<vmem>>, vector<1x4x128xbf16>
    %40 = vector.shape_cast %39 : vector<1x4x128xbf16> to vector<4x128xbf16>
    %cst_46 = arith.constant dense<0.000000e+00> : vector<256x128xf32>
    %41 = tpu.matmul %38, %40, %cst_46 {dimension_numbers = #tpu.dot_dimension_numbers<[1], [0], [0], [1], [0, 0, 1, 1], [], []>} : vector<256x4xbf16>, vector<4x128xbf16>, vector<256x128xf32> -> vector<256x128xf32>
    %42 = arith.addf %36, %41 : vector<256x128xf32>
    %c2_47 = arith.constant 2 : index
    %c0_48 = arith.constant 0 : index
    %c0_49 = arith.constant 0 : index
    %43 = vector.load %arg6[%c2_47, %c0_48, %c0_49] : memref<18x18x4xbf16, #tpu.memory_space<vmem>>, vector<16x16x4xbf16>
    %44 = vector.shape_cast %43 : vector<16x16x4xbf16> to vector<256x4xbf16>
    %c6 = arith.constant 6 : index
    %c0_50 = arith.constant 0 : index
    %c0_51 = arith.constant 0 : index
    %45 = vector.load %arg2[%c6, %c0_50, %c0_51] : memref<9x4x128xbf16, #tpu.memory_space<vmem>>, vector<1x4x128xbf16>
    %46 = vector.shape_cast %45 : vector<1x4x128xbf16> to vector<4x128xbf16>
    %cst_52 = arith.constant dense<0.000000e+00> : vector<256x128xf32>
    %47 = tpu.matmul %44, %46, %cst_52 {dimension_numbers = #tpu.dot_dimension_numbers<[1], [0], [0], [1], [0, 0, 1, 1], [], []>} : vector<256x4xbf16>, vector<4x128xbf16>, vector<256x128xf32> -> vector<256x128xf32>
    %48 = arith.addf %42, %47 : vector<256x128xf32>
    %c2_53 = arith.constant 2 : index
    %c1_54 = arith.constant 1 : index
    %c0_55 = arith.constant 0 : index
    %49 = vector.load %arg6[%c2_53, %c1_54, %c0_55] : memref<18x18x4xbf16, #tpu.memory_space<vmem>>, vector<16x16x4xbf16>
    %50 = vector.shape_cast %49 : vector<16x16x4xbf16> to vector<256x4xbf16>
    %c7 = arith.constant 7 : index
    %c0_56 = arith.constant 0 : index
    %c0_57 = arith.constant 0 : index
    %51 = vector.load %arg2[%c7, %c0_56, %c0_57] : memref<9x4x128xbf16, #tpu.memory_space<vmem>>, vector<1x4x128xbf16>
    %52 = vector.shape_cast %51 : vector<1x4x128xbf16> to vector<4x128xbf16>
    %cst_58 = arith.constant dense<0.000000e+00> : vector<256x128xf32>
    %53 = tpu.matmul %50, %52, %cst_58 {dimension_numbers = #tpu.dot_dimension_numbers<[1], [0], [0], [1], [0, 0, 1, 1], [], []>} : vector<256x4xbf16>, vector<4x128xbf16>, vector<256x128xf32> -> vector<256x128xf32>
    %54 = arith.addf %48, %53 : vector<256x128xf32>
    %c2_59 = arith.constant 2 : index
    %c2_60 = arith.constant 2 : index
    %c0_61 = arith.constant 0 : index
    %55 = vector.load %arg6[%c2_59, %c2_60, %c0_61] : memref<18x18x4xbf16, #tpu.memory_space<vmem>>, vector<16x16x4xbf16>
    %56 = vector.shape_cast %55 : vector<16x16x4xbf16> to vector<256x4xbf16>
    %c8 = arith.constant 8 : index
    %c0_62 = arith.constant 0 : index
    %c0_63 = arith.constant 0 : index
    %57 = vector.load %arg2[%c8, %c0_62, %c0_63] : memref<9x4x128xbf16, #tpu.memory_space<vmem>>, vector<1x4x128xbf16>
    %58 = vector.shape_cast %57 : vector<1x4x128xbf16> to vector<4x128xbf16>
    %cst_64 = arith.constant dense<0.000000e+00> : vector<256x128xf32>
    %59 = tpu.matmul %56, %58, %cst_64 {dimension_numbers = #tpu.dot_dimension_numbers<[1], [0], [0], [1], [0, 0, 1, 1], [], []>} : vector<256x4xbf16>, vector<4x128xbf16>, vector<256x128xf32> -> vector<256x128xf32>
    %60 = arith.addf %54, %59 : vector<256x128xf32>
    %c0_65 = arith.constant 0 : index
    %c0_66 = arith.constant 0 : index
    %61 = vector.load %arg3[%c0_65, %c0_66] : memref<1x128xf32, #tpu.memory_space<vmem>>, vector<1x128xf32>
    %62 = vector.broadcast %61 : vector<1x128xf32> to vector<256x128xf32>
    %63 = arith.addf %60, %62 : vector<256x128xf32>
    %64 = arith.truncf %63 : vector<256x128xf32> to vector<256x128xbf16>
    %65 = vector.shape_cast %64 : vector<256x128xbf16> to vector<1x16x16x128xbf16>
    %c0_67 = arith.constant 0 : index
    %c0_68 = arith.constant 0 : index
    %c0_69 = arith.constant 0 : index
    %c0_70 = arith.constant 0 : index
    %66 = vector.load %arg4[%c0_67, %c0_68, %c0_69, %c0_70] : memref<1x16x16x128xbf16, #tpu.memory_space<vmem>>, vector<1x16x16x128xbf16>
    tpu.vector_store %arg4[%c0_67, %c0_68, %c0_69, %c0_70], %65 {strides = array<i32>} : memref<1x16x16x128xbf16, #tpu.memory_space<vmem>>, vector<1x16x16x128xbf16>,
    %67 = arith.extf %64 : vector<256x128xbf16> to vector<256x128xf32>
    %cst_71 = arith.constant dense<0.000000e+00> : vector<128xf32>
    %68 = vector.multi_reduction <add>, %67, %cst_71 [0] : vector<256x128xf32> to vector<128xf32>
    %69 = vector.shape_cast %68 : vector<128xf32> to vector<1x128xf32>
    %cst_72 = arith.constant 2.560000e+02 : f32
    %70 = vector.broadcast %cst_72 : f32 to vector<1x128xf32>
    %71 = arith.divf %69, %70 : vector<1x128xf32>
    %72 = vector.broadcast %71 : vector<1x128xf32> to vector<256x128xf32>
    %73 = arith.subf %67, %72 : vector<256x128xf32>
    %74 = arith.mulf %73, %73 : vector<256x128xf32>
    %cst_73 = arith.constant dense<0.000000e+00> : vector<128xf32>
    %75 = vector.multi_reduction <add>, %74, %cst_73 [0] : vector<256x128xf32> to vector<128xf32>
    %76 = vector.shape_cast %75 : vector<128xf32> to vector<1x128xf32>
    %77 = tpu.concatenate %69, %76 in 0 : vector<1x128xf32>, vector<1x128xf32> -> vector<2x128xf32>
    %78 = vector.shape_cast %77 : vector<2x128xf32> to vector<1x2x128xf32>
    %c0_74 = arith.constant 0 : index
    %c0_75 = arith.constant 0 : index
    %c0_76 = arith.constant 0 : index
    %79 = vector.load %arg5[%c0_74, %c0_75, %c0_76] : memref<1x2x128xf32, #tpu.memory_space<vmem>>, vector<1x2x128xf32>
    tpu.vector_store %arg5[%c0_74, %c0_75, %c0_76], %78 {strides = array<i32>} : memref<1x2x128xf32, #tpu.memory_space<vmem>>, vector<1x2x128xf32>,
    return
  }
  func.func @transform_0(%arg0: i32) -> (i32, i32, i32, i32) {
    %c0_i32 = arith.constant 0 : i32
    %c0_i32_0 = arith.constant 0 : i32
    %c0_i32_1 = arith.constant 0 : i32
    %c0_i32_2 = arith.constant 0 : i32
    return %arg0, %c0_i32, %c0_i32_0, %c0_i32_1 : i32, i32, i32, i32
  }
  func.func @transform_1(%arg0: i32) -> (i32, i32, i32) {
    %c0_i32 = arith.constant 0 : i32
    %c0_i32_0 = arith.constant 0 : i32
    %c0_i32_1 = arith.constant 0 : i32
    %c0_i32_2 = arith.constant 0 : i32
    return %c0_i32, %c0_i32_0, %c0_i32_1 : i32, i32, i32
  }
  func.func @transform_2(%arg0: i32) -> (i32, i32) {
    %c0_i32 = arith.constant 0 : i32
    %c0_i32_0 = arith.constant 0 : i32
    %c0_i32_1 = arith.constant 0 : i32
    return %c0_i32, %c0_i32_0 : i32, i32
  }
  func.func @transform_3(%arg0: i32) -> (i32, i32, i32, i32) {
    %c0_i32 = arith.constant 0 : i32
    %c0_i32_0 = arith.constant 0 : i32
    %c0_i32_1 = arith.constant 0 : i32
    %c0_i32_2 = arith.constant 0 : i32
    return %arg0, %c0_i32, %c0_i32_0, %c0_i32_1 : i32, i32, i32, i32
  }
  func.func @transform_4(%arg0: i32) -> (i32, i32, i32) {
    %c0_i32 = arith.constant 0 : i32
    %c0_i32_0 = arith.constant 0 : i32
    %c0_i32_1 = arith.constant 0 : i32
    return %arg0, %c0_i32, %c0_i32_0 : i32, i32, i32
  }
}

module attributes {stable_mosaic.version = 11 : i64} {
  func.func @_bn_act_kernel(%arg0: i32, %arg1: memref<1x16x16x128xbf16, #tpu.memory_space<vmem>>, %arg2: memref<1x8xf32, #tpu.memory_space<vmem>>, %arg3: memref<1x8xf32, #tpu.memory_space<vmem>>, %arg4: memref<1x16x16x8xf32, #tpu.memory_space<vmem>>) attributes {dimension_semantics = [#tpu.dimension_semantics<parallel>], iteration_bounds = array<i64: 2>, scalar_prefetch = 0 : i64, scratch_operands = 0 : i64, tpu.core_type = #tpu.core_type<tc>, window_params = [{transform_indices = @transform_0, window_bounds = array<i64: 1, 16, 16, 128>}, {pipeline_mode = #tpu.pipeline_mode<synchronous>, transform_indices = @transform_1, window_bounds = array<i64: 1, 8>}, {pipeline_mode = #tpu.pipeline_mode<synchronous>, transform_indices = @transform_2, window_bounds = array<i64: 1, 8>}, {transform_indices = @transform_3, window_bounds = array<i64: 1, 16, 16, 8>}]} {
    %c0 = arith.constant 0 : index
    %c0_0 = arith.constant 0 : index
    %c0_1 = arith.constant 0 : index
    %c0_2 = arith.constant 0 : index
    %0 = vector.load %arg1[%c0, %c0_0, %c0_1, %c0_2] : memref<1x16x16x128xbf16, #tpu.memory_space<vmem>>, vector<1x16x16x8xbf16>
    %1 = vector.shape_cast %0 : vector<1x16x16x8xbf16> to vector<16x16x8xbf16>
    %2 = arith.extf %1 : vector<16x16x8xbf16> to vector<16x16x8xf32>
    %c0_3 = arith.constant 0 : index
    %c0_4 = arith.constant 0 : index
    %3 = vector.load %arg2[%c0_3, %c0_4] : memref<1x8xf32, #tpu.memory_space<vmem>>, vector<1x8xf32>
    %4 = vector.shape_cast %3 : vector<1x8xf32> to vector<1x1x8xf32>
    %5 = vector.broadcast %4 : vector<1x1x8xf32> to vector<16x16x8xf32>
    %6 = arith.mulf %2, %5 : vector<16x16x8xf32>
    %c0_5 = arith.constant 0 : index
    %c0_6 = arith.constant 0 : index
    %7 = vector.load %arg3[%c0_5, %c0_6] : memref<1x8xf32, #tpu.memory_space<vmem>>, vector<1x8xf32>
    %8 = vector.shape_cast %7 : vector<1x8xf32> to vector<1x1x8xf32>
    %9 = vector.broadcast %8 : vector<1x1x8xf32> to vector<16x16x8xf32>
    %10 = arith.addf %6, %9 : vector<16x16x8xf32>
    %cst = arith.constant 0.000000e+00 : f32
    %11 = vector.broadcast %cst : f32 to vector<16x16x8xf32>
    %12 = arith.cmpf oge, %10, %11 : vector<16x16x8xf32>
    %cst_7 = arith.constant 0.00999999977 : f32
    %13 = vector.broadcast %cst_7 : f32 to vector<16x16x8xf32>
    %14 = arith.mulf %13, %10 : vector<16x16x8xf32>
    %15 = arith.select %12, %10, %14 : vector<16x16x8xi1>, vector<16x16x8xf32>
    %16 = vector.shape_cast %15 : vector<16x16x8xf32> to vector<1x16x16x8xf32>
    %c0_8 = arith.constant 0 : index
    %c0_9 = arith.constant 0 : index
    %c0_10 = arith.constant 0 : index
    %c0_11 = arith.constant 0 : index
    %17 = vector.load %arg4[%c0_8, %c0_9, %c0_10, %c0_11] : memref<1x16x16x8xf32, #tpu.memory_space<vmem>>, vector<1x16x16x8xf32>
    tpu.vector_store %arg4[%c0_8, %c0_9, %c0_10, %c0_11], %16 {strides = array<i32>} : memref<1x16x16x8xf32, #tpu.memory_space<vmem>>, vector<1x16x16x8xf32>,
    return
  }
  func.func @transform_0(%arg0: i32) -> (i32, i32, i32, i32) {
    %c0_i32 = arith.constant 0 : i32
    %c0_i32_0 = arith.constant 0 : i32
    %c0_i32_1 = arith.constant 0 : i32
    %c0_i32_2 = arith.constant 0 : i32
    return %arg0, %c0_i32, %c0_i32_0, %c0_i32_1 : i32, i32, i32, i32
  }
  func.func @transform_1(%arg0: i32) -> (i32, i32) {
    %c0_i32 = arith.constant 0 : i32
    %c0_i32_0 = arith.constant 0 : i32
    %c0_i32_1 = arith.constant 0 : i32
    return %c0_i32, %c0_i32_0 : i32, i32
  }
  func.func @transform_2(%arg0: i32) -> (i32, i32) {
    %c0_i32 = arith.constant 0 : i32
    %c0_i32_0 = arith.constant 0 : i32
    %c0_i32_1 = arith.constant 0 : i32
    return %c0_i32, %c0_i32_0 : i32, i32
  }
  func.func @transform_3(%arg0: i32) -> (i32, i32, i32, i32) {
    %c0_i32 = arith.constant 0 : i32
    %c0_i32_0 = arith.constant 0 : i32
    %c0_i32_1 = arith.constant 0 : i32
    %c0_i32_2 = arith.constant 0 : i32
    return %arg0, %c0_i32, %c0_i32_0, %c0_i32_1 : i32, i32, i32, i32
  }
}

</mosaic_0001>

<llo_original>
// kernel: double_conv_pallas.5
$region0: #{double_conv_pallas.5}
  #allocation0 [shape = 'u32[]', space=smem, size = 0x4, offset = 0x4, fixed_abs, tag = 'smem constant byte address 0x4 - core index']
  #allocation1 [shape = 'u32[72,128]{1,0:T(1,128)}', space=vmem, size = 0x9000, scoped, tag = 'internal scratch']
  %s0 = inlined_call_operand.vmem [shape: bf16[2,16,16,128], index: 0, kind: input, shape index: {}]
  %s1 = inlined_call_operand.vmem [shape: f32[1,8], index: 1, kind: input, shape index: {}]
  %s2 = inlined_call_operand.vmem [shape: f32[1,8], index: 2, kind: input, shape index: {}]
  %s3 = inlined_call_operand.vmem [shape: f32[2,16,16,8], index: 3, kind: output, shape index: {}]
  %s4 = sld [smem:[#allocation0]]
  $region45: #{double_conv_pallas.5} parent=0
    _
  %s6 = ssub.s32 1, %s4
  %s7 = scalar_select 0, %s6, %s4
  loop: start=0, step=1, limit=4
  $region2: #{double_conv_pallas.5} parent=0 // loop_pre_header
    _
  $region3: #{double_conv_pallas.5} parent=0 // loop_header
    %s9 = sphi 0, %s13
    %p10 = scmp.ge.s32.totalorder %s9, 4
    %s19 = sphi 0, %s21
    %s22 = sphi 0, %s19
    %s23 = sphi 0, %s22
    %s39 = sphi 0, %s23
    %s43 = sphi 0, %s43
    %s45 = sphi 0, %s43
    %s46 = sphi 0, %s45
    %s60 = sphi 0, %s46
    %s64 = sphi 0, %s64
    %s66 = sphi 0, %s64
    %s67 = sphi 0, %s66
    %s81 = sphi 0, %s67
    %s87 = sphi 0, %s89
    %s90 = sphi 0, %s87
    %s91 = sphi 0, %s90
    %s107 = sphi 0, %s91
  $region4: #{double_conv_pallas.5} parent=0 // loop_header_branch
    %12 = sbr.rel (%p10) target = $region8
  $region5: #{double_conv_pallas.5} parent=0 // loop_body
    %s14 = ssub.s32 %s9, 1
    %s15 = ssub.s32 %s9, 2
    %s16 = sadd.s32 %s9, 1
    %s17 = ssub.s32 %s9, %s16
    %p18 = scmp.eq.s32.totalorder %s17, 0
    %s20 = sadd.s32 %s19, 1
    %s21 = scalar_select %p18, %s19, %s20
    %p24 = pneg %p18
    %p25 = scmp.eq.s32.totalorder %s9, 1
    %p26 = por %p24, %p25
    %p27 = scmp.ne.s32.totalorder %s19, %s22
    %p28 = scmp.eq.s32.totalorder %s9, 0
    %p29 = por %p27, %p28
    %p30 = scmp.ne.s32.totalorder %s19, %s22
    %p31 = scmp.eq.s32.totalorder %s14, 1
    %p32 = por %p30, %p31
    %p33 = scmp.ne.s32.totalorder %s22, %s23
    %p34 = scmp.eq.s32.totalorder %s14, 0
    %p35 = por %p33, %p34
    %p36 = scmp.ne.s32.totalorder %s22, %s23
    %p37 = scmp.eq.s32.totalorder %s15, 1
    %p38 = por %p36, %p37
    %p40 = scmp.ne.s32.totalorder %s23, %s39
    %p41 = scmp.eq.s32.totalorder %s15, 0
    %p42 = por %p40, %p41
    %s44 = sadd.s32 %s43, 1
    %p47 = scmp.eq.s32.totalorder %s9, 1
    %p48 = scmp.ne.s32.totalorder %s43, %s45
    %p49 = scmp.eq.s32.totalorder %s9, 0
    %p50 = por %p48, %p49
    %p51 = scmp.ne.s32.totalorder %s43, %s45
    %p52 = scmp.eq.s32.totalorder %s14, 1
    %p53 = por %p51, %p52
    %p54 = scmp.ne.s32.totalorder %s45, %s46
    %p55 = scmp.eq.s32.totalorder %s14, 0
    %p56 = por %p54, %p55
    %p57 = scmp.ne.s32.totalorder %s45, %s46
    %p58 = scmp.eq.s32.totalorder %s15, 1
    %p59 = por %p57, %p58
    %p61 = scmp.ne.s32.totalorder %s46, %s60
    %p62 = scmp.eq.s32.totalorder %s15, 0
    %p63 = por %p61, %p62
    %s65 = sadd.s32 %s64, 1
    %p68 = scmp.eq.s32.totalorder %s9, 1
    %p69 = scmp.ne.s32.totalorder %s64, %s66
    %p70 = scmp.eq.s32.totalorder %s9, 0
    %p71 = por %p69, %p70
    %p72 = scmp.ne.s32.totalorder %s64, %s66
    %p73 = scmp.eq.s32.totalorder %s14, 1
    %p74 = por %p72, %p73
    %p75 = scmp.ne.s32.totalorder %s66, %s67
    %p76 = scmp.eq.s32.totalorder %s14, 0
    %p77 = por %p75, %p76
    %p78 = scmp.ne.s32.totalorder %s66, %s67
    %p79 = scmp.eq.s32.totalorder %s15, 1
    %p80 = por %p78, %p79
    %p82 = scmp.ne.s32.totalorder %s67, %s81
    %p83 = scmp.eq.s32.totalorder %s15, 0
    %p84 = por %p82, %p83
    %s85 = ssub.s32 %s9, %s16
    %p86 = scmp.eq.s32.totalorder %s85, 0
    %s88 = sadd.s32 %s87, 1
    %s89 = scalar_select %p86, %s87, %s88
    %p92 = pneg %p86
    %p93 = scmp.eq.s32.totalorder %s9, 1
    %p94 = por %p92, %p93
    %p95 = scmp.ne.s32.totalorder %s87, %s90
    %p96 = scmp.eq.s32.totalorder %s9, 0
    %p97 = por %p95, %p96
    %p98 = scmp.ne.s32.totalorder %s87, %s90
    %p99 = scmp.eq.s32.totalorder %s14, 1
    %p100 = por %p98, %p99
    %p101 = scmp.ne.s32.totalorder %s90, %s91
    %p102 = scmp.eq.s32.totalorder %s14, 0
    %p103 = por %p101, %p102
    %p104 = scmp.ne.s32.totalorder %s90, %s91
    %p105 = scmp.eq.s32.totalorder %s15, 1
    %p106 = por %p104, %p105
    %p108 = scmp.ne.s32.totalorder %s91, %s107
    %p109 = scmp.eq.s32.totalorder %s15, 0
    %p110 = por %p108, %p109
    %p111 = scmp.le.s32.totalorder 1, %s9
    %p112 = scmp.lt.s32.totalorder %s9, 3
    %p113 = pnand %p111, %p112
    %p114 = pneg %p113
    // Predicated region
    $region9: #{double_conv_pallas.5} parent=5 // pred_check
      _
    $region10: #{double_conv_pallas.5} parent=5 // pred_check_branch
      %116 = sbr.rel (%p113) target = $region12
    $region11: #{double_conv_pallas.5} parent=5 // pred_region
      %s117 = ssub.s32 %s9, 1
      // Predicated region
      $region13: #{double_conv_pallas.5} parent=11 // pred_check
        %p118 = pneg %p56
      $region14: #{double_conv_pallas.5} parent=11 // pred_check_branch
        %120 = sbr.rel (%p118) target = $region16
      $region15: #{double_conv_pallas.5} parent=11 // pred_region
        _
      $region16: #{double_conv_pallas.5} parent=11 // pred_fallthru
        _
      // Predicated region
      $region17: #{double_conv_pallas.5} parent=11 // pred_check
        %p121 = pneg %p77
      $region18: #{double_conv_pallas.5} parent=11 // pred_check_branch
        %123 = sbr.rel (%p121) target = $region20
      $region19: #{double_conv_pallas.5} parent=11 // pred_region
        _
      $region20: #{double_conv_pallas.5} parent=11 // pred_fallthru
        _
    $region12: #{double_conv_pallas.5} parent=5 // pred_fallthru
      _
    %p124 = scmp.lt.s32.totalorder %s9, 2
    // Predicated region
    $region21: #{double_conv_pallas.5} parent=5 // pred_check
      %p125 = pneg %p124
    $region22: #{double_conv_pallas.5} parent=5 // pred_check_branch
      %127 = sbr.rel (%p125) target = $region24
    $region23: #{double_conv_pallas.5} parent=5 // pred_region
      // Predicated region
      $region25: #{double_conv_pallas.5} parent=23 // pred_check
        %p128 = pneg %p29
      $region26: #{double_conv_pallas.5} parent=23 // pred_check_branch
        %130 = sbr.rel (%p128) target = $region28
      $region27: #{double_conv_pallas.5} parent=23 // pred_region
        %p131 = scmp.lt.s32.totalorder %s9, 1
        %s132 = scalar_select %p131, %s9, 1
        %s133 = smul.addr %s132, 32
        %s134 = smul.addr %s133, 4
        %s135 = scalar_lea.vmem %s0, %s134
      $region28: #{double_conv_pallas.5} parent=23 // pred_fallthru
        _
    $region24: #{double_conv_pallas.5} parent=5 // pred_fallthru
      _
    %p136 = scmp.le.s32.totalorder 1, %s9
    %p137 = scmp.lt.s32.totalorder %s9, 3
    %p138 = pnand %p136, %p137
    %p139 = pneg %p138
    // Predicated region
    $region29: #{double_conv_pallas.5} parent=5 // pred_check
      _
    $region30: #{double_conv_pallas.5} parent=5 // pred_check_branch
      %141 = sbr.rel (%p138) target = $region32
    $region31: #{double_conv_pallas.5} parent=5 // pred_region
      %s142 = ssub.s32 %s9, 1
      %p143 = scmp.lt.s32.totalorder %s14, 1
      %s144 = scalar_select %p143, %s14, 1
      %s145 = smul.addr %s144, 32
      %s146 = smul.addr %s145, 4
      %s147 = scalar_lea.vmem %s0, %s146
      %p148 = pneg %p35
      %p149 = pneg %p32
      %p150 = pneg %p56
      %p151 = pneg %p53
      %p152 = pneg %p77
      %p153 = pneg %p74
      %p154 = pneg %p103
      %p155 = pneg %p100
      %p156 = scmp.lt.s32.totalorder %s14, 1
      %s157 = scalar_select %p156, %s14, 1
      %s158 = smul.addr %s157, 32
      %s159 = smul.addr %s158, 8
      %s160 = scalar_lea.vmem %s3, %s159
      %p161 = scmp.lt.s32.totalorder %s14, 1
      %s162 = scalar_select %p161, %s14, 1
      %s163 = smul.addr %s162, 32
      %s164 = smul.addr %s163, 4
      %s165 = scalar_lea.vmem %s0, %s164
      %p166 = scmp.lt.s32.totalorder %s14, 1
      %s167 = scalar_select %p166, %s14, 1
      %s168 = smul.addr %s167, 32
      %s169 = smul.addr %s168, 8
      %s170 = scalar_lea.vmem %s3, %s169
      %v171 = vld [vmem:[%s165] sm:$0xf]
      %v172 = vld [vmem:[%s165 + $0x4] sm:$0xf]
      %v173 = vld [vmem:[%s165 + $0x8] sm:$0xf]
      %v174 = vld [vmem:[%s165 + $0xc] sm:$0xf]
      %v175 = vld [vmem:[%s165 + $0x10] sm:$0xf]
      %v176 = vld [vmem:[%s165 + $0x14] sm:$0xf]
      %v177 = vld [vmem:[%s165 + $0x18] sm:$0xf]
      %v178 = vld [vmem:[%s165 + $0x1c] sm:$0xf]
      %v179 = vld [vmem:[%s165 + $0x20] sm:$0xf]
      %v180 = vld [vmem:[%s165 + $0x24] sm:$0xf]
      %v181 = vld [vmem:[%s165 + $0x28] sm:$0xf]
      %v182 = vld [vmem:[%s165 + $0x2c] sm:$0xf]
      %v183 = vld [vmem:[%s165 + $0x30] sm:$0xf]
      %v184 = vld [vmem:[%s165 + $0x34] sm:$0xf]
      %v185 = vld [vmem:[%s165 + $0x38] sm:$0xf]
      %v186 = vld [vmem:[%s165 + $0x3c] sm:$0xf]
      %v187 = vld [vmem:[%s165 + $0x40] sm:$0xf]
      %v188 = vld [vmem:[%s165 + $0x44] sm:$0xf]
      %v189 = vld [vmem:[%s165 + $0x48] sm:$0xf]
      %v190 = vld [vmem:[%s165 + $0x4c] sm:$0xf]
      %v191 = vld [vmem:[%s165 + $0x50] sm:$0xf]
      %v192 = vld [vmem:[%s165 + $0x54] sm:$0xf]
      %v193 = vld [vmem:[%s165 + $0x58] sm:$0xf]
      %v194 = vld [vmem:[%s165 + $0x5c] sm:$0xf]
      %v195 = vld [vmem:[%s165 + $0x60] sm:$0xf]
      %v196 = vld [vmem:[%s165 + $0x64] sm:$0xf]
      %v197 = vld [vmem:[%s165 + $0x68] sm:$0xf]
      %v198 = vld [vmem:[%s165 + $0x6c] sm:$0xf]
      %v199 = vld [vmem:[%s165 + $0x70] sm:$0xf]
      %v200 = vld [vmem:[%s165 + $0x74] sm:$0xf]
      %v201 = vld [vmem:[%s165 + $0x78] sm:$0xf]
      %v202 = vld [vmem:[%s165 + $0x7c] sm:$0xf]
      %v203 = vunpack.c.l.bf16 %v171
      %v204 = vunpack.c.l.bf16 %v172
      %v205 = vunpack.c.l.bf16 %v173
      %v206 = vunpack.c.l.bf16 %v174
      %v207 = vunpack.c.l.bf16 %v175
      %v208 = vunpack.c.l.bf16 %v176
      %v209 = vunpack.c.l.bf16 %v177
      %v210 = vunpack.c.l.bf16 %v178
      %v211 = vunpack.c.l.bf16 %v179
      %v212 = vunpack.c.l.bf16 %v180
      %v213 = vunpack.c.l.bf16 %v181
      %v214 = vunpack.c.l.bf16 %v182
      %v215 = vunpack.c.l.bf16 %v183
      %v216 = vunpack.c.l.bf16 %v184
      %v217 = vunpack.c.l.bf16 %v185
      %v218 = vunpack.c.l.bf16 %v186
      %v219 = vunpack.c.l.bf16 %v187
      %v220 = vunpack.c.l.bf16 %v188
      %v221 = vunpack.c.l.bf16 %v189
      %v222 = vunpack.c.l.bf16 %v190
      %v223 = vunpack.c.l.bf16 %v191
      %v224 = vunpack.c.l.bf16 %v192
      %v225 = vunpack.c.l.bf16 %v193
      %v226 = vunpack.c.l.bf16 %v194
      %v227 = vunpack.c.l.bf16 %v195
      %v228 = vunpack.c.l.bf16 %v196
      %v229 = vunpack.c.l.bf16 %v197
      %v230 = vunpack.c.l.bf16 %v198
      %v231 = vunpack.c.l.bf16 %v199
      %v232 = vunpack.c.l.bf16 %v200
      %v233 = vunpack.c.l.bf16 %v201
      %v234 = vunpack.c.l.bf16 %v202
      %v235 = vld [vmem:[%s1] sm:$0x1]
      %v237 = vperm.slane %v235, 0
      %v239 = vmul.f32 %v203, %v237
      %v240 = vmul.f32 %v204, %v237
      %v241 = vmul.f32 %v205, %v237
      %v242 = vmul.f32 %v206, %v237
      %v243 = vmul.f32 %v207, %v237
      %v244 = vmul.f32 %v208, %v237
      %v245 = vmul.f32 %v209, %v237
      %v246 = vmul.f32 %v210, %v237
      %v247 = vmul.f32 %v211, %v237
      %v248 = vmul.f32 %v212, %v237
      %v249 = vmul.f32 %v213, %v237
      %v250 = vmul.f32 %v214, %v237
      %v251 = vmul.f32 %v215, %v237
      %v252 = vmul.f32 %v216, %v237
      %v253 = vmul.f32 %v217, %v237
      %v254 = vmul.f32 %v218, %v237
      %v255 = vmul.f32 %v219, %v237
      %v256 = vmul.f32 %v220, %v237
      %v257 = vmul.f32 %v221, %v237
      %v258 = vmul.f32 %v222, %v237
      %v259 = vmul.f32 %v223, %v237
      %v260 = vmul.f32 %v224, %v237
      %v261 = vmul.f32 %v225, %v237
      %v262 = vmul.f32 %v226, %v237
      %v263 = vmul.f32 %v227, %v237
      %v264 = vmul.f32 %v228, %v237
      %v265 = vmul.f32 %v229, %v237
      %v266 = vmul.f32 %v230, %v237
      %v267 = vmul.f32 %v231, %v237
      %v268 = vmul.f32 %v232, %v237
      %v269 = vmul.f32 %v233, %v237
      %v270 = vmul.f32 %v234, %v237
      %v271 = vld [vmem:[%s2] sm:$0x1]
      %v273 = vperm.slane %v271, 0
      %v275 = vadd.f32 %v239, %v273
      %v276 = vadd.f32 %v240, %v273
      %v277 = vadd.f32 %v241, %v273
      %v278 = vadd.f32 %v242, %v273
      %v279 = vadd.f32 %v243, %v273
      %v280 = vadd.f32 %v244, %v273
      %v281 = vadd.f32 %v245, %v273
      %v282 = vadd.f32 %v246, %v273
      %v283 = vadd.f32 %v247, %v273
      %v284 = vadd.f32 %v248, %v273
      %v285 = vadd.f32 %v249, %v273
      %v286 = vadd.f32 %v250, %v273
      %v287 = vadd.f32 %v251, %v273
      %v288 = vadd.f32 %v252, %v273
      %v289 = vadd.f32 %v253, %v273
      %v290 = vadd.f32 %v254, %v273
      %v291 = vadd.f32 %v255, %v273
      %v292 = vadd.f32 %v256, %v273
      %v293 = vadd.f32 %v257, %v273
      %v294 = vadd.f32 %v258, %v273
      %v295 = vadd.f32 %v259, %v273
      %v296 = vadd.f32 %v260, %v273
      %v297 = vadd.f32 %v261, %v273
      %v298 = vadd.f32 %v262, %v273
      %v299 = vadd.f32 %v263, %v273
      %v300 = vadd.f32 %v264, %v273
      %v301 = vadd.f32 %v265, %v273
      %v302 = vadd.f32 %v266, %v273
      %v303 = vadd.f32 %v267, %v273
      %v304 = vadd.f32 %v268, %v273
      %v305 = vadd.f32 %v269, %v273
      %v306 = vadd.f32 %v270, %v273
      %vm307 = vcmp.ge.f32.partialorder %v275, 0.0
      %vm308 = vcmp.ge.f32.partialorder %v276, 0.0
      %vm309 = vcmp.ge.f32.partialorder %v277, 0.0
      %vm310 = vcmp.ge.f32.partialorder %v278, 0.0
      %vm311 = vcmp.ge.f32.partialorder %v279, 0.0
      %vm312 = vcmp.ge.f32.partialorder %v280, 0.0
      %vm313 = vcmp.ge.f32.partialorder %v281, 0.0
      %vm314 = vcmp.ge.f32.partialorder %v282, 0.0
      %vm315 = vcmp.ge.f32.partialorder %v283, 0.0
      %vm316 = vcmp.ge.f32.partialorder %v284, 0.0
      %vm317 = vcmp.ge.f32.partialorder %v285, 0.0
      %vm318 = vcmp.ge.f32.partialorder %v286, 0.0
      %vm319 = vcmp.ge.f32.partialorder %v287, 0.0
      %vm320 = vcmp.ge.f32.partialorder %v288, 0.0
      %vm321 = vcmp.ge.f32.partialorder %v289, 0.0
      %vm322 = vcmp.ge.f32.partialorder %v290, 0.0
      %vm323 = vcmp.ge.f32.partialorder %v291, 0.0
      %vm324 = vcmp.ge.f32.partialorder %v292, 0.0
      %vm325 = vcmp.ge.f32.partialorder %v293, 0.0
      %vm326 = vcmp.ge.f32.partialorder %v294, 0.0
      %vm327 = vcmp.ge.f32.partialorder %v295, 0.0
      %vm328 = vcmp.ge.f32.partialorder %v296, 0.0
      %vm329 = vcmp.ge.f32.partialorder %v297, 0.0
      %vm330 = vcmp.ge.f32.partialorder %v298, 0.0
      %vm331 = vcmp.ge.f32.partialorder %v299, 0.0
      %vm332 = vcmp.ge.f32.partialorder %v300, 0.0
      %vm333 = vcmp.ge.f32.partialorder %v301, 0.0
      %vm334 = vcmp.ge.f32.partialorder %v302, 0.0
      %vm335 = vcmp.ge.f32.partialorder %v303, 0.0
      %vm336 = vcmp.ge.f32.partialorder %v304, 0.0
      %vm337 = vcmp.ge.f32.partialorder %v305, 0.0
      %vm338 = vcmp.ge.f32.partialorder %v306, 0.0
      %v339 = vmul.f32 %v275, 0.01
      %v340 = vmul.f32 %v276, 0.01
      %v341 = vmul.f32 %v277, 0.01
      %v342 = vmul.f32 %v278, 0.01
      %v343 = vmul.f32 %v279, 0.01
      %v344 = vmul.f32 %v280, 0.01
      %v345 = vmul.f32 %v281, 0.01
      %v346 = vmul.f32 %v282, 0.01
      %v347 = vmul.f32 %v283, 0.01
      %v348 = vmul.f32 %v284, 0.01
      %v349 = vmul.f32 %v285, 0.01
      %v350 = vmul.f32 %v286, 0.01
      %v351 = vmul.f32 %v287, 0.01
      %v352 = vmul.f32 %v288, 0.01
      %v353 = vmul.f32 %v289, 0.01
      %v354 = vmul.f32 %v290, 0.01
      %v355 = vmul.f32 %v291, 0.01
      %v356 = vmul.f32 %v292, 0.01
      %v357 = vmul.f32 %v293, 0.01
      %v358 = vmul.f32 %v294, 0.01
      %v359 = vmul.f32 %v295, 0.01
      %v360 = vmul.f32 %v296, 0.01
      %v361 = vmul.f32 %v297, 0.01
      %v362 = vmul.f32 %v298, 0.01
      %v363 = vmul.f32 %v299, 0.01
      %v364 = vmul.f32 %v300, 0.01
      %v365 = vmul.f32 %v301, 0.01
      %v366 = vmul.f32 %v302, 0.01
      %v367 = vmul.f32 %v303, 0.01
      %v368 = vmul.f32 %v304, 0.01
      %v369 = vmul.f32 %v305, 0.01
      %v370 = vmul.f32 %v306, 0.01
      %v371 = vsel %vm307, %v275, %v339
      %v372 = vsel %vm308, %v276, %v340
      %v373 = vsel %vm309, %v277, %v341
      %v374 = vsel %vm310, %v278, %v342
      %v375 = vsel %vm311, %v279, %v343
      %v376 = vsel %vm312, %v280, %v344
      %v377 = vsel %vm313, %v281, %v345
      %v378 = vsel %vm314, %v282, %v346
      %v379 = vsel %vm315, %v283, %v347
      %v380 = vsel %vm316, %v284, %v348
      %v381 = vsel %vm317, %v285, %v349
      %v382 = vsel %vm318, %v286, %v350
      %v383 = vsel %vm319, %v287, %v351
      %v384 = vsel %vm320, %v288, %v352
      %v385 = vsel %vm321, %v289, %v353
      %v386 = vsel %vm322, %v290, %v354
      %v387 = vsel %vm323, %v291, %v355
      %v388 = vsel %vm324, %v292, %v356
      %v389 = vsel %vm325, %v293, %v357
      %v390 = vsel %vm326, %v294, %v358
      %v391 = vsel %vm327, %v295, %v359
      %v392 = vsel %vm328, %v296, %v360
      %v393 = vsel %vm329, %v297, %v361
      %v394 = vsel %vm330, %v298, %v362
      %v395 = vsel %vm331, %v299, %v363
      %v396 = vsel %vm332, %v300, %v364
      %v397 = vsel %vm333, %v301, %v365
      %v398 = vsel %vm334, %v302, %v366
      %v399 = vsel %vm335, %v303, %v367
      %v400 = vsel %vm336, %v304, %v368
      %v401 = vsel %vm337, %v305, %v369
      %v402 = vsel %vm338, %v306, %v370
      %vm403 = vcmask 64512
      %404 = vst.msk [vmem:[%s170] sm:$0xff] %vm403, %v371
      %405 = vst.msk [vmem:[%s170 + $0x8] sm:$0xff] %vm403, %v372
      %406 = vst.msk [vmem:[%s170 + $0x10] sm:$0xff] %vm403, %v373
      %407 = vst.msk [vmem:[%s170 + $0x18] sm:$0xff] %vm403, %v374
      %408 = vst.msk [vmem:[%s170 + $0x20] sm:$0xff] %vm403, %v375
      %409 = vst.msk [vmem:[%s170 + $0x28] sm:$0xff] %vm403, %v376
      %410 = vst.msk [vmem:[%s170 + $0x30] sm:$0xff] %vm403, %v377
      %411 = vst.msk [vmem:[%s170 + $0x38] sm:$0xff] %vm403, %v378
      %412 = vst.msk [vmem:[%s170 + $0x40] sm:$0xff] %vm403, %v379
      %413 = vst.msk [vmem:[%s170 + $0x48] sm:$0xff] %vm403, %v380
      %414 = vst.msk [vmem:[%s170 + $0x50] sm:$0xff] %vm403, %v381
      %415 = vst.msk [vmem:[%s170 + $0x58] sm:$0xff] %vm403, %v382
      %416 = vst.msk [vmem:[%s170 + $0x60] sm:$0xff] %vm403, %v383
      %417 = vst.msk [vmem:[%s170 + $0x68] sm:$0xff] %vm403, %v384
      %418 = vst.msk [vmem:[%s170 + $0x70] sm:$0xff] %vm403, %v385
      %419 = vst.msk [vmem:[%s170 + $0x78] sm:$0xff] %vm403, %v386
      %420 = vst.msk [vmem:[%s170 + $0x80] sm:$0xff] %vm403, %v387
      %421 = vst.msk [vmem:[%s170 + $0x88] sm:$0xff] %vm403, %v388
      %422 = vst.msk [vmem:[%s170 + $0x90] sm:$0xff] %vm403, %v389
      %423 = vst.msk [vmem:[%s170 + $0x98] sm:$0xff] %vm403, %v390
      %424 = vst.msk [vmem:[%s170 + $0xa0] sm:$0xff] %vm403, %v391
      %425 = vst.msk [vmem:[%s170 + $0xa8] sm:$0xff] %vm403, %v392
      %426 = vst.msk [vmem:[%s170 + $0xb0] sm:$0xff] %vm403, %v393
      %427 = vst.msk [vmem:[%s170 + $0xb8] sm:$0xff] %vm403, %v394
      %428 = vst.msk [vmem:[%s170 + $0xc0] sm:$0xff] %vm403, %v395
      %429 = vst.msk [vmem:[%s170 + $0xc8] sm:$0xff] %vm403, %v396
      %430 = vst.msk [vmem:[%s170 + $0xd0] sm:$0xff] %vm403, %v397
      %431 = vst.msk [vmem:[%s170 + $0xd8] sm:$0xff] %vm403, %v398
      %432 = vst.msk [vmem:[%s170 + $0xe0] sm:$0xff] %vm403, %v399
      %433 = vst.msk [vmem:[%s170 + $0xe8] sm:$0xff] %vm403, %v400
      %434 = vst.msk [vmem:[%s170 + $0xf0] sm:$0xff] %vm403, %v401
      %435 = vst.msk [vmem:[%s170 + $0xf8] sm:$0xff] %vm403, %v402
      %p436 = scmp.lt.s32.totalorder %s14, 1
      %s437 = scalar_select %p436, %s14, 1
      %s438 = smul.addr %s437, 32
      %s439 = smul.addr %s438, 8
      %s440 = scalar_lea.vmem %s3, %s439
      // Predicated region
      $region33: #{double_conv_pallas.5} parent=31 // pred_check
        %p441 = pneg %p100
      $region34: #{double_conv_pallas.5} parent=31 // pred_check_branch
        %443 = sbr.rel (%p441) target = $region36
      $region35: #{double_conv_pallas.5} parent=31 // pred_region
        _
      $region36: #{double_conv_pallas.5} parent=31 // pred_fallthru
        _
    $region32: #{double_conv_pallas.5} parent=5 // pred_fallthru
      _
    %p444 = scmp.le.s32.totalorder 2, %s9
    // Predicated region
    $region37: #{double_conv_pallas.5} parent=5 // pred_check
      %p445 = pneg %p444
    $region38: #{double_conv_pallas.5} parent=5 // pred_check_branch
      %447 = sbr.rel (%p445) target = $region40
    $region39: #{double_conv_pallas.5} parent=5 // pred_region
      %s448 = ssub.s32 %s9, 2
      // Predicated region
      $region41: #{double_conv_pallas.5} parent=39 // pred_check
        %p449 = pneg %p106
      $region42: #{double_conv_pallas.5} parent=39 // pred_check_branch
        %451 = sbr.rel (%p449) target = $region44
      $region43: #{double_conv_pallas.5} parent=39 // pred_region
        %p452 = scmp.lt.s32.totalorder %s15, 1
        %s453 = scalar_select %p452, %s15, 1
        %s454 = smul.addr %s453, 32
        %s455 = smul.addr %s454, 8
        %s456 = scalar_lea.vmem %s3, %s455
      $region44: #{double_conv_pallas.5} parent=39 // pred_fallthru
        _
    $region40: #{double_conv_pallas.5} parent=5 // pred_fallthru
      _
  $region6: #{double_conv_pallas.5} parent=0 // loop_footer
    %s13 = sadd.s32 1, %s9
  $region7: #{double_conv_pallas.5} parent=0 // loop_footer_branch
    %8 = sbr.rel target = $region3
  $region8: #{double_conv_pallas.5} parent=0 // loop_exit
    _

// kernel: double_conv_pallas.3
$region0: #{double_conv_pallas.3}
  #allocation0 [shape = 'u32[]', space=smem, size = 0x4, offset = 0x4, fixed_abs, tag = 'smem constant byte address 0x4 - core index']
  #allocation1 [shape = 'u32[72,128]{1,0:T(1,128)}', space=vmem, size = 0x9000, scoped, tag = 'internal scratch']
  #allocation2 [shape = 'bf16[18,18,4]{2,1,0:T(8,128)(2,1)}', space=vmem, size = 0x1b000, scoped, tag = 'scratch operand']
  %s0 = inlined_call_operand.vmem [shape: f32[2,16,16,4], index: 0, kind: input, shape index: {}]
  %s1 = inlined_call_operand.vmem [shape: bf16[9,4,128], index: 1, kind: input, shape index: {}]
  %s2 = inlined_call_operand.vmem [shape: f32[1,128], index: 2, kind: input, shape index: {}]
  %s3 = inlined_call_operand.vmem [shape: bf16[2,16,16,128], index: 3, kind: output, shape index: {0}]
  %s4 = inlined_call_operand.vmem [shape: f32[2,2,128], index: 4, kind: output, shape index: {1}]
  %5 = xla_tuple %s3, %s4
  %s6 = sld [smem:[#allocation0]]
  $region53: #{double_conv_pallas.3} parent=0
    _
  %s8 = ssub.s32 1, %s6
  %s9 = scalar_select 0, %s8, %s6
  loop: start=0, step=1, limit=4
  $region2: #{double_conv_pallas.3} parent=0 // loop_pre_header
    _
  $region3: #{double_conv_pallas.3} parent=0 // loop_header
    %s11 = sphi 0, %s15
    %p12 = scmp.ge.s32.totalorder %s11, 4
    %s21 = sphi 0, %s23
    %s24 = sphi 0, %s21
    %s25 = sphi 0, %s24
    %s41 = sphi 0, %s25
    %s45 = sphi 0, %s45
    %s47 = sphi 0, %s45
    %s48 = sphi 0, %s47
    %s62 = sphi 0, %s48
    %s66 = sphi 0, %s66
    %s68 = sphi 0, %s66
    %s69 = sphi 0, %s68
    %s83 = sphi 0, %s69
    %s89 = sphi 0, %s91
    %s92 = sphi 0, %s89
    %s93 = sphi 0, %s92
    %s109 = sphi 0, %s93
    %s115 = sphi 0, %s117
    %s118 = sphi 0, %s115
    %s119 = sphi 0, %s118
    %s135 = sphi 0, %s119
  $region4: #{double_conv_pallas.3} parent=0 // loop_header_branch
    %14 = sbr.rel (%p12) target = $region8
  $region5: #{double_conv_pallas.3} parent=0 // loop_body
    %s16 = ssub.s32 %s11, 1
    %s17 = ssub.s32 %s11, 2
    %s18 = sadd.s32 %s11, 1
    %s19 = ssub.s32 %s11, %s18
    %p20 = scmp.eq.s32.totalorder %s19, 0
    %s22 = sadd.s32 %s21, 1
    %s23 = scalar_select %p20, %s21, %s22
    %p26 = pneg %p20
    %p27 = scmp.eq.s32.totalorder %s11, 1
    %p28 = por %p26, %p27
    %p29 = scmp.ne.s32.totalorder %s21, %s24
    %p30 = scmp.eq.s32.totalorder %s11, 0
    %p31 = por %p29, %p30
    %p32 = scmp.ne.s32.totalorder %s21, %s24
    %p33 = scmp.eq.s32.totalorder %s16, 1
    %p34 = por %p32, %p33
    %p35 = scmp.ne.s32.totalorder %s24, %s25
    %p36 = scmp.eq.s32.totalorder %s16, 0
    %p37 = por %p35, %p36
    %p38 = scmp.ne.s32.totalorder %s24, %s25
    %p39 = scmp.eq.s32.totalorder %s17, 1
    %p40 = por %p38, %p39
    %p42 = scmp.ne.s32.totalorder %s25, %s41
    %p43 = scmp.eq.s32.totalorder %s17, 0
    %p44 = por %p42, %p43
    %s46 = sadd.s32 %s45, 1
    %p49 = scmp.eq.s32.totalorder %s11, 1
    %p50 = scmp.ne.s32.totalorder %s45, %s47
    %p51 = scmp.eq.s32.totalorder %s11, 0
    %p52 = por %p50, %p51
    %p53 = scmp.ne.s32.totalorder %s45, %s47
    %p54 = scmp.eq.s32.totalorder %s16, 1
    %p55 = por %p53, %p54
    %p56 = scmp.ne.s32.totalorder %s47, %s48
    %p57 = scmp.eq.s32.totalorder %s16, 0
    %p58 = por %p56, %p57
    %p59 = scmp.ne.s32.totalorder %s47, %s48
    %p60 = scmp.eq.s32.totalorder %s17, 1
    %p61 = por %p59, %p60
    %p63 = scmp.ne.s32.totalorder %s48, %s62
    %p64 = scmp.eq.s32.totalorder %s17, 0
    %p65 = por %p63, %p64
    %s67 = sadd.s32 %s66, 1
    %p70 = scmp.eq.s32.totalorder %s11, 1
    %p71 = scmp.ne.s32.totalorder %s66, %s68
    %p72 = scmp.eq.s32.totalorder %s11, 0
    %p73 = por %p71, %p72
    %p74 = scmp.ne.s32.totalorder %s66, %s68
    %p75 = scmp.eq.s32.totalorder %s16, 1
    %p76 = por %p74, %p75
    %p77 = scmp.ne.s32.totalorder %s68, %s69
    %p78 = scmp.eq.s32.totalorder %s16, 0
    %p79 = por %p77, %p78
    %p80 = scmp.ne.s32.totalorder %s68, %s69
    %p81 = scmp.eq.s32.totalorder %s17, 1
    %p82 = por %p80, %p81
    %p84 = scmp.ne.s32.totalorder %s69, %s83
    %p85 = scmp.eq.s32.totalorder %s17, 0
    %p86 = por %p84, %p85
    %s87 = ssub.s32 %s11, %s18
    %p88 = scmp.eq.s32.totalorder %s87, 0
    %s90 = sadd.s32 %s89, 1
    %s91 = scalar_select %p88, %s89, %s90
    %p94 = pneg %p88
    %p95 = scmp.eq.s32.totalorder %s11, 1
    %p96 = por %p94, %p95
    %p97 = scmp.ne.s32.totalorder %s89, %s92
    %p98 = scmp.eq.s32.totalorder %s11, 0
    %p99 = por %p97, %p98
    %p100 = scmp.ne.s32.totalorder %s89, %s92
    %p101 = scmp.eq.s32.totalorder %s16, 1
    %p102 = por %p100, %p101
    %p103 = scmp.ne.s32.totalorder %s92, %s93
    %p104 = scmp.eq.s32.totalorder %s16, 0
    %p105 = por %p103, %p104
    %p106 = scmp.ne.s32.totalorder %s92, %s93
    %p107 = scmp.eq.s32.totalorder %s17, 1
    %p108 = por %p106, %p107
    %p110 = scmp.ne.s32.totalorder %s93, %s109
    %p111 = scmp.eq.s32.totalorder %s17, 0
    %p112 = por %p110, %p111
    %s113 = ssub.s32 %s11, %s18
    %p114 = scmp.eq.s32.totalorder %s113, 0
    %s116 = sadd.s32 %s115, 1
    %s117 = scalar_select %p114, %s115, %s116
    %p120 = pneg %p114
    %p121 = scmp.eq.s32.totalorder %s11, 1
    %p122 = por %p120, %p121
    %p123 = scmp.ne.s32.totalorder %s115, %s118
    %p124 = scmp.eq.s32.totalorder %s11, 0
    %p125 = por %p123, %p124
    %p126 = scmp.ne.s32.totalorder %s115, %s118
    %p127 = scmp.eq.s32.totalorder %s16, 1
    %p128 = por %p126, %p127
    %p129 = scmp.ne.s32.totalorder %s118, %s119
    %p130 = scmp.eq.s32.totalorder %s16, 0
    %p131 = por %p129, %p130
    %p132 = scmp.ne.s32.totalorder %s118, %s119
    %p133 = scmp.eq.s32.totalorder %s17, 1
    %p134 = por %p132, %p133
    %p136 = scmp.ne.s32.totalorder %s119, %s135
    %p137 = scmp.eq.s32.totalorder %s17, 0
    %p138 = por %p136, %p137
    %p139 = scmp.le.s32.totalorder 1, %s11
    %p140 = scmp.lt.s32.totalorder %s11, 3
    %p141 = pnand %p139, %p140
    %p142 = pneg %p141
    // Predicated region
    $region9: #{double_conv_pallas.3} parent=5 // pred_check
      _
    $region10: #{double_conv_pallas.3} parent=5 // pred_check_branch
      %144 = sbr.rel (%p141) target = $region12
    $region11: #{double_conv_pallas.3} parent=5 // pred_region
      %s145 = ssub.s32 %s11, 1
      // Predicated region
      $region13: #{double_conv_pallas.3} parent=11 // pred_check
        %p146 = pneg %p58
      $region14: #{double_conv_pallas.3} parent=11 // pred_check_branch
        %148 = sbr.rel (%p146) target = $region16
      $region15: #{double_conv_pallas.3} parent=11 // pred_region
        _
      $region16: #{double_conv_pallas.3} parent=11 // pred_fallthru
        _
      // Predicated region
      $region17: #{double_conv_pallas.3} parent=11 // pred_check
        %p149 = pneg %p79
      $region18: #{double_conv_pallas.3} parent=11 // pred_check_branch
        %151 = sbr.rel (%p149) target = $region20
      $region19: #{double_conv_pallas.3} parent=11 // pred_region
        _
      $region20: #{double_conv_pallas.3} parent=11 // pred_fallthru
        _
    $region12: #{double_conv_pallas.3} parent=5 // pred_fallthru
      _
    %p152 = scmp.lt.s32.totalorder %s11, 2
    // Predicated region
    $region21: #{double_conv_pallas.3} parent=5 // pred_check
      %p153 = pneg %p152
    $region22: #{double_conv_pallas.3} parent=5 // pred_check_branch
      %155 = sbr.rel (%p153) target = $region24
    $region23: #{double_conv_pallas.3} parent=5 // pred_region
      // Predicated region
      $region25: #{double_conv_pallas.3} parent=23 // pred_check
        %p156 = pneg %p31
      $region26: #{double_conv_pallas.3} parent=23 // pred_check_branch
        %158 = sbr.rel (%p156) target = $region28
      $region27: #{double_conv_pallas.3} parent=23 // pred_region
        %p159 = scmp.lt.s32.totalorder %s11, 1
        %s160 = scalar_select %p159, %s11, 1
        %s161 = smul.addr %s160, 32
        %s162 = smul.addr %s161, 8
        %s163 = scalar_lea.vmem %s0, %s162
      $region28: #{double_conv_pallas.3} parent=23 // pred_fallthru
        _
    $region24: #{double_conv_pallas.3} parent=5 // pred_fallthru
      _
    %p164 = scmp.le.s32.totalorder 1, %s11
    %p165 = scmp.lt.s32.totalorder %s11, 3
    %p166 = pnand %p164, %p165
    %p167 = pneg %p166
    // Predicated region
    $region29: #{double_conv_pallas.3} parent=5 // pred_check
      _
    $region30: #{double_conv_pallas.3} parent=5 // pred_check_branch
      %169 = sbr.rel (%p166) target = $region32
    $region31: #{double_conv_pallas.3} parent=5 // pred_region
      %s170 = ssub.s32 %s11, 1
      %p171 = scmp.lt.s32.totalorder %s16, 1
      %s172 = scalar_select %p171, %s16, 1
      %s173 = smul.addr %s172, 32
      %s174 = smul.addr %s173, 8
      %s175 = scalar_lea.vmem %s0, %s174
      %p176 = pneg %p37
      %p177 = pneg %p34
      %p178 = pneg %p58
      %p179 = pneg %p55
      %p180 = pneg %p79
      %p181 = pneg %p76
      %p182 = pneg %p105
      %p183 = pneg %p102
      %p184 = scmp.lt.s32.totalorder %s16, 1
      %s185 = scalar_select %p184, %s16, 1
      %s186 = smul.addr %s185, 32
      %s187 = smul.addr %s186, 4
      %s188 = scalar_lea.vmem %s3, %s187
      %p189 = pneg %p131
      %p190 = pneg %p128
      %p191 = scmp.lt.s32.totalorder %s16, 1
      %s192 = scalar_select %p191, %s16, 1
      %s193 = smul.addr %s192, 2
      %s194 = scalar_lea.vmem %s4, %s193
      %p195 = scmp.lt.s32.totalorder %s16, 1
      %s196 = scalar_select %p195, %s16, 1
      %s197 = smul.addr %s196, 32
      %s198 = smul.addr %s197, 8
      %s199 = scalar_lea.vmem %s0, %s198
      %p200 = scmp.lt.s32.totalorder %s16, 1
      %s201 = scalar_select %p200, %s16, 1
      %s202 = smul.addr %s201, 32
      %s203 = smul.addr %s202, 4
      %s204 = scalar_lea.vmem %s3, %s203
      %p205 = scmp.lt.s32.totalorder %s16, 1
      %s206 = scalar_select %p205, %s16, 1
      %s207 = smul.addr %s206, 2
      %s208 = scalar_lea.vmem %s4, %s207
      %vm210 = vcmask 27648
      %211 = vst.msk [vmem:[#allocation2] sm:$0xf] %vm210, 0
      %212 = vst.msk [vmem:[#allocation2 + $0x4] sm:$0xf] %vm210, 0
      %vm213 = vcmask 24576
      %214 = vst.msk [vmem:[#allocation2 + $0x8] sm:$0x1] %vm213, 0
      %215 = vst.msk [vmem:[#allocation2 + $0xc] sm:$0xf] %vm210, 0
      %216 = vst.msk [vmem:[#allocation2 + $0x10] sm:$0xf] %vm210, 0
      %217 = vst.msk [vmem:[#allocation2 + $0x14] sm:$0x1] %vm213, 0
      %218 = vst.msk [vmem:[#allocation2 + $0x18] sm:$0xf] %vm210, 0
      %219 = vst.msk [vmem:[#allocation2 + $0x1c] sm:$0xf] %vm210, 0
      %220 = vst.msk [vmem:[#allocation2 + $0x20] sm:$0x1] %vm213, 0
      %221 = vst.msk [vmem:[#allocation2 + $0x24] sm:$0xf] %vm210, 0
      %222 = vst.msk [vmem:[#allocation2 + $0x28] sm:$0xf] %vm210, 0
      %223 = vst.msk [vmem:[#allocation2 + $0x2c] sm:$0x1] %vm213, 0
      %224 = vst.msk [vmem:[#allocation2 + $0x30] sm:$0xf] %vm210, 0
      %225 = vst.msk [vmem:[#allocation2 + $0x34] sm:$0xf] %vm210, 0
      %226 = vst.msk [vmem:[#allocation2 + $0x38] sm:$0x1] %vm213, 0
      %227 = vst.msk [vmem:[#allocation2 + $0x3c] sm:$0xf] %vm210, 0
      %228 = vst.msk [vmem:[#allocation2 + $0x40] sm:$0xf] %vm210, 0
      %229 = vst.msk [vmem:[#allocation2 + $0x44] sm:$0x1] %vm213, 0
      %230 = vst.msk [vmem:[#allocation2 + $0x48] sm:$0xf] %vm210, 0
      %231 = vst.msk [vmem:[#allocation2 + $0x4c] sm:$0xf] %vm210, 0
      %232 = vst.msk [vmem:[#allocation2 + $0x50] sm:$0x1] %vm213, 0
      %233 = vst.msk [vmem:[#allocation2 + $0x54] sm:$0xf] %vm210, 0
      %234 = vst.msk [vmem:[#allocation2 + $0x58] sm:$0xf] %vm210, 0
      %235 = vst.msk [vmem:[#allocation2 + $0x5c] sm:$0x1] %vm213, 0
      %236 = vst.msk [vmem:[#allocation2 + $0x60] sm:$0xf] %vm210, 0
      %237 = vst.msk [vmem:[#allocation2 + $0x64] sm:$0xf] %vm210, 0
      %238 = vst.msk [vmem:[#allocation2 + $0x68] sm:$0x1] %vm213, 0
      %239 = vst.msk [vmem:[#allocation2 + $0x6c] sm:$0xf] %vm210, 0
      %240 = vst.msk [vmem:[#allocation2 + $0x70] sm:$0xf] %vm210, 0
      %241 = vst.msk [vmem:[#allocation2 + $0x74] sm:$0x1] %vm213, 0
      %242 = vst.msk [vmem:[#allocation2 + $0x78] sm:$0xf] %vm210, 0
      %243 = vst.msk [vmem:[#allocation2 + $0x7c] sm:$0xf] %vm210, 0
      %244 = vst.msk [vmem:[#allocation2 + $0x80] sm:$0x1] %vm213, 0
      %245 = vst.msk [vmem:[#allocation2 + $0x84] sm:$0xf] %vm210, 0
      %246 = vst.msk [vmem:[#allocation2 + $0x88] sm:$0xf] %vm210, 0
      %247 = vst.msk [vmem:[#allocation2 + $0x8c] sm:$0x1] %vm213, 0
      %248 = vst.msk [vmem:[#allocation2 + $0x90] sm:$0xf] %vm210, 0
      %249 = vst.msk [vmem:[#allocation2 + $0x94] sm:$0xf] %vm210, 0
      %250 = vst.msk [vmem:[#allocation2 + $0x98] sm:$0x1] %vm213, 0
      %251 = vst.msk [vmem:[#allocation2 + $0x9c] sm:$0xf] %vm210, 0
      %252 = vst.msk [vmem:[#allocation2 + $0xa0] sm:$0xf] %vm210, 0
      %253 = vst.msk [vmem:[#allocation2 + $0xa4] sm:$0x1] %vm213, 0
      %254 = vst.msk [vmem:[#allocation2 + $0xa8] sm:$0xf] %vm210, 0
      %255 = vst.msk [vmem:[#allocation2 + $0xac] sm:$0xf] %vm210, 0
      %256 = vst.msk [vmem:[#allocation2 + $0xb0] sm:$0x1] %vm213, 0
      %257 = vst.msk [vmem:[#allocation2 + $0xb4] sm:$0xf] %vm210, 0
      %258 = vst.msk [vmem:[#allocation2 + $0xb8] sm:$0xf] %vm210, 0
      %259 = vst.msk [vmem:[#allocation2 + $0xbc] sm:$0x1] %vm213, 0
      %260 = vst.msk [vmem:[#allocation2 + $0xc0] sm:$0xf] %vm210, 0
      %261 = vst.msk [vmem:[#allocation2 + $0xc4] sm:$0xf] %vm210, 0
      %262 = vst.msk [vmem:[#allocation2 + $0xc8] sm:$0x1] %vm213, 0
      %263 = vst.msk [vmem:[#allocation2 + $0xcc] sm:$0xf] %vm210, 0
      %264 = vst.msk [vmem:[#allocation2 + $0xd0] sm:$0xf] %vm210, 0
      %265 = vst.msk [vmem:[#allocation2 + $0xd4] sm:$0x1] %vm213, 0
      %v266 = vld [vmem:[%s199] sm:$0xff]
      %v267 = vld [vmem:[%s199 + $0x8] sm:$0xff]
      %v268 = vld [vmem:[%s199 + $0x10] sm:$0xff]
      %v269 = vld [vmem:[%s199 + $0x18] sm:$0xff]
      %v270 = vld [vmem:[%s199 + $0x20] sm:$0xff]
      %v271 = vld [vmem:[%s199 + $0x28] sm:$0xff]
      %v272 = vld [vmem:[%s199 + $0x30] sm:$0xff]
      %v273 = vld [vmem:[%s199 + $0x38] sm:$0xff]
      %v274 = vld [vmem:[%s199 + $0x40] sm:$0xff]
      %v275 = vld [vmem:[%s199 + $0x48] sm:$0xff]
      %v276 = vld [vmem:[%s199 + $0x50] sm:$0xff]
      %v277 = vld [vmem:[%s199 + $0x58] sm:$0xff]
      %v278 = vld [vmem:[%s199 + $0x60] sm:$0xff]
      %v279 = vld [vmem:[%s199 + $0x68] sm:$0xff]
      %v280 = vld [vmem:[%s199 + $0x70] sm:$0xff]
      %v281 = vld [vmem:[%s199 + $0x78] sm:$0xff]
      %v282 = vld [vmem:[%s199 + $0x80] sm:$0xff]
      %v283 = vld [vmem:[%s199 + $0x88] sm:$0xff]
      %v284 = vld [vmem:[%s199 + $0x90] sm:$0xff]
      %v285 = vld [vmem:[%s199 + $0x98] sm:$0xff]
      %v286 = vld [vmem:[%s199 + $0xa0] sm:$0xff]
      %v287 = vld [vmem:[%s199 + $0xa8] sm:$0xff]
      %v288 = vld [vmem:[%s199 + $0xb0] sm:$0xff]
      %v289 = vld [vmem:[%s199 + $0xb8] sm:$0xff]
      %v290 = vld [vmem:[%s199 + $0xc0] sm:$0xff]
      %v291 = vld [vmem:[%s199 + $0xc8] sm:$0xff]
      %v292 = vld [vmem:[%s199 + $0xd0] sm:$0xff]
      %v293 = vld [vmem:[%s199 + $0xd8] sm:$0xff]
      %v294 = vld [vmem:[%s199 + $0xe0] sm:$0xff]
      %v295 = vld [vmem:[%s199 + $0xe8] sm:$0xff]
      %v296 = vld [vmem:[%s199 + $0xf0] sm:$0xff]
      %v297 = vld [vmem:[%s199 + $0xf8] sm:$0xff]
      %v298 = vpack.c.bf16 %v266, %v266
      %v299 = vpack.c.bf16 %v267, %v267
      %v300 = vpack.c.bf16 %v268, %v268
      %v301 = vpack.c.bf16 %v269, %v269
      %v302 = vpack.c.bf16 %v270, %v270
      %v303 = vpack.c.bf16 %v271, %v271
      %v304 = vpack.c.bf16 %v272, %v272
      %v305 = vpack.c.bf16 %v273, %v273
      %v306 = vpack.c.bf16 %v274, %v274
      %v307 = vpack.c.bf16 %v275, %v275
      %v308 = vpack.c.bf16 %v276, %v276
      %v309 = vpack.c.bf16 %v277, %v277
      %v310 = vpack.c.bf16 %v278, %v278
      %v311 = vpack.c.bf16 %v279, %v279
      %v312 = vpack.c.bf16 %v280, %v280
      %v313 = vpack.c.bf16 %v281, %v281
      %v314 = vpack.c.bf16 %v282, %v282
      %v315 = vpack.c.bf16 %v283, %v283
      %v316 = vpack.c.bf16 %v284, %v284
      %v317 = vpack.c.bf16 %v285, %v285
      %v318 = vpack.c.bf16 %v286, %v286
      %v319 = vpack.c.bf16 %v287, %v287
      %v320 = vpack.c.bf16 %v288, %v288
      %v321 = vpack.c.bf16 %v289, %v289
      %v322 = vpack.c.bf16 %v290, %v290
      %v323 = vpack.c.bf16 %v291, %v291
      %v324 = vpack.c.bf16 %v292, %v292
      %v325 = vpack.c.bf16 %v293, %v293
      %v326 = vpack.c.bf16 %v294, %v294
      %v327 = vpack.c.bf16 %v295, %v295
      %v328 = vpack.c.bf16 %v296, %v296
      %v329 = vpack.c.bf16 %v297, %v297
      %vm330 = vsmask.f32 256
      %vm331 = vsmask.f32 4368
      %vm332 = vmor %vm330, %vm331
      %v334 = vshrl.u32 %v298, 16
      %v336 = vrot.slane %v334, 7
      %v337 = vshll.u32 %v298, 16
      %v339 = vor.u32 %v336, %v337
      %v340 = vrot.slane %v336, 4
      %v342 = vshrl.u32 %v299, 16
      %v344 = vrot.slane %v342, 7
      %v345 = vshll.u32 %v299, 16
      %v347 = vor.u32 %v344, %v345
      %v348 = vsel %vm332, %v340, %v347
      %v349 = vrot.slane %v344, 4
      %v351 = vshrl.u32 %v300, 16
      %v353 = vrot.slane %v351, 7
      %v354 = vshll.u32 %v300, 16
      %v356 = vor.u32 %v353, %v354
      %v357 = vrot.slane %v353, 4
      %v359 = vshrl.u32 %v301, 16
      %v361 = vrot.slane %v359, 7
      %v362 = vshll.u32 %v301, 16
      %v364 = vor.u32 %v361, %v362
      %v365 = vsel %vm332, %v357, %v364
      %v366 = vrot.slane %v361, 4
      %v368 = vshrl.u32 %v302, 16
      %v370 = vrot.slane %v368, 7
      %v371 = vshll.u32 %v302, 16
      %v373 = vor.u32 %v370, %v371
      %v374 = vrot.slane %v370, 4
      %v376 = vshrl.u32 %v303, 16
      %v378 = vrot.slane %v376, 7
      %v379 = vshll.u32 %v303, 16
      %v381 = vor.u32 %v378, %v379
      %v382 = vsel %vm332, %v374, %v381
      %v383 = vrot.slane %v378, 4
      %v385 = vshrl.u32 %v304, 16
      %v387 = vrot.slane %v385, 7
      %v388 = vshll.u32 %v304, 16
      %v390 = vor.u32 %v387, %v388
      %v391 = vrot.slane %v387, 4
      %v393 = vshrl.u32 %v305, 16
      %v395 = vrot.slane %v393, 7
      %v396 = vshll.u32 %v305, 16
      %v398 = vor.u32 %v395, %v396
      %v399 = vsel %vm332, %v391, %v398
      %v400 = vrot.slane %v395, 4
      %v402 = vshrl.u32 %v306, 16
      %v404 = vrot.slane %v402, 7
      %v405 = vshll.u32 %v306, 16
      %v407 = vor.u32 %v404, %v405
      %v408 = vrot.slane %v404, 4
      %v410 = vshrl.u32 %v307, 16
      %v412 = vrot.slane %v410, 7
      %v413 = vshll.u32 %v307, 16
      %v415 = vor.u32 %v412, %v413
      %v416 = vsel %vm332, %v408, %v415
      %v417 = vrot.slane %v412, 4
      %v419 = vshrl.u32 %v308, 16
      %v421 = vrot.slane %v419, 7
      %v422 = vshll.u32 %v308, 16
      %v424 = vor.u32 %v421, %v422
      %v425 = vrot.slane %v421, 4
      %v427 = vshrl.u32 %v309, 16
      %v429 = vrot.slane %v427, 7
      %v430 = vshll.u32 %v309, 16
      %v432 = vor.u32 %v429, %v430
      %v433 = vsel %vm332, %v425, %v432
      %v434 = vrot.slane %v429, 4
      %v436 = vshrl.u32 %v310, 16
      %v438 = vrot.slane %v436, 7
      %v439 = vshll.u32 %v310, 16
      %v441 = vor.u32 %v438, %v439
      %v442 = vrot.slane %v438, 4
      %v444 = vshrl.u32 %v311, 16
      %v446 = vrot.slane %v444, 7
      %v447 = vshll.u32 %v311, 16
      %v449 = vor.u32 %v446, %v447
      %v450 = vsel %vm332, %v442, %v449
      %v451 = vrot.slane %v446, 4
      %v453 = vshrl.u32 %v312, 16
      %v455 = vrot.slane %v453, 7
      %v456 = vshll.u32 %v312, 16
      %v458 = vor.u32 %v455, %v456
      %v459 = vrot.slane %v455, 4
      %v461 = vshrl.u32 %v313, 16
      %v463 = vrot.slane %v461, 7
      %v464 = vshll.u32 %v313, 16
      %v466 = vor.u32 %v463, %v464
      %v467 = vsel %vm332, %v459, %v466
      %v468 = vrot.slane %v463, 4
      %v470 = vshrl.u32 %v314, 16
      %v472 = vrot.slane %v470, 7
      %v473 = vshll.u32 %v314, 16
      %v475 = vor.u32 %v472, %v473
      %v476 = vrot.slane %v472, 4
      %v478 = vshrl.u32 %v315, 16
      %v480 = vrot.slane %v478, 7
      %v481 = vshll.u32 %v315, 16
      %v483 = vor.u32 %v480, %v481
      %v484 = vsel %vm332, %v476, %v483
      %v485 = vrot.slane %v480, 4
      %v487 = vshrl.u32 %v316, 16
      %v489 = vrot.slane %v487, 7
      %v490 = vshll.u32 %v316, 16
      %v492 = vor.u32 %v489, %v490
      %v493 = vrot.slane %v489, 4
      %v495 = vshrl.u32 %v317, 16
      %v497 = vrot.slane %v495, 7
      %v498 = vshll.u32 %v317, 16
      %v500 = vor.u32 %v497, %v498
      %v501 = vsel %vm332, %v493, %v500
      %v502 = vrot.slane %v497, 4
      %v504 = vshrl.u32 %v318, 16
      %v506 = vrot.slane %v504, 7
      %v507 = vshll.u32 %v318, 16
      %v509 = vor.u32 %v506, %v507
      %v510 = vrot.slane %v506, 4
      %v512 = vshrl.u32 %v319, 16
      %v514 = vrot.slane %v512, 7
      %v515 = vshll.u32 %v319, 16
      %v517 = vor.u32 %v514, %v515
      %v518 = vsel %vm332, %v510, %v517
      %v519 = vrot.slane %v514, 4
      %v521 = vshrl.u32 %v320, 16
      %v523 = vrot.slane %v521, 7
      %v524 = vshll.u32 %v320, 16
      %v526 = vor.u32 %v523, %v524
      %v527 = vrot.slane %v523, 4
      %v529 = vshrl.u32 %v321, 16
      %v531 = vrot.slane %v529, 7
      %v532 = vshll.u32 %v321, 16
      %v534 = vor.u32 %v531, %v532
      %v535 = vsel %vm332, %v527, %v534
      %v536 = vrot.slane %v531, 4
      %v538 = vshrl.u32 %v322, 16
      %v540 = vrot.slane %v538, 7
      %v541 = vshll.u32 %v322, 16
      %v543 = vor.u32 %v540, %v541
      %v544 = vrot.slane %v540, 4
      %v546 = vshrl.u32 %v323, 16
      %v548 = vrot.slane %v546, 7
      %v549 = vshll.u32 %v323, 16
      %v551 = vor.u32 %v548, %v549
      %v552 = vsel %vm332, %v544, %v551
      %v553 = vrot.slane %v548, 4
      %v555 = vshrl.u32 %v324, 16
      %v557 = vrot.slane %v555, 7
      %v558 = vshll.u32 %v324, 16
      %v560 = vor.u32 %v557, %v558
      %v561 = vrot.slane %v557, 4
      %v563 = vshrl.u32 %v325, 16
      %v565 = vrot.slane %v563, 7
      %v566 = vshll.u32 %v325, 16
      %v568 = vor.u32 %v565, %v566
      %v569 = vsel %vm332, %v561, %v568
      %v570 = vrot.slane %v565, 4
      %v572 = vshrl.u32 %v326, 16
      %v574 = vrot.slane %v572, 7
      %v575 = vshll.u32 %v326, 16
      %v577 = vor.u32 %v574, %v575
      %v578 = vrot.slane %v574, 4
      %v580 = vshrl.u32 %v327, 16
      %v582 = vrot.slane %v580, 7
      %v583 = vshll.u32 %v327, 16
      %v585 = vor.u32 %v582, %v583
      %v586 = vsel %vm332, %v578, %v585
      %v587 = vrot.slane %v582, 4
      %v589 = vshrl.u32 %v328, 16
      %v591 = vrot.slane %v589, 7
      %v592 = vshll.u32 %v328, 16
      %v594 = vor.u32 %v591, %v592
      %v595 = vrot.slane %v591, 4
      %v597 = vshrl.u32 %v329, 16
      %v599 = vrot.slane %v597, 7
      %v600 = vshll.u32 %v329, 16
      %v602 = vor.u32 %v599, %v600
      %v603 = vsel %vm332, %v595, %v602
      %v604 = vrot.slane %v599, 4
      %s653 = scalar_lea.vmem [#allocation2], 12
      %vm654 = vcmask 27648
      %vm655 = vsmask.f32 7938
      %vm656 = vmand %vm654, %vm655
      %v657 = vld [vmem:[%s653] sm:$0xf]
      %v658 = vsel %vm656, %v339, %v657
      %659 = vst [vmem:[%s653] sm:$0xf] %v658
      %660 = vst.msk [vmem:[%s653 + $0x4] sm:$0xf] %vm210, %v348
      %vm661 = vcmask 24576
      %vm662 = vmand %vm661, %vm330
      %v663 = vld [vmem:[%s653 + $0x8] sm:$0x1]
      %v664 = vsel %vm662, %v349, %v663
      %665 = vst [vmem:[%s653 + $0x8] sm:$0x1] %v664
      %v666 = vld [vmem:[%s653 + $0xc] sm:$0xf]
      %v667 = vsel %vm656, %v356, %v666
      %668 = vst [vmem:[%s653 + $0xc] sm:$0xf] %v667
      %669 = vst.msk [vmem:[%s653 + $0x10] sm:$0xf] %vm210, %v365
      %v670 = vld [vmem:[%s653 + $0x14] sm:$0x1]
      %v671 = vsel %vm662, %v366, %v670
      %672 = vst [vmem:[%s653 + $0x14] sm:$0x1] %v671
      %v673 = vld [vmem:[%s653 + $0x18] sm:$0xf]
      %v674 = vsel %vm656, %v373, %v673
      %675 = vst [vmem:[%s653 + $0x18] sm:$0xf] %v674
      %676 = vst.msk [vmem:[%s653 + $0x1c] sm:$0xf] %vm210, %v382
      %v677 = vld [vmem:[%s653 + $0x20] sm:$0x1]
      %v678 = vsel %vm662, %v383, %v677
      %679 = vst [vmem:[%s653 + $0x20] sm:$0x1] %v678
      %v680 = vld [vmem:[%s653 + $0x24] sm:$0xf]
      %v681 = vsel %vm656, %v390, %v680
      %682 = vst [vmem:[%s653 + $0x24] sm:$0xf] %v681
      %683 = vst.msk [vmem:[%s653 + $0x28] sm:$0xf] %vm210, %v399
      %v684 = vld [vmem:[%s653 + $0x2c] sm:$0x1]
      %v685 = vsel %vm662, %v400, %v684
      %686 = vst [vmem:[%s653 + $0x2c] sm:$0x1] %v685
      %v687 = vld [vmem:[%s653 + $0x30] sm:$0xf]
      %v688 = vsel %vm656, %v407, %v687
      %689 = vst [vmem:[%s653 + $0x30] sm:$0xf] %v688
      %690 = vst.msk [vmem:[%s653 + $0x34] sm:$0xf] %vm210, %v416
      %v691 = vld [vmem:[%s653 + $0x38] sm:$0x1]
      %v692 = vsel %vm662, %v417, %v691
      %693 = vst [vmem:[%s653 + $0x38] sm:$0x1] %v692
      %v694 = vld [vmem:[%s653 + $0x3c] sm:$0xf]
      %v695 = vsel %vm656, %v424, %v694
      %696 = vst [vmem:[%s653 + $0x3c] sm:$0xf] %v695
      %697 = vst.msk [vmem:[%s653 + $0x40] sm:$0xf] %vm210, %v433
      %v698 = vld [vmem:[%s653 + $0x44] sm:$0x1]
      %v699 = vsel %vm662, %v434, %v698
      %700 = vst [vmem:[%s653 + $0x44] sm:$0x1] %v699
      %v701 = vld [vmem:[%s653 + $0x48] sm:$0xf]
      %v702 = vsel %vm656, %v441, %v701
      %703 = vst [vmem:[%s653 + $0x48] sm:$0xf] %v702
      %704 = vst.msk [vmem:[%s653 + $0x4c] sm:$0xf] %vm210, %v450
      %v705 = vld [vmem:[%s653 + $0x50] sm:$0x1]
      %v706 = vsel %vm662, %v451, %v705
      %707 = vst [vmem:[%s653 + $0x50] sm:$0x1] %v706
      %v708 = vld [vmem:[%s653 + $0x54] sm:$0xf]
      %v709 = vsel %vm656, %v458, %v708
      %710 = vst [vmem:[%s653 + $0x54] sm:$0xf] %v709
      %711 = vst.msk [vmem:[%s653 + $0x58] sm:$0xf] %vm210, %v467
      %v712 = vld [vmem:[%s653 + $0x5c] sm:$0x1]
      %v713 = vsel %vm662, %v468, %v712
      %714 = vst [vmem:[%s653 + $0x5c] sm:$0x1] %v713
      %v715 = vld [vmem:[%s653 + $0x60] sm:$0xf]
      %v716 = vsel %vm656, %v475, %v715
      %717 = vst [vmem:[%s653 + $0x60] sm:$0xf] %v716
      %718 = vst.msk [vmem:[%s653 + $0x64] sm:$0xf] %vm210, %v484
      %v719 = vld [vmem:[%s653 + $0x68] sm:$0x1]
      %v720 = vsel %vm662, %v485, %v719
      %721 = vst [vmem:[%s653 + $0x68] sm:$0x1] %v720
      %v722 = vld [vmem:[%s653 + $0x6c] sm:$0xf]
      %v723 = vsel %vm656, %v492, %v722
      %724 = vst [vmem:[%s653 + $0x6c] sm:$0xf] %v723
      %725 = vst.msk [vmem:[%s653 + $0x70] sm:$0xf] %vm210, %v501
      %v726 = vld [vmem:[%s653 + $0x74] sm:$0x1]
      %v727 = vsel %vm662, %v502, %v726
      %728 = vst [vmem:[%s653 + $0x74] sm:$0x1] %v727
      %v729 = vld [vmem:[%s653 + $0x78] sm:$0xf]
      %v730 = vsel %vm656, %v509, %v729
      %731 = vst [vmem:[%s653 + $0x78] sm:$0xf] %v730
      %732 = vst.msk [vmem:[%s653 + $0x7c] sm:$0xf] %vm210, %v518
      %v733 = vld [vmem:[%s653 + $0x80] sm:$0x1]
      %v734 = vsel %vm662, %v519, %v733
      %735 = vst [vmem:[%s653 + $0x80] sm:$0x1] %v734
      %v736 = vld [vmem:[%s653 + $0x84] sm:$0xf]
      %v737 = vsel %vm656, %v526, %v736
      %738 = vst [vmem:[%s653 + $0x84] sm:$0xf] %v737
      %739 = vst.msk [vmem:[%s653 + $0x88] sm:$0xf] %vm210, %v535
      %v740 = vld [vmem:[%s653 + $0x8c] sm:$0x1]
      %v741 = vsel %vm662, %v536, %v740
      %742 = vst [vmem:[%s653 + $0x8c] sm:$0x1] %v741
      %v743 = vld [vmem:[%s653 + $0x90] sm:$0xf]
      %v744 = vsel %vm656, %v543, %v743
      %745 = vst [vmem:[%s653 + $0x90] sm:$0xf] %v744
      %746 = vst.msk [vmem:[%s653 + $0x94] sm:$0xf] %vm210, %v552
      %v747 = vld [vmem:[%s653 + $0x98] sm:$0x1]
      %v748 = vsel %vm662, %v553, %v747
      %749 = vst [vmem:[%s653 + $0x98] sm:$0x1] %v748
      %v750 = vld [vmem:[%s653 + $0x9c] sm:$0xf]
      %v751 = vsel %vm656, %v560, %v750
      %752 = vst [vmem:[%s653 + $0x9c] sm:$0xf] %v751
      %753 = vst.msk [vmem:[%s653 + $0xa0] sm:$0xf] %vm210, %v569
      %v754 = vld [vmem:[%s653 + $0xa4] sm:$0x1]
      %v755 = vsel %vm662, %v570, %v754
      %756 = vst [vmem:[%s653 + $0xa4] sm:$0x1] %v755
      %v757 = vld [vmem:[%s653 + $0xa8] sm:$0xf]
      %v758 = vsel %vm656, %v577, %v757
      %759 = vst [vmem:[%s653 + $0xa8] sm:$0xf] %v758
      %760 = vst.msk [vmem:[%s653 + $0xac] sm:$0xf] %vm210, %v586
      %v761 = vld [vmem:[%s653 + $0xb0] sm:$0x1]
      %v762 = vsel %vm662, %v587, %v761
      %763 = vst [vmem:[%s653 + $0xb0] sm:$0x1] %v762
      %v764 = vld [vmem:[%s653 + $0xb4] sm:$0xf]
      %v765 = vsel %vm656, %v594, %v764
      %766 = vst [vmem:[%s653 + $0xb4] sm:$0xf] %v765
      %767 = vst.msk [vmem:[%s653 + $0xb8] sm:$0xf] %vm210, %v603
      %v768 = vld [vmem:[%s653 + $0xbc] sm:$0x1]
      %v769 = vsel %vm662, %v604, %v768
      %770 = vst [vmem:[%s653 + $0xbc] sm:$0x1] %v769
      %v771 = vld [vmem:[#allocation2] sm:$0xf]
      %v772 = vld [vmem:[#allocation2 + $0x4] sm:$0xf]
      %v773 = vld [vmem:[#allocation2 + $0xc] sm:$0xf]
      %v774 = vld [vmem:[#allocation2 + $0x10] sm:$0xf]
      %v775 = vld [vmem:[#allocation2 + $0x18] sm:$0xf]
      %v776 = vld [vmem:[#allocation2 + $0x1c] sm:$0xf]
      %v777 = vld [vmem:[#allocation2 + $0x24] sm:$0xf]
      %v778 = vld [vmem:[#allocation2 + $0x28] sm:$0xf]
      %v779 = vld [vmem:[#allocation2 + $0x30] sm:$0xf]
      %v780 = vld [vmem:[#allocation2 + $0x34] sm:$0xf]
      %v781 = vld [vmem:[#allocation2 + $0x3c] sm:$0xf]
      %v782 = vld [vmem:[#allocation2 + $0x40] sm:$0xf]
      %v783 = vld [vmem:[#allocation2 + $0x48] sm:$0xf]
      %v784 = vld [vmem:[#allocation2 + $0x4c] sm:$0xf]
      %v785 = vld [vmem:[#allocation2 + $0x54] sm:$0xf]
      %v786 = vld [vmem:[#allocation2 + $0x58] sm:$0xf]
      %v787 = vld [vmem:[#allocation2 + $0x60] sm:$0xf]
      %v788 = vld [vmem:[#allocation2 + $0x64] sm:$0xf]
      %v789 = vld [vmem:[#allocation2 + $0x6c] sm:$0xf]
      %v790 = vld [vmem:[#allocation2 + $0x70] sm:$0xf]
      %v791 = vld [vmem:[#allocation2 + $0x78] sm:$0xf]
      %v792 = vld [vmem:[#allocation2 + $0x7c] sm:$0xf]
      %v793 = vld [vmem:[#allocation2 + $0x84] sm:$0xf]
      %v794 = vld [vmem:[#allocation2 + $0x88] sm:$0xf]
      %v795 = vld [vmem:[#allocation2 + $0x90] sm:$0xf]
      %v796 = vld [vmem:[#allocation2 + $0x94] sm:$0xf]
      %v797 = vld [vmem:[#allocation2 + $0x9c] sm:$0xf]
      %v798 = vld [vmem:[#allocation2 + $0xa0] sm:$0xf]
      %v799 = vld [vmem:[#allocation2 + $0xa8] sm:$0xf]
      %v800 = vld [vmem:[#allocation2 + $0xac] sm:$0xf]
      %v801 = vld [vmem:[#allocation2 + $0xb4] sm:$0xf]
      %v802 = vld [vmem:[#allocation2 + $0xb8] sm:$0xf]
      %v803 = vld [vmem:[%s1] sm:$0x3]
      %v804 = vld [vmem:[#allocation2 + $0x8] sm:$0x1]
      %v805 = vld [vmem:[#allocation2 + $0x14] sm:$0x1]
      %v806 = vld [vmem:[#allocation2 + $0x20] sm:$0x1]
      %v807 = vld [vmem:[#allocation2 + $0x2c] sm:$0x1]
      %v808 = vld [vmem:[#allocation2 + $0x38] sm:$0x1]
      %v809 = vld [vmem:[#allocation2 + $0x44] sm:$0x1]
      %v810 = vld [vmem:[#allocation2 + $0x50] sm:$0x1]
      %v811 = vld [vmem:[#allocation2 + $0x5c] sm:$0x1]
      %v812 = vld [vmem:[#allocation2 + $0x68] sm:$0x1]
      %v813 = vld [vmem:[#allocation2 + $0x74] sm:$0x1]
      %v814 = vld [vmem:[#allocation2 + $0x80] sm:$0x1]
      %v815 = vld [vmem:[#allocation2 + $0x8c] sm:$0x1]
      %v816 = vld [vmem:[#allocation2 + $0x98] sm:$0x1]
      %v817 = vld [vmem:[#allocation2 + $0xa4] sm:$0x1]
      %v818 = vld [vmem:[#allocation2 + $0xb0] sm:$0x1]
      %v819 = vld [vmem:[#allocation2 + $0xbc] sm:$0x1]
      %vm820 = vsmask.f32 3328
      %vm821 = vsmask.f32 7440
      %vm822 = vmor %vm820, %vm821
      %v824 = vshrl.u32 %v771, 16
      %v826 = vrot.slane %v824, 4
      %v827 = vshll.u32 %v771, 16
      %v829 = vrot.slane %v827, 5
      %v830 = vor.u32 %v826, %v829
      %v831 = vrot.slane %v830, 4
      %v833 = vshll.u32 %v772, 16
      %v835 = vrot.slane %v833, 5
      %v836 = vsel %vm822, %v831, %v835
      %v837 = vshrl.u32 %v772, 16
      %v839 = vrot.slane %v837, 4
      %v840 = vor.u32 %v839, %v835
      %v841 = vrot.slane %v840, 4
      %v843 = vshll.u32 %v804, 16
      %v845 = vrot.slane %v843, 5
      %v846 = vsel %vm822, %v841, %v845
      %v848 = vshrl.u32 %v773, 16
      %v850 = vrot.slane %v848, 4
      %v851 = vshll.u32 %v773, 16
      %v853 = vrot.slane %v851, 5
      %v854 = vor.u32 %v850, %v853
      %v855 = vrot.slane %v854, 4
      %v857 = vshll.u32 %v774, 16
      %v859 = vrot.slane %v857, 5
      %v860 = vsel %vm822, %v855, %v859
      %v861 = vshrl.u32 %v774, 16
      %v863 = vrot.slane %v861, 4
      %v864 = vor.u32 %v863, %v859
      %v865 = vrot.slane %v864, 4
      %v867 = vshll.u32 %v805, 16
      %v869 = vrot.slane %v867, 5
      %v870 = vsel %vm822, %v865, %v869
      %v872 = vshrl.u32 %v775, 16
      %v874 = vrot.slane %v872, 4
      %v875 = vshll.u32 %v775, 16
      %v877 = vrot.slane %v875, 5
      %v878 = vor.u32 %v874, %v877
      %v879 = vrot.slane %v878, 4
      %v881 = vshll.u32 %v776, 16
      %v883 = vrot.slane %v881, 5
      %v884 = vsel %vm822, %v879, %v883
      %v885 = vshrl.u32 %v776, 16
      %v887 = vrot.slane %v885, 4
      %v888 = vor.u32 %v887, %v883
      %v889 = vrot.slane %v888, 4
      %v891 = vshll.u32 %v806, 16
      %v893 = vrot.slane %v891, 5
      %v894 = vsel %vm822, %v889, %v893
      %v896 = vshrl.u32 %v777, 16
      %v898 = vrot.slane %v896, 4
      %v899 = vshll.u32 %v777, 16
      %v901 = vrot.slane %v899, 5
      %v902 = vor.u32 %v898, %v901
      %v903 = vrot.slane %v902, 4
      %v905 = vshll.u32 %v778, 16
      %v907 = vrot.slane %v905, 5
      %v908 = vsel %vm822, %v903, %v907
      %v909 = vshrl.u32 %v778, 16
      %v911 = vrot.slane %v909, 4
      %v912 = vor.u32 %v911, %v907
      %v913 = vrot.slane %v912, 4
      %v915 = vshll.u32 %v807, 16
      %v917 = vrot.slane %v915, 5
      %v918 = vsel %vm822, %v913, %v917
      %v920 = vshrl.u32 %v779, 16
      %v922 = vrot.slane %v920, 4
      %v923 = vshll.u32 %v779, 16
      %v925 = vrot.slane %v923, 5
      %v926 = vor.u32 %v922, %v925
      %v927 = vrot.slane %v926, 4
      %v929 = vshll.u32 %v780, 16
      %v931 = vrot.slane %v929, 5
      %v932 = vsel %vm822, %v927, %v931
      %v933 = vshrl.u32 %v780, 16
      %v935 = vrot.slane %v933, 4
      %v936 = vor.u32 %v935, %v931
      %v937 = vrot.slane %v936, 4
      %v939 = vshll.u32 %v808, 16
      %v941 = vrot.slane %v939, 5
      %v942 = vsel %vm822, %v937, %v941
      %v944 = vshrl.u32 %v781, 16
      %v946 = vrot.slane %v944, 4
      %v947 = vshll.u32 %v781, 16
      %v949 = vrot.slane %v947, 5
      %v950 = vor.u32 %v946, %v949
      %v951 = vrot.slane %v950, 4
      %v953 = vshll.u32 %v782, 16
      %v955 = vrot.slane %v953, 5
      %v956 = vsel %vm822, %v951, %v955
      %v957 = vshrl.u32 %v782, 16
      %v959 = vrot.slane %v957, 4
      %v960 = vor.u32 %v959, %v955
      %v961 = vrot.slane %v960, 4
      %v963 = vshll.u32 %v809, 16
      %v965 = vrot.slane %v963, 5
      %v966 = vsel %vm822, %v961, %v965
      %v968 = vshrl.u32 %v783, 16
      %v970 = vrot.slane %v968, 4
      %v971 = vshll.u32 %v783, 16
      %v973 = vrot.slane %v971, 5
      %v974 = vor.u32 %v970, %v973
      %v975 = vrot.slane %v974, 4
      %v977 = vshll.u32 %v784, 16
      %v979 = vrot.slane %v977, 5
      %v980 = vsel %vm822, %v975, %v979
      %v981 = vshrl.u32 %v784, 16
      %v983 = vrot.slane %v981, 4
      %v984 = vor.u32 %v983, %v979
      %v985 = vrot.slane %v984, 4
      %v987 = vshll.u32 %v810, 16
      %v989 = vrot.slane %v987, 5
      %v990 = vsel %vm822, %v985, %v989
      %v992 = vshrl.u32 %v785, 16
      %v994 = vrot.slane %v992, 4
      %v995 = vshll.u32 %v785, 16
      %v997 = vrot.slane %v995, 5
      %v998 = vor.u32 %v994, %v997
      %v999 = vrot.slane %v998, 4
      %v1001 = vshll.u32 %v786, 16
      %v1003 = vrot.slane %v1001, 5
      %v1004 = vsel %vm822, %v999, %v1003
      %v1005 = vshrl.u32 %v786, 16
      %v1007 = vrot.slane %v1005, 4
      %v1008 = vor.u32 %v1007, %v1003
      %v1009 = vrot.slane %v1008, 4
      %v1011 = vshll.u32 %v811, 16
      %v1013 = vrot.slane %v1011, 5
      %v1014 = vsel %vm822, %v1009, %v1013
      %v1016 = vshrl.u32 %v787, 16
      %v1018 = vrot.slane %v1016, 4
      %v1019 = vshll.u32 %v787, 16
      %v1021 = vrot.slane %v1019, 5
      %v1022 = vor.u32 %v1018, %v1021
      %v1023 = vrot.slane %v1022, 4
      %v1025 = vshll.u32 %v788, 16
      %v1027 = vrot.slane %v1025, 5
      %v1028 = vsel %vm822, %v1023, %v1027
      %v1029 = vshrl.u32 %v788, 16
      %v1031 = vrot.slane %v1029, 4
      %v1032 = vor.u32 %v1031, %v1027
      %v1033 = vrot.slane %v1032, 4
      %v1035 = vshll.u32 %v812, 16
      %v1037 = vrot.slane %v1035, 5
      %v1038 = vsel %vm822, %v1033, %v1037
      %v1040 = vshrl.u32 %v789, 16
      %v1042 = vrot.slane %v1040, 4
      %v1043 = vshll.u32 %v789, 16
      %v1045 = vrot.slane %v1043, 5
      %v1046 = vor.u32 %v1042, %v1045
      %v1047 = vrot.slane %v1046, 4
      %v1049 = vshll.u32 %v790, 16
      %v1051 = vrot.slane %v1049, 5
      %v1052 = vsel %vm822, %v1047, %v1051
      %v1053 = vshrl.u32 %v790, 16
      %v1055 = vrot.slane %v1053, 4
      %v1056 = vor.u32 %v1055, %v1051
      %v1057 = vrot.slane %v1056, 4
      %v1059 = vshll.u32 %v813, 16
      %v1061 = vrot.slane %v1059, 5
      %v1062 = vsel %vm822, %v1057, %v1061
      %v1064 = vshrl.u32 %v791, 16
      %v1066 = vrot.slane %v1064, 4
      %v1067 = vshll.u32 %v791, 16
      %v1069 = vrot.slane %v1067, 5
      %v1070 = vor.u32 %v1066, %v1069
      %v1071 = vrot.slane %v1070, 4
      %v1073 = vshll.u32 %v792, 16
      %v1075 = vrot.slane %v1073, 5
      %v1076 = vsel %vm822, %v1071, %v1075
      %v1077 = vshrl.u32 %v792, 16
      %v1079 = vrot.slane %v1077, 4
      %v1080 = vor.u32 %v1079, %v1075
      %v1081 = vrot.slane %v1080, 4
      %v1083 = vshll.u32 %v814, 16
      %v1085 = vrot.slane %v1083, 5
      %v1086 = vsel %vm822, %v1081, %v1085
      %v1088 = vshrl.u32 %v793, 16
      %v1090 = vrot.slane %v1088, 4
      %v1091 = vshll.u32 %v793, 16
      %v1093 = vrot.slane %v1091, 5
      %v1094 = vor.u32 %v1090, %v1093
      %v1095 = vrot.slane %v1094, 4
      %v1097 = vshll.u32 %v794, 16
      %v1099 = vrot.slane %v1097, 5
      %v1100 = vsel %vm822, %v1095, %v1099
      %v1101 = vshrl.u32 %v794, 16
      %v1103 = vrot.slane %v1101, 4
      %v1104 = vor.u32 %v1103, %v1099
      %v1105 = vrot.slane %v1104, 4
      %v1107 = vshll.u32 %v815, 16
      %v1109 = vrot.slane %v1107, 5
      %v1110 = vsel %vm822, %v1105, %v1109
      %v1112 = vshrl.u32 %v795, 16
      %v1114 = vrot.slane %v1112, 4
      %v1115 = vshll.u32 %v795, 16
      %v1117 = vrot.slane %v1115, 5
      %v1118 = vor.u32 %v1114, %v1117
      %v1119 = vrot.slane %v1118, 4
      %v1121 = vshll.u32 %v796, 16
      %v1123 = vrot.slane %v1121, 5
      %v1124 = vsel %vm822, %v1119, %v1123
      %v1125 = vshrl.u32 %v796, 16
      %v1127 = vrot.slane %v1125, 4
      %v1128 = vor.u32 %v1127, %v1123
      %v1129 = vrot.slane %v1128, 4
      %v1131 = vshll.u32 %v816, 16
      %v1133 = vrot.slane %v1131, 5
      %v1134 = vsel %vm822, %v1129, %v1133
      %v1136 = vshrl.u32 %v797, 16
      %v1138 = vrot.slane %v1136, 4
      %v1139 = vshll.u32 %v797, 16
      %v1141 = vrot.slane %v1139, 5
      %v1142 = vor.u32 %v1138, %v1141
      %v1143 = vrot.slane %v1142, 4
      %v1145 = vshll.u32 %v798, 16
      %v1147 = vrot.slane %v1145, 5
      %v1148 = vsel %vm822, %v1143, %v1147
      %v1149 = vshrl.u32 %v798, 16
      %v1151 = vrot.slane %v1149, 4
      %v1152 = vor.u32 %v1151, %v1147
      %v1153 = vrot.slane %v1152, 4
      %v1155 = vshll.u32 %v817, 16
      %v1157 = vrot.slane %v1155, 5
      %v1158 = vsel %vm822, %v1153, %v1157
      %v1160 = vshrl.u32 %v799, 16
      %v1162 = vrot.slane %v1160, 4
      %v1163 = vshll.u32 %v799, 16
      %v1165 = vrot.slane %v1163, 5
      %v1166 = vor.u32 %v1162, %v1165
      %v1167 = vrot.slane %v1166, 4
      %v1169 = vshll.u32 %v800, 16
      %v1171 = vrot.slane %v1169, 5
      %v1172 = vsel %vm822, %v1167, %v1171
      %v1173 = vshrl.u32 %v800, 16
      %v1175 = vrot.slane %v1173, 4
      %v1176 = vor.u32 %v1175, %v1171
      %v1177 = vrot.slane %v1176, 4
      %v1179 = vshll.u32 %v818, 16
      %v1181 = vrot.slane %v1179, 5
      %v1182 = vsel %vm822, %v1177, %v1181
      %v1184 = vshrl.u32 %v801, 16
      %v1186 = vrot.slane %v1184, 4
      %v1187 = vshll.u32 %v801, 16
      %v1189 = vrot.slane %v1187, 5
      %v1190 = vor.u32 %v1186, %v1189
      %v1191 = vrot.slane %v1190, 4
      %v1193 = vshll.u32 %v802, 16
      %v1195 = vrot.slane %v1193, 5
      %v1196 = vsel %vm822, %v1191, %v1195
      %v1197 = vshrl.u32 %v802, 16
      %v1199 = vrot.slane %v1197, 4
      %v1200 = vor.u32 %v1199, %v1195
      %v1201 = vrot.slane %v1200, 4
      %v1203 = vshll.u32 %v819, 16
      %v1205 = vrot.slane %v1203, 5
      %v1206 = vsel %vm822, %v1201, %v1205
      %s1207 = scalar_lea.vmem %s1, 2
      %v1208 = vld [vmem:[%s1207] sm:$0x3]
      %v1209 = vunpack.c.l.b16 %v836
      %v1210 = vunpack.c.l.b16 %v846
      %v1211 = vunpack.c.l.b16 %v860
      %v1212 = vunpack.c.l.b16 %v870
      %v1213 = vunpack.c.l.b16 %v884
      %v1214 = vunpack.c.l.b16 %v894
      %v1215 = vunpack.c.l.b16 %v908
      %v1216 = vunpack.c.l.b16 %v918
      %v1217 = vunpack.c.l.b16 %v932
      %v1218 = vunpack.c.l.b16 %v942
      %v1219 = vunpack.c.l.b16 %v956
      %v1220 = vunpack.c.l.b16 %v966
      %v1221 = vunpack.c.l.b16 %v980
      %v1222 = vunpack.c.l.b16 %v990
      %v1223 = vunpack.c.l.b16 %v1004
      %v1224 = vunpack.c.l.b16 %v1014
      %v1225 = vunpack.c.l.b16 %v1028
      %v1226 = vunpack.c.l.b16 %v1038
      %v1227 = vunpack.c.l.b16 %v1052
      %v1228 = vunpack.c.l.b16 %v1062
      %v1229 = vunpack.c.l.b16 %v1076
      %v1230 = vunpack.c.l.b16 %v1086
      %v1231 = vunpack.c.l.b16 %v1100
      %v1232 = vunpack.c.l.b16 %v1110
      %v1233 = vunpack.c.l.b16 %v1124
      %v1234 = vunpack.c.l.b16 %v1134
      %v1235 = vunpack.c.l.b16 %v1148
      %v1236 = vunpack.c.l.b16 %v1158
      %v1237 = vunpack.c.l.b16 %v1172
      %v1238 = vunpack.c.l.b16 %v1182
      %v1239 = vunpack.c.l.b16 %v1196
      %v1240 = vunpack.c.l.b16 %v1206
      %v1241 = vpack.c.b16 %v1210, %v1209
      %v1242 = vpack.c.b16 %v1212, %v1211
      %v1243 = vpack.c.b16 %v1214, %v1213
      %v1244 = vpack.c.b16 %v1216, %v1215
      %v1245 = vpack.c.b16 %v1218, %v1217
      %v1246 = vpack.c.b16 %v1220, %v1219
      %v1247 = vpack.c.b16 %v1222, %v1221
      %v1248 = vpack.c.b16 %v1224, %v1223
      %v1249 = vpack.c.b16 %v1226, %v1225
      %v1250 = vpack.c.b16 %v1228, %v1227
      %v1251 = vpack.c.b16 %v1230, %v1229
      %v1252 = vpack.c.b16 %v1232, %v1231
      %v1253 = vpack.c.b16 %v1234, %v1233
      %v1254 = vpack.c.b16 %v1236, %v1235
      %v1255 = vpack.c.b16 %v1238, %v1237
      %v1256 = vpack.c.b16 %v1240, %v1239
      %vm1257 = vcmask 31744
      %v1259 = vsel %vm1257, %v1241, 0
      %v1262 = vsel %vm1257, %v1242, 0
      %v1265 = vsel %vm1257, %v1243, 0
      %v1268 = vsel %vm1257, %v1244, 0
      %v1271 = vsel %vm1257, %v1245, 0
      %v1274 = vsel %vm1257, %v1246, 0
      %v1277 = vsel %vm1257, %v1247, 0
      %v1280 = vsel %vm1257, %v1248, 0
      %v1283 = vsel %vm1257, %v1249, 0
      %v1286 = vsel %vm1257, %v1250, 0
      %v1289 = vsel %vm1257, %v1251, 0
      %v1292 = vsel %vm1257, %v1252, 0
      %v1295 = vsel %vm1257, %v1253, 0
      %v1298 = vsel %vm1257, %v1254, 0
      %v1301 = vsel %vm1257, %v1255, 0
      %v1304 = vsel %vm1257, %v1256, 0
      %vm1306 = vcmask 1041408
      %v1308 = vsel %vm1306, %v1208, 0
      %1310 = vmatpush.bf16.msra.mxu0 0
      %1311 = vmatpush.bf16.msra.mxu0 0
      %1312 = vmatpush.bf16.msra.mxu0 0
      %1313 = vmatpush.bf16.msra.mxu0 0
      %1314 = vmatpush.bf16.msra.mxu0 0
      %1315 = vmatpush.bf16.msra.mxu0 0
      %1316 = vmatpush.bf16.msra.mxu0 0
      %1317 = vmatpush.bf16.msra.mxu0 %v1308
      %1318 = vmatmul.bf16.gmra.mxu0 %v1259
      %v1319 = vpop.f32.mrf.mxu0
      %v1320 = vadd.f32 0.0, %v1319
      %v1321 = vpop.f32.mrf.mxu0
      %v1322 = vadd.f32 0.0, %v1321
      %1323 = vmatmul.bf16.gmra.mxu0 %v1262
      %v1324 = vpop.f32.mrf.mxu0
      %v1325 = vadd.f32 0.0, %v1324
      %v1326 = vpop.f32.mrf.mxu0
      %v1327 = vadd.f32 0.0, %v1326
      %1328 = vmatmul.bf16.gmra.mxu0 %v1265
      %v1329 = vpop.f32.mrf.mxu0
      %v1330 = vadd.f32 0.0, %v1329
      %v1331 = vpop.f32.mrf.mxu0
      %v1332 = vadd.f32 0.0, %v1331
      %1333 = vmatmul.bf16.gmra.mxu0 %v1268
      %v1334 = vpop.f32.mrf.mxu0
      %v1335 = vadd.f32 0.0, %v1334
      %v1336 = vpop.f32.mrf.mxu0
      %v1337 = vadd.f32 0.0, %v1336
      %1338 = vmatmul.bf16.gmra.mxu0 %v1271
      %v1339 = vpop.f32.mrf.mxu0
      %v1340 = vadd.f32 0.0, %v1339
      %v1341 = vpop.f32.mrf.mxu0
      %v1342 = vadd.f32 0.0, %v1341
      %1343 = vmatmul.bf16.gmra.mxu0 %v1274
      %v1344 = vpop.f32.mrf.mxu0
      %v1345 = vadd.f32 0.0, %v1344
      %v1346 = vpop.f32.mrf.mxu0
      %v1347 = vadd.f32 0.0, %v1346
      %1348 = vmatmul.bf16.gmra.mxu0 %v1277
      %v1349 = vpop.f32.mrf.mxu0
      %v1350 = vadd.f32 0.0, %v1349
      %v1351 = vpop.f32.mrf.mxu0
      %v1352 = vadd.f32 0.0, %v1351
      %1353 = vmatmul.bf16.gmra.mxu0 %v1280
      %v1354 = vpop.f32.mrf.mxu0
      %v1355 = vadd.f32 0.0, %v1354
      %v1356 = vpop.f32.mrf.mxu0
      %v1357 = vadd.f32 0.0, %v1356
      %1358 = vmatmul.bf16.gmra.mxu0 %v1283
      %v1359 = vpop.f32.mrf.mxu0
      %v1360 = vadd.f32 0.0, %v1359
      %v1361 = vpop.f32.mrf.mxu0
      %v1362 = vadd.f32 0.0, %v1361
      %1363 = vmatmul.bf16.gmra.mxu0 %v1286
      %v1364 = vpop.f32.mrf.mxu0
      %v1365 = vadd.f32 0.0, %v1364
      %v1366 = vpop.f32.mrf.mxu0
      %v1367 = vadd.f32 0.0, %v1366
      %1368 = vmatmul.bf16.gmra.mxu0 %v1289
      %v1369 = vpop.f32.mrf.mxu0
      %v1370 = vadd.f32 0.0, %v1369
      %v1371 = vpop.f32.mrf.mxu0
      %v1372 = vadd.f32 0.0, %v1371
      %1373 = vmatmul.bf16.gmra.mxu0 %v1292
      %v1374 = vpop.f32.mrf.mxu0
      %v1375 = vadd.f32 0.0, %v1374
      %v1376 = vpop.f32.mrf.mxu0
      %v1377 = vadd.f32 0.0, %v1376
      %1378 = vmatmul.bf16.gmra.mxu0 %v1295
      %v1379 = vpop.f32.mrf.mxu0
      %v1380 = vadd.f32 0.0, %v1379
      %v1381 = vpop.f32.mrf.mxu0
      %v1382 = vadd.f32 0.0, %v1381
      %1383 = vmatmul.bf16.gmra.mxu0 %v1298
      %v1384 = vpop.f32.mrf.mxu0
      %v1385 = vadd.f32 0.0, %v1384
      %v1386 = vpop.f32.mrf.mxu0
      %v1387 = vadd.f32 0.0, %v1386
      %1388 = vmatmul.bf16.gmra.mxu0 %v1301
      %v1389 = vpop.f32.mrf.mxu0
      %v1390 = vadd.f32 0.0, %v1389
      %v1391 = vpop.f32.mrf.mxu0
      %v1392 = vadd.f32 0.0, %v1391
      %1393 = vmatmul.bf16.gmra.mxu0 %v1304
      %v1394 = vpop.f32.mrf.mxu0
      %v1395 = vadd.f32 0.0, %v1394
      %v1396 = vpop.f32.mrf.mxu0
      %v1397 = vadd.f32 0.0, %v1396
      %1398 = vdwg.mxu0
      %v1431 = vunpack.c.l.b16 %v771
      %v1432 = vunpack.c.l.b16 %v772
      %v1433 = vunpack.c.l.b16 %v773
      %v1434 = vunpack.c.l.b16 %v774
      %v1435 = vunpack.c.l.b16 %v775
      %v1436 = vunpack.c.l.b16 %v776
      %v1437 = vunpack.c.l.b16 %v777
      %v1438 = vunpack.c.l.b16 %v778
      %v1439 = vunpack.c.l.b16 %v779
      %v1440 = vunpack.c.l.b16 %v780
      %v1441 = vunpack.c.l.b16 %v781
      %v1442 = vunpack.c.l.b16 %v782
      %v1443 = vunpack.c.l.b16 %v783
      %v1444 = vunpack.c.l.b16 %v784
      %v1445 = vunpack.c.l.b16 %v785
      %v1446 = vunpack.c.l.b16 %v786
      %v1447 = vunpack.c.l.b16 %v787
      %v1448 = vunpack.c.l.b16 %v788
      %v1449 = vunpack.c.l.b16 %v789
      %v1450 = vunpack.c.l.b16 %v790
      %v1451 = vunpack.c.l.b16 %v791
      %v1452 = vunpack.c.l.b16 %v792
      %v1453 = vunpack.c.l.b16 %v793
      %v1454 = vunpack.c.l.b16 %v794
      %v1455 = vunpack.c.l.b16 %v795
      %v1456 = vunpack.c.l.b16 %v796
      %v1457 = vunpack.c.l.b16 %v797
      %v1458 = vunpack.c.l.b16 %v798
      %v1459 = vunpack.c.l.b16 %v799
      %v1460 = vunpack.c.l.b16 %v800
      %v1461 = vunpack.c.l.b16 %v801
      %v1462 = vunpack.c.l.b16 %v802
      %v1463 = vpack.c.b16 %v1432, %v1431
      %v1464 = vpack.c.b16 %v1434, %v1433
      %v1465 = vpack.c.b16 %v1436, %v1435
      %v1466 = vpack.c.b16 %v1438, %v1437
      %v1467 = vpack.c.b16 %v1440, %v1439
      %v1468 = vpack.c.b16 %v1442, %v1441
      %v1469 = vpack.c.b16 %v1444, %v1443
      %v1470 = vpack.c.b16 %v1446, %v1445
      %v1471 = vpack.c.b16 %v1448, %v1447
      %v1472 = vpack.c.b16 %v1450, %v1449
      %v1473 = vpack.c.b16 %v1452, %v1451
      %v1474 = vpack.c.b16 %v1454, %v1453
      %v1475 = vpack.c.b16 %v1456, %v1455
      %v1476 = vpack.c.b16 %v1458, %v1457
      %v1477 = vpack.c.b16 %v1460, %v1459
      %v1478 = vpack.c.b16 %v1462, %v1461
      %v1480 = vsel %vm1257, %v1463, 0
      %v1483 = vsel %vm1257, %v1464, 0
      %v1486 = vsel %vm1257, %v1465, 0
      %v1489 = vsel %vm1257, %v1466, 0
      %v1492 = vsel %vm1257, %v1467, 0
      %v1495 = vsel %vm1257, %v1468, 0
      %v1498 = vsel %vm1257, %v1469, 0
      %v1501 = vsel %vm1257, %v1470, 0
      %v1504 = vsel %vm1257, %v1471, 0
      %v1507 = vsel %vm1257, %v1472, 0
      %v1510 = vsel %vm1257, %v1473, 0
      %v1513 = vsel %vm1257, %v1474, 0
      %v1516 = vsel %vm1257, %v1475, 0
      %v1519 = vsel %vm1257, %v1476, 0
      %v1522 = vsel %vm1257, %v1477, 0
      %v1525 = vsel %vm1257, %v1478, 0
      %v1528 = vsel %vm1306, %v803, 0
      %1530 = vmatpush.bf16.msra.mxu0 0
      %1531 = vmatpush.bf16.msra.mxu0 0
      %1532 = vmatpush.bf16.msra.mxu0 0
      %1533 = vmatpush.bf16.msra.mxu0 0
      %1534 = vmatpush.bf16.msra.mxu0 0
      %1535 = vmatpush.bf16.msra.mxu0 0
      %1536 = vmatpush.bf16.msra.mxu0 0
      %1537 = vmatpush.bf16.msra.mxu0 %v1528
      %1538 = vmatmul.bf16.gmra.mxu0 %v1480
      %v1539 = vpop.f32.mrf.mxu0
      %v1540 = vadd.f32 %v1320, %v1539
      %v1541 = vpop.f32.mrf.mxu0
      %v1542 = vadd.f32 %v1322, %v1541
      %1543 = vmatmul.bf16.gmra.mxu0 %v1483
      %v1544 = vpop.f32.mrf.mxu0
      %v1545 = vadd.f32 %v1325, %v1544
      %v1546 = vpop.f32.mrf.mxu0
      %v1547 = vadd.f32 %v1327, %v1546
      %1548 = vmatmul.bf16.gmra.mxu0 %v1486
      %v1549 = vpop.f32.mrf.mxu0
      %v1550 = vadd.f32 %v1330, %v1549
      %v1551 = vpop.f32.mrf.mxu0
      %v1552 = vadd.f32 %v1332, %v1551
      %1553 = vmatmul.bf16.gmra.mxu0 %v1489
      %v1554 = vpop.f32.mrf.mxu0
      %v1555 = vadd.f32 %v1335, %v1554
      %v1556 = vpop.f32.mrf.mxu0
      %v1557 = vadd.f32 %v1337, %v1556
      %1558 = vmatmul.bf16.gmra.mxu0 %v1492
      %v1559 = vpop.f32.mrf.mxu0
      %v1560 = vadd.f32 %v1340, %v1559
      %v1561 = vpop.f32.mrf.mxu0
      %v1562 = vadd.f32 %v1342, %v1561
      %1563 = vmatmul.bf16.gmra.mxu0 %v1495
      %v1564 = vpop.f32.mrf.mxu0
      %v1565 = vadd.f32 %v1345, %v1564
      %v1566 = vpop.f32.mrf.mxu0
      %v1567 = vadd.f32 %v1347, %v1566
      %1568 = vmatmul.bf16.gmra.mxu0 %v1498
      %v1569 = vpop.f32.mrf.mxu0
      %v1570 = vadd.f32 %v1350, %v1569
      %v1571 = vpop.f32.mrf.mxu0
      %v1572 = vadd.f32 %v1352, %v1571
      %1573 = vmatmul.bf16.gmra.mxu0 %v1501
      %v1574 = vpop.f32.mrf.mxu0
      %v1575 = vadd.f32 %v1355, %v1574
      %v1576 = vpop.f32.mrf.mxu0
      %v1577 = vadd.f32 %v1357, %v1576
      %1578 = vmatmul.bf16.gmra.mxu0 %v1504
      %v1579 = vpop.f32.mrf.mxu0
      %v1580 = vadd.f32 %v1360, %v1579
      %v1581 = vpop.f32.mrf.mxu0
      %v1582 = vadd.f32 %v1362, %v1581
      %1583 = vmatmul.bf16.gmra.mxu0 %v1507
      %v1584 = vpop.f32.mrf.mxu0
      %v1585 = vadd.f32 %v1365, %v1584
      %v1586 = vpop.f32.mrf.mxu0
      %v1587 = vadd.f32 %v1367, %v1586
      %1588 = vmatmul.bf16.gmra.mxu0 %v1510
      %v1589 = vpop.f32.mrf.mxu0
      %v1590 = vadd.f32 %v1370, %v1589
      %v1591 = vpop.f32.mrf.mxu0
      %v1592 = vadd.f32 %v1372, %v1591
      %1593 = vmatmul.bf16.gmra.mxu0 %v1513
      %v1594 = vpop.f32.mrf.mxu0
      %v1595 = vadd.f32 %v1375, %v1594
      %v1596 = vpop.f32.mrf.mxu0
      %v1597 = vadd.f32 %v1377, %v1596
      %1598 = vmatmul.bf16.gmra.mxu0 %v1516
      %v1599 = vpop.f32.mrf.mxu0
      %v1600 = vadd.f32 %v1380, %v1599
      %v1601 = vpop.f32.mrf.mxu0
      %v1602 = vadd.f32 %v1382, %v1601
      %1603 = vmatmul.bf16.gmra.mxu0 %v1519
      %v1604 = vpop.f32.mrf.mxu0
      %v1605 = vadd.f32 %v1385, %v1604
      %v1606 = vpop.f32.mrf.mxu0
      %v1607 = vadd.f32 %v1387, %v1606
      %1608 = vmatmul.bf16.gmra.mxu0 %v1522
      %v1609 = vpop.f32.mrf.mxu0
      %v1610 = vadd.f32 %v1390, %v1609
      %v1611 = vpop.f32.mrf.mxu0
      %v1612 = vadd.f32 %v1392, %v1611
      %1613 = vmatmul.bf16.gmra.mxu0 %v1525
      %v1614 = vpop.f32.mrf.mxu0
      %v1615 = vadd.f32 %v1395, %v1614
      %v1616 = vpop.f32.mrf.mxu0
      %v1617 = vadd.f32 %v1397, %v1616
      %1618 = vdwg.mxu0
      %v1619 = vld [vmem:[#allocation2] sm:$0xe]
      %v1620 = vld [vmem:[#allocation2 + $0xc] sm:$0xe]
      %v1621 = vld [vmem:[#allocation2 + $0x18] sm:$0xe]
      %v1622 = vld [vmem:[#allocation2 + $0x24] sm:$0xe]
      %v1623 = vld [vmem:[#allocation2 + $0x30] sm:$0xe]
      %v1624 = vld [vmem:[#allocation2 + $0x3c] sm:$0xe]
      %v1625 = vld [vmem:[#allocation2 + $0x48] sm:$0xe]
      %v1626 = vld [vmem:[#allocation2 + $0x54] sm:$0xe]
      %v1627 = vld [vmem:[#allocation2 + $0x60] sm:$0xe]
      %v1628 = vld [vmem:[#allocation2 + $0x6c] sm:$0xe]
      %v1629 = vld [vmem:[#allocation2 + $0x78] sm:$0xe]
      %v1630 = vld [vmem:[#allocation2 + $0x84] sm:$0xe]
      %v1631 = vld [vmem:[#allocation2 + $0x90] sm:$0xe]
      %v1632 = vld [vmem:[#allocation2 + $0x9c] sm:$0xe]
      %v1633 = vld [vmem:[#allocation2 + $0xa8] sm:$0xe]
      %v1634 = vld [vmem:[#allocation2 + $0xb4] sm:$0xe]
      %vm1667 = vcmask 1042432
      %vm1668 = vcmask 1046532
      %vm1669 = vmor %vm1667, %vm1668
      %v1670 = vrot.slane %v1619, 5
      %v1671 = vrot.slane %v1670, 4
      %v1672 = vrot.slane %v772, 5
      %v1673 = vsel %vm1669, %v1671, %v1672
      %v1674 = vrot.slane %v1672, 4
      %v1675 = vrot.slane %v804, 5
      %v1676 = vsel %vm1669, %v1674, %v1675
      %v1677 = vrot.slane %v1620, 5
      %v1678 = vrot.slane %v1677, 4
      %v1679 = vrot.slane %v774, 5
      %v1680 = vsel %vm1669, %v1678, %v1679
      %v1681 = vrot.slane %v1679, 4
      %v1682 = vrot.slane %v805, 5
      %v1683 = vsel %vm1669, %v1681, %v1682
      %v1684 = vrot.slane %v1621, 5
      %v1685 = vrot.slane %v1684, 4
      %v1686 = vrot.slane %v776, 5
      %v1687 = vsel %vm1669, %v1685, %v1686
      %v1688 = vrot.slane %v1686, 4
      %v1689 = vrot.slane %v806, 5
      %v1690 = vsel %vm1669, %v1688, %v1689
      %v1691 = vrot.slane %v1622, 5
      %v1692 = vrot.slane %v1691, 4
      %v1693 = vrot.slane %v778, 5
      %v1694 = vsel %vm1669, %v1692, %v1693
      %v1695 = vrot.slane %v1693, 4
      %v1696 = vrot.slane %v807, 5
      %v1697 = vsel %vm1669, %v1695, %v1696
      %v1698 = vrot.slane %v1623, 5
      %v1699 = vrot.slane %v1698, 4
      %v1700 = vrot.slane %v780, 5
      %v1701 = vsel %vm1669, %v1699, %v1700
      %v1702 = vrot.slane %v1700, 4
      %v1703 = vrot.slane %v808, 5
      %v1704 = vsel %vm1669, %v1702, %v1703
      %v1705 = vrot.slane %v1624, 5
      %v1706 = vrot.slane %v1705, 4
      %v1707 = vrot.slane %v782, 5
      %v1708 = vsel %vm1669, %v1706, %v1707
      %v1709 = vrot.slane %v1707, 4
      %v1710 = vrot.slane %v809, 5
      %v1711 = vsel %vm1669, %v1709, %v1710
      %v1712 = vrot.slane %v1625, 5
      %v1713 = vrot.slane %v1712, 4
      %v1714 = vrot.slane %v784, 5
      %v1715 = vsel %vm1669, %v1713, %v1714
      %v1716 = vrot.slane %v1714, 4
      %v1717 = vrot.slane %v810, 5
      %v1718 = vsel %vm1669, %v1716, %v1717
      %v1719 = vrot.slane %v1626, 5
      %v1720 = vrot.slane %v1719, 4
      %v1721 = vrot.slane %v786, 5
      %v1722 = vsel %vm1669, %v1720, %v1721
      %v1723 = vrot.slane %v1721, 4
      %v1724 = vrot.slane %v811, 5
      %v1725 = vsel %vm1669, %v1723, %v1724
      %v1726 = vrot.slane %v1627, 5
      %v1727 = vrot.slane %v1726, 4
      %v1728 = vrot.slane %v788, 5
      %v1729 = vsel %vm1669, %v1727, %v1728
      %v1730 = vrot.slane %v1728, 4
      %v1731 = vrot.slane %v812, 5
      %v1732 = vsel %vm1669, %v1730, %v1731
      %v1733 = vrot.slane %v1628, 5
      %v1734 = vrot.slane %v1733, 4
      %v1735 = vrot.slane %v790, 5
      %v1736 = vsel %vm1669, %v1734, %v1735
      %v1737 = vrot.slane %v1735, 4
      %v1738 = vrot.slane %v813, 5
      %v1739 = vsel %vm1669, %v1737, %v1738
      %v1740 = vrot.slane %v1629, 5
      %v1741 = vrot.slane %v1740, 4
      %v1742 = vrot.slane %v792, 5
      %v1743 = vsel %vm1669, %v1741, %v1742
      %v1744 = vrot.slane %v1742, 4
      %v1745 = vrot.slane %v814, 5
      %v1746 = vsel %vm1669, %v1744, %v1745
      %v1747 = vrot.slane %v1630, 5
      %v1748 = vrot.slane %v1747, 4
      %v1749 = vrot.slane %v794, 5
      %v1750 = vsel %vm1669, %v1748, %v1749
      %v1751 = vrot.slane %v1749, 4
      %v1752 = vrot.slane %v815, 5
      %v1753 = vsel %vm1669, %v1751, %v1752
      %v1754 = vrot.slane %v1631, 5
      %v1755 = vrot.slane %v1754, 4
      %v1756 = vrot.slane %v796, 5
      %v1757 = vsel %vm1669, %v1755, %v1756
      %v1758 = vrot.slane %v1756, 4
      %v1759 = vrot.slane %v816, 5
      %v1760 = vsel %vm1669, %v1758, %v1759
      %v1761 = vrot.slane %v1632, 5
      %v1762 = vrot.slane %v1761, 4
      %v1763 = vrot.slane %v798, 5
      %v1764 = vsel %vm1669, %v1762, %v1763
      %v1765 = vrot.slane %v1763, 4
      %v1766 = vrot.slane %v817, 5
      %v1767 = vsel %vm1669, %v1765, %v1766
      %v1768 = vrot.slane %v1633, 5
      %v1769 = vrot.slane %v1768, 4
      %v1770 = vrot.slane %v800, 5
      %v1771 = vsel %vm1669, %v1769, %v1770
      %v1772 = vrot.slane %v1770, 4
      %v1773 = vrot.slane %v818, 5
      %v1774 = vsel %vm1669, %v1772, %v1773
      %v1775 = vrot.slane %v1634, 5
      %v1776 = vrot.slane %v1775, 4
      %v1777 = vrot.slane %v802, 5
      %v1778 = vsel %vm1669, %v1776, %v1777
      %v1779 = vrot.slane %v1777, 4
      %v1780 = vrot.slane %v819, 5
      %v1781 = vsel %vm1669, %v1779, %v1780
      %s1782 = scalar_lea.vmem %s1, 4
      %v1783 = vld [vmem:[%s1782] sm:$0x3]
      %v1784 = vunpack.c.l.b16 %v1673
      %v1785 = vunpack.c.l.b16 %v1676
      %v1786 = vunpack.c.l.b16 %v1680
      %v1787 = vunpack.c.l.b16 %v1683
      %v1788 = vunpack.c.l.b16 %v1687
      %v1789 = vunpack.c.l.b16 %v1690
      %v1790 = vunpack.c.l.b16 %v1694
      %v1791 = vunpack.c.l.b16 %v1697
      %v1792 = vunpack.c.l.b16 %v1701
      %v1793 = vunpack.c.l.b16 %v1704
      %v1794 = vunpack.c.l.b16 %v1708
      %v1795 = vunpack.c.l.b16 %v1711
      %v1796 = vunpack.c.l.b16 %v1715
      %v1797 = vunpack.c.l.b16 %v1718
      %v1798 = vunpack.c.l.b16 %v1722
      %v1799 = vunpack.c.l.b16 %v1725
      %v1800 = vunpack.c.l.b16 %v1729
      %v1801 = vunpack.c.l.b16 %v1732
      %v1802 = vunpack.c.l.b16 %v1736
      %v1803 = vunpack.c.l.b16 %v1739
      %v1804 = vunpack.c.l.b16 %v1743
      %v1805 = vunpack.c.l.b16 %v1746
      %v1806 = vunpack.c.l.b16 %v1750
      %v1807 = vunpack.c.l.b16 %v1753
      %v1808 = vunpack.c.l.b16 %v1757
      %v1809 = vunpack.c.l.b16 %v1760
      %v1810 = vunpack.c.l.b16 %v1764
      %v1811 = vunpack.c.l.b16 %v1767
      %v1812 = vunpack.c.l.b16 %v1771
      %v1813 = vunpack.c.l.b16 %v1774
      %v1814 = vunpack.c.l.b16 %v1778
      %v1815 = vunpack.c.l.b16 %v1781
      %v1816 = vpack.c.b16 %v1785, %v1784
      %v1817 = vpack.c.b16 %v1787, %v1786
      %v1818 = vpack.c.b16 %v1789, %v1788
      %v1819 = vpack.c.b16 %v1791, %v1790
      %v1820 = vpack.c.b16 %v1793, %v1792
      %v1821 = vpack.c.b16 %v1795, %v1794
      %v1822 = vpack.c.b16 %v1797, %v1796
      %v1823 = vpack.c.b16 %v1799, %v1798
      %v1824 = vpack.c.b16 %v1801, %v1800
      %v1825 = vpack.c.b16 %v1803, %v1802
      %v1826 = vpack.c.b16 %v1805, %v1804
      %v1827 = vpack.c.b16 %v1807, %v1806
      %v1828 = vpack.c.b16 %v1809, %v1808
      %v1829 = vpack.c.b16 %v1811, %v1810
      %v1830 = vpack.c.b16 %v1813, %v1812
      %v1831 = vpack.c.b16 %v1815, %v1814
      %v1833 = vsel %vm1257, %v1816, 0
      %v1836 = vsel %vm1257, %v1817, 0
      %v1839 = vsel %vm1257, %v1818, 0
      %v1842 = vsel %vm1257, %v1819, 0
      %v1845 = vsel %vm1257, %v1820, 0
      %v1848 = vsel %vm1257, %v1821, 0
      %v1851 = vsel %vm1257, %v1822, 0
      %v1854 = vsel %vm1257, %v1823, 0
      %v1857 = vsel %vm1257, %v1824, 0
      %v1860 = vsel %vm1257, %v1825, 0
      %v1863 = vsel %vm1257, %v1826, 0
      %v1866 = vsel %vm1257, %v1827, 0
      %v1869 = vsel %vm1257, %v1828, 0
      %v1872 = vsel %vm1257, %v1829, 0
      %v1875 = vsel %vm1257, %v1830, 0
      %v1878 = vsel %vm1257, %v1831, 0
      %v1881 = vsel %vm1306, %v1783, 0
      %1883 = vmatpush.bf16.msra.mxu0 0
      %1884 = vmatpush.bf16.msra.mxu0 0
      %1885 = vmatpush.bf16.msra.mxu0 0
      %1886 = vmatpush.bf16.msra.mxu0 0
      %1887 = vmatpush.bf16.msra.mxu0 0
      %1888 = vmatpush.bf16.msra.mxu0 0
      %1889 = vmatpush.bf16.msra.mxu0 0
      %1890 = vmatpush.bf16.msra.mxu0 %v1881
      %1891 = vmatmul.bf16.gmra.mxu0 %v1833
      %v1892 = vpop.f32.mrf.mxu0
      %v1893 = vadd.f32 0.0, %v1892
      %v1894 = vpop.f32.mrf.mxu0
      %v1895 = vadd.f32 0.0, %v1894
      %1896 = vmatmul.bf16.gmra.mxu0 %v1836
      %v1897 = vpop.f32.mrf.mxu0
      %v1898 = vadd.f32 0.0, %v1897
      %v1899 = vpop.f32.mrf.mxu0
      %v1900 = vadd.f32 0.0, %v1899
      %1901 = vmatmul.bf16.gmra.mxu0 %v1839
      %v1902 = vpop.f32.mrf.mxu0
      %v1903 = vadd.f32 0.0, %v1902
      %v1904 = vpop.f32.mrf.mxu0
      %v1905 = vadd.f32 0.0, %v1904
      %1906 = vmatmul.bf16.gmra.mxu0 %v1842
      %v1907 = vpop.f32.mrf.mxu0
      %v1908 = vadd.f32 0.0, %v1907
      %v1909 = vpop.f32.mrf.mxu0
      %v1910 = vadd.f32 0.0, %v1909
      %1911 = vmatmul.bf16.gmra.mxu0 %v1845
      %v1912 = vpop.f32.mrf.mxu0
      %v1913 = vadd.f32 0.0, %v1912
      %v1914 = vpop.f32.mrf.mxu0
      %v1915 = vadd.f32 0.0, %v1914
      %1916 = vmatmul.bf16.gmra.mxu0 %v1848
      %v1917 = vpop.f32.mrf.mxu0
      %v1918 = vadd.f32 0.0, %v1917
      %v1919 = vpop.f32.mrf.mxu0
      %v1920 = vadd.f32 0.0, %v1919
      %1921 = vmatmul.bf16.gmra.mxu0 %v1851
      %v1922 = vpop.f32.mrf.mxu0
      %v1923 = vadd.f32 0.0, %v1922
      %v1924 = vpop.f32.mrf.mxu0
      %v1925 = vadd.f32 0.0, %v1924
      %1926 = vmatmul.bf16.gmra.mxu0 %v1854
      %v1927 = vpop.f32.mrf.mxu0
      %v1928 = vadd.f32 0.0, %v1927
      %v1929 = vpop.f32.mrf.mxu0
      %v1930 = vadd.f32 0.0, %v1929
      %1931 = vmatmul.bf16.gmra.mxu0 %v1857
      %v1932 = vpop.f32.mrf.mxu0
      %v1933 = vadd.f32 0.0, %v1932
      %v1934 = vpop.f32.mrf.mxu0
      %v1935 = vadd.f32 0.0, %v1934
      %1936 = vmatmul.bf16.gmra.mxu0 %v1860
      %v1937 = vpop.f32.mrf.mxu0
      %v1938 = vadd.f32 0.0, %v1937
      %v1939 = vpop.f32.mrf.mxu0
      %v1940 = vadd.f32 0.0, %v1939
      %1941 = vmatmul.bf16.gmra.mxu0 %v1863
      %v1942 = vpop.f32.mrf.mxu0
      %v1943 = vadd.f32 0.0, %v1942
      %v1944 = vpop.f32.mrf.mxu0
      %v1945 = vadd.f32 0.0, %v1944
      %1946 = vmatmul.bf16.gmra.mxu0 %v1866
      %v1947 = vpop.f32.mrf.mxu0
      %v1948 = vadd.f32 0.0, %v1947
      %v1949 = vpop.f32.mrf.mxu0
      %v1950 = vadd.f32 0.0, %v1949
      %1951 = vmatmul.bf16.gmra.mxu0 %v1869
      %v1952 = vpop.f32.mrf.mxu0
      %v1953 = vadd.f32 0.0, %v1952
      %v1954 = vpop.f32.mrf.mxu0
      %v1955 = vadd.f32 0.0, %v1954
      %1956 = vmatmul.bf16.gmra.mxu0 %v1872
      %v1957 = vpop.f32.mrf.mxu0
      %v1958 = vadd.f32 0.0, %v1957
      %v1959 = vpop.f32.mrf.mxu0
      %v1960 = vadd.f32 0.0, %v1959
      %1961 = vmatmul.bf16.gmra.mxu0 %v1875
      %v1962 = vpop.f32.mrf.mxu0
      %v1963 = vadd.f32 0.0, %v1962
      %v1964 = vpop.f32.mrf.mxu0
      %v1965 = vadd.f32 0.0, %v1964
      %1966 = vmatmul.bf16.gmra.mxu0 %v1878
      %v1967 = vpop.f32.mrf.mxu0
      %v1968 = vadd.f32 0.0, %v1967
      %v1969 = vpop.f32.mrf.mxu0
      %v1970 = vadd.f32 0.0, %v1969
      %1971 = vdwg.mxu0
      %v1972 = vadd.f32 %v1540, %v1893
      %v1973 = vadd.f32 %v1542, %v1895
      %v1974 = vadd.f32 %v1545, %v1898
      %v1975 = vadd.f32 %v1547, %v1900
      %v1976 = vadd.f32 %v1550, %v1903
      %v1977 = vadd.f32 %v1552, %v1905
      %v1978 = vadd.f32 %v1555, %v1908
      %v1979 = vadd.f32 %v1557, %v1910
      %v1980 = vadd.f32 %v1560, %v1913
      %v1981 = vadd.f32 %v1562, %v1915
      %v1982 = vadd.f32 %v1565, %v1918
      %v1983 = vadd.f32 %v1567, %v1920
      %v1984 = vadd.f32 %v1570, %v1923
      %v1985 = vadd.f32 %v1572, %v1925
      %v1986 = vadd.f32 %v1575, %v1928
      %v1987 = vadd.f32 %v1577, %v1930
      %v1988 = vadd.f32 %v1580, %v1933
      %v1989 = vadd.f32 %v1582, %v1935
      %v1990 = vadd.f32 %v1585, %v1938
      %v1991 = vadd.f32 %v1587, %v1940
      %v1992 = vadd.f32 %v1590, %v1943
      %v1993 = vadd.f32 %v1592, %v1945
      %v1994 = vadd.f32 %v1595, %v1948
      %v1995 = vadd.f32 %v1597, %v1950
      %v1996 = vadd.f32 %v1600, %v1953
      %v1997 = vadd.f32 %v1602, %v1955
      %v1998 = vadd.f32 %v1605, %v1958
      %v1999 = vadd.f32 %v1607, %v1960
      %v2000 = vadd.f32 %v1610, %v1963
      %v2001 = vadd.f32 %v1612, %v1965
      %v2002 = vadd.f32 %v1615, %v1968
      %v2003 = vadd.f32 %v1617, %v1970
      %v2004 = vld [vmem:[%s653] sm:$0xf]
      %v2005 = vld [vmem:[%s653 + $0x4] sm:$0xf]
      %v2006 = vld [vmem:[%s653 + $0xc] sm:$0xf]
      %v2007 = vld [vmem:[%s653 + $0x10] sm:$0xf]
      %v2008 = vld [vmem:[%s653 + $0x18] sm:$0xf]
      %v2009 = vld [vmem:[%s653 + $0x1c] sm:$0xf]
      %v2010 = vld [vmem:[%s653 + $0x24] sm:$0xf]
      %v2011 = vld [vmem:[%s653 + $0x28] sm:$0xf]
      %v2012 = vld [vmem:[%s653 + $0x30] sm:$0xf]
      %v2013 = vld [vmem:[%s653 + $0x34] sm:$0xf]
      %v2014 = vld [vmem:[%s653 + $0x3c] sm:$0xf]
      %v2015 = vld [vmem:[%s653 + $0x40] sm:$0xf]
      %v2016 = vld [vmem:[%s653 + $0x48] sm:$0xf]
      %v2017 = vld [vmem:[%s653 + $0x4c] sm:$0xf]
      %v2018 = vld [vmem:[%s653 + $0x54] sm:$0xf]
      %v2019 = vld [vmem:[%s653 + $0x58] sm:$0xf]
      %v2020 = vld [vmem:[%s653 + $0x60] sm:$0xf]
      %v2021 = vld [vmem:[%s653 + $0x64] sm:$0xf]
      %v2022 = vld [vmem:[%s653 + $0x6c] sm:$0xf]
      %v2023 = vld [vmem:[%s653 + $0x70] sm:$0xf]
      %v2024 = vld [vmem:[%s653 + $0x78] sm:$0xf]
      %v2025 = vld [vmem:[%s653 + $0x7c] sm:$0xf]
      %v2026 = vld [vmem:[%s653 + $0x84] sm:$0xf]
      %v2027 = vld [vmem:[%s653 + $0x88] sm:$0xf]
      %v2028 = vld [vmem:[%s653 + $0x90] sm:$0xf]
      %v2029 = vld [vmem:[%s653 + $0x94] sm:$0xf]
      %v2030 = vld [vmem:[%s653 + $0x9c] sm:$0xf]
      %v2031 = vld [vmem:[%s653 + $0xa0] sm:$0xf]
      %v2032 = vld [vmem:[%s653 + $0xa8] sm:$0xf]
      %v2033 = vld [vmem:[%s653 + $0xac] sm:$0xf]
      %v2034 = vld [vmem:[%s653 + $0xb4] sm:$0xf]
      %v2035 = vld [vmem:[%s653 + $0xb8] sm:$0xf]
      %s2036 = scalar_lea.vmem %s1, 6
      %v2037 = vld [vmem:[%s2036] sm:$0x3]
      %v2070 = vunpack.c.l.b16 %v2004
      %v2071 = vunpack.c.l.b16 %v2005
      %v2072 = vunpack.c.l.b16 %v2006
      %v2073 = vunpack.c.l.b16 %v2007
      %v2074 = vunpack.c.l.b16 %v2008
      %v2075 = vunpack.c.l.b16 %v2009
      %v2076 = vunpack.c.l.b16 %v2010
      %v2077 = vunpack.c.l.b16 %v2011
      %v2078 = vunpack.c.l.b16 %v2012
      %v2079 = vunpack.c.l.b16 %v2013
      %v2080 = vunpack.c.l.b16 %v2014
      %v2081 = vunpack.c.l.b16 %v2015
      %v2082 = vunpack.c.l.b16 %v2016
      %v2083 = vunpack.c.l.b16 %v2017
      %v2084 = vunpack.c.l.b16 %v2018
      %v2085 = vunpack.c.l.b16 %v2019
      %v2086 = vunpack.c.l.b16 %v2020
      %v2087 = vunpack.c.l.b16 %v2021
      %v2088 = vunpack.c.l.b16 %v2022
      %v2089 = vunpack.c.l.b16 %v2023
      %v2090 = vunpack.c.l.b16 %v2024
      %v2091 = vunpack.c.l.b16 %v2025
      %v2092 = vunpack.c.l.b16 %v2026
      %v2093 = vunpack.c.l.b16 %v2027
      %v2094 = vunpack.c.l.b16 %v2028
      %v2095 = vunpack.c.l.b16 %v2029
      %v2096 = vunpack.c.l.b16 %v2030
      %v2097 = vunpack.c.l.b16 %v2031
      %v2098 = vunpack.c.l.b16 %v2032
      %v2099 = vunpack.c.l.b16 %v2033
      %v2100 = vunpack.c.l.b16 %v2034
      %v2101 = vunpack.c.l.b16 %v2035
      %v2102 = vpack.c.b16 %v2071, %v2070
      %v2103 = vpack.c.b16 %v2073, %v2072
      %v2104 = vpack.c.b16 %v2075, %v2074
      %v2105 = vpack.c.b16 %v2077, %v2076
      %v2106 = vpack.c.b16 %v2079, %v2078
      %v2107 = vpack.c.b16 %v2081, %v2080
      %v2108 = vpack.c.b16 %v2083, %v2082
      %v2109 = vpack.c.b16 %v2085, %v2084
      %v2110 = vpack.c.b16 %v2087, %v2086
      %v2111 = vpack.c.b16 %v2089, %v2088
      %v2112 = vpack.c.b16 %v2091, %v2090
      %v2113 = vpack.c.b16 %v2093, %v2092
      %v2114 = vpack.c.b16 %v2095, %v2094
      %v2115 = vpack.c.b16 %v2097, %v2096
      %v2116 = vpack.c.b16 %v2099, %v2098
      %v2117 = vpack.c.b16 %v2101, %v2100
      %v2119 = vsel %vm1257, %v2102, 0
      %v2122 = vsel %vm1257, %v2103, 0
      %v2125 = vsel %vm1257, %v2104, 0
      %v2128 = vsel %vm1257, %v2105, 0
      %v2131 = vsel %vm1257, %v2106, 0
      %v2134 = vsel %vm1257, %v2107, 0
      %v2137 = vsel %vm1257, %v2108, 0
      %v2140 = vsel %vm1257, %v2109, 0
      %v2143 = vsel %vm1257, %v2110, 0
      %v2146 = vsel %vm1257, %v2111, 0
      %v2149 = vsel %vm1257, %v2112, 0
      %v2152 = vsel %vm1257, %v2113, 0
      %v2155 = vsel %vm1257, %v2114, 0
      %v2158 = vsel %vm1257, %v2115, 0
      %v2161 = vsel %vm1257, %v2116, 0
      %v2164 = vsel %vm1257, %v2117, 0
      %v2167 = vsel %vm1306, %v2037, 0
      %2169 = vmatpush.bf16.msra.mxu0 0
      %2170 = vmatpush.bf16.msra.mxu0 0
      %2171 = vmatpush.bf16.msra.mxu0 0
      %2172 = vmatpush.bf16.msra.mxu0 0
      %2173 = vmatpush.bf16.msra.mxu0 0
      %2174 = vmatpush.bf16.msra.mxu0 0
      %2175 = vmatpush.bf16.msra.mxu0 0
      %2176 = vmatpush.bf16.msra.mxu0 %v2167
      %2177 = vmatmul.bf16.gmra.mxu0 %v2119
      %v2178 = vpop.f32.mrf.mxu0
      %v2179 = vadd.f32 0.0, %v2178
      %v2180 = vpop.f32.mrf.mxu0
      %v2181 = vadd.f32 0.0, %v2180
      %2182 = vmatmul.bf16.gmra.mxu0 %v2122
      %v2183 = vpop.f32.mrf.mxu0
      %v2184 = vadd.f32 0.0, %v2183
      %v2185 = vpop.f32.mrf.mxu0
      %v2186 = vadd.f32 0.0, %v2185
      %2187 = vmatmul.bf16.gmra.mxu0 %v2125
      %v2188 = vpop.f32.mrf.mxu0
      %v2189 = vadd.f32 0.0, %v2188
      %v2190 = vpop.f32.mrf.mxu0
      %v2191 = vadd.f32 0.0, %v2190
      %2192 = vmatmul.bf16.gmra.mxu0 %v2128
      %v2193 = vpop.f32.mrf.mxu0
      %v2194 = vadd.f32 0.0, %v2193
      %v2195 = vpop.f32.mrf.mxu0
      %v2196 = vadd.f32 0.0, %v2195
      %2197 = vmatmul.bf16.gmra.mxu0 %v2131
      %v2198 = vpop.f32.mrf.mxu0
      %v2199 = vadd.f32 0.0, %v2198
      %v2200 = vpop.f32.mrf.mxu0
      %v2201 = vadd.f32 0.0, %v2200
      %2202 = vmatmul.bf16.gmra.mxu0 %v2134
      %v2203 = vpop.f32.mrf.mxu0
      %v2204 = vadd.f32 0.0, %v2203
      %v2205 = vpop.f32.mrf.mxu0
      %v2206 = vadd.f32 0.0, %v2205
      %2207 = vmatmul.bf16.gmra.mxu0 %v2137
      %v2208 = vpop.f32.mrf.mxu0
      %v2209 = vadd.f32 0.0, %v2208
      %v2210 = vpop.f32.mrf.mxu0
      %v2211 = vadd.f32 0.0, %v2210
      %2212 = vmatmul.bf16.gmra.mxu0 %v2140
      %v2213 = vpop.f32.mrf.mxu0
      %v2214 = vadd.f32 0.0, %v2213
      %v2215 = vpop.f32.mrf.mxu0
      %v2216 = vadd.f32 0.0, %v2215
      %2217 = vmatmul.bf16.gmra.mxu0 %v2143
      %v2218 = vpop.f32.mrf.mxu0
      %v2219 = vadd.f32 0.0, %v2218
      %v2220 = vpop.f32.mrf.mxu0
      %v2221 = vadd.f32 0.0, %v2220
      %2222 = vmatmul.bf16.gmra.mxu0 %v2146
      %v2223 = vpop.f32.mrf.mxu0
      %v2224 = vadd.f32 0.0, %v2223
      %v2225 = vpop.f32.mrf.mxu0
      %v2226 = vadd.f32 0.0, %v2225
      %2227 = vmatmul.bf16.gmra.mxu0 %v2149
      %v2228 = vpop.f32.mrf.mxu0
      %v2229 = vadd.f32 0.0, %v2228
      %v2230 = vpop.f32.mrf.mxu0
      %v2231 = vadd.f32 0.0, %v2230
      %2232 = vmatmul.bf16.gmra.mxu0 %v2152
      %v2233 = vpop.f32.mrf.mxu0
      %v2234 = vadd.f32 0.0, %v2233
      %v2235 = vpop.f32.mrf.mxu0
      %v2236 = vadd.f32 0.0, %v2235
      %2237 = vmatmul.bf16.gmra.mxu0 %v2155
      %v2238 = vpop.f32.mrf.mxu0
      %v2239 = vadd.f32 0.0, %v2238
      %v2240 = vpop.f32.mrf.mxu0
      %v2241 = vadd.f32 0.0, %v2240
      %2242 = vmatmul.bf16.gmra.mxu0 %v2158
      %v2243 = vpop.f32.mrf.mxu0
      %v2244 = vadd.f32 0.0, %v2243
      %v2245 = vpop.f32.mrf.mxu0
      %v2246 = vadd.f32 0.0, %v2245
      %2247 = vmatmul.bf16.gmra.mxu0 %v2161
      %v2248 = vpop.f32.mrf.mxu0
      %v2249 = vadd.f32 0.0, %v2248
      %v2250 = vpop.f32.mrf.mxu0
      %v2251 = vadd.f32 0.0, %v2250
      %2252 = vmatmul.bf16.gmra.mxu0 %v2164
      %v2253 = vpop.f32.mrf.mxu0
      %v2254 = vadd.f32 0.0, %v2253
      %v2255 = vpop.f32.mrf.mxu0
      %v2256 = vadd.f32 0.0, %v2255
      %2257 = vdwg.mxu0
      %v2258 = vadd.f32 %v1972, %v2179
      %v2259 = vadd.f32 %v1973, %v2181
      %v2260 = vadd.f32 %v1974, %v2184
      %v2261 = vadd.f32 %v1975, %v2186
      %v2262 = vadd.f32 %v1976, %v2189
      %v2263 = vadd.f32 %v1977, %v2191
      %v2264 = vadd.f32 %v1978, %v2194
      %v2265 = vadd.f32 %v1979, %v2196
      %v2266 = vadd.f32 %v1980, %v2199
      %v2267 = vadd.f32 %v1981, %v2201
      %v2268 = vadd.f32 %v1982, %v2204
      %v2269 = vadd.f32 %v1983, %v2206
      %v2270 = vadd.f32 %v1984, %v2209
      %v2271 = vadd.f32 %v1985, %v2211
      %v2272 = vadd.f32 %v1986, %v2214
      %v2273 = vadd.f32 %v1987, %v2216
      %v2274 = vadd.f32 %v1988, %v2219
      %v2275 = vadd.f32 %v1989, %v2221
      %v2276 = vadd.f32 %v1990, %v2224
      %v2277 = vadd.f32 %v1991, %v2226
      %v2278 = vadd.f32 %v1992, %v2229
      %v2279 = vadd.f32 %v1993, %v2231
      %v2280 = vadd.f32 %v1994, %v2234
      %v2281 = vadd.f32 %v1995, %v2236
      %v2282 = vadd.f32 %v1996, %v2239
      %v2283 = vadd.f32 %v1997, %v2241
      %v2284 = vadd.f32 %v1998, %v2244
      %v2285 = vadd.f32 %v1999, %v2246
      %v2286 = vadd.f32 %v2000, %v2249
      %v2287 = vadd.f32 %v2001, %v2251
      %v2288 = vadd.f32 %v2002, %v2254
      %v2289 = vadd.f32 %v2003, %v2256
      %v2290 = vld [vmem:[%s653] sm:$0xf]
      %v2291 = vld [vmem:[%s653 + $0x4] sm:$0xf]
      %v2292 = vld [vmem:[%s653 + $0x8] sm:$0x1]
      %v2293 = vld [vmem:[%s653 + $0xc] sm:$0xf]
      %v2294 = vld [vmem:[%s653 + $0x10] sm:$0xf]
      %v2295 = vld [vmem:[%s653 + $0x14] sm:$0x1]
      %v2296 = vld [vmem:[%s653 + $0x18] sm:$0xf]
      %v2297 = vld [vmem:[%s653 + $0x1c] sm:$0xf]
      %v2298 = vld [vmem:[%s653 + $0x20] sm:$0x1]
      %v2299 = vld [vmem:[%s653 + $0x24] sm:$0xf]
      %v2300 = vld [vmem:[%s653 + $0x28] sm:$0xf]
      %v2301 = vld [vmem:[%s653 + $0x2c] sm:$0x1]
      %v2302 = vld [vmem:[%s653 + $0x30] sm:$0xf]
      %v2303 = vld [vmem:[%s653 + $0x34] sm:$0xf]
      %v2304 = vld [vmem:[%s653 + $0x38] sm:$0x1]
      %v2305 = vld [vmem:[%s653 + $0x3c] sm:$0xf]
      %v2306 = vld [vmem:[%s653 + $0x40] sm:$0xf]
      %v2307 = vld [vmem:[%s653 + $0x44] sm:$0x1]
      %v2308 = vld [vmem:[%s653 + $0x48] sm:$0xf]
      %v2309 = vld [vmem:[%s653 + $0x4c] sm:$0xf]
      %v2310 = vld [vmem:[%s653 + $0x50] sm:$0x1]
      %v2311 = vld [vmem:[%s653 + $0x54] sm:$0xf]
      %v2312 = vld [vmem:[%s653 + $0x58] sm:$0xf]
      %v2313 = vld [vmem:[%s653 + $0x5c] sm:$0x1]
      %v2314 = vld [vmem:[%s653 + $0x60] sm:$0xf]
      %v2315 = vld [vmem:[%s653 + $0x64] sm:$0xf]
      %v2316 = vld [vmem:[%s653 + $0x68] sm:$0x1]
      %v2317 = vld [vmem:[%s653 + $0x6c] sm:$0xf]
      %v2318 = vld [vmem:[%s653 + $0x70] sm:$0xf]
      %v2319 = vld [vmem:[%s653 + $0x74] sm:$0x1]
      %v2320 = vld [vmem:[%s653 + $0x78] sm:$0xf]
      %v2321 = vld [vmem:[%s653 + $0x7c] sm:$0xf]
      %v2322 = vld [vmem:[%s653 + $0x80] sm:$0x1]
      %v2323 = vld [vmem:[%s653 + $0x84] sm:$0xf]
      %v2324 = vld [vmem:[%s653 + $0x88] sm:$0xf]
      %v2325 = vld [vmem:[%s653 + $0x8c] sm:$0x1]
      %v2326 = vld [vmem:[%s653 + $0x90] sm:$0xf]
      %v2327 = vld [vmem:[%s653 + $0x94] sm:$0xf]
      %v2328 = vld [vmem:[%s653 + $0x98] sm:$0x1]
      %v2329 = vld [vmem:[%s653 + $0x9c] sm:$0xf]
      %v2330 = vld [vmem:[%s653 + $0xa0] sm:$0xf]
      %v2331 = vld [vmem:[%s653 + $0xa4] sm:$0x1]
      %v2332 = vld [vmem:[%s653 + $0xa8] sm:$0xf]
      %v2333 = vld [vmem:[%s653 + $0xac] sm:$0xf]
      %v2334 = vld [vmem:[%s653 + $0xb0] sm:$0x1]
      %v2335 = vld [vmem:[%s653 + $0xb4] sm:$0xf]
      %v2336 = vld [vmem:[%s653 + $0xb8] sm:$0xf]
      %v2337 = vld [vmem:[%s653 + $0xbc] sm:$0x1]
      %v2339 = vshrl.u32 %v2290, 16
      %v2341 = vrot.slane %v2339, 4
      %v2342 = vshll.u32 %v2290, 16
      %v2344 = vrot.slane %v2342, 5
      %v2345 = vor.u32 %v2341, %v2344
      %v2346 = vrot.slane %v2345, 4
      %v2348 = vshll.u32 %v2291, 16
      %v2350 = vrot.slane %v2348, 5
      %v2351 = vsel %vm822, %v2346, %v2350
      %v2352 = vshrl.u32 %v2291, 16
      %v2354 = vrot.slane %v2352, 4
      %v2355 = vor.u32 %v2354, %v2350
      %v2356 = vrot.slane %v2355, 4
      %v2358 = vshll.u32 %v2292, 16
      %v2360 = vrot.slane %v2358, 5
      %v2361 = vsel %vm822, %v2356, %v2360
      %v2363 = vshrl.u32 %v2293, 16
      %v2365 = vrot.slane %v2363, 4
      %v2366 = vshll.u32 %v2293, 16
      %v2368 = vrot.slane %v2366, 5
      %v2369 = vor.u32 %v2365, %v2368
      %v2370 = vrot.slane %v2369, 4
      %v2372 = vshll.u32 %v2294, 16
      %v2374 = vrot.slane %v2372, 5
      %v2375 = vsel %vm822, %v2370, %v2374
      %v2376 = vshrl.u32 %v2294, 16
      %v2378 = vrot.slane %v2376, 4
      %v2379 = vor.u32 %v2378, %v2374
      %v2380 = vrot.slane %v2379, 4
      %v2382 = vshll.u32 %v2295, 16
      %v2384 = vrot.slane %v2382, 5
      %v2385 = vsel %vm822, %v2380, %v2384
      %v2387 = vshrl.u32 %v2296, 16
      %v2389 = vrot.slane %v2387, 4
      %v2390 = vshll.u32 %v2296, 16
      %v2392 = vrot.slane %v2390, 5
      %v2393 = vor.u32 %v2389, %v2392
      %v2394 = vrot.slane %v2393, 4
      %v2396 = vshll.u32 %v2297, 16
      %v2398 = vrot.slane %v2396, 5
      %v2399 = vsel %vm822, %v2394, %v2398
      %v2400 = vshrl.u32 %v2297, 16
      %v2402 = vrot.slane %v2400, 4
      %v2403 = vor.u32 %v2402, %v2398
      %v2404 = vrot.slane %v2403, 4
      %v2406 = vshll.u32 %v2298, 16
      %v2408 = vrot.slane %v2406, 5
      %v2409 = vsel %vm822, %v2404, %v2408
      %v2411 = vshrl.u32 %v2299, 16
      %v2413 = vrot.slane %v2411, 4
      %v2414 = vshll.u32 %v2299, 16
      %v2416 = vrot.slane %v2414, 5
      %v2417 = vor.u32 %v2413, %v2416
      %v2418 = vrot.slane %v2417, 4
      %v2420 = vshll.u32 %v2300, 16
      %v2422 = vrot.slane %v2420, 5
      %v2423 = vsel %vm822, %v2418, %v2422
      %v2424 = vshrl.u32 %v2300, 16
      %v2426 = vrot.slane %v2424, 4
      %v2427 = vor.u32 %v2426, %v2422
      %v2428 = vrot.slane %v2427, 4
      %v2430 = vshll.u32 %v2301, 16
      %v2432 = vrot.slane %v2430, 5
      %v2433 = vsel %vm822, %v2428, %v2432
      %v2435 = vshrl.u32 %v2302, 16
      %v2437 = vrot.slane %v2435, 4
      %v2438 = vshll.u32 %v2302, 16
      %v2440 = vrot.slane %v2438, 5
      %v2441 = vor.u32 %v2437, %v2440
      %v2442 = vrot.slane %v2441, 4
      %v2444 = vshll.u32 %v2303, 16
      %v2446 = vrot.slane %v2444, 5
      %v2447 = vsel %vm822, %v2442, %v2446
      %v2448 = vshrl.u32 %v2303, 16
      %v2450 = vrot.slane %v2448, 4
      %v2451 = vor.u32 %v2450, %v2446
      %v2452 = vrot.slane %v2451, 4
      %v2454 = vshll.u32 %v2304, 16
      %v2456 = vrot.slane %v2454, 5
      %v2457 = vsel %vm822, %v2452, %v2456
      %v2459 = vshrl.u32 %v2305, 16
      %v2461 = vrot.slane %v2459, 4
      %v2462 = vshll.u32 %v2305, 16
      %v2464 = vrot.slane %v2462, 5
      %v2465 = vor.u32 %v2461, %v2464
      %v2466 = vrot.slane %v2465, 4
      %v2468 = vshll.u32 %v2306, 16
      %v2470 = vrot.slane %v2468, 5
      %v2471 = vsel %vm822, %v2466, %v2470
      %v2472 = vshrl.u32 %v2306, 16
      %v2474 = vrot.slane %v2472, 4
      %v2475 = vor.u32 %v2474, %v2470
      %v2476 = vrot.slane %v2475, 4
      %v2478 = vshll.u32 %v2307, 16
      %v2480 = vrot.slane %v2478, 5
      %v2481 = vsel %vm822, %v2476, %v2480
      %v2483 = vshrl.u32 %v2308, 16
      %v2485 = vrot.slane %v2483, 4
      %v2486 = vshll.u32 %v2308, 16
      %v2488 = vrot.slane %v2486, 5
      %v2489 = vor.u32 %v2485, %v2488
      %v2490 = vrot.slane %v2489, 4
      %v2492 = vshll.u32 %v2309, 16
      %v2494 = vrot.slane %v2492, 5
      %v2495 = vsel %vm822, %v2490, %v2494
      %v2496 = vshrl.u32 %v2309, 16
      %v2498 = vrot.slane %v2496, 4
      %v2499 = vor.u32 %v2498, %v2494
      %v2500 = vrot.slane %v2499, 4
      %v2502 = vshll.u32 %v2310, 16
      %v2504 = vrot.slane %v2502, 5
      %v2505 = vsel %vm822, %v2500, %v2504
      %v2507 = vshrl.u32 %v2311, 16
      %v2509 = vrot.slane %v2507, 4
      %v2510 = vshll.u32 %v2311, 16
      %v2512 = vrot.slane %v2510, 5
      %v2513 = vor.u32 %v2509, %v2512
      %v2514 = vrot.slane %v2513, 4
      %v2516 = vshll.u32 %v2312, 16
      %v2518 = vrot.slane %v2516, 5
      %v2519 = vsel %vm822, %v2514, %v2518
      %v2520 = vshrl.u32 %v2312, 16
      %v2522 = vrot.slane %v2520, 4
      %v2523 = vor.u32 %v2522, %v2518
      %v2524 = vrot.slane %v2523, 4
      %v2526 = vshll.u32 %v2313, 16
      %v2528 = vrot.slane %v2526, 5
      %v2529 = vsel %vm822, %v2524, %v2528
      %v2531 = vshrl.u32 %v2314, 16
      %v2533 = vrot.slane %v2531, 4
      %v2534 = vshll.u32 %v2314, 16
      %v2536 = vrot.slane %v2534, 5
      %v2537 = vor.u32 %v2533, %v2536
      %v2538 = vrot.slane %v2537, 4
      %v2540 = vshll.u32 %v2315, 16
      %v2542 = vrot.slane %v2540, 5
      %v2543 = vsel %vm822, %v2538, %v2542
      %v2544 = vshrl.u32 %v2315, 16
      %v2546 = vrot.slane %v2544, 4
      %v2547 = vor.u32 %v2546, %v2542
      %v2548 = vrot.slane %v2547, 4
      %v2550 = vshll.u32 %v2316, 16
      %v2552 = vrot.slane %v2550, 5
      %v2553 = vsel %vm822, %v2548, %v2552
      %v2555 = vshrl.u32 %v2317, 16
      %v2557 = vrot.slane %v2555, 4
      %v2558 = vshll.u32 %v2317, 16
      %v2560 = vrot.slane %v2558, 5
      %v2561 = vor.u32 %v2557, %v2560
      %v2562 = vrot.slane %v2561, 4
      %v2564 = vshll.u32 %v2318, 16
      %v2566 = vrot.slane %v2564, 5
      %v2567 = vsel %vm822, %v2562, %v2566
      %v2568 = vshrl.u32 %v2318, 16
      %v2570 = vrot.slane %v2568, 4
      %v2571 = vor.u32 %v2570, %v2566
      %v2572 = vrot.slane %v2571, 4
      %v2574 = vshll.u32 %v2319, 16
      %v2576 = vrot.slane %v2574, 5
      %v2577 = vsel %vm822, %v2572, %v2576
      %v2579 = vshrl.u32 %v2320, 16
      %v2581 = vrot.slane %v2579, 4
      %v2582 = vshll.u32 %v2320, 16
      %v2584 = vrot.slane %v2582, 5
      %v2585 = vor.u32 %v2581, %v2584
      %v2586 = vrot.slane %v2585, 4
      %v2588 = vshll.u32 %v2321, 16
      %v2590 = vrot.slane %v2588, 5
      %v2591 = vsel %vm822, %v2586, %v2590
      %v2592 = vshrl.u32 %v2321, 16
      %v2594 = vrot.slane %v2592, 4
      %v2595 = vor.u32 %v2594, %v2590
      %v2596 = vrot.slane %v2595, 4
      %v2598 = vshll.u32 %v2322, 16
      %v2600 = vrot.slane %v2598, 5
      %v2601 = vsel %vm822, %v2596, %v2600
      %v2603 = vshrl.u32 %v2323, 16
      %v2605 = vrot.slane %v2603, 4
      %v2606 = vshll.u32 %v2323, 16
      %v2608 = vrot.slane %v2606, 5
      %v2609 = vor.u32 %v2605, %v2608
      %v2610 = vrot.slane %v2609, 4
      %v2612 = vshll.u32 %v2324, 16
      %v2614 = vrot.slane %v2612, 5
      %v2615 = vsel %vm822, %v2610, %v2614
      %v2616 = vshrl.u32 %v2324, 16
      %v2618 = vrot.slane %v2616, 4
      %v2619 = vor.u32 %v2618, %v2614
      %v2620 = vrot.slane %v2619, 4
      %v2622 = vshll.u32 %v2325, 16
      %v2624 = vrot.slane %v2622, 5
      %v2625 = vsel %vm822, %v2620, %v2624
      %v2627 = vshrl.u32 %v2326, 16
      %v2629 = vrot.slane %v2627, 4
      %v2630 = vshll.u32 %v2326, 16
      %v2632 = vrot.slane %v2630, 5
      %v2633 = vor.u32 %v2629, %v2632
      %v2634 = vrot.slane %v2633, 4
      %v2636 = vshll.u32 %v2327, 16
      %v2638 = vrot.slane %v2636, 5
      %v2639 = vsel %vm822, %v2634, %v2638
      %v2640 = vshrl.u32 %v2327, 16
      %v2642 = vrot.slane %v2640, 4
      %v2643 = vor.u32 %v2642, %v2638
      %v2644 = vrot.slane %v2643, 4
      %v2646 = vshll.u32 %v2328, 16
      %v2648 = vrot.slane %v2646, 5
      %v2649 = vsel %vm822, %v2644, %v2648
      %v2651 = vshrl.u32 %v2329, 16
      %v2653 = vrot.slane %v2651, 4
      %v2654 = vshll.u32 %v2329, 16
      %v2656 = vrot.slane %v2654, 5
      %v2657 = vor.u32 %v2653, %v2656
      %v2658 = vrot.slane %v2657, 4
      %v2660 = vshll.u32 %v2330, 16
      %v2662 = vrot.slane %v2660, 5
      %v2663 = vsel %vm822, %v2658, %v2662
      %v2664 = vshrl.u32 %v2330, 16
      %v2666 = vrot.slane %v2664, 4
      %v2667 = vor.u32 %v2666, %v2662
      %v2668 = vrot.slane %v2667, 4
      %v2670 = vshll.u32 %v2331, 16
      %v2672 = vrot.slane %v2670, 5
      %v2673 = vsel %vm822, %v2668, %v2672
      %v2675 = vshrl.u32 %v2332, 16
      %v2677 = vrot.slane %v2675, 4
      %v2678 = vshll.u32 %v2332, 16
      %v2680 = vrot.slane %v2678, 5
      %v2681 = vor.u32 %v2677, %v2680
      %v2682 = vrot.slane %v2681, 4
      %v2684 = vshll.u32 %v2333, 16
      %v2686 = vrot.slane %v2684, 5
      %v2687 = vsel %vm822, %v2682, %v2686
      %v2688 = vshrl.u32 %v2333, 16
      %v2690 = vrot.slane %v2688, 4
      %v2691 = vor.u32 %v2690, %v2686
      %v2692 = vrot.slane %v2691, 4
      %v2694 = vshll.u32 %v2334, 16
      %v2696 = vrot.slane %v2694, 5
      %v2697 = vsel %vm822, %v2692, %v2696
      %v2699 = vshrl.u32 %v2335, 16
      %v2701 = vrot.slane %v2699, 4
      %v2702 = vshll.u32 %v2335, 16
      %v2704 = vrot.slane %v2702, 5
      %v2705 = vor.u32 %v2701, %v2704
      %v2706 = vrot.slane %v2705, 4
      %v2708 = vshll.u32 %v2336, 16
      %v2710 = vrot.slane %v2708, 5
      %v2711 = vsel %vm822, %v2706, %v2710
      %v2712 = vshrl.u32 %v2336, 16
      %v2714 = vrot.slane %v2712, 4
      %v2715 = vor.u32 %v2714, %v2710
      %v2716 = vrot.slane %v2715, 4
      %v2718 = vshll.u32 %v2337, 16
      %v2720 = vrot.slane %v2718, 5
      %v2721 = vsel %vm822, %v2716, %v2720
      %s2722 = scalar_lea.vmem %s1, 8
      %v2723 = vld [vmem:[%s2722] sm:$0x3]
      %v2724 = vunpack.c.l.b16 %v2351
      %v2725 = vunpack.c.l.b16 %v2361
      %v2726 = vunpack.c.l.b16 %v2375
      %v2727 = vunpack.c.l.b16 %v2385
      %v2728 = vunpack.c.l.b16 %v2399
      %v2729 = vunpack.c.l.b16 %v2409
      %v2730 = vunpack.c.l.b16 %v2423
      %v2731 = vunpack.c.l.b16 %v2433
      %v2732 = vunpack.c.l.b16 %v2447
      %v2733 = vunpack.c.l.b16 %v2457
      %v2734 = vunpack.c.l.b16 %v2471
      %v2735 = vunpack.c.l.b16 %v2481
      %v2736 = vunpack.c.l.b16 %v2495
      %v2737 = vunpack.c.l.b16 %v2505
      %v2738 = vunpack.c.l.b16 %v2519
      %v2739 = vunpack.c.l.b16 %v2529
      %v2740 = vunpack.c.l.b16 %v2543
      %v2741 = vunpack.c.l.b16 %v2553
      %v2742 = vunpack.c.l.b16 %v2567
      %v2743 = vunpack.c.l.b16 %v2577
      %v2744 = vunpack.c.l.b16 %v2591
      %v2745 = vunpack.c.l.b16 %v2601
      %v2746 = vunpack.c.l.b16 %v2615
      %v2747 = vunpack.c.l.b16 %v2625
      %v2748 = vunpack.c.l.b16 %v2639
      %v2749 = vunpack.c.l.b16 %v2649
      %v2750 = vunpack.c.l.b16 %v2663
      %v2751 = vunpack.c.l.b16 %v2673
      %v2752 = vunpack.c.l.b16 %v2687
      %v2753 = vunpack.c.l.b16 %v2697
      %v2754 = vunpack.c.l.b16 %v2711
      %v2755 = vunpack.c.l.b16 %v2721
      %v2756 = vpack.c.b16 %v2725, %v2724
      %v2757 = vpack.c.b16 %v2727, %v2726
      %v2758 = vpack.c.b16 %v2729, %v2728
      %v2759 = vpack.c.b16 %v2731, %v2730
      %v2760 = vpack.c.b16 %v2733, %v2732
      %v2761 = vpack.c.b16 %v2735, %v2734
      %v2762 = vpack.c.b16 %v2737, %v2736
      %v2763 = vpack.c.b16 %v2739, %v2738
      %v2764 = vpack.c.b16 %v2741, %v2740
      %v2765 = vpack.c.b16 %v2743, %v2742
      %v2766 = vpack.c.b16 %v2745, %v2744
      %v2767 = vpack.c.b16 %v2747, %v2746
      %v2768 = vpack.c.b16 %v2749, %v2748
      %v2769 = vpack.c.b16 %v2751, %v2750
      %v2770 = vpack.c.b16 %v2753, %v2752
      %v2771 = vpack.c.b16 %v2755, %v2754
      %v2773 = vsel %vm1257, %v2756, 0
      %v2776 = vsel %vm1257, %v2757, 0
      %v2779 = vsel %vm1257, %v2758, 0
      %v2782 = vsel %vm1257, %v2759, 0
      %v2785 = vsel %vm1257, %v2760, 0
      %v2788 = vsel %vm1257, %v2761, 0
      %v2791 = vsel %vm1257, %v2762, 0
      %v2794 = vsel %vm1257, %v2763, 0
      %v2797 = vsel %vm1257, %v2764, 0
      %v2800 = vsel %vm1257, %v2765, 0
      %v2803 = vsel %vm1257, %v2766, 0
      %v2806 = vsel %vm1257, %v2767, 0
      %v2809 = vsel %vm1257, %v2768, 0
      %v2812 = vsel %vm1257, %v2769, 0
      %v2815 = vsel %vm1257, %v2770, 0
      %v2818 = vsel %vm1257, %v2771, 0
      %v2821 = vsel %vm1306, %v2723, 0
      %2823 = vmatpush.bf16.msra.mxu0 0
      %2824 = vmatpush.bf16.msra.mxu0 0
      %2825 = vmatpush.bf16.msra.mxu0 0
      %2826 = vmatpush.bf16.msra.mxu0 0
      %2827 = vmatpush.bf16.msra.mxu0 0
      %2828 = vmatpush.bf16.msra.mxu0 0
      %2829 = vmatpush.bf16.msra.mxu0 0
      %2830 = vmatpush.bf16.msra.mxu0 %v2821
      %2831 = vmatmul.bf16.gmra.mxu0 %v2773
      %v2832 = vpop.f32.mrf.mxu0
      %v2833 = vadd.f32 0.0, %v2832
      %v2834 = vpop.f32.mrf.mxu0
      %v2835 = vadd.f32 0.0, %v2834
      %2836 = vmatmul.bf16.gmra.mxu0 %v2776
      %v2837 = vpop.f32.mrf.mxu0
      %v2838 = vadd.f32 0.0, %v2837
      %v2839 = vpop.f32.mrf.mxu0
      %v2840 = vadd.f32 0.0, %v2839
      %2841 = vmatmul.bf16.gmra.mxu0 %v2779
      %v2842 = vpop.f32.mrf.mxu0
      %v2843 = vadd.f32 0.0, %v2842
      %v2844 = vpop.f32.mrf.mxu0
      %v2845 = vadd.f32 0.0, %v2844
      %2846 = vmatmul.bf16.gmra.mxu0 %v2782
      %v2847 = vpop.f32.mrf.mxu0
      %v2848 = vadd.f32 0.0, %v2847
      %v2849 = vpop.f32.mrf.mxu0
      %v2850 = vadd.f32 0.0, %v2849
      %2851 = vmatmul.bf16.gmra.mxu0 %v2785
      %v2852 = vpop.f32.mrf.mxu0
      %v2853 = vadd.f32 0.0, %v2852
      %v2854 = vpop.f32.mrf.mxu0
      %v2855 = vadd.f32 0.0, %v2854
      %2856 = vmatmul.bf16.gmra.mxu0 %v2788
      %v2857 = vpop.f32.mrf.mxu0
      %v2858 = vadd.f32 0.0, %v2857
      %v2859 = vpop.f32.mrf.mxu0
      %v2860 = vadd.f32 0.0, %v2859
      %2861 = vmatmul.bf16.gmra.mxu0 %v2791
      %v2862 = vpop.f32.mrf.mxu0
      %v2863 = vadd.f32 0.0, %v2862
      %v2864 = vpop.f32.mrf.mxu0
      %v2865 = vadd.f32 0.0, %v2864
      %2866 = vmatmul.bf16.gmra.mxu0 %v2794
      %v2867 = vpop.f32.mrf.mxu0
      %v2868 = vadd.f32 0.0, %v2867
      %v2869 = vpop.f32.mrf.mxu0
      %v2870 = vadd.f32 0.0, %v2869
      %2871 = vmatmul.bf16.gmra.mxu0 %v2797
      %v2872 = vpop.f32.mrf.mxu0
      %v2873 = vadd.f32 0.0, %v2872
      %v2874 = vpop.f32.mrf.mxu0
      %v2875 = vadd.f32 0.0, %v2874
      %2876 = vmatmul.bf16.gmra.mxu0 %v2800
      %v2877 = vpop.f32.mrf.mxu0
      %v2878 = vadd.f32 0.0, %v2877
      %v2879 = vpop.f32.mrf.mxu0
      %v2880 = vadd.f32 0.0, %v2879
      %2881 = vmatmul.bf16.gmra.mxu0 %v2803
      %v2882 = vpop.f32.mrf.mxu0
      %v2883 = vadd.f32 0.0, %v2882
      %v2884 = vpop.f32.mrf.mxu0
      %v2885 = vadd.f32 0.0, %v2884
      %2886 = vmatmul.bf16.gmra.mxu0 %v2806
      %v2887 = vpop.f32.mrf.mxu0
      %v2888 = vadd.f32 0.0, %v2887
      %v2889 = vpop.f32.mrf.mxu0
      %v2890 = vadd.f32 0.0, %v2889
      %2891 = vmatmul.bf16.gmra.mxu0 %v2809
      %v2892 = vpop.f32.mrf.mxu0
      %v2893 = vadd.f32 0.0, %v2892
      %v2894 = vpop.f32.mrf.mxu0
      %v2895 = vadd.f32 0.0, %v2894
      %2896 = vmatmul.bf16.gmra.mxu0 %v2812
      %v2897 = vpop.f32.mrf.mxu0
      %v2898 = vadd.f32 0.0, %v2897
      %v2899 = vpop.f32.mrf.mxu0
      %v2900 = vadd.f32 0.0, %v2899
      %2901 = vmatmul.bf16.gmra.mxu0 %v2815
      %v2902 = vpop.f32.mrf.mxu0
      %v2903 = vadd.f32 0.0, %v2902
      %v2904 = vpop.f32.mrf.mxu0
      %v2905 = vadd.f32 0.0, %v2904
      %2906 = vmatmul.bf16.gmra.mxu0 %v2818
      %v2907 = vpop.f32.mrf.mxu0
      %v2908 = vadd.f32 0.0, %v2907
      %v2909 = vpop.f32.mrf.mxu0
      %v2910 = vadd.f32 0.0, %v2909
      %2911 = vdwg.mxu0
      %v2912 = vadd.f32 %v2258, %v2833
      %v2913 = vadd.f32 %v2259, %v2835
      %v2914 = vadd.f32 %v2260, %v2838
      %v2915 = vadd.f32 %v2261, %v2840
      %v2916 = vadd.f32 %v2262, %v2843
      %v2917 = vadd.f32 %v2263, %v2845
      %v2918 = vadd.f32 %v2264, %v2848
      %v2919 = vadd.f32 %v2265, %v2850
      %v2920 = vadd.f32 %v2266, %v2853
      %v2921 = vadd.f32 %v2267, %v2855
      %v2922 = vadd.f32 %v2268, %v2858
      %v2923 = vadd.f32 %v2269, %v2860
      %v2924 = vadd.f32 %v2270, %v2863
      %v2925 = vadd.f32 %v2271, %v2865
      %v2926 = vadd.f32 %v2272, %v2868
      %v2927 = vadd.f32 %v2273, %v2870
      %v2928 = vadd.f32 %v2274, %v2873
      %v2929 = vadd.f32 %v2275, %v2875
      %v2930 = vadd.f32 %v2276, %v2878
      %v2931 = vadd.f32 %v2277, %v2880
      %v2932 = vadd.f32 %v2278, %v2883
      %v2933 = vadd.f32 %v2279, %v2885
      %v2934 = vadd.f32 %v2280, %v2888
      %v2935 = vadd.f32 %v2281, %v2890
      %v2936 = vadd.f32 %v2282, %v2893
      %v2937 = vadd.f32 %v2283, %v2895
      %v2938 = vadd.f32 %v2284, %v2898
      %v2939 = vadd.f32 %v2285, %v2900
      %v2940 = vadd.f32 %v2286, %v2903
      %v2941 = vadd.f32 %v2287, %v2905
      %v2942 = vadd.f32 %v2288, %v2908
      %v2943 = vadd.f32 %v2289, %v2910
      %v2944 = vld [vmem:[%s653] sm:$0xe]
      %v2945 = vld [vmem:[%s653 + $0xc] sm:$0xe]
      %v2946 = vld [vmem:[%s653 + $0x18] sm:$0xe]
      %v2947 = vld [vmem:[%s653 + $0x24] sm:$0xe]
      %v2948 = vld [vmem:[%s653 + $0x30] sm:$0xe]
      %v2949 = vld [vmem:[%s653 + $0x3c] sm:$0xe]
      %v2950 = vld [vmem:[%s653 + $0x48] sm:$0xe]
      %v2951 = vld [vmem:[%s653 + $0x54] sm:$0xe]
      %v2952 = vld [vmem:[%s653 + $0x60] sm:$0xe]
      %v2953 = vld [vmem:[%s653 + $0x6c] sm:$0xe]
      %v2954 = vld [vmem:[%s653 + $0x78] sm:$0xe]
      %v2955 = vld [vmem:[%s653 + $0x84] sm:$0xe]
      %v2956 = vld [vmem:[%s653 + $0x90] sm:$0xe]
      %v2957 = vld [vmem:[%s653 + $0x9c] sm:$0xe]
      %v2958 = vld [vmem:[%s653 + $0xa8] sm:$0xe]
      %v2959 = vld [vmem:[%s653 + $0xb4] sm:$0xe]
      %v3008 = vrot.slane %v2944, 5
      %v3009 = vrot.slane %v3008, 4
      %v3010 = vrot.slane %v2291, 5
      %v3011 = vsel %vm1669, %v3009, %v3010
      %v3012 = vrot.slane %v3010, 4
      %v3013 = vrot.slane %v2292, 5
      %v3014 = vsel %vm1669, %v3012, %v3013
      %v3015 = vrot.slane %v2945, 5
      %v3016 = vrot.slane %v3015, 4
      %v3017 = vrot.slane %v2294, 5
      %v3018 = vsel %vm1669, %v3016, %v3017
      %v3019 = vrot.slane %v3017, 4
      %v3020 = vrot.slane %v2295, 5
      %v3021 = vsel %vm1669, %v3019, %v3020
      %v3022 = vrot.slane %v2946, 5
      %v3023 = vrot.slane %v3022, 4
      %v3024 = vrot.slane %v2297, 5
      %v3025 = vsel %vm1669, %v3023, %v3024
      %v3026 = vrot.slane %v3024, 4
      %v3027 = vrot.slane %v2298, 5
      %v3028 = vsel %vm1669, %v3026, %v3027
      %v3029 = vrot.slane %v2947, 5
      %v3030 = vrot.slane %v3029, 4
      %v3031 = vrot.slane %v2300, 5
      %v3032 = vsel %vm1669, %v3030, %v3031
      %v3033 = vrot.slane %v3031, 4
      %v3034 = vrot.slane %v2301, 5
      %v3035 = vsel %vm1669, %v3033, %v3034
      %v3036 = vrot.slane %v2948, 5
      %v3037 = vrot.slane %v3036, 4
      %v3038 = vrot.slane %v2303, 5
      %v3039 = vsel %vm1669, %v3037, %v3038
      %v3040 = vrot.slane %v3038, 4
      %v3041 = vrot.slane %v2304, 5
      %v3042 = vsel %vm1669, %v3040, %v3041
      %v3043 = vrot.slane %v2949, 5
      %v3044 = vrot.slane %v3043, 4
      %v3045 = vrot.slane %v2306, 5
      %v3046 = vsel %vm1669, %v3044, %v3045
      %v3047 = vrot.slane %v3045, 4
      %v3048 = vrot.slane %v2307, 5
      %v3049 = vsel %vm1669, %v3047, %v3048
      %v3050 = vrot.slane %v2950, 5
      %v3051 = vrot.slane %v3050, 4
      %v3052 = vrot.slane %v2309, 5
      %v3053 = vsel %vm1669, %v3051, %v3052
      %v3054 = vrot.slane %v3052, 4
      %v3055 = vrot.slane %v2310, 5
      %v3056 = vsel %vm1669, %v3054, %v3055
      %v3057 = vrot.slane %v2951, 5
      %v3058 = vrot.slane %v3057, 4
      %v3059 = vrot.slane %v2312, 5
      %v3060 = vsel %vm1669, %v3058, %v3059
      %v3061 = vrot.slane %v3059, 4
      %v3062 = vrot.slane %v2313, 5
      %v3063 = vsel %vm1669, %v3061, %v3062
      %v3064 = vrot.slane %v2952, 5
      %v3065 = vrot.slane %v3064, 4
      %v3066 = vrot.slane %v2315, 5
      %v3067 = vsel %vm1669, %v3065, %v3066
      %v3068 = vrot.slane %v3066, 4
      %v3069 = vrot.slane %v2316, 5
      %v3070 = vsel %vm1669, %v3068, %v3069
      %v3071 = vrot.slane %v2953, 5
      %v3072 = vrot.slane %v3071, 4
      %v3073 = vrot.slane %v2318, 5
      %v3074 = vsel %vm1669, %v3072, %v3073
      %v3075 = vrot.slane %v3073, 4
      %v3076 = vrot.slane %v2319, 5
      %v3077 = vsel %vm1669, %v3075, %v3076
      %v3078 = vrot.slane %v2954, 5
      %v3079 = vrot.slane %v3078, 4
      %v3080 = vrot.slane %v2321, 5
      %v3081 = vsel %vm1669, %v3079, %v3080
      %v3082 = vrot.slane %v3080, 4
      %v3083 = vrot.slane %v2322, 5
      %v3084 = vsel %vm1669, %v3082, %v3083
      %v3085 = vrot.slane %v2955, 5
      %v3086 = vrot.slane %v3085, 4
      %v3087 = vrot.slane %v2324, 5
      %v3088 = vsel %vm1669, %v3086, %v3087
      %v3089 = vrot.slane %v3087, 4
      %v3090 = vrot.slane %v2325, 5
      %v3091 = vsel %vm1669, %v3089, %v3090
      %v3092 = vrot.slane %v2956, 5
      %v3093 = vrot.slane %v3092, 4
      %v3094 = vrot.slane %v2327, 5
      %v3095 = vsel %vm1669, %v3093, %v3094
      %v3096 = vrot.slane %v3094, 4
      %v3097 = vrot.slane %v2328, 5
      %v3098 = vsel %vm1669, %v3096, %v3097
      %v3099 = vrot.slane %v2957, 5
      %v3100 = vrot.slane %v3099, 4
      %v3101 = vrot.slane %v2330, 5
      %v3102 = vsel %vm1669, %v3100, %v3101
      %v3103 = vrot.slane %v3101, 4
      %v3104 = vrot.slane %v2331, 5
      %v3105 = vsel %vm1669, %v3103, %v3104
      %v3106 = vrot.slane %v2958, 5
      %v3107 = vrot.slane %v3106, 4
      %v3108 = vrot.slane %v2333, 5
      %v3109 = vsel %vm1669, %v3107, %v3108
      %v3110 = vrot.slane %v3108, 4
      %v3111 = vrot.slane %v2334, 5
      %v3112 = vsel %vm1669, %v3110, %v3111
      %v3113 = vrot.slane %v2959, 5
      %v3114 = vrot.slane %v3113, 4
      %v3115 = vrot.slane %v2336, 5
      %v3116 = vsel %vm1669, %v3114, %v3115
      %v3117 = vrot.slane %v3115, 4
      %v3118 = vrot.slane %v2337, 5
      %v3119 = vsel %vm1669, %v3117, %v3118
      %s3120 = scalar_lea.vmem %s1, 10
      %v3121 = vld [vmem:[%s3120] sm:$0x3]
      %v3122 = vunpack.c.l.b16 %v3011
      %v3123 = vunpack.c.l.b16 %v3014
      %v3124 = vunpack.c.l.b16 %v3018
      %v3125 = vunpack.c.l.b16 %v3021
      %v3126 = vunpack.c.l.b16 %v3025
      %v3127 = vunpack.c.l.b16 %v3028
      %v3128 = vunpack.c.l.b16 %v3032
      %v3129 = vunpack.c.l.b16 %v3035
      %v3130 = vunpack.c.l.b16 %v3039
      %v3131 = vunpack.c.l.b16 %v3042
      %v3132 = vunpack.c.l.b16 %v3046
      %v3133 = vunpack.c.l.b16 %v3049
      %v3134 = vunpack.c.l.b16 %v3053
      %v3135 = vunpack.c.l.b16 %v3056
      %v3136 = vunpack.c.l.b16 %v3060
      %v3137 = vunpack.c.l.b16 %v3063
      %v3138 = vunpack.c.l.b16 %v3067
      %v3139 = vunpack.c.l.b16 %v3070
      %v3140 = vunpack.c.l.b16 %v3074
      %v3141 = vunpack.c.l.b16 %v3077
      %v3142 = vunpack.c.l.b16 %v3081
      %v3143 = vunpack.c.l.b16 %v3084
      %v3144 = vunpack.c.l.b16 %v3088
      %v3145 = vunpack.c.l.b16 %v3091
      %v3146 = vunpack.c.l.b16 %v3095
      %v3147 = vunpack.c.l.b16 %v3098
      %v3148 = vunpack.c.l.b16 %v3102
      %v3149 = vunpack.c.l.b16 %v3105
      %v3150 = vunpack.c.l.b16 %v3109
      %v3151 = vunpack.c.l.b16 %v3112
      %v3152 = vunpack.c.l.b16 %v3116
      %v3153 = vunpack.c.l.b16 %v3119
      %v3154 = vpack.c.b16 %v3123, %v3122
      %v3155 = vpack.c.b16 %v3125, %v3124
      %v3156 = vpack.c.b16 %v3127, %v3126
      %v3157 = vpack.c.b16 %v3129, %v3128
      %v3158 = vpack.c.b16 %v3131, %v3130
      %v3159 = vpack.c.b16 %v3133, %v3132
      %v3160 = vpack.c.b16 %v3135, %v3134
      %v3161 = vpack.c.b16 %v3137, %v3136
      %v3162 = vpack.c.b16 %v3139, %v3138
      %v3163 = vpack.c.b16 %v3141, %v3140
      %v3164 = vpack.c.b16 %v3143, %v3142
      %v3165 = vpack.c.b16 %v3145, %v3144
      %v3166 = vpack.c.b16 %v3147, %v3146
      %v3167 = vpack.c.b16 %v3149, %v3148
      %v3168 = vpack.c.b16 %v3151, %v3150
      %v3169 = vpack.c.b16 %v3153, %v3152
      %v3171 = vsel %vm1257, %v3154, 0
      %v3174 = vsel %vm1257, %v3155, 0
      %v3177 = vsel %vm1257, %v3156, 0
      %v3180 = vsel %vm1257, %v3157, 0
      %v3183 = vsel %vm1257, %v3158, 0
      %v3186 = vsel %vm1257, %v3159, 0
      %v3189 = vsel %vm1257, %v3160, 0
      %v3192 = vsel %vm1257, %v3161, 0
      %v3195 = vsel %vm1257, %v3162, 0
      %v3198 = vsel %vm1257, %v3163, 0
      %v3201 = vsel %vm1257, %v3164, 0
      %v3204 = vsel %vm1257, %v3165, 0
      %v3207 = vsel %vm1257, %v3166, 0
      %v3210 = vsel %vm1257, %v3167, 0
      %v3213 = vsel %vm1257, %v3168, 0
      %v3216 = vsel %vm1257, %v3169, 0
      %v3219 = vsel %vm1306, %v3121, 0
      %3221 = vmatpush.bf16.msra.mxu0 0
      %3222 = vmatpush.bf16.msra.mxu0 0
      %3223 = vmatpush.bf16.msra.mxu0 0
      %3224 = vmatpush.bf16.msra.mxu0 0
      %3225 = vmatpush.bf16.msra.mxu0 0
      %3226 = vmatpush.bf16.msra.mxu0 0
      %3227 = vmatpush.bf16.msra.mxu0 0
      %3228 = vmatpush.bf16.msra.mxu0 %v3219
      %3229 = vmatmul.bf16.gmra.mxu0 %v3171
      %v3230 = vpop.f32.mrf.mxu0
      %v3231 = vadd.f32 0.0, %v3230
      %v3232 = vpop.f32.mrf.mxu0
      %v3233 = vadd.f32 0.0, %v3232
      %3234 = vmatmul.bf16.gmra.mxu0 %v3174
      %v3235 = vpop.f32.mrf.mxu0
      %v3236 = vadd.f32 0.0, %v3235
      %v3237 = vpop.f32.mrf.mxu0
      %v3238 = vadd.f32 0.0, %v3237
      %3239 = vmatmul.bf16.gmra.mxu0 %v3177
      %v3240 = vpop.f32.mrf.mxu0
      %v3241 = vadd.f32 0.0, %v3240
      %v3242 = vpop.f32.mrf.mxu0
      %v3243 = vadd.f32 0.0, %v3242
      %3244 = vmatmul.bf16.gmra.mxu0 %v3180
      %v3245 = vpop.f32.mrf.mxu0
      %v3246 = vadd.f32 0.0, %v3245
      %v3247 = vpop.f32.mrf.mxu0
      %v3248 = vadd.f32 0.0, %v3247
      %3249 = vmatmul.bf16.gmra.mxu0 %v3183
      %v3250 = vpop.f32.mrf.mxu0
      %v3251 = vadd.f32 0.0, %v3250
      %v3252 = vpop.f32.mrf.mxu0
      %v3253 = vadd.f32 0.0, %v3252
      %3254 = vmatmul.bf16.gmra.mxu0 %v3186
      %v3255 = vpop.f32.mrf.mxu0
      %v3256 = vadd.f32 0.0, %v3255
      %v3257 = vpop.f32.mrf.mxu0
      %v3258 = vadd.f32 0.0, %v3257
      %3259 = vmatmul.bf16.gmra.mxu0 %v3189
      %v3260 = vpop.f32.mrf.mxu0
      %v3261 = vadd.f32 0.0, %v3260
      %v3262 = vpop.f32.mrf.mxu0
      %v3263 = vadd.f32 0.0, %v3262
      %3264 = vmatmul.bf16.gmra.mxu0 %v3192
      %v3265 = vpop.f32.mrf.mxu0
      %v3266 = vadd.f32 0.0, %v3265
      %v3267 = vpop.f32.mrf.mxu0
      %v3268 = vadd.f32 0.0, %v3267
      %3269 = vmatmul.bf16.gmra.mxu0 %v3195
      %v3270 = vpop.f32.mrf.mxu0
      %v3271 = vadd.f32 0.0, %v3270
      %v3272 = vpop.f32.mrf.mxu0
      %v3273 = vadd.f32 0.0, %v3272
      %3274 = vmatmul.bf16.gmra.mxu0 %v3198
      %v3275 = vpop.f32.mrf.mxu0
      %v3276 = vadd.f32 0.0, %v3275
      %v3277 = vpop.f32.mrf.mxu0
      %v3278 = vadd.f32 0.0, %v3277
      %3279 = vmatmul.bf16.gmra.mxu0 %v3201
      %v3280 = vpop.f32.mrf.mxu0
      %v3281 = vadd.f32 0.0, %v3280
      %v3282 = vpop.f32.mrf.mxu0
      %v3283 = vadd.f32 0.0, %v3282
      %3284 = vmatmul.bf16.gmra.mxu0 %v3204
      %v3285 = vpop.f32.mrf.mxu0
      %v3286 = vadd.f32 0.0, %v3285
      %v3287 = vpop.f32.mrf.mxu0
      %v3288 = vadd.f32 0.0, %v3287
      %3289 = vmatmul.bf16.gmra.mxu0 %v3207
      %v3290 = vpop.f32.mrf.mxu0
      %v3291 = vadd.f32 0.0, %v3290
      %v3292 = vpop.f32.mrf.mxu0
      %v3293 = vadd.f32 0.0, %v3292
      %3294 = vmatmul.bf16.gmra.mxu0 %v3210
      %v3295 = vpop.f32.mrf.mxu0
      %v3296 = vadd.f32 0.0, %v3295
      %v3297 = vpop.f32.mrf.mxu0
      %v3298 = vadd.f32 0.0, %v3297
      %3299 = vmatmul.bf16.gmra.mxu0 %v3213
      %v3300 = vpop.f32.mrf.mxu0
      %v3301 = vadd.f32 0.0, %v3300
      %v3302 = vpop.f32.mrf.mxu0
      %v3303 = vadd.f32 0.0, %v3302
      %3304 = vmatmul.bf16.gmra.mxu0 %v3216
      %v3305 = vpop.f32.mrf.mxu0
      %v3306 = vadd.f32 0.0, %v3305
      %v3307 = vpop.f32.mrf.mxu0
      %v3308 = vadd.f32 0.0, %v3307
      %3309 = vdwg.mxu0
      %v3310 = vadd.f32 %v2912, %v3231
      %v3311 = vadd.f32 %v2913, %v3233
      %v3312 = vadd.f32 %v2914, %v3236
      %v3313 = vadd.f32 %v2915, %v3238
      %v3314 = vadd.f32 %v2916, %v3241
      %v3315 = vadd.f32 %v2917, %v3243
      %v3316 = vadd.f32 %v2918, %v3246
      %v3317 = vadd.f32 %v2919, %v3248
      %v3318 = vadd.f32 %v2920, %v3251
      %v3319 = vadd.f32 %v2921, %v3253
      %v3320 = vadd.f32 %v2922, %v3256
      %v3321 = vadd.f32 %v2923, %v3258
      %v3322 = vadd.f32 %v2924, %v3261
      %v3323 = vadd.f32 %v2925, %v3263
      %v3324 = vadd.f32 %v2926, %v3266
      %v3325 = vadd.f32 %v2927, %v3268
      %v3326 = vadd.f32 %v2928, %v3271
      %v3327 = vadd.f32 %v2929, %v3273
      %v3328 = vadd.f32 %v2930, %v3276
      %v3329 = vadd.f32 %v2931, %v3278
      %v3330 = vadd.f32 %v2932, %v3281
      %v3331 = vadd.f32 %v2933, %v3283
      %v3332 = vadd.f32 %v2934, %v3286
      %v3333 = vadd.f32 %v2935, %v3288
      %v3334 = vadd.f32 %v2936, %v3291
      %v3335 = vadd.f32 %v2937, %v3293
      %v3336 = vadd.f32 %v2938, %v3296
      %v3337 = vadd.f32 %v2939, %v3298
      %v3338 = vadd.f32 %v2940, %v3301
      %v3339 = vadd.f32 %v2941, %v3303
      %v3340 = vadd.f32 %v2942, %v3306
      %v3341 = vadd.f32 %v2943, %v3308
      %s3342 = scalar_lea.vmem [#allocation2], 24
      %v3343 = vld [vmem:[%s3342] sm:$0xf]
      %v3344 = vld [vmem:[%s3342 + $0x4] sm:$0xf]
      %v3345 = vld [vmem:[%s3342 + $0xc] sm:$0xf]
      %v3346 = vld [vmem:[%s3342 + $0x10] sm:$0xf]
      %v3347 = vld [vmem:[%s3342 + $0x18] sm:$0xf]
      %v3348 = vld [vmem:[%s3342 + $0x1c] sm:$0xf]
      %v3349 = vld [vmem:[%s3342 + $0x24] sm:$0xf]
      %v3350 = vld [vmem:[%s3342 + $0x28] sm:$0xf]
      %v3351 = vld [vmem:[%s3342 + $0x30] sm:$0xf]
      %v3352 = vld [vmem:[%s3342 + $0x34] sm:$0xf]
      %v3353 = vld [vmem:[%s3342 + $0x3c] sm:$0xf]
      %v3354 = vld [vmem:[%s3342 + $0x40] sm:$0xf]
      %v3355 = vld [vmem:[%s3342 + $0x48] sm:$0xf]
      %v3356 = vld [vmem:[%s3342 + $0x4c] sm:$0xf]
      %v3357 = vld [vmem:[%s3342 + $0x54] sm:$0xf]
      %v3358 = vld [vmem:[%s3342 + $0x58] sm:$0xf]
      %v3359 = vld [vmem:[%s3342 + $0x60] sm:$0xf]
      %v3360 = vld [vmem:[%s3342 + $0x64] sm:$0xf]
      %v3361 = vld [vmem:[%s3342 + $0x6c] sm:$0xf]
      %v3362 = vld [vmem:[%s3342 + $0x70] sm:$0xf]
      %v3363 = vld [vmem:[%s3342 + $0x78] sm:$0xf]
      %v3364 = vld [vmem:[%s3342 + $0x7c] sm:$0xf]
      %v3365 = vld [vmem:[%s3342 + $0x84] sm:$0xf]
      %v3366 = vld [vmem:[%s3342 + $0x88] sm:$0xf]
      %v3367 = vld [vmem:[%s3342 + $0x90] sm:$0xf]
      %v3368 = vld [vmem:[%s3342 + $0x94] sm:$0xf]
      %v3369 = vld [vmem:[%s3342 + $0x9c] sm:$0xf]
      %v3370 = vld [vmem:[%s3342 + $0xa0] sm:$0xf]
      %v3371 = vld [vmem:[%s3342 + $0xa8] sm:$0xf]
      %v3372 = vld [vmem:[%s3342 + $0xac] sm:$0xf]
      %v3373 = vld [vmem:[%s3342 + $0xb4] sm:$0xf]
      %v3374 = vld [vmem:[%s3342 + $0xb8] sm:$0xf]
      %s3375 = scalar_lea.vmem %s1, 12
      %v3376 = vld [vmem:[%s3375] sm:$0x3]
      %v3409 = vunpack.c.l.b16 %v3343
      %v3410 = vunpack.c.l.b16 %v3344
      %v3411 = vunpack.c.l.b16 %v3345
      %v3412 = vunpack.c.l.b16 %v3346
      %v3413 = vunpack.c.l.b16 %v3347
      %v3414 = vunpack.c.l.b16 %v3348
      %v3415 = vunpack.c.l.b16 %v3349
      %v3416 = vunpack.c.l.b16 %v3350
      %v3417 = vunpack.c.l.b16 %v3351
      %v3418 = vunpack.c.l.b16 %v3352
      %v3419 = vunpack.c.l.b16 %v3353
      %v3420 = vunpack.c.l.b16 %v3354
      %v3421 = vunpack.c.l.b16 %v3355
      %v3422 = vunpack.c.l.b16 %v3356
      %v3423 = vunpack.c.l.b16 %v3357
      %v3424 = vunpack.c.l.b16 %v3358
      %v3425 = vunpack.c.l.b16 %v3359
      %v3426 = vunpack.c.l.b16 %v3360
      %v3427 = vunpack.c.l.b16 %v3361
      %v3428 = vunpack.c.l.b16 %v3362
      %v3429 = vunpack.c.l.b16 %v3363
      %v3430 = vunpack.c.l.b16 %v3364
      %v3431 = vunpack.c.l.b16 %v3365
      %v3432 = vunpack.c.l.b16 %v3366
      %v3433 = vunpack.c.l.b16 %v3367
      %v3434 = vunpack.c.l.b16 %v3368
      %v3435 = vunpack.c.l.b16 %v3369
      %v3436 = vunpack.c.l.b16 %v3370
      %v3437 = vunpack.c.l.b16 %v3371
      %v3438 = vunpack.c.l.b16 %v3372
      %v3439 = vunpack.c.l.b16 %v3373
      %v3440 = vunpack.c.l.b16 %v3374
      %v3441 = vpack.c.b16 %v3410, %v3409
      %v3442 = vpack.c.b16 %v3412, %v3411
      %v3443 = vpack.c.b16 %v3414, %v3413
      %v3444 = vpack.c.b16 %v3416, %v3415
      %v3445 = vpack.c.b16 %v3418, %v3417
      %v3446 = vpack.c.b16 %v3420, %v3419
      %v3447 = vpack.c.b16 %v3422, %v3421
      %v3448 = vpack.c.b16 %v3424, %v3423
      %v3449 = vpack.c.b16 %v3426, %v3425
      %v3450 = vpack.c.b16 %v3428, %v3427
      %v3451 = vpack.c.b16 %v3430, %v3429
      %v3452 = vpack.c.b16 %v3432, %v3431
      %v3453 = vpack.c.b16 %v3434, %v3433
      %v3454 = vpack.c.b16 %v3436, %v3435
      %v3455 = vpack.c.b16 %v3438, %v3437
      %v3456 = vpack.c.b16 %v3440, %v3439
      %v3458 = vsel %vm1257, %v3441, 0
      %v3461 = vsel %vm1257, %v3442, 0
      %v3464 = vsel %vm1257, %v3443, 0
      %v3467 = vsel %vm1257, %v3444, 0
      %v3470 = vsel %vm1257, %v3445, 0
      %v3473 = vsel %vm1257, %v3446, 0
      %v3476 = vsel %vm1257, %v3447, 0
      %v3479 = vsel %vm1257, %v3448, 0
      %v3482 = vsel %vm1257, %v3449, 0
      %v3485 = vsel %vm1257, %v3450, 0
      %v3488 = vsel %vm1257, %v3451, 0
      %v3491 = vsel %vm1257, %v3452, 0
      %v3494 = vsel %vm1257, %v3453, 0
      %v3497 = vsel %vm1257, %v3454, 0
      %v3500 = vsel %vm1257, %v3455, 0
      %v3503 = vsel %vm1257, %v3456, 0
      %v3506 = vsel %vm1306, %v3376, 0
      %3508 = vmatpush.bf16.msra.mxu0 0
      %3509 = vmatpush.bf16.msra.mxu0 0
      %3510 = vmatpush.bf16.msra.mxu0 0
      %3511 = vmatpush.bf16.msra.mxu0 0
      %3512 = vmatpush.bf16.msra.mxu0 0
      %3513 = vmatpush.bf16.msra.mxu0 0
      %3514 = vmatpush.bf16.msra.mxu0 0
      %3515 = vmatpush.bf16.msra.mxu0 %v3506
      %3516 = vmatmul.bf16.gmra.mxu0 %v3458
      %v3517 = vpop.f32.mrf.mxu0
      %v3518 = vadd.f32 0.0, %v3517
      %v3519 = vpop.f32.mrf.mxu0
      %v3520 = vadd.f32 0.0, %v3519
      %3521 = vmatmul.bf16.gmra.mxu0 %v3461
      %v3522 = vpop.f32.mrf.mxu0
      %v3523 = vadd.f32 0.0, %v3522
      %v3524 = vpop.f32.mrf.mxu0
      %v3525 = vadd.f32 0.0, %v3524
      %3526 = vmatmul.bf16.gmra.mxu0 %v3464
      %v3527 = vpop.f32.mrf.mxu0
      %v3528 = vadd.f32 0.0, %v3527
      %v3529 = vpop.f32.mrf.mxu0
      %v3530 = vadd.f32 0.0, %v3529
      %3531 = vmatmul.bf16.gmra.mxu0 %v3467
      %v3532 = vpop.f32.mrf.mxu0
      %v3533 = vadd.f32 0.0, %v3532
      %v3534 = vpop.f32.mrf.mxu0
      %v3535 = vadd.f32 0.0, %v3534
      %3536 = vmatmul.bf16.gmra.mxu0 %v3470
      %v3537 = vpop.f32.mrf.mxu0
      %v3538 = vadd.f32 0.0, %v3537
      %v3539 = vpop.f32.mrf.mxu0
      %v3540 = vadd.f32 0.0, %v3539
      %3541 = vmatmul.bf16.gmra.mxu0 %v3473
      %v3542 = vpop.f32.mrf.mxu0
      %v3543 = vadd.f32 0.0, %v3542
      %v3544 = vpop.f32.mrf.mxu0
      %v3545 = vadd.f32 0.0, %v3544
      %3546 = vmatmul.bf16.gmra.mxu0 %v3476
      %v3547 = vpop.f32.mrf.mxu0
      %v3548 = vadd.f32 0.0, %v3547
      %v3549 = vpop.f32.mrf.mxu0
      %v3550 = vadd.f32 0.0, %v3549
      %3551 = vmatmul.bf16.gmra.mxu0 %v3479
      %v3552 = vpop.f32.mrf.mxu0
      %v3553 = vadd.f32 0.0, %v3552
      %v3554 = vpop.f32.mrf.mxu0
      %v3555 = vadd.f32 0.0, %v3554
      %3556 = vmatmul.bf16.gmra.mxu0 %v3482
      %v3557 = vpop.f32.mrf.mxu0
      %v3558 = vadd.f32 0.0, %v3557
      %v3559 = vpop.f32.mrf.mxu0
      %v3560 = vadd.f32 0.0, %v3559
      %3561 = vmatmul.bf16.gmra.mxu0 %v3485
      %v3562 = vpop.f32.mrf.mxu0
      %v3563 = vadd.f32 0.0, %v3562
      %v3564 = vpop.f32.mrf.mxu0
      %v3565 = vadd.f32 0.0, %v3564
      %3566 = vmatmul.bf16.gmra.mxu0 %v3488
      %v3567 = vpop.f32.mrf.mxu0
      %v3568 = vadd.f32 0.0, %v3567
      %v3569 = vpop.f32.mrf.mxu0
      %v3570 = vadd.f32 0.0, %v3569
      %3571 = vmatmul.bf16.gmra.mxu0 %v3491
      %v3572 = vpop.f32.mrf.mxu0
      %v3573 = vadd.f32 0.0, %v3572
      %v3574 = vpop.f32.mrf.mxu0
      %v3575 = vadd.f32 0.0, %v3574
      %3576 = vmatmul.bf16.gmra.mxu0 %v3494
      %v3577 = vpop.f32.mrf.mxu0
      %v3578 = vadd.f32 0.0, %v3577
      %v3579 = vpop.f32.mrf.mxu0
      %v3580 = vadd.f32 0.0, %v3579
      %3581 = vmatmul.bf16.gmra.mxu0 %v3497
      %v3582 = vpop.f32.mrf.mxu0
      %v3583 = vadd.f32 0.0, %v3582
      %v3584 = vpop.f32.mrf.mxu0
      %v3585 = vadd.f32 0.0, %v3584
      %3586 = vmatmul.bf16.gmra.mxu0 %v3500
      %v3587 = vpop.f32.mrf.mxu0
      %v3588 = vadd.f32 0.0, %v3587
      %v3589 = vpop.f32.mrf.mxu0
      %v3590 = vadd.f32 0.0, %v3589
      %3591 = vmatmul.bf16.gmra.mxu0 %v3503
      %v3592 = vpop.f32.mrf.mxu0
      %v3593 = vadd.f32 0.0, %v3592
      %v3594 = vpop.f32.mrf.mxu0
      %v3595 = vadd.f32 0.0, %v3594
      %3596 = vdwg.mxu0
      %v3597 = vadd.f32 %v3310, %v3518
      %v3598 = vadd.f32 %v3311, %v3520
      %v3599 = vadd.f32 %v3312, %v3523
      %v3600 = vadd.f32 %v3313, %v3525
      %v3601 = vadd.f32 %v3314, %v3528
      %v3602 = vadd.f32 %v3315, %v3530
      %v3603 = vadd.f32 %v3316, %v3533
      %v3604 = vadd.f32 %v3317, %v3535
      %v3605 = vadd.f32 %v3318, %v3538
      %v3606 = vadd.f32 %v3319, %v3540
      %v3607 = vadd.f32 %v3320, %v3543
      %v3608 = vadd.f32 %v3321, %v3545
      %v3609 = vadd.f32 %v3322, %v3548
      %v3610 = vadd.f32 %v3323, %v3550
      %v3611 = vadd.f32 %v3324, %v3553
      %v3612 = vadd.f32 %v3325, %v3555
      %v3613 = vadd.f32 %v3326, %v3558
      %v3614 = vadd.f32 %v3327, %v3560
      %v3615 = vadd.f32 %v3328, %v3563
      %v3616 = vadd.f32 %v3329, %v3565
      %v3617 = vadd.f32 %v3330, %v3568
      %v3618 = vadd.f32 %v3331, %v3570
      %v3619 = vadd.f32 %v3332, %v3573
      %v3620 = vadd.f32 %v3333, %v3575
      %v3621 = vadd.f32 %v3334, %v3578
      %v3622 = vadd.f32 %v3335, %v3580
      %v3623 = vadd.f32 %v3336, %v3583
      %v3624 = vadd.f32 %v3337, %v3585
      %v3625 = vadd.f32 %v3338, %v3588
      %v3626 = vadd.f32 %v3339, %v3590
      %v3627 = vadd.f32 %v3340, %v3593
      %v3628 = vadd.f32 %v3341, %v3595
      %v3629 = vld [vmem:[%s3342] sm:$0xf]
      %v3630 = vld [vmem:[%s3342 + $0x4] sm:$0xf]
      %v3631 = vld [vmem:[%s3342 + $0x8] sm:$0x1]
      %v3632 = vld [vmem:[%s3342 + $0xc] sm:$0xf]
      %v3633 = vld [vmem:[%s3342 + $0x10] sm:$0xf]
      %v3634 = vld [vmem:[%s3342 + $0x14] sm:$0x1]
      %v3635 = vld [vmem:[%s3342 + $0x18] sm:$0xf]
      %v3636 = vld [vmem:[%s3342 + $0x1c] sm:$0xf]
      %v3637 = vld [vmem:[%s3342 + $0x20] sm:$0x1]
      %v3638 = vld [vmem:[%s3342 + $0x24] sm:$0xf]
      %v3639 = vld [vmem:[%s3342 + $0x28] sm:$0xf]
      %v3640 = vld [vmem:[%s3342 + $0x2c] sm:$0x1]
      %v3641 = vld [vmem:[%s3342 + $0x30] sm:$0xf]
      %v3642 = vld [vmem:[%s3342 + $0x34] sm:$0xf]
      %v3643 = vld [vmem:[%s3342 + $0x38] sm:$0x1]
      %v3644 = vld [vmem:[%s3342 + $0x3c] sm:$0xf]
      %v3645 = vld [vmem:[%s3342 + $0x40] sm:$0xf]
      %v3646 = vld [vmem:[%s3342 + $0x44] sm:$0x1]
      %v3647 = vld [vmem:[%s3342 + $0x48] sm:$0xf]
      %v3648 = vld [vmem:[%s3342 + $0x4c] sm:$0xf]
      %v3649 = vld [vmem:[%s3342 + $0x50] sm:$0x1]
      %v3650 = vld [vmem:[%s3342 + $0x54] sm:$0xf]
      %v3651 = vld [vmem:[%s3342 + $0x58] sm:$0xf]
      %v3652 = vld [vmem:[%s3342 + $0x5c] sm:$0x1]
      %v3653 = vld [vmem:[%s3342 + $0x60] sm:$0xf]
      %v3654 = vld [vmem:[%s3342 + $0x64] sm:$0xf]
      %v3655 = vld [vmem:[%s3342 + $0x68] sm:$0x1]
      %v3656 = vld [vmem:[%s3342 + $0x6c] sm:$0xf]
      %v3657 = vld [vmem:[%s3342 + $0x70] sm:$0xf]
      %v3658 = vld [vmem:[%s3342 + $0x74] sm:$0x1]
      %v3659 = vld [vmem:[%s3342 + $0x78] sm:$0xf]
      %v3660 = vld [vmem:[%s3342 + $0x7c] sm:$0xf]
      %v3661 = vld [vmem:[%s3342 + $0x80] sm:$0x1]
      %v3662 = vld [vmem:[%s3342 + $0x84] sm:$0xf]
      %v3663 = vld [vmem:[%s3342 + $0x88] sm:$0xf]
      %v3664 = vld [vmem:[%s3342 + $0x8c] sm:$0x1]
      %v3665 = vld [vmem:[%s3342 + $0x90] sm:$0xf]
      %v3666 = vld [vmem:[%s3342 + $0x94] sm:$0xf]
      %v3667 = vld [vmem:[%s3342 + $0x98] sm:$0x1]
      %v3668 = vld [vmem:[%s3342 + $0x9c] sm:$0xf]
      %v3669 = vld [vmem:[%s3342 + $0xa0] sm:$0xf]
      %v3670 = vld [vmem:[%s3342 + $0xa4] sm:$0x1]
      %v3671 = vld [vmem:[%s3342 + $0xa8] sm:$0xf]
      %v3672 = vld [vmem:[%s3342 + $0xac] sm:$0xf]
      %v3673 = vld [vmem:[%s3342 + $0xb0] sm:$0x1]
      %v3674 = vld [vmem:[%s3342 + $0xb4] sm:$0xf]
      %v3675 = vld [vmem:[%s3342 + $0xb8] sm:$0xf]
      %v3676 = vld [vmem:[%s3342 + $0xbc] sm:$0x1]
      %v3678 = vshrl.u32 %v3629, 16
      %v3680 = vrot.slane %v3678, 4
      %v3681 = vshll.u32 %v3629, 16
      %v3683 = vrot.slane %v3681, 5
      %v3684 = vor.u32 %v3680, %v3683
      %v3685 = vrot.slane %v3684, 4
      %v3687 = vshll.u32 %v3630, 16
      %v3689 = vrot.slane %v3687, 5
      %v3690 = vsel %vm822, %v3685, %v3689
      %v3691 = vshrl.u32 %v3630, 16
      %v3693 = vrot.slane %v3691, 4
      %v3694 = vor.u32 %v3693, %v3689
      %v3695 = vrot.slane %v3694, 4
      %v3697 = vshll.u32 %v3631, 16
      %v3699 = vrot.slane %v3697, 5
      %v3700 = vsel %vm822, %v3695, %v3699
      %v3702 = vshrl.u32 %v3632, 16
      %v3704 = vrot.slane %v3702, 4
      %v3705 = vshll.u32 %v3632, 16
      %v3707 = vrot.slane %v3705, 5
      %v3708 = vor.u32 %v3704, %v3707
      %v3709 = vrot.slane %v3708, 4
      %v3711 = vshll.u32 %v3633, 16
      %v3713 = vrot.slane %v3711, 5
      %v3714 = vsel %vm822, %v3709, %v3713
      %v3715 = vshrl.u32 %v3633, 16
      %v3717 = vrot.slane %v3715, 4
      %v3718 = vor.u32 %v3717, %v3713
      %v3719 = vrot.slane %v3718, 4
      %v3721 = vshll.u32 %v3634, 16
      %v3723 = vrot.slane %v3721, 5
      %v3724 = vsel %vm822, %v3719, %v3723
      %v3726 = vshrl.u32 %v3635, 16
      %v3728 = vrot.slane %v3726, 4
      %v3729 = vshll.u32 %v3635, 16
      %v3731 = vrot.slane %v3729, 5
      %v3732 = vor.u32 %v3728, %v3731
      %v3733 = vrot.slane %v3732, 4
      %v3735 = vshll.u32 %v3636, 16
      %v3737 = vrot.slane %v3735, 5
      %v3738 = vsel %vm822, %v3733, %v3737
      %v3739 = vshrl.u32 %v3636, 16
      %v3741 = vrot.slane %v3739, 4
      %v3742 = vor.u32 %v3741, %v3737
      %v3743 = vrot.slane %v3742, 4
      %v3745 = vshll.u32 %v3637, 16
      %v3747 = vrot.slane %v3745, 5
      %v3748 = vsel %vm822, %v3743, %v3747
      %v3750 = vshrl.u32 %v3638, 16
      %v3752 = vrot.slane %v3750, 4
      %v3753 = vshll.u32 %v3638, 16
      %v3755 = vrot.slane %v3753, 5
      %v3756 = vor.u32 %v3752, %v3755
      %v3757 = vrot.slane %v3756, 4
      %v3759 = vshll.u32 %v3639, 16
      %v3761 = vrot.slane %v3759, 5
      %v3762 = vsel %vm822, %v3757, %v3761
      %v3763 = vshrl.u32 %v3639, 16
      %v3765 = vrot.slane %v3763, 4
      %v3766 = vor.u32 %v3765, %v3761
      %v3767 = vrot.slane %v3766, 4
      %v3769 = vshll.u32 %v3640, 16
      %v3771 = vrot.slane %v3769, 5
      %v3772 = vsel %vm822, %v3767, %v3771
      %v3774 = vshrl.u32 %v3641, 16
      %v3776 = vrot.slane %v3774, 4
      %v3777 = vshll.u32 %v3641, 16
      %v3779 = vrot.slane %v3777, 5
      %v3780 = vor.u32 %v3776, %v3779
      %v3781 = vrot.slane %v3780, 4
      %v3783 = vshll.u32 %v3642, 16
      %v3785 = vrot.slane %v3783, 5
      %v3786 = vsel %vm822, %v3781, %v3785
      %v3787 = vshrl.u32 %v3642, 16
      %v3789 = vrot.slane %v3787, 4
      %v3790 = vor.u32 %v3789, %v3785
      %v3791 = vrot.slane %v3790, 4
      %v3793 = vshll.u32 %v3643, 16
      %v3795 = vrot.slane %v3793, 5
      %v3796 = vsel %vm822, %v3791, %v3795
      %v3798 = vshrl.u32 %v3644, 16
      %v3800 = vrot.slane %v3798, 4
      %v3801 = vshll.u32 %v3644, 16
      %v3803 = vrot.slane %v3801, 5
      %v3804 = vor.u32 %v3800, %v3803
      %v3805 = vrot.slane %v3804, 4
      %v3807 = vshll.u32 %v3645, 16
      %v3809 = vrot.slane %v3807, 5
      %v3810 = vsel %vm822, %v3805, %v3809
      %v3811 = vshrl.u32 %v3645, 16
      %v3813 = vrot.slane %v3811, 4
      %v3814 = vor.u32 %v3813, %v3809
      %v3815 = vrot.slane %v3814, 4
      %v3817 = vshll.u32 %v3646, 16
      %v3819 = vrot.slane %v3817, 5
      %v3820 = vsel %vm822, %v3815, %v3819
      %v3822 = vshrl.u32 %v3647, 16
      %v3824 = vrot.slane %v3822, 4
      %v3825 = vshll.u32 %v3647, 16
      %v3827 = vrot.slane %v3825, 5
      %v3828 = vor.u32 %v3824, %v3827
      %v3829 = vrot.slane %v3828, 4
      %v3831 = vshll.u32 %v3648, 16
      %v3833 = vrot.slane %v3831, 5
      %v3834 = vsel %vm822, %v3829, %v3833
      %v3835 = vshrl.u32 %v3648, 16
      %v3837 = vrot.slane %v3835, 4
      %v3838 = vor.u32 %v3837, %v3833
      %v3839 = vrot.slane %v3838, 4
      %v3841 = vshll.u32 %v3649, 16
      %v3843 = vrot.slane %v3841, 5
      %v3844 = vsel %vm822, %v3839, %v3843
      %v3846 = vshrl.u32 %v3650, 16
      %v3848 = vrot.slane %v3846, 4
      %v3849 = vshll.u32 %v3650, 16
      %v3851 = vrot.slane %v3849, 5
      %v3852 = vor.u32 %v3848, %v3851
      %v3853 = vrot.slane %v3852, 4
      %v3855 = vshll.u32 %v3651, 16
      %v3857 = vrot.slane %v3855, 5
      %v3858 = vsel %vm822, %v3853, %v3857
      %v3859 = vshrl.u32 %v3651, 16
      %v3861 = vrot.slane %v3859, 4
      %v3862 = vor.u32 %v3861, %v3857
      %v3863 = vrot.slane %v3862, 4
      %v3865 = vshll.u32 %v3652, 16
      %v3867 = vrot.slane %v3865, 5
      %v3868 = vsel %vm822, %v3863, %v3867
      %v3870 = vshrl.u32 %v3653, 16
      %v3872 = vrot.slane %v3870, 4
      %v3873 = vshll.u32 %v3653, 16
      %v3875 = vrot.slane %v3873, 5
      %v3876 = vor.u32 %v3872, %v3875
      %v3877 = vrot.slane %v3876, 4
      %v3879 = vshll.u32 %v3654, 16
      %v3881 = vrot.slane %v3879, 5
      %v3882 = vsel %vm822, %v3877, %v3881
      %v3883 = vshrl.u32 %v3654, 16
      %v3885 = vrot.slane %v3883, 4
      %v3886 = vor.u32 %v3885, %v3881
      %v3887 = vrot.slane %v3886, 4
      %v3889 = vshll.u32 %v3655, 16
      %v3891 = vrot.slane %v3889, 5
      %v3892 = vsel %vm822, %v3887, %v3891
      %v3894 = vshrl.u32 %v3656, 16
      %v3896 = vrot.slane %v3894, 4
      %v3897 = vshll.u32 %v3656, 16
      %v3899 = vrot.slane %v3897, 5
      %v3900 = vor.u32 %v3896, %v3899
      %v3901 = vrot.slane %v3900, 4
      %v3903 = vshll.u32 %v3657, 16
      %v3905 = vrot.slane %v3903, 5
      %v3906 = vsel %vm822, %v3901, %v3905
      %v3907 = vshrl.u32 %v3657, 16
      %v3909 = vrot.slane %v3907, 4
      %v3910 = vor.u32 %v3909, %v3905
      %v3911 = vrot.slane %v3910, 4
      %v3913 = vshll.u32 %v3658, 16
      %v3915 = vrot.slane %v3913, 5
      %v3916 = vsel %vm822, %v3911, %v3915
      %v3918 = vshrl.u32 %v3659, 16
      %v3920 = vrot.slane %v3918, 4
      %v3921 = vshll.u32 %v3659, 16
      %v3923 = vrot.slane %v3921, 5
      %v3924 = vor.u32 %v3920, %v3923
      %v3925 = vrot.slane %v3924, 4
      %v3927 = vshll.u32 %v3660, 16
      %v3929 = vrot.slane %v3927, 5
      %v3930 = vsel %vm822, %v3925, %v3929
      %v3931 = vshrl.u32 %v3660, 16
      %v3933 = vrot.slane %v3931, 4
      %v3934 = vor.u32 %v3933, %v3929
      %v3935 = vrot.slane %v3934, 4
      %v3937 = vshll.u32 %v3661, 16
      %v3939 = vrot.slane %v3937, 5
      %v3940 = vsel %vm822, %v3935, %v3939
      %v3942 = vshrl.u32 %v3662, 16
      %v3944 = vrot.slane %v3942, 4
      %v3945 = vshll.u32 %v3662, 16
      %v3947 = vrot.slane %v3945, 5
      %v3948 = vor.u32 %v3944, %v3947
      %v3949 = vrot.slane %v3948, 4
      %v3951 = vshll.u32 %v3663, 16
      %v3953 = vrot.slane %v3951, 5
      %v3954 = vsel %vm822, %v3949, %v3953
      %v3955 = vshrl.u32 %v3663, 16
      %v3957 = vrot.slane %v3955, 4
      %v3958 = vor.u32 %v3957, %v3953
      %v3959 = vrot.slane %v3958, 4
      %v3961 = vshll.u32 %v3664, 16
      %v3963 = vrot.slane %v3961, 5
      %v3964 = vsel %vm822, %v3959, %v3963
      %v3966 = vshrl.u32 %v3665, 16
      %v3968 = vrot.slane %v3966, 4
      %v3969 = vshll.u32 %v3665, 16
      %v3971 = vrot.slane %v3969, 5
      %v3972 = vor.u32 %v3968, %v3971
      %v3973 = vrot.slane %v3972, 4
      %v3975 = vshll.u32 %v3666, 16
      %v3977 = vrot.slane %v3975, 5
      %v3978 = vsel %vm822, %v3973, %v3977
      %v3979 = vshrl.u32 %v3666, 16
      %v3981 = vrot.slane %v3979, 4
      %v3982 = vor.u32 %v3981, %v3977
      %v3983 = vrot.slane %v3982, 4
      %v3985 = vshll.u32 %v3667, 16
      %v3987 = vrot.slane %v3985, 5
      %v3988 = vsel %vm822, %v3983, %v3987
      %v3990 = vshrl.u32 %v3668, 16
      %v3992 = vrot.slane %v3990, 4
      %v3993 = vshll.u32 %v3668, 16
      %v3995 = vrot.slane %v3993, 5
      %v3996 = vor.u32 %v3992, %v3995
      %v3997 = vrot.slane %v3996, 4
      %v3999 = vshll.u32 %v3669, 16
      %v4001 = vrot.slane %v3999, 5
      %v4002 = vsel %vm822, %v3997, %v4001
      %v4003 = vshrl.u32 %v3669, 16
      %v4005 = vrot.slane %v4003, 4
      %v4006 = vor.u32 %v4005, %v4001
      %v4007 = vrot.slane %v4006, 4
      %v4009 = vshll.u32 %v3670, 16
      %v4011 = vrot.slane %v4009, 5
      %v4012 = vsel %vm822, %v4007, %v4011
      %v4014 = vshrl.u32 %v3671, 16
      %v4016 = vrot.slane %v4014, 4
      %v4017 = vshll.u32 %v3671, 16
      %v4019 = vrot.slane %v4017, 5
      %v4020 = vor.u32 %v4016, %v4019
      %v4021 = vrot.slane %v4020, 4
      %v4023 = vshll.u32 %v3672, 16
      %v4025 = vrot.slane %v4023, 5
      %v4026 = vsel %vm822, %v4021, %v4025
      %v4027 = vshrl.u32 %v3672, 16
      %v4029 = vrot.slane %v4027, 4
      %v4030 = vor.u32 %v4029, %v4025
      %v4031 = vrot.slane %v4030, 4
      %v4033 = vshll.u32 %v3673, 16
      %v4035 = vrot.slane %v4033, 5
      %v4036 = vsel %vm822, %v4031, %v4035
      %v4038 = vshrl.u32 %v3674, 16
      %v4040 = vrot.slane %v4038, 4
      %v4041 = vshll.u32 %v3674, 16
      %v4043 = vrot.slane %v4041, 5
      %v4044 = vor.u32 %v4040, %v4043
      %v4045 = vrot.slane %v4044, 4
      %v4047 = vshll.u32 %v3675, 16
      %v4049 = vrot.slane %v4047, 5
      %v4050 = vsel %vm822, %v4045, %v4049
      %v4051 = vshrl.u32 %v3675, 16
      %v4053 = vrot.slane %v4051, 4
      %v4054 = vor.u32 %v4053, %v4049
      %v4055 = vrot.slane %v4054, 4
      %v4057 = vshll.u32 %v3676, 16
      %v4059 = vrot.slane %v4057, 5
      %v4060 = vsel %vm822, %v4055, %v4059
      %s4061 = scalar_lea.vmem %s1, 14
      %v4062 = vld [vmem:[%s4061] sm:$0x3]
      %v4063 = vunpack.c.l.b16 %v3690
      %v4064 = vunpack.c.l.b16 %v3700
      %v4065 = vunpack.c.l.b16 %v3714
      %v4066 = vunpack.c.l.b16 %v3724
      %v4067 = vunpack.c.l.b16 %v3738
      %v4068 = vunpack.c.l.b16 %v3748
      %v4069 = vunpack.c.l.b16 %v3762
      %v4070 = vunpack.c.l.b16 %v3772
      %v4071 = vunpack.c.l.b16 %v3786
      %v4072 = vunpack.c.l.b16 %v3796
      %v4073 = vunpack.c.l.b16 %v3810
      %v4074 = vunpack.c.l.b16 %v3820
      %v4075 = vunpack.c.l.b16 %v3834
      %v4076 = vunpack.c.l.b16 %v3844
      %v4077 = vunpack.c.l.b16 %v3858
      %v4078 = vunpack.c.l.b16 %v3868
      %v4079 = vunpack.c.l.b16 %v3882
      %v4080 = vunpack.c.l.b16 %v3892
      %v4081 = vunpack.c.l.b16 %v3906
      %v4082 = vunpack.c.l.b16 %v3916
      %v4083 = vunpack.c.l.b16 %v3930
      %v4084 = vunpack.c.l.b16 %v3940
      %v4085 = vunpack.c.l.b16 %v3954
      %v4086 = vunpack.c.l.b16 %v3964
      %v4087 = vunpack.c.l.b16 %v3978
      %v4088 = vunpack.c.l.b16 %v3988
      %v4089 = vunpack.c.l.b16 %v4002
      %v4090 = vunpack.c.l.b16 %v4012
      %v4091 = vunpack.c.l.b16 %v4026
      %v4092 = vunpack.c.l.b16 %v4036
      %v4093 = vunpack.c.l.b16 %v4050
      %v4094 = vunpack.c.l.b16 %v4060
      %v4095 = vpack.c.b16 %v4064, %v4063
      %v4096 = vpack.c.b16 %v4066, %v4065
      %v4097 = vpack.c.b16 %v4068, %v4067
      %v4098 = vpack.c.b16 %v4070, %v4069
      %v4099 = vpack.c.b16 %v4072, %v4071
      %v4100 = vpack.c.b16 %v4074, %v4073
      %v4101 = vpack.c.b16 %v4076, %v4075
      %v4102 = vpack.c.b16 %v4078, %v4077
      %v4103 = vpack.c.b16 %v4080, %v4079
      %v4104 = vpack.c.b16 %v4082, %v4081
      %v4105 = vpack.c.b16 %v4084, %v4083
      %v4106 = vpack.c.b16 %v4086, %v4085
      %v4107 = vpack.c.b16 %v4088, %v4087
      %v4108 = vpack.c.b16 %v4090, %v4089
      %v4109 = vpack.c.b16 %v4092, %v4091
      %v4110 = vpack.c.b16 %v4094, %v4093
      %v4112 = vsel %vm1257, %v4095, 0
      %v4115 = vsel %vm1257, %v4096, 0
      %v4118 = vsel %vm1257, %v4097, 0
      %v4121 = vsel %vm1257, %v4098, 0
      %v4124 = vsel %vm1257, %v4099, 0
      %v4127 = vsel %vm1257, %v4100, 0
      %v4130 = vsel %vm1257, %v4101, 0
      %v4133 = vsel %vm1257, %v4102, 0
      %v4136 = vsel %vm1257, %v4103, 0
      %v4139 = vsel %vm1257, %v4104, 0
      %v4142 = vsel %vm1257, %v4105, 0
      %v4145 = vsel %vm1257, %v4106, 0
      %v4148 = vsel %vm1257, %v4107, 0
      %v4151 = vsel %vm1257, %v4108, 0
      %v4154 = vsel %vm1257, %v4109, 0
      %v4157 = vsel %vm1257, %v4110, 0
      %v4160 = vsel %vm1306, %v4062, 0
      %4162 = vmatpush.bf16.msra.mxu0 0
      %4163 = vmatpush.bf16.msra.mxu0 0
      %4164 = vmatpush.bf16.msra.mxu0 0
      %4165 = vmatpush.bf16.msra.mxu0 0
      %4166 = vmatpush.bf16.msra.mxu0 0
      %4167 = vmatpush.bf16.msra.mxu0 0
      %4168 = vmatpush.bf16.msra.mxu0 0
      %4169 = vmatpush.bf16.msra.mxu0 %v4160
      %4170 = vmatmul.bf16.gmra.mxu0 %v4112
      %v4171 = vpop.f32.mrf.mxu0
      %v4172 = vadd.f32 0.0, %v4171
      %v4173 = vpop.f32.mrf.mxu0
      %v4174 = vadd.f32 0.0, %v4173
      %4175 = vmatmul.bf16.gmra.mxu0 %v4115
      %v4176 = vpop.f32.mrf.mxu0
      %v4177 = vadd.f32 0.0, %v4176
      %v4178 = vpop.f32.mrf.mxu0
      %v4179 = vadd.f32 0.0, %v4178
      %4180 = vmatmul.bf16.gmra.mxu0 %v4118
      %v4181 = vpop.f32.mrf.mxu0
      %v4182 = vadd.f32 0.0, %v4181
      %v4183 = vpop.f32.mrf.mxu0
      %v4184 = vadd.f32 0.0, %v4183
      %4185 = vmatmul.bf16.gmra.mxu0 %v4121
      %v4186 = vpop.f32.mrf.mxu0
      %v4187 = vadd.f32 0.0, %v4186
      %v4188 = vpop.f32.mrf.mxu0
      %v4189 = vadd.f32 0.0, %v4188
      %4190 = vmatmul.bf16.gmra.mxu0 %v4124
      %v4191 = vpop.f32.mrf.mxu0
      %v4192 = vadd.f32 0.0, %v4191
      %v4193 = vpop.f32.mrf.mxu0
      %v4194 = vadd.f32 0.0, %v4193
      %4195 = vmatmul.bf16.gmra.mxu0 %v4127
      %v4196 = vpop.f32.mrf.mxu0
      %v4197 = vadd.f32 0.0, %v4196
      %v4198 = vpop.f32.mrf.mxu0
      %v4199 = vadd.f32 0.0, %v4198
      %4200 = vmatmul.bf16.gmra.mxu0 %v4130
      %v4201 = vpop.f32.mrf.mxu0
      %v4202 = vadd.f32 0.0, %v4201
      %v4203 = vpop.f32.mrf.mxu0
      %v4204 = vadd.f32 0.0, %v4203
      %4205 = vmatmul.bf16.gmra.mxu0 %v4133
      %v4206 = vpop.f32.mrf.mxu0
      %v4207 = vadd.f32 0.0, %v4206
      %v4208 = vpop.f32.mrf.mxu0
      %v4209 = vadd.f32 0.0, %v4208
      %4210 = vmatmul.bf16.gmra.mxu0 %v4136
      %v4211 = vpop.f32.mrf.mxu0
      %v4212 = vadd.f32 0.0, %v4211
      %v4213 = vpop.f32.mrf.mxu0
      %v4214 = vadd.f32 0.0, %v4213
      %4215 = vmatmul.bf16.gmra.mxu0 %v4139
      %v4216 = vpop.f32.mrf.mxu0
      %v4217 = vadd.f32 0.0, %v4216
      %v4218 = vpop.f32.mrf.mxu0
      %v4219 = vadd.f32 0.0, %v4218
      %4220 = vmatmul.bf16.gmra.mxu0 %v4142
      %v4221 = vpop.f32.mrf.mxu0
      %v4222 = vadd.f32 0.0, %v4221
      %v4223 = vpop.f32.mrf.mxu0
      %v4224 = vadd.f32 0.0, %v4223
      %4225 = vmatmul.bf16.gmra.mxu0 %v4145
      %v4226 = vpop.f32.mrf.mxu0
      %v4227 = vadd.f32 0.0, %v4226
      %v4228 = vpop.f32.mrf.mxu0
      %v4229 = vadd.f32 0.0, %v4228
      %4230 = vmatmul.bf16.gmra.mxu0 %v4148
      %v4231 = vpop.f32.mrf.mxu0
      %v4232 = vadd.f32 0.0, %v4231
      %v4233 = vpop.f32.mrf.mxu0
      %v4234 = vadd.f32 0.0, %v4233
      %4235 = vmatmul.bf16.gmra.mxu0 %v4151
      %v4236 = vpop.f32.mrf.mxu0
      %v4237 = vadd.f32 0.0, %v4236
      %v4238 = vpop.f32.mrf.mxu0
      %v4239 = vadd.f32 0.0, %v4238
      %4240 = vmatmul.bf16.gmra.mxu0 %v4154
      %v4241 = vpop.f32.mrf.mxu0
      %v4242 = vadd.f32 0.0, %v4241
      %v4243 = vpop.f32.mrf.mxu0
      %v4244 = vadd.f32 0.0, %v4243
      %4245 = vmatmul.bf16.gmra.mxu0 %v4157
      %v4246 = vpop.f32.mrf.mxu0
      %v4247 = vadd.f32 0.0, %v4246
      %v4248 = vpop.f32.mrf.mxu0
      %v4249 = vadd.f32 0.0, %v4248
      %4250 = vdwg.mxu0
      %v4251 = vadd.f32 %v3597, %v4172
      %v4252 = vadd.f32 %v3598, %v4174
      %v4253 = vadd.f32 %v3599, %v4177
      %v4254 = vadd.f32 %v3600, %v4179
      %v4255 = vadd.f32 %v3601, %v4182
      %v4256 = vadd.f32 %v3602, %v4184
      %v4257 = vadd.f32 %v3603, %v4187
      %v4258 = vadd.f32 %v3604, %v4189
      %v4259 = vadd.f32 %v3605, %v4192
      %v4260 = vadd.f32 %v3606, %v4194
      %v4261 = vadd.f32 %v3607, %v4197
      %v4262 = vadd.f32 %v3608, %v4199
      %v4263 = vadd.f32 %v3609, %v4202
      %v4264 = vadd.f32 %v3610, %v4204
      %v4265 = vadd.f32 %v3611, %v4207
      %v4266 = vadd.f32 %v3612, %v4209
      %v4267 = vadd.f32 %v3613, %v4212
      %v4268 = vadd.f32 %v3614, %v4214
      %v4269 = vadd.f32 %v3615, %v4217
      %v4270 = vadd.f32 %v3616, %v4219
      %v4271 = vadd.f32 %v3617, %v4222
      %v4272 = vadd.f32 %v3618, %v4224
      %v4273 = vadd.f32 %v3619, %v4227
      %v4274 = vadd.f32 %v3620, %v4229
      %v4275 = vadd.f32 %v3621, %v4232
      %v4276 = vadd.f32 %v3622, %v4234
      %v4277 = vadd.f32 %v3623, %v4237
      %v4278 = vadd.f32 %v3624, %v4239
      %v4279 = vadd.f32 %v3625, %v4242
      %v4280 = vadd.f32 %v3626, %v4244
      %v4281 = vadd.f32 %v3627, %v4247
      %v4282 = vadd.f32 %v3628, %v4249
      %v4283 = vld [vmem:[%s3342] sm:$0xe]
      %v4284 = vld [vmem:[%s3342 + $0xc] sm:$0xe]
      %v4285 = vld [vmem:[%s3342 + $0x18] sm:$0xe]
      %v4286 = vld [vmem:[%s3342 + $0x24] sm:$0xe]
      %v4287 = vld [vmem:[%s3342 + $0x30] sm:$0xe]
      %v4288 = vld [vmem:[%s3342 + $0x3c] sm:$0xe]
      %v4289 = vld [vmem:[%s3342 + $0x48] sm:$0xe]
      %v4290 = vld [vmem:[%s3342 + $0x54] sm:$0xe]
      %v4291 = vld [vmem:[%s3342 + $0x60] sm:$0xe]
      %v4292 = vld [vmem:[%s3342 + $0x6c] sm:$0xe]
      %v4293 = vld [vmem:[%s3342 + $0x78] sm:$0xe]
      %v4294 = vld [vmem:[%s3342 + $0x84] sm:$0xe]
      %v4295 = vld [vmem:[%s3342 + $0x90] sm:$0xe]
      %v4296 = vld [vmem:[%s3342 + $0x9c] sm:$0xe]
      %v4297 = vld [vmem:[%s3342 + $0xa8] sm:$0xe]
      %v4298 = vld [vmem:[%s3342 + $0xb4] sm:$0xe]
      %v4347 = vrot.slane %v4283, 5
      %v4348 = vrot.slane %v4347, 4
      %v4349 = vrot.slane %v3630, 5
      %v4350 = vsel %vm1669, %v4348, %v4349
      %v4351 = vrot.slane %v4349, 4
      %v4352 = vrot.slane %v3631, 5
      %v4353 = vsel %vm1669, %v4351, %v4352
      %v4354 = vrot.slane %v4284, 5
      %v4355 = vrot.slane %v4354, 4
      %v4356 = vrot.slane %v3633, 5
      %v4357 = vsel %vm1669, %v4355, %v4356
      %v4358 = vrot.slane %v4356, 4
      %v4359 = vrot.slane %v3634, 5
      %v4360 = vsel %vm1669, %v4358, %v4359
      %v4361 = vrot.slane %v4285, 5
      %v4362 = vrot.slane %v4361, 4
      %v4363 = vrot.slane %v3636, 5
      %v4364 = vsel %vm1669, %v4362, %v4363
      %v4365 = vrot.slane %v4363, 4
      %v4366 = vrot.slane %v3637, 5
      %v4367 = vsel %vm1669, %v4365, %v4366
      %v4368 = vrot.slane %v4286, 5
      %v4369 = vrot.slane %v4368, 4
      %v4370 = vrot.slane %v3639, 5
      %v4371 = vsel %vm1669, %v4369, %v4370
      %v4372 = vrot.slane %v4370, 4
      %v4373 = vrot.slane %v3640, 5
      %v4374 = vsel %vm1669, %v4372, %v4373
      %v4375 = vrot.slane %v4287, 5
      %v4376 = vrot.slane %v4375, 4
      %v4377 = vrot.slane %v3642, 5
      %v4378 = vsel %vm1669, %v4376, %v4377
      %v4379 = vrot.slane %v4377, 4
      %v4380 = vrot.slane %v3643, 5
      %v4381 = vsel %vm1669, %v4379, %v4380
      %v4382 = vrot.slane %v4288, 5
      %v4383 = vrot.slane %v4382, 4
      %v4384 = vrot.slane %v3645, 5
      %v4385 = vsel %vm1669, %v4383, %v4384
      %v4386 = vrot.slane %v4384, 4
      %v4387 = vrot.slane %v3646, 5
      %v4388 = vsel %vm1669, %v4386, %v4387
      %v4389 = vrot.slane %v4289, 5
      %v4390 = vrot.slane %v4389, 4
      %v4391 = vrot.slane %v3648, 5
      %v4392 = vsel %vm1669, %v4390, %v4391
      %v4393 = vrot.slane %v4391, 4
      %v4394 = vrot.slane %v3649, 5
      %v4395 = vsel %vm1669, %v4393, %v4394
      %v4396 = vrot.slane %v4290, 5
      %v4397 = vrot.slane %v4396, 4
      %v4398 = vrot.slane %v3651, 5
      %v4399 = vsel %vm1669, %v4397, %v4398
      %v4400 = vrot.slane %v4398, 4
      %v4401 = vrot.slane %v3652, 5
      %v4402 = vsel %vm1669, %v4400, %v4401
      %v4403 = vrot.slane %v4291, 5
      %v4404 = vrot.slane %v4403, 4
      %v4405 = vrot.slane %v3654, 5
      %v4406 = vsel %vm1669, %v4404, %v4405
      %v4407 = vrot.slane %v4405, 4
      %v4408 = vrot.slane %v3655, 5
      %v4409 = vsel %vm1669, %v4407, %v4408
      %v4410 = vrot.slane %v4292, 5
      %v4411 = vrot.slane %v4410, 4
      %v4412 = vrot.slane %v3657, 5
      %v4413 = vsel %vm1669, %v4411, %v4412
      %v4414 = vrot.slane %v4412, 4
      %v4415 = vrot.slane %v3658, 5
      %v4416 = vsel %vm1669, %v4414, %v4415
      %v4417 = vrot.slane %v4293, 5
      %v4418 = vrot.slane %v4417, 4
      %v4419 = vrot.slane %v3660, 5
      %v4420 = vsel %vm1669, %v4418, %v4419
      %v4421 = vrot.slane %v4419, 4
      %v4422 = vrot.slane %v3661, 5
      %v4423 = vsel %vm1669, %v4421, %v4422
      %v4424 = vrot.slane %v4294, 5
      %v4425 = vrot.slane %v4424, 4
      %v4426 = vrot.slane %v3663, 5
      %v4427 = vsel %vm1669, %v4425, %v4426
      %v4428 = vrot.slane %v4426, 4
      %v4429 = vrot.slane %v3664, 5
      %v4430 = vsel %vm1669, %v4428, %v4429
      %v4431 = vrot.slane %v4295, 5
      %v4432 = vrot.slane %v4431, 4
      %v4433 = vrot.slane %v3666, 5
      %v4434 = vsel %vm1669, %v4432, %v4433
      %v4435 = vrot.slane %v4433, 4
      %v4436 = vrot.slane %v3667, 5
      %v4437 = vsel %vm1669, %v4435, %v4436
      %v4438 = vrot.slane %v4296, 5
      %v4439 = vrot.slane %v4438, 4
      %v4440 = vrot.slane %v3669, 5
      %v4441 = vsel %vm1669, %v4439, %v4440
      %v4442 = vrot.slane %v4440, 4
      %v4443 = vrot.slane %v3670, 5
      %v4444 = vsel %vm1669, %v4442, %v4443
      %v4445 = vrot.slane %v4297, 5
      %v4446 = vrot.slane %v4445, 4
      %v4447 = vrot.slane %v3672, 5
      %v4448 = vsel %vm1669, %v4446, %v4447
      %v4449 = vrot.slane %v4447, 4
      %v4450 = vrot.slane %v3673, 5
      %v4451 = vsel %vm1669, %v4449, %v4450
      %v4452 = vrot.slane %v4298, 5
      %v4453 = vrot.slane %v4452, 4
      %v4454 = vrot.slane %v3675, 5
      %v4455 = vsel %vm1669, %v4453, %v4454
      %v4456 = vrot.slane %v4454, 4
      %v4457 = vrot.slane %v3676, 5
      %v4458 = vsel %vm1669, %v4456, %v4457
      %s4459 = scalar_lea.vmem %s1, 16
      %v4460 = vld [vmem:[%s4459] sm:$0x3]
      %v4461 = vunpack.c.l.b16 %v4350
      %v4462 = vunpack.c.l.b16 %v4353
      %v4463 = vunpack.c.l.b16 %v4357
      %v4464 = vunpack.c.l.b16 %v4360
      %v4465 = vunpack.c.l.b16 %v4364
      %v4466 = vunpack.c.l.b16 %v4367
      %v4467 = vunpack.c.l.b16 %v4371
      %v4468 = vunpack.c.l.b16 %v4374
      %v4469 = vunpack.c.l.b16 %v4378
      %v4470 = vunpack.c.l.b16 %v4381
      %v4471 = vunpack.c.l.b16 %v4385
      %v4472 = vunpack.c.l.b16 %v4388
      %v4473 = vunpack.c.l.b16 %v4392
      %v4474 = vunpack.c.l.b16 %v4395
      %v4475 = vunpack.c.l.b16 %v4399
      %v4476 = vunpack.c.l.b16 %v4402
      %v4477 = vunpack.c.l.b16 %v4406
      %v4478 = vunpack.c.l.b16 %v4409
      %v4479 = vunpack.c.l.b16 %v4413
      %v4480 = vunpack.c.l.b16 %v4416
      %v4481 = vunpack.c.l.b16 %v4420
      %v4482 = vunpack.c.l.b16 %v4423
      %v4483 = vunpack.c.l.b16 %v4427
      %v4484 = vunpack.c.l.b16 %v4430
      %v4485 = vunpack.c.l.b16 %v4434
      %v4486 = vunpack.c.l.b16 %v4437
      %v4487 = vunpack.c.l.b16 %v4441
      %v4488 = vunpack.c.l.b16 %v4444
      %v4489 = vunpack.c.l.b16 %v4448
      %v4490 = vunpack.c.l.b16 %v4451
      %v4491 = vunpack.c.l.b16 %v4455
      %v4492 = vunpack.c.l.b16 %v4458
      %v4493 = vpack.c.b16 %v4462, %v4461
      %v4494 = vpack.c.b16 %v4464, %v4463
      %v4495 = vpack.c.b16 %v4466, %v4465
      %v4496 = vpack.c.b16 %v4468, %v4467
      %v4497 = vpack.c.b16 %v4470, %v4469
      %v4498 = vpack.c.b16 %v4472, %v4471
      %v4499 = vpack.c.b16 %v4474, %v4473
      %v4500 = vpack.c.b16 %v4476, %v4475
      %v4501 = vpack.c.b16 %v4478, %v4477
      %v4502 = vpack.c.b16 %v4480, %v4479
      %v4503 = vpack.c.b16 %v4482, %v4481
      %v4504 = vpack.c.b16 %v4484, %v4483
      %v4505 = vpack.c.b16 %v4486, %v4485
      %v4506 = vpack.c.b16 %v4488, %v4487
      %v4507 = vpack.c.b16 %v4490, %v4489
      %v4508 = vpack.c.b16 %v4492, %v4491
      %v4510 = vsel %vm1257, %v4493, 0
      %v4513 = vsel %vm1257, %v4494, 0
      %v4516 = vsel %vm1257, %v4495, 0
      %v4519 = vsel %vm1257, %v4496, 0
      %v4522 = vsel %vm1257, %v4497, 0
      %v4525 = vsel %vm1257, %v4498, 0
      %v4528 = vsel %vm1257, %v4499, 0
      %v4531 = vsel %vm1257, %v4500, 0
      %v4534 = vsel %vm1257, %v4501, 0
      %v4537 = vsel %vm1257, %v4502, 0
      %v4540 = vsel %vm1257, %v4503, 0
      %v4543 = vsel %vm1257, %v4504, 0
      %v4546 = vsel %vm1257, %v4505, 0
      %v4549 = vsel %vm1257, %v4506, 0
      %v4552 = vsel %vm1257, %v4507, 0
      %v4555 = vsel %vm1257, %v4508, 0
      %v4558 = vsel %vm1306, %v4460, 0
      %4560 = vmatpush.bf16.msra.mxu0 0
      %4561 = vmatpush.bf16.msra.mxu0 0
      %4562 = vmatpush.bf16.msra.mxu0 0
      %4563 = vmatpush.bf16.msra.mxu0 0
      %4564 = vmatpush.bf16.msra.mxu0 0
      %4565 = vmatpush.bf16.msra.mxu0 0
      %4566 = vmatpush.bf16.msra.mxu0 0
      %4567 = vmatpush.bf16.msra.mxu0 %v4558
      %4568 = vmatmul.bf16.gmra.mxu0 %v4510
      %v4569 = vpop.f32.mrf.mxu0
      %v4570 = vadd.f32 0.0, %v4569
      %v4571 = vpop.f32.mrf.mxu0
      %v4572 = vadd.f32 0.0, %v4571
      %4573 = vmatmul.bf16.gmra.mxu0 %v4513
      %v4574 = vpop.f32.mrf.mxu0
      %v4575 = vadd.f32 0.0, %v4574
      %v4576 = vpop.f32.mrf.mxu0
      %v4577 = vadd.f32 0.0, %v4576
      %4578 = vmatmul.bf16.gmra.mxu0 %v4516
      %v4579 = vpop.f32.mrf.mxu0
      %v4580 = vadd.f32 0.0, %v4579
      %v4581 = vpop.f32.mrf.mxu0
      %v4582 = vadd.f32 0.0, %v4581
      %4583 = vmatmul.bf16.gmra.mxu0 %v4519
      %v4584 = vpop.f32.mrf.mxu0
      %v4585 = vadd.f32 0.0, %v4584
      %v4586 = vpop.f32.mrf.mxu0
      %v4587 = vadd.f32 0.0, %v4586
      %4588 = vmatmul.bf16.gmra.mxu0 %v4522
      %v4589 = vpop.f32.mrf.mxu0
      %v4590 = vadd.f32 0.0, %v4589
      %v4591 = vpop.f32.mrf.mxu0
      %v4592 = vadd.f32 0.0, %v4591
      %4593 = vmatmul.bf16.gmra.mxu0 %v4525
      %v4594 = vpop.f32.mrf.mxu0
      %v4595 = vadd.f32 0.0, %v4594
      %v4596 = vpop.f32.mrf.mxu0
      %v4597 = vadd.f32 0.0, %v4596
      %4598 = vmatmul.bf16.gmra.mxu0 %v4528
      %v4599 = vpop.f32.mrf.mxu0
      %v4600 = vadd.f32 0.0, %v4599
      %v4601 = vpop.f32.mrf.mxu0
      %v4602 = vadd.f32 0.0, %v4601
      %4603 = vmatmul.bf16.gmra.mxu0 %v4531
      %v4604 = vpop.f32.mrf.mxu0
      %v4605 = vadd.f32 0.0, %v4604
      %v4606 = vpop.f32.mrf.mxu0
      %v4607 = vadd.f32 0.0, %v4606
      %4608 = vmatmul.bf16.gmra.mxu0 %v4534
      %v4609 = vpop.f32.mrf.mxu0
      %v4610 = vadd.f32 0.0, %v4609
      %v4611 = vpop.f32.mrf.mxu0
      %v4612 = vadd.f32 0.0, %v4611
      %4613 = vmatmul.bf16.gmra.mxu0 %v4537
      %v4614 = vpop.f32.mrf.mxu0
      %v4615 = vadd.f32 0.0, %v4614
      %v4616 = vpop.f32.mrf.mxu0
      %v4617 = vadd.f32 0.0, %v4616
      %4618 = vmatmul.bf16.gmra.mxu0 %v4540
      %v4619 = vpop.f32.mrf.mxu0
      %v4620 = vadd.f32 0.0, %v4619
      %v4621 = vpop.f32.mrf.mxu0
      %v4622 = vadd.f32 0.0, %v4621
      %4623 = vmatmul.bf16.gmra.mxu0 %v4543
      %v4624 = vpop.f32.mrf.mxu0
      %v4625 = vadd.f32 0.0, %v4624
      %v4626 = vpop.f32.mrf.mxu0
      %v4627 = vadd.f32 0.0, %v4626
      %4628 = vmatmul.bf16.gmra.mxu0 %v4546
      %v4629 = vpop.f32.mrf.mxu0
      %v4630 = vadd.f32 0.0, %v4629
      %v4631 = vpop.f32.mrf.mxu0
      %v4632 = vadd.f32 0.0, %v4631
      %4633 = vmatmul.bf16.gmra.mxu0 %v4549
      %v4634 = vpop.f32.mrf.mxu0
      %v4635 = vadd.f32 0.0, %v4634
      %v4636 = vpop.f32.mrf.mxu0
      %v4637 = vadd.f32 0.0, %v4636
      %4638 = vmatmul.bf16.gmra.mxu0 %v4552
      %v4639 = vpop.f32.mrf.mxu0
      %v4640 = vadd.f32 0.0, %v4639
      %v4641 = vpop.f32.mrf.mxu0
      %v4642 = vadd.f32 0.0, %v4641
      %4643 = vmatmul.bf16.gmra.mxu0 %v4555
      %v4644 = vpop.f32.mrf.mxu0
      %v4645 = vadd.f32 0.0, %v4644
      %v4646 = vpop.f32.mrf.mxu0
      %v4647 = vadd.f32 0.0, %v4646
      %4648 = vdwg.mxu0
      %v4649 = vadd.f32 %v4251, %v4570
      %v4650 = vadd.f32 %v4252, %v4572
      %v4651 = vadd.f32 %v4253, %v4575
      %v4652 = vadd.f32 %v4254, %v4577
      %v4653 = vadd.f32 %v4255, %v4580
      %v4654 = vadd.f32 %v4256, %v4582
      %v4655 = vadd.f32 %v4257, %v4585
      %v4656 = vadd.f32 %v4258, %v4587
      %v4657 = vadd.f32 %v4259, %v4590
      %v4658 = vadd.f32 %v4260, %v4592
      %v4659 = vadd.f32 %v4261, %v4595
      %v4660 = vadd.f32 %v4262, %v4597
      %v4661 = vadd.f32 %v4263, %v4600
      %v4662 = vadd.f32 %v4264, %v4602
      %v4663 = vadd.f32 %v4265, %v4605
      %v4664 = vadd.f32 %v4266, %v4607
      %v4665 = vadd.f32 %v4267, %v4610
      %v4666 = vadd.f32 %v4268, %v4612
      %v4667 = vadd.f32 %v4269, %v4615
      %v4668 = vadd.f32 %v4270, %v4617
      %v4669 = vadd.f32 %v4271, %v4620
      %v4670 = vadd.f32 %v4272, %v4622
      %v4671 = vadd.f32 %v4273, %v4625
      %v4672 = vadd.f32 %v4274, %v4627
      %v4673 = vadd.f32 %v4275, %v4630
      %v4674 = vadd.f32 %v4276, %v4632
      %v4675 = vadd.f32 %v4277, %v4635
      %v4676 = vadd.f32 %v4278, %v4637
      %v4677 = vadd.f32 %v4279, %v4640
      %v4678 = vadd.f32 %v4280, %v4642
      %v4679 = vadd.f32 %v4281, %v4645
      %v4680 = vadd.f32 %v4282, %v4647
      %v4681 = vld [vmem:[%s2] sm:$0x1]
      %v4683 = vperm.slane %v4681, 0
      %v4685 = vadd.f32 %v4649, %v4683
      %v4686 = vadd.f32 %v4650, %v4683
      %v4687 = vadd.f32 %v4651, %v4683
      %v4688 = vadd.f32 %v4652, %v4683
      %v4689 = vadd.f32 %v4653, %v4683
      %v4690 = vadd.f32 %v4654, %v4683
      %v4691 = vadd.f32 %v4655, %v4683
      %v4692 = vadd.f32 %v4656, %v4683
      %v4693 = vadd.f32 %v4657, %v4683
      %v4694 = vadd.f32 %v4658, %v4683
      %v4695 = vadd.f32 %v4659, %v4683
      %v4696 = vadd.f32 %v4660, %v4683
      %v4697 = vadd.f32 %v4661, %v4683
      %v4698 = vadd.f32 %v4662, %v4683
      %v4699 = vadd.f32 %v4663, %v4683
      %v4700 = vadd.f32 %v4664, %v4683
      %v4701 = vadd.f32 %v4665, %v4683
      %v4702 = vadd.f32 %v4666, %v4683
      %v4703 = vadd.f32 %v4667, %v4683
      %v4704 = vadd.f32 %v4668, %v4683
      %v4705 = vadd.f32 %v4669, %v4683
      %v4706 = vadd.f32 %v4670, %v4683
      %v4707 = vadd.f32 %v4671, %v4683
      %v4708 = vadd.f32 %v4672, %v4683
      %v4709 = vadd.f32 %v4673, %v4683
      %v4710 = vadd.f32 %v4674, %v4683
      %v4711 = vadd.f32 %v4675, %v4683
      %v4712 = vadd.f32 %v4676, %v4683
      %v4713 = vadd.f32 %v4677, %v4683
      %v4714 = vadd.f32 %v4678, %v4683
      %v4715 = vadd.f32 %v4679, %v4683
      %v4716 = vadd.f32 %v4680, %v4683
      %v4717 = vpack.c.bf16 %v4685, %v4685
      %v4718 = vpack.c.bf16 %v4686, %v4686
      %v4719 = vpack.c.bf16 %v4687, %v4687
      %v4720 = vpack.c.bf16 %v4688, %v4688
      %v4721 = vpack.c.bf16 %v4689, %v4689
      %v4722 = vpack.c.bf16 %v4690, %v4690
      %v4723 = vpack.c.bf16 %v4691, %v4691
      %v4724 = vpack.c.bf16 %v4692, %v4692
      %v4725 = vpack.c.bf16 %v4693, %v4693
      %v4726 = vpack.c.bf16 %v4694, %v4694
      %v4727 = vpack.c.bf16 %v4695, %v4695
      %v4728 = vpack.c.bf16 %v4696, %v4696
      %v4729 = vpack.c.bf16 %v4697, %v4697
      %v4730 = vpack.c.bf16 %v4698, %v4698
      %v4731 = vpack.c.bf16 %v4699, %v4699
      %v4732 = vpack.c.bf16 %v4700, %v4700
      %v4733 = vpack.c.bf16 %v4701, %v4701
      %v4734 = vpack.c.bf16 %v4702, %v4702
      %v4735 = vpack.c.bf16 %v4703, %v4703
      %v4736 = vpack.c.bf16 %v4704, %v4704
      %v4737 = vpack.c.bf16 %v4705, %v4705
      %v4738 = vpack.c.bf16 %v4706, %v4706
      %v4739 = vpack.c.bf16 %v4707, %v4707
      %v4740 = vpack.c.bf16 %v4708, %v4708
      %v4741 = vpack.c.bf16 %v4709, %v4709
      %v4742 = vpack.c.bf16 %v4710, %v4710
      %v4743 = vpack.c.bf16 %v4711, %v4711
      %v4744 = vpack.c.bf16 %v4712, %v4712
      %v4745 = vpack.c.bf16 %v4713, %v4713
      %v4746 = vpack.c.bf16 %v4714, %v4714
      %v4747 = vpack.c.bf16 %v4715, %v4715
      %v4748 = vpack.c.bf16 %v4716, %v4716
      %4749 = vst [vmem:[%s204] sm:$0xf] %v4717
      %4750 = vst [vmem:[%s204 + $0x4] sm:$0xf] %v4718
      %4751 = vst [vmem:[%s204 + $0x8] sm:$0xf] %v4719
      %4752 = vst [vmem:[%s204 + $0xc] sm:$0xf] %v4720
      %4753 = vst [vmem:[%s204 + $0x10] sm:$0xf] %v4721
      %4754 = vst [vmem:[%s204 + $0x14] sm:$0xf] %v4722
      %4755 = vst [vmem:[%s204 + $0x18] sm:$0xf] %v4723
      %4756 = vst [vmem:[%s204 + $0x1c] sm:$0xf] %v4724
      %4757 = vst [vmem:[%s204 + $0x20] sm:$0xf] %v4725
      %4758 = vst [vmem:[%s204 + $0x24] sm:$0xf] %v4726
      %4759 = vst [vmem:[%s204 + $0x28] sm:$0xf] %v4727
      %4760 = vst [vmem:[%s204 + $0x2c] sm:$0xf] %v4728
      %4761 = vst [vmem:[%s204 + $0x30] sm:$0xf] %v4729
      %4762 = vst [vmem:[%s204 + $0x34] sm:$0xf] %v4730
      %4763 = vst [vmem:[%s204 + $0x38] sm:$0xf] %v4731
      %4764 = vst [vmem:[%s204 + $0x3c] sm:$0xf] %v4732
      %4765 = vst [vmem:[%s204 + $0x40] sm:$0xf] %v4733
      %4766 = vst [vmem:[%s204 + $0x44] sm:$0xf] %v4734
      %4767 = vst [vmem:[%s204 + $0x48] sm:$0xf] %v4735
      %4768 = vst [vmem:[%s204 + $0x4c] sm:$0xf] %v4736
      %4769 = vst [vmem:[%s204 + $0x50] sm:$0xf] %v4737
      %4770 = vst [vmem:[%s204 + $0x54] sm:$0xf] %v4738
      %4771 = vst [vmem:[%s204 + $0x58] sm:$0xf] %v4739
      %4772 = vst [vmem:[%s204 + $0x5c] sm:$0xf] %v4740
      %4773 = vst [vmem:[%s204 + $0x60] sm:$0xf] %v4741
      %4774 = vst [vmem:[%s204 + $0x64] sm:$0xf] %v4742
      %4775 = vst [vmem:[%s204 + $0x68] sm:$0xf] %v4743
      %4776 = vst [vmem:[%s204 + $0x6c] sm:$0xf] %v4744
      %4777 = vst [vmem:[%s204 + $0x70] sm:$0xf] %v4745
      %4778 = vst [vmem:[%s204 + $0x74] sm:$0xf] %v4746
      %4779 = vst [vmem:[%s204 + $0x78] sm:$0xf] %v4747
      %4780 = vst [vmem:[%s204 + $0x7c] sm:$0xf] %v4748
      %v4781 = vunpack.c.l.bf16 %v4717
      %v4782 = vunpack.c.l.bf16 %v4718
      %v4783 = vunpack.c.l.bf16 %v4719
      %v4784 = vunpack.c.l.bf16 %v4720
      %v4785 = vunpack.c.l.bf16 %v4721
      %v4786 = vunpack.c.l.bf16 %v4722
      %v4787 = vunpack.c.l.bf16 %v4723
      %v4788 = vunpack.c.l.bf16 %v4724
      %v4789 = vunpack.c.l.bf16 %v4725
      %v4790 = vunpack.c.l.bf16 %v4726
      %v4791 = vunpack.c.l.bf16 %v4727
      %v4792 = vunpack.c.l.bf16 %v4728
      %v4793 = vunpack.c.l.bf16 %v4729
      %v4794 = vunpack.c.l.bf16 %v4730
      %v4795 = vunpack.c.l.bf16 %v4731
      %v4796 = vunpack.c.l.bf16 %v4732
      %v4797 = vunpack.c.l.bf16 %v4733
      %v4798 = vunpack.c.l.bf16 %v4734
      %v4799 = vunpack.c.l.bf16 %v4735
      %v4800 = vunpack.c.l.bf16 %v4736
      %v4801 = vunpack.c.l.bf16 %v4737
      %v4802 = vunpack.c.l.bf16 %v4738
      %v4803 = vunpack.c.l.bf16 %v4739
      %v4804 = vunpack.c.l.bf16 %v4740
      %v4805 = vunpack.c.l.bf16 %v4741
      %v4806 = vunpack.c.l.bf16 %v4742
      %v4807 = vunpack.c.l.bf16 %v4743
      %v4808 = vunpack.c.l.bf16 %v4744
      %v4809 = vunpack.c.l.bf16 %v4745
      %v4810 = vunpack.c.l.bf16 %v4746
      %v4811 = vunpack.c.l.bf16 %v4747
      %v4812 = vunpack.c.l.bf16 %v4748
      %v4813 = vadd.f32 %v4781, %v4782
      %v4814 = vadd.f32 %v4813, %v4783
      %v4815 = vadd.f32 %v4814, %v4784
      %v4816 = vadd.f32 %v4815, %v4785
      %v4817 = vadd.f32 %v4816, %v4786
      %v4818 = vadd.f32 %v4817, %v4787
      %v4819 = vadd.f32 %v4818, %v4788
      %v4820 = vadd.f32 %v4819, %v4789
      %v4821 = vadd.f32 %v4820, %v4790
      %v4822 = vadd.f32 %v4821, %v4791
      %v4823 = vadd.f32 %v4822, %v4792
      %v4824 = vadd.f32 %v4823, %v4793
      %v4825 = vadd.f32 %v4824, %v4794
      %v4826 = vadd.f32 %v4825, %v4795
      %v4827 = vadd.f32 %v4826, %v4796
      %v4828 = vadd.f32 %v4827, %v4797
      %v4829 = vadd.f32 %v4828, %v4798
      %v4830 = vadd.f32 %v4829, %v4799
      %v4831 = vadd.f32 %v4830, %v4800
      %v4832 = vadd.f32 %v4831, %v4801
      %v4833 = vadd.f32 %v4832, %v4802
      %v4834 = vadd.f32 %v4833, %v4803
      %v4835 = vadd.f32 %v4834, %v4804
      %v4836 = vadd.f32 %v4835, %v4805
      %v4837 = vadd.f32 %v4836, %v4806
      %v4838 = vadd.f32 %v4837, %v4807
      %v4839 = vadd.f32 %v4838, %v4808
      %v4840 = vadd.f32 %v4839, %v4809
      %v4841 = vadd.f32 %v4840, %v4810
      %v4842 = vadd.f32 %v4841, %v4811
      %v4843 = vadd.f32 %v4842, %v4812
      %v4844 = vrot.slane %v4843, 4
      %v4845 = vadd.f32 %v4843, %v4844
      %v4846 = vrot.slane %v4845, 2
      %v4847 = vadd.f32 %v4845, %v4846
      %v4848 = vrot.slane %v4847, 1
      %v4849 = vadd.f32 %v4847, %v4848
      %v4850 = vrcp.pop 256.0
      %v4851 = vmul.f32 256.0, %v4850
      %v4852 = vsub.f32 1.0, %v4851
      %v4853 = vmul.f32 %v4850, %v4852
      %v4854 = vadd.f32 %v4850, %v4853
      %vm4855 = vweird.f32 %v4850
      %v4856 = vsel %vm4855, %v4850, %v4854
      %v4857 = vmul.f32 %v4849, %v4856
      %v4858 = vsub.f32 %v4781, %v4857
      %v4859 = vsub.f32 %v4782, %v4857
      %v4860 = vsub.f32 %v4783, %v4857
      %v4861 = vsub.f32 %v4784, %v4857
      %v4862 = vsub.f32 %v4785, %v4857
      %v4863 = vsub.f32 %v4786, %v4857
      %v4864 = vsub.f32 %v4787, %v4857
      %v4865 = vsub.f32 %v4788, %v4857
      %v4866 = vsub.f32 %v4789, %v4857
      %v4867 = vsub.f32 %v4790, %v4857
      %v4868 = vsub.f32 %v4791, %v4857
      %v4869 = vsub.f32 %v4792, %v4857
      %v4870 = vsub.f32 %v4793, %v4857
      %v4871 = vsub.f32 %v4794, %v4857
      %v4872 = vsub.f32 %v4795, %v4857
      %v4873 = vsub.f32 %v4796, %v4857
      %v4874 = vsub.f32 %v4797, %v4857
      %v4875 = vsub.f32 %v4798, %v4857
      %v4876 = vsub.f32 %v4799, %v4857
      %v4877 = vsub.f32 %v4800, %v4857
      %v4878 = vsub.f32 %v4801, %v4857
      %v4879 = vsub.f32 %v4802, %v4857
      %v4880 = vsub.f32 %v4803, %v4857
      %v4881 = vsub.f32 %v4804, %v4857
      %v4882 = vsub.f32 %v4805, %v4857
      %v4883 = vsub.f32 %v4806, %v4857
      %v4884 = vsub.f32 %v4807, %v4857
      %v4885 = vsub.f32 %v4808, %v4857
      %v4886 = vsub.f32 %v4809, %v4857
      %v4887 = vsub.f32 %v4810, %v4857
      %v4888 = vsub.f32 %v4811, %v4857
      %v4889 = vsub.f32 %v4812, %v4857
      %v4890 = vmul.f32 %v4858, %v4858
      %v4891 = vmul.f32 %v4859, %v4859
      %v4892 = vmul.f32 %v4860, %v4860
      %v4893 = vmul.f32 %v4861, %v4861
      %v4894 = vmul.f32 %v4862, %v4862
      %v4895 = vmul.f32 %v4863, %v4863
      %v4896 = vmul.f32 %v4864, %v4864
      %v4897 = vmul.f32 %v4865, %v4865
      %v4898 = vmul.f32 %v4866, %v4866
      %v4899 = vmul.f32 %v4867, %v4867
      %v4900 = vmul.f32 %v4868, %v4868
      %v4901 = vmul.f32 %v4869, %v4869
      %v4902 = vmul.f32 %v4870, %v4870
      %v4903 = vmul.f32 %v4871, %v4871
      %v4904 = vmul.f32 %v4872, %v4872
      %v4905 = vmul.f32 %v4873, %v4873
      %v4906 = vmul.f32 %v4874, %v4874
      %v4907 = vmul.f32 %v4875, %v4875
      %v4908 = vmul.f32 %v4876, %v4876
      %v4909 = vmul.f32 %v4877, %v4877
      %v4910 = vmul.f32 %v4878, %v4878
      %v4911 = vmul.f32 %v4879, %v4879
      %v4912 = vmul.f32 %v4880, %v4880
      %v4913 = vmul.f32 %v4881, %v4881
      %v4914 = vmul.f32 %v4882, %v4882
      %v4915 = vmul.f32 %v4883, %v4883
      %v4916 = vmul.f32 %v4884, %v4884
      %v4917 = vmul.f32 %v4885, %v4885
      %v4918 = vmul.f32 %v4886, %v4886
      %v4919 = vmul.f32 %v4887, %v4887
      %v4920 = vmul.f32 %v4888, %v4888
      %v4921 = vmul.f32 %v4889, %v4889
      %v4922 = vadd.f32 %v4890, %v4891
      %v4923 = vadd.f32 %v4922, %v4892
      %v4924 = vadd.f32 %v4923, %v4893
      %v4925 = vadd.f32 %v4924, %v4894
      %v4926 = vadd.f32 %v4925, %v4895
      %v4927 = vadd.f32 %v4926, %v4896
      %v4928 = vadd.f32 %v4927, %v4897
      %v4929 = vadd.f32 %v4928, %v4898
      %v4930 = vadd.f32 %v4929, %v4899
      %v4931 = vadd.f32 %v4930, %v4900
      %v4932 = vadd.f32 %v4931, %v4901
      %v4933 = vadd.f32 %v4932, %v4902
      %v4934 = vadd.f32 %v4933, %v4903
      %v4935 = vadd.f32 %v4934, %v4904
      %v4936 = vadd.f32 %v4935, %v4905
      %v4937 = vadd.f32 %v4936, %v4906
      %v4938 = vadd.f32 %v4937, %v4907
      %v4939 = vadd.f32 %v4938, %v4908
      %v4940 = vadd.f32 %v4939, %v4909
      %v4941 = vadd.f32 %v4940, %v4910
      %v4942 = vadd.f32 %v4941, %v4911
      %v4943 = vadd.f32 %v4942, %v4912
      %v4944 = vadd.f32 %v4943, %v4913
      %v4945 = vadd.f32 %v4944, %v4914
      %v4946 = vadd.f32 %v4945, %v4915
      %v4947 = vadd.f32 %v4946, %v4916
      %v4948 = vadd.f32 %v4947, %v4917
      %v4949 = vadd.f32 %v4948, %v4918
      %v4950 = vadd.f32 %v4949, %v4919
      %v4951 = vadd.f32 %v4950, %v4920
      %v4952 = vadd.f32 %v4951, %v4921
      %v4953 = vrot.slane %v4952, 4
      %v4954 = vadd.f32 %v4952, %v4953
      %v4955 = vrot.slane %v4954, 2
      %v4956 = vadd.f32 %v4954, %v4955
      %v4957 = vrot.slane %v4956, 1
      %v4958 = vadd.f32 %v4956, %v4957
      %vm4959 = vcmask 1040384
      %v4960 = vsel %vm4959, %v4849, %v4958
      %4961 = vst [vmem:[%s208] sm:$0x3] %v4960
      %p4962 = scmp.lt.s32.totalorder %s16, 1
      %s4963 = scalar_select %p4962, %s16, 1
      %s4964 = smul.addr %s4963, 32
      %s4965 = smul.addr %s4964, 4
      %s4966 = scalar_lea.vmem %s3, %s4965
      %p4967 = scmp.lt.s32.totalorder %s16, 1
      %s4968 = scalar_select %p4967, %s16, 1
      %s4969 = smul.addr %s4968, 2
      %s4970 = scalar_lea.vmem %s4, %s4969
      // Predicated region
      $region33: #{double_conv_pallas.3} parent=31 // pred_check
        %p4971 = pneg %p102
      $region34: #{double_conv_pallas.3} parent=31 // pred_check_branch
        %4973 = sbr.rel (%p4971) target = $region36
      $region35: #{double_conv_pallas.3} parent=31 // pred_region
        _
      $region36: #{double_conv_pallas.3} parent=31 // pred_fallthru
        _
      // Predicated region
      $region37: #{double_conv_pallas.3} parent=31 // pred_check
        %p4974 = pneg %p128
      $region38: #{double_conv_pallas.3} parent=31 // pred_check_branch
        %4976 = sbr.rel (%p4974) target = $region40
      $region39: #{double_conv_pallas.3} parent=31 // pred_region
        _
      $region40: #{double_conv_pallas.3} parent=31 // pred_fallthru
        _
    $region32: #{double_conv_pallas.3} parent=5 // pred_fallthru
      _
    %p4977 = scmp.le.s32.totalorder 2, %s11
    // Predicated region
    $region41: #{double_conv_pallas.3} parent=5 // pred_check
      %p4978 = pneg %p4977
    $region42: #{double_conv_pallas.3} parent=5 // pred_check_branch
      %4980 = sbr.rel (%p4978) target = $region44
    $region43: #{double_conv_pallas.3} parent=5 // pred_region
      %s4981 = ssub.s32 %s11, 2
      // Predicated region
      $region45: #{double_conv_pallas.3} parent=43 // pred_check
        %p4982 = pneg %p108
      $region46: #{double_conv_pallas.3} parent=43 // pred_check_branch
        %4984 = sbr.rel (%p4982) target = $region48
      $region47: #{double_conv_pallas.3} parent=43 // pred_region
        %p4985 = scmp.lt.s32.totalorder %s17, 1
        %s4986 = scalar_select %p4985, %s17, 1
        %s4987 = smul.addr %s4986, 32
        %s4988 = smul.addr %s4987, 4
        %s4989 = scalar_lea.vmem %s3, %s4988
      $region48: #{double_conv_pallas.3} parent=43 // pred_fallthru
        _
      // Predicated region
      $region49: #{double_conv_pallas.3} parent=43 // pred_check
        %p4990 = pneg %p134
      $region50: #{double_conv_pallas.3} parent=43 // pred_check_branch
        %4992 = sbr.rel (%p4990) target = $region52
      $region51: #{double_conv_pallas.3} parent=43 // pred_region
        %p4993 = scmp.lt.s32.totalorder %s17, 1
        %s4994 = scalar_select %p4993, %s17, 1
        %s4995 = smul.addr %s4994, 2
        %s4996 = scalar_lea.vmem %s4, %s4995
      $region52: #{double_conv_pallas.3} parent=43 // pred_fallthru
        _
    $region44: #{double_conv_pallas.3} parent=5 // pred_fallthru
      _
  $region6: #{double_conv_pallas.3} parent=0 // loop_footer
    %s15 = sadd.s32 1, %s11
  $region7: #{double_conv_pallas.3} parent=0 // loop_footer_branch
    %10 = sbr.rel target = $region3
  $region8: #{double_conv_pallas.3} parent=0 // loop_exit
    _

// kernel: double_conv_pallas.4
$region0: #{double_conv_pallas.4}
  #allocation0 [shape = 'u32[]', space=smem, size = 0x4, offset = 0x4, fixed_abs, tag = 'smem constant byte address 0x4 - core index']
  #allocation1 [shape = 'u32[72,128]{1,0:T(1,128)}', space=vmem, size = 0x9000, scoped, tag = 'internal scratch']
  #allocation2 [shape = 'bf16[18,18,128]{2,1,0:T(8,128)(2,1)}', space=vmem, size = 0x1b000, scoped, tag = 'scratch operand']
  #allocation3 [shape = 'bf16[256,1152]{1,0:T(8,128)(2,1)}', space=vmem, size = 0x90000, scoped, tag = 'scratch operand']
  %s0 = inlined_call_operand.vmem [shape: bf16[2,16,16,128], index: 0, kind: input, shape index: {}]
  %s1 = inlined_call_operand.vmem [shape: bf16[1152,128], index: 1, kind: input, shape index: {}]
  %s2 = inlined_call_operand.vmem [shape: f32[1,128], index: 2, kind: input, shape index: {}]
  %s3 = inlined_call_operand.vmem [shape: f32[1,128], index: 3, kind: input, shape index: {}]
  %s4 = inlined_call_operand.vmem [shape: f32[1,128], index: 4, kind: input, shape index: {}]
  %s5 = inlined_call_operand.vmem [shape: bf16[2,16,16,128], index: 5, kind: output, shape index: {0}]
  %s6 = inlined_call_operand.vmem [shape: f32[2,2,128], index: 6, kind: output, shape index: {1}]
  %7 = xla_tuple %s5, %s6
  %s8 = sld [smem:[#allocation0]]
  $region61: #{double_conv_pallas.4} parent=0
    _
  %s10 = ssub.s32 1, %s8
  %s11 = scalar_select 0, %s10, %s8
  loop: start=0, step=1, limit=4
  $region2: #{double_conv_pallas.4} parent=0 // loop_pre_header
    _
  $region3: #{double_conv_pallas.4} parent=0 // loop_header
    %s13 = sphi 0, %s17
    %p14 = scmp.ge.s32.totalorder %s13, 4
    %s23 = sphi 0, %s25
    %s26 = sphi 0, %s23
    %s27 = sphi 0, %s26
    %s43 = sphi 0, %s27
    %s47 = sphi 0, %s47
    %s49 = sphi 0, %s47
    %s50 = sphi 0, %s49
    %s64 = sphi 0, %s50
    %s68 = sphi 0, %s68
    %s70 = sphi 0, %s68
    %s71 = sphi 0, %s70
    %s85 = sphi 0, %s71
    %s89 = sphi 0, %s89
    %s91 = sphi 0, %s89
    %s92 = sphi 0, %s91
    %s106 = sphi 0, %s92
    %s110 = sphi 0, %s110
    %s112 = sphi 0, %s110
    %s113 = sphi 0, %s112
    %s127 = sphi 0, %s113
    %s133 = sphi 0, %s135
    %s136 = sphi 0, %s133
    %s137 = sphi 0, %s136
    %s153 = sphi 0, %s137
    %s159 = sphi 0, %s161
    %s162 = sphi 0, %s159
    %s163 = sphi 0, %s162
    %s179 = sphi 0, %s163
  $region4: #{double_conv_pallas.4} parent=0 // loop_header_branch
    %16 = sbr.rel (%p14) target = $region8
  $region5: #{double_conv_pallas.4} parent=0 // loop_body
    %s18 = ssub.s32 %s13, 1
    %s19 = ssub.s32 %s13, 2
    %s20 = sadd.s32 %s13, 1
    %s21 = ssub.s32 %s13, %s20
    %p22 = scmp.eq.s32.totalorder %s21, 0
    %s24 = sadd.s32 %s23, 1
    %s25 = scalar_select %p22, %s23, %s24
    %p28 = pneg %p22
    %p29 = scmp.eq.s32.totalorder %s13, 1
    %p30 = por %p28, %p29
    %p31 = scmp.ne.s32.totalorder %s23, %s26
    %p32 = scmp.eq.s32.totalorder %s13, 0
    %p33 = por %p31, %p32
    %p34 = scmp.ne.s32.totalorder %s23, %s26
    %p35 = scmp.eq.s32.totalorder %s18, 1
    %p36 = por %p34, %p35
    %p37 = scmp.ne.s32.totalorder %s26, %s27
    %p38 = scmp.eq.s32.totalorder %s18, 0
    %p39 = por %p37, %p38
    %p40 = scmp.ne.s32.totalorder %s26, %s27
    %p41 = scmp.eq.s32.totalorder %s19, 1
    %p42 = por %p40, %p41
    %p44 = scmp.ne.s32.totalorder %s27, %s43
    %p45 = scmp.eq.s32.totalorder %s19, 0
    %p46 = por %p44, %p45
    %s48 = sadd.s32 %s47, 1
    %p51 = scmp.eq.s32.totalorder %s13, 1
    %p52 = scmp.ne.s32.totalorder %s47, %s49
    %p53 = scmp.eq.s32.totalorder %s13, 0
    %p54 = por %p52, %p53
    %p55 = scmp.ne.s32.totalorder %s47, %s49
    %p56 = scmp.eq.s32.totalorder %s18, 1
    %p57 = por %p55, %p56
    %p58 = scmp.ne.s32.totalorder %s49, %s50
    %p59 = scmp.eq.s32.totalorder %s18, 0
    %p60 = por %p58, %p59
    %p61 = scmp.ne.s32.totalorder %s49, %s50
    %p62 = scmp.eq.s32.totalorder %s19, 1
    %p63 = por %p61, %p62
    %p65 = scmp.ne.s32.totalorder %s50, %s64
    %p66 = scmp.eq.s32.totalorder %s19, 0
    %p67 = por %p65, %p66
    %s69 = sadd.s32 %s68, 1
    %p72 = scmp.eq.s32.totalorder %s13, 1
    %p73 = scmp.ne.s32.totalorder %s68, %s70
    %p74 = scmp.eq.s32.totalorder %s13, 0
    %p75 = por %p73, %p74
    %p76 = scmp.ne.s32.totalorder %s68, %s70
    %p77 = scmp.eq.s32.totalorder %s18, 1
    %p78 = por %p76, %p77
    %p79 = scmp.ne.s32.totalorder %s70, %s71
    %p80 = scmp.eq.s32.totalorder %s18, 0
    %p81 = por %p79, %p80
    %p82 = scmp.ne.s32.totalorder %s70, %s71
    %p83 = scmp.eq.s32.totalorder %s19, 1
    %p84 = por %p82, %p83
    %p86 = scmp.ne.s32.totalorder %s71, %s85
    %p87 = scmp.eq.s32.totalorder %s19, 0
    %p88 = por %p86, %p87
    %s90 = sadd.s32 %s89, 1
    %p93 = scmp.eq.s32.totalorder %s13, 1
    %p94 = scmp.ne.s32.totalorder %s89, %s91
    %p95 = scmp.eq.s32.totalorder %s13, 0
    %p96 = por %p94, %p95
    %p97 = scmp.ne.s32.totalorder %s89, %s91
    %p98 = scmp.eq.s32.totalorder %s18, 1
    %p99 = por %p97, %p98
    %p100 = scmp.ne.s32.totalorder %s91, %s92
    %p101 = scmp.eq.s32.totalorder %s18, 0
    %p102 = por %p100, %p101
    %p103 = scmp.ne.s32.totalorder %s91, %s92
    %p104 = scmp.eq.s32.totalorder %s19, 1
    %p105 = por %p103, %p104
    %p107 = scmp.ne.s32.totalorder %s92, %s106
    %p108 = scmp.eq.s32.totalorder %s19, 0
    %p109 = por %p107, %p108
    %s111 = sadd.s32 %s110, 1
    %p114 = scmp.eq.s32.totalorder %s13, 1
    %p115 = scmp.ne.s32.totalorder %s110, %s112
    %p116 = scmp.eq.s32.totalorder %s13, 0
    %p117 = por %p115, %p116
    %p118 = scmp.ne.s32.totalorder %s110, %s112
    %p119 = scmp.eq.s32.totalorder %s18, 1
    %p120 = por %p118, %p119
    %p121 = scmp.ne.s32.totalorder %s112, %s113
    %p122 = scmp.eq.s32.totalorder %s18, 0
    %p123 = por %p121, %p122
    %p124 = scmp.ne.s32.totalorder %s112, %s113
    %p125 = scmp.eq.s32.totalorder %s19, 1
    %p126 = por %p124, %p125
    %p128 = scmp.ne.s32.totalorder %s113, %s127
    %p129 = scmp.eq.s32.totalorder %s19, 0
    %p130 = por %p128, %p129
    %s131 = ssub.s32 %s13, %s20
    %p132 = scmp.eq.s32.totalorder %s131, 0
    %s134 = sadd.s32 %s133, 1
    %s135 = scalar_select %p132, %s133, %s134
    %p138 = pneg %p132
    %p139 = scmp.eq.s32.totalorder %s13, 1
    %p140 = por %p138, %p139
    %p141 = scmp.ne.s32.totalorder %s133, %s136
    %p142 = scmp.eq.s32.totalorder %s13, 0
    %p143 = por %p141, %p142
    %p144 = scmp.ne.s32.totalorder %s133, %s136
    %p145 = scmp.eq.s32.totalorder %s18, 1
    %p146 = por %p144, %p145
    %p147 = scmp.ne.s32.totalorder %s136, %s137
    %p148 = scmp.eq.s32.totalorder %s18, 0
    %p149 = por %p147, %p148
    %p150 = scmp.ne.s32.totalorder %s136, %s137
    %p151 = scmp.eq.s32.totalorder %s19, 1
    %p152 = por %p150, %p151
    %p154 = scmp.ne.s32.totalorder %s137, %s153
    %p155 = scmp.eq.s32.totalorder %s19, 0
    %p156 = por %p154, %p155
    %s157 = ssub.s32 %s13, %s20
    %p158 = scmp.eq.s32.totalorder %s157, 0
    %s160 = sadd.s32 %s159, 1
    %s161 = scalar_select %p158, %s159, %s160
    %p164 = pneg %p158
    %p165 = scmp.eq.s32.totalorder %s13, 1
    %p166 = por %p164, %p165
    %p167 = scmp.ne.s32.totalorder %s159, %s162
    %p168 = scmp.eq.s32.totalorder %s13, 0
    %p169 = por %p167, %p168
    %p170 = scmp.ne.s32.totalorder %s159, %s162
    %p171 = scmp.eq.s32.totalorder %s18, 1
    %p172 = por %p170, %p171
    %p173 = scmp.ne.s32.totalorder %s162, %s163
    %p174 = scmp.eq.s32.totalorder %s18, 0
    %p175 = por %p173, %p174
    %p176 = scmp.ne.s32.totalorder %s162, %s163
    %p177 = scmp.eq.s32.totalorder %s19, 1
    %p178 = por %p176, %p177
    %p180 = scmp.ne.s32.totalorder %s163, %s179
    %p181 = scmp.eq.s32.totalorder %s19, 0
    %p182 = por %p180, %p181
    %p183 = scmp.le.s32.totalorder 1, %s13
    %p184 = scmp.lt.s32.totalorder %s13, 3
    %p185 = pnand %p183, %p184
    %p186 = pneg %p185
    // Predicated region
    $region9: #{double_conv_pallas.4} parent=5 // pred_check
      _
    $region10: #{double_conv_pallas.4} parent=5 // pred_check_branch
      %188 = sbr.rel (%p185) target = $region12
    $region11: #{double_conv_pallas.4} parent=5 // pred_region
      %s189 = ssub.s32 %s13, 1
      // Predicated region
      $region13: #{double_conv_pallas.4} parent=11 // pred_check
        %p190 = pneg %p60
      $region14: #{double_conv_pallas.4} parent=11 // pred_check_branch
        %192 = sbr.rel (%p190) target = $region16
      $region15: #{double_conv_pallas.4} parent=11 // pred_region
        _
      $region16: #{double_conv_pallas.4} parent=11 // pred_fallthru
        _
      // Predicated region
      $region17: #{double_conv_pallas.4} parent=11 // pred_check
        %p193 = pneg %p81
      $region18: #{double_conv_pallas.4} parent=11 // pred_check_branch
        %195 = sbr.rel (%p193) target = $region20
      $region19: #{double_conv_pallas.4} parent=11 // pred_region
        _
      $region20: #{double_conv_pallas.4} parent=11 // pred_fallthru
        _
      // Predicated region
      $region21: #{double_conv_pallas.4} parent=11 // pred_check
        %p196 = pneg %p102
      $region22: #{double_conv_pallas.4} parent=11 // pred_check_branch
        %198 = sbr.rel (%p196) target = $region24
      $region23: #{double_conv_pallas.4} parent=11 // pred_region
        _
      $region24: #{double_conv_pallas.4} parent=11 // pred_fallthru
        _
      // Predicated region
      $region25: #{double_conv_pallas.4} parent=11 // pred_check
        %p199 = pneg %p123
      $region26: #{double_conv_pallas.4} parent=11 // pred_check_branch
        %201 = sbr.rel (%p199) target = $region28
      $region27: #{double_conv_pallas.4} parent=11 // pred_region
        _
      $region28: #{double_conv_pallas.4} parent=11 // pred_fallthru
        _
    $region12: #{double_conv_pallas.4} parent=5 // pred_fallthru
      _
    %p202 = scmp.lt.s32.totalorder %s13, 2
    // Predicated region
    $region29: #{double_conv_pallas.4} parent=5 // pred_check
      %p203 = pneg %p202
    $region30: #{double_conv_pallas.4} parent=5 // pred_check_branch
      %205 = sbr.rel (%p203) target = $region32
    $region31: #{double_conv_pallas.4} parent=5 // pred_region
      // Predicated region
      $region33: #{double_conv_pallas.4} parent=31 // pred_check
        %p206 = pneg %p33
      $region34: #{double_conv_pallas.4} parent=31 // pred_check_branch
        %208 = sbr.rel (%p206) target = $region36
      $region35: #{double_conv_pallas.4} parent=31 // pred_region
        %p209 = scmp.lt.s32.totalorder %s13, 1
        %s210 = scalar_select %p209, %s13, 1
        %s211 = smul.addr %s210, 32
        %s212 = smul.addr %s211, 4
        %s213 = scalar_lea.vmem %s0, %s212
      $region36: #{double_conv_pallas.4} parent=31 // pred_fallthru
        _
    $region32: #{double_conv_pallas.4} parent=5 // pred_fallthru
      _
    %p214 = scmp.le.s32.totalorder 1, %s13
    %p215 = scmp.lt.s32.totalorder %s13, 3
    %p216 = pnand %p214, %p215
    %p217 = pneg %p216
    // Predicated region
    $region37: #{double_conv_pallas.4} parent=5 // pred_check
      _
    $region38: #{double_conv_pallas.4} parent=5 // pred_check_branch
      %219 = sbr.rel (%p216) target = $region40
    $region39: #{double_conv_pallas.4} parent=5 // pred_region
      %s220 = ssub.s32 %s13, 1
      %p221 = scmp.lt.s32.totalorder %s18, 1
      %s222 = scalar_select %p221, %s18, 1
      %s223 = smul.addr %s222, 32
      %s224 = smul.addr %s223, 4
      %s225 = scalar_lea.vmem %s0, %s224
      %p226 = pneg %p39
      %p227 = pneg %p36
      %p228 = pneg %p60
      %p229 = pneg %p57
      %p230 = pneg %p81
      %p231 = pneg %p78
      %p232 = pneg %p102
      %p233 = pneg %p99
      %p234 = pneg %p123
      %p235 = pneg %p120
      %p236 = pneg %p149
      %p237 = pneg %p146
      %p238 = scmp.lt.s32.totalorder %s18, 1
      %s239 = scalar_select %p238, %s18, 1
      %s240 = smul.addr %s239, 32
      %s241 = smul.addr %s240, 4
      %s242 = scalar_lea.vmem %s5, %s241
      %p243 = pneg %p175
      %p244 = pneg %p172
      %p245 = scmp.lt.s32.totalorder %s18, 1
      %s246 = scalar_select %p245, %s18, 1
      %s247 = smul.addr %s246, 2
      %s248 = scalar_lea.vmem %s6, %s247
      %p249 = scmp.lt.s32.totalorder %s18, 1
      %s250 = scalar_select %p249, %s18, 1
      %s251 = smul.addr %s250, 32
      %s252 = smul.addr %s251, 4
      %s253 = scalar_lea.vmem %s0, %s252
      %p254 = scmp.lt.s32.totalorder %s18, 1
      %s255 = scalar_select %p254, %s18, 1
      %s256 = smul.addr %s255, 32
      %s257 = smul.addr %s256, 4
      %s258 = scalar_lea.vmem %s5, %s257
      %p259 = scmp.lt.s32.totalorder %s18, 1
      %s260 = scalar_select %p259, %s18, 1
      %s261 = smul.addr %s260, 2
      %s262 = scalar_lea.vmem %s6, %s261
      %v264 = vld [vmem:[%s253] sm:$0xf]
      %v265 = vld [vmem:[%s253 + $0x4] sm:$0xf]
      %v266 = vld [vmem:[%s253 + $0x8] sm:$0xf]
      %v267 = vld [vmem:[%s253 + $0xc] sm:$0xf]
      %v268 = vld [vmem:[%s253 + $0x10] sm:$0xf]
      %v269 = vld [vmem:[%s253 + $0x14] sm:$0xf]
      %v270 = vld [vmem:[%s253 + $0x18] sm:$0xf]
      %v271 = vld [vmem:[%s253 + $0x1c] sm:$0xf]
      %v272 = vld [vmem:[%s253 + $0x20] sm:$0xf]
      %v273 = vld [vmem:[%s253 + $0x24] sm:$0xf]
      %v274 = vld [vmem:[%s253 + $0x28] sm:$0xf]
      %v275 = vld [vmem:[%s253 + $0x2c] sm:$0xf]
      %v276 = vld [vmem:[%s253 + $0x30] sm:$0xf]
      %v277 = vld [vmem:[%s253 + $0x34] sm:$0xf]
      %v278 = vld [vmem:[%s253 + $0x38] sm:$0xf]
      %v279 = vld [vmem:[%s253 + $0x3c] sm:$0xf]
      %v280 = vld [vmem:[%s253 + $0x40] sm:$0xf]
      %v281 = vld [vmem:[%s253 + $0x44] sm:$0xf]
      %v282 = vld [vmem:[%s253 + $0x48] sm:$0xf]
      %v283 = vld [vmem:[%s253 + $0x4c] sm:$0xf]
      %v284 = vld [vmem:[%s253 + $0x50] sm:$0xf]
      %v285 = vld [vmem:[%s253 + $0x54] sm:$0xf]
      %v286 = vld [vmem:[%s253 + $0x58] sm:$0xf]
      %v287 = vld [vmem:[%s253 + $0x5c] sm:$0xf]
      %v288 = vld [vmem:[%s253 + $0x60] sm:$0xf]
      %v289 = vld [vmem:[%s253 + $0x64] sm:$0xf]
      %v290 = vld [vmem:[%s253 + $0x68] sm:$0xf]
      %v291 = vld [vmem:[%s253 + $0x6c] sm:$0xf]
      %v292 = vld [vmem:[%s253 + $0x70] sm:$0xf]
      %v293 = vld [vmem:[%s253 + $0x74] sm:$0xf]
      %v294 = vld [vmem:[%s253 + $0x78] sm:$0xf]
      %v295 = vld [vmem:[%s253 + $0x7c] sm:$0xf]
      %v296 = vunpack.c.l.bf16 %v264
      %v297 = vunpack.c.l.bf16 %v265
      %v298 = vunpack.c.l.bf16 %v266
      %v299 = vunpack.c.l.bf16 %v267
      %v300 = vunpack.c.l.bf16 %v268
      %v301 = vunpack.c.l.bf16 %v269
      %v302 = vunpack.c.l.bf16 %v270
      %v303 = vunpack.c.l.bf16 %v271
      %v304 = vunpack.c.l.bf16 %v272
      %v305 = vunpack.c.l.bf16 %v273
      %v306 = vunpack.c.l.bf16 %v274
      %v307 = vunpack.c.l.bf16 %v275
      %v308 = vunpack.c.l.bf16 %v276
      %v309 = vunpack.c.l.bf16 %v277
      %v310 = vunpack.c.l.bf16 %v278
      %v311 = vunpack.c.l.bf16 %v279
      %v312 = vunpack.c.l.bf16 %v280
      %v313 = vunpack.c.l.bf16 %v281
      %v314 = vunpack.c.l.bf16 %v282
      %v315 = vunpack.c.l.bf16 %v283
      %v316 = vunpack.c.l.bf16 %v284
      %v317 = vunpack.c.l.bf16 %v285
      %v318 = vunpack.c.l.bf16 %v286
      %v319 = vunpack.c.l.bf16 %v287
      %v320 = vunpack.c.l.bf16 %v288
      %v321 = vunpack.c.l.bf16 %v289
      %v322 = vunpack.c.l.bf16 %v290
      %v323 = vunpack.c.l.bf16 %v291
      %v324 = vunpack.c.l.bf16 %v292
      %v325 = vunpack.c.l.bf16 %v293
      %v326 = vunpack.c.l.bf16 %v294
      %v327 = vunpack.c.l.bf16 %v295
      %v328 = vld [vmem:[%s3] sm:$0x1]
      %v330 = vperm.slane %v328, 0
      %v332 = vmul.f32 %v296, %v330
      %v333 = vmul.f32 %v297, %v330
      %v334 = vmul.f32 %v298, %v330
      %v335 = vmul.f32 %v299, %v330
      %v336 = vmul.f32 %v300, %v330
      %v337 = vmul.f32 %v301, %v330
      %v338 = vmul.f32 %v302, %v330
      %v339 = vmul.f32 %v303, %v330
      %v340 = vmul.f32 %v304, %v330
      %v341 = vmul.f32 %v305, %v330
      %v342 = vmul.f32 %v306, %v330
      %v343 = vmul.f32 %v307, %v330
      %v344 = vmul.f32 %v308, %v330
      %v345 = vmul.f32 %v309, %v330
      %v346 = vmul.f32 %v310, %v330
      %v347 = vmul.f32 %v311, %v330
      %v348 = vmul.f32 %v312, %v330
      %v349 = vmul.f32 %v313, %v330
      %v350 = vmul.f32 %v314, %v330
      %v351 = vmul.f32 %v315, %v330
      %v352 = vmul.f32 %v316, %v330
      %v353 = vmul.f32 %v317, %v330
      %v354 = vmul.f32 %v318, %v330
      %v355 = vmul.f32 %v319, %v330
      %v356 = vmul.f32 %v320, %v330
      %v357 = vmul.f32 %v321, %v330
      %v358 = vmul.f32 %v322, %v330
      %v359 = vmul.f32 %v323, %v330
      %v360 = vmul.f32 %v324, %v330
      %v361 = vmul.f32 %v325, %v330
      %v362 = vmul.f32 %v326, %v330
      %v363 = vmul.f32 %v327, %v330
      %v364 = vld [vmem:[%s4] sm:$0x1]
      %v366 = vperm.slane %v364, 0
      %v368 = vadd.f32 %v332, %v366
      %v369 = vadd.f32 %v333, %v366
      %v370 = vadd.f32 %v334, %v366
      %v371 = vadd.f32 %v335, %v366
      %v372 = vadd.f32 %v336, %v366
      %v373 = vadd.f32 %v337, %v366
      %v374 = vadd.f32 %v338, %v366
      %v375 = vadd.f32 %v339, %v366
      %v376 = vadd.f32 %v340, %v366
      %v377 = vadd.f32 %v341, %v366
      %v378 = vadd.f32 %v342, %v366
      %v379 = vadd.f32 %v343, %v366
      %v380 = vadd.f32 %v344, %v366
      %v381 = vadd.f32 %v345, %v366
      %v382 = vadd.f32 %v346, %v366
      %v383 = vadd.f32 %v347, %v366
      %v384 = vadd.f32 %v348, %v366
      %v385 = vadd.f32 %v349, %v366
      %v386 = vadd.f32 %v350, %v366
      %v387 = vadd.f32 %v351, %v366
      %v388 = vadd.f32 %v352, %v366
      %v389 = vadd.f32 %v353, %v366
      %v390 = vadd.f32 %v354, %v366
      %v391 = vadd.f32 %v355, %v366
      %v392 = vadd.f32 %v356, %v366
      %v393 = vadd.f32 %v357, %v366
      %v394 = vadd.f32 %v358, %v366
      %v395 = vadd.f32 %v359, %v366
      %v396 = vadd.f32 %v360, %v366
      %v397 = vadd.f32 %v361, %v366
      %v398 = vadd.f32 %v362, %v366
      %v399 = vadd.f32 %v363, %v366
      %vm400 = vcmp.ge.f32.partialorder %v368, 0.0
      %vm401 = vcmp.ge.f32.partialorder %v369, 0.0
      %vm402 = vcmp.ge.f32.partialorder %v370, 0.0
      %vm403 = vcmp.ge.f32.partialorder %v371, 0.0
      %vm404 = vcmp.ge.f32.partialorder %v372, 0.0
      %vm405 = vcmp.ge.f32.partialorder %v373, 0.0
      %vm406 = vcmp.ge.f32.partialorder %v374, 0.0
      %vm407 = vcmp.ge.f32.partialorder %v375, 0.0
      %vm408 = vcmp.ge.f32.partialorder %v376, 0.0
      %vm409 = vcmp.ge.f32.partialorder %v377, 0.0
      %vm410 = vcmp.ge.f32.partialorder %v378, 0.0
      %vm411 = vcmp.ge.f32.partialorder %v379, 0.0
      %vm412 = vcmp.ge.f32.partialorder %v380, 0.0
      %vm413 = vcmp.ge.f32.partialorder %v381, 0.0
      %vm414 = vcmp.ge.f32.partialorder %v382, 0.0
      %vm415 = vcmp.ge.f32.partialorder %v383, 0.0
      %vm416 = vcmp.ge.f32.partialorder %v384, 0.0
      %vm417 = vcmp.ge.f32.partialorder %v385, 0.0
      %vm418 = vcmp.ge.f32.partialorder %v386, 0.0
      %vm419 = vcmp.ge.f32.partialorder %v387, 0.0
      %vm420 = vcmp.ge.f32.partialorder %v388, 0.0
      %vm421 = vcmp.ge.f32.partialorder %v389, 0.0
      %vm422 = vcmp.ge.f32.partialorder %v390, 0.0
      %vm423 = vcmp.ge.f32.partialorder %v391, 0.0
      %vm424 = vcmp.ge.f32.partialorder %v392, 0.0
      %vm425 = vcmp.ge.f32.partialorder %v393, 0.0
      %vm426 = vcmp.ge.f32.partialorder %v394, 0.0
      %vm427 = vcmp.ge.f32.partialorder %v395, 0.0
      %vm428 = vcmp.ge.f32.partialorder %v396, 0.0
      %vm429 = vcmp.ge.f32.partialorder %v397, 0.0
      %vm430 = vcmp.ge.f32.partialorder %v398, 0.0
      %vm431 = vcmp.ge.f32.partialorder %v399, 0.0
      %v432 = vmul.f32 %v368, 0.01
      %v433 = vmul.f32 %v369, 0.01
      %v434 = vmul.f32 %v370, 0.01
      %v435 = vmul.f32 %v371, 0.01
      %v436 = vmul.f32 %v372, 0.01
      %v437 = vmul.f32 %v373, 0.01
      %v438 = vmul.f32 %v374, 0.01
      %v439 = vmul.f32 %v375, 0.01
      %v440 = vmul.f32 %v376, 0.01
      %v441 = vmul.f32 %v377, 0.01
      %v442 = vmul.f32 %v378, 0.01
      %v443 = vmul.f32 %v379, 0.01
      %v444 = vmul.f32 %v380, 0.01
      %v445 = vmul.f32 %v381, 0.01
      %v446 = vmul.f32 %v382, 0.01
      %v447 = vmul.f32 %v383, 0.01
      %v448 = vmul.f32 %v384, 0.01
      %v449 = vmul.f32 %v385, 0.01
      %v450 = vmul.f32 %v386, 0.01
      %v451 = vmul.f32 %v387, 0.01
      %v452 = vmul.f32 %v388, 0.01
      %v453 = vmul.f32 %v389, 0.01
      %v454 = vmul.f32 %v390, 0.01
      %v455 = vmul.f32 %v391, 0.01
      %v456 = vmul.f32 %v392, 0.01
      %v457 = vmul.f32 %v393, 0.01
      %v458 = vmul.f32 %v394, 0.01
      %v459 = vmul.f32 %v395, 0.01
      %v460 = vmul.f32 %v396, 0.01
      %v461 = vmul.f32 %v397, 0.01
      %v462 = vmul.f32 %v398, 0.01
      %v463 = vmul.f32 %v399, 0.01
      %v464 = vsel %vm400, %v368, %v432
      %v465 = vsel %vm401, %v369, %v433
      %v466 = vsel %vm402, %v370, %v434
      %v467 = vsel %vm403, %v371, %v435
      %v468 = vsel %vm404, %v372, %v436
      %v469 = vsel %vm405, %v373, %v437
      %v470 = vsel %vm406, %v374, %v438
      %v471 = vsel %vm407, %v375, %v439
      %v472 = vsel %vm408, %v376, %v440
      %v473 = vsel %vm409, %v377, %v441
      %v474 = vsel %vm410, %v378, %v442
      %v475 = vsel %vm411, %v379, %v443
      %v476 = vsel %vm412, %v380, %v444
      %v477 = vsel %vm413, %v381, %v445
      %v478 = vsel %vm414, %v382, %v446
      %v479 = vsel %vm415, %v383, %v447
      %v480 = vsel %vm416, %v384, %v448
      %v481 = vsel %vm417, %v385, %v449
      %v482 = vsel %vm418, %v386, %v450
      %v483 = vsel %vm419, %v387, %v451
      %v484 = vsel %vm420, %v388, %v452
      %v485 = vsel %vm421, %v389, %v453
      %v486 = vsel %vm422, %v390, %v454
      %v487 = vsel %vm423, %v391, %v455
      %v488 = vsel %vm424, %v392, %v456
      %v489 = vsel %vm425, %v393, %v457
      %v490 = vsel %vm426, %v394, %v458
      %v491 = vsel %vm427, %v395, %v459
      %v492 = vsel %vm428, %v396, %v460
      %v493 = vsel %vm429, %v397, %v461
      %v494 = vsel %vm430, %v398, %v462
      %v495 = vsel %vm431, %v399, %v463
      %v496 = vpack.c.bf16 %v464, %v464
      %v497 = vpack.c.bf16 %v465, %v465
      %v498 = vpack.c.bf16 %v466, %v466
      %v499 = vpack.c.bf16 %v467, %v467
      %v500 = vpack.c.bf16 %v468, %v468
      %v501 = vpack.c.bf16 %v469, %v469
      %v502 = vpack.c.bf16 %v470, %v470
      %v503 = vpack.c.bf16 %v471, %v471
      %v504 = vpack.c.bf16 %v472, %v472
      %v505 = vpack.c.bf16 %v473, %v473
      %v506 = vpack.c.bf16 %v474, %v474
      %v507 = vpack.c.bf16 %v475, %v475
      %v508 = vpack.c.bf16 %v476, %v476
      %v509 = vpack.c.bf16 %v477, %v477
      %v510 = vpack.c.bf16 %v478, %v478
      %v511 = vpack.c.bf16 %v479, %v479
      %v512 = vpack.c.bf16 %v480, %v480
      %v513 = vpack.c.bf16 %v481, %v481
      %v514 = vpack.c.bf16 %v482, %v482
      %v515 = vpack.c.bf16 %v483, %v483
      %v516 = vpack.c.bf16 %v484, %v484
      %v517 = vpack.c.bf16 %v485, %v485
      %v518 = vpack.c.bf16 %v486, %v486
      %v519 = vpack.c.bf16 %v487, %v487
      %v520 = vpack.c.bf16 %v488, %v488
      %v521 = vpack.c.bf16 %v489, %v489
      %v522 = vpack.c.bf16 %v490, %v490
      %v523 = vpack.c.bf16 %v491, %v491
      %v524 = vpack.c.bf16 %v492, %v492
      %v525 = vpack.c.bf16 %v493, %v493
      %v526 = vpack.c.bf16 %v494, %v494
      %v527 = vpack.c.bf16 %v495, %v495
      %528 = vst [vmem:[#allocation2] sm:$0xf] 0
      %529 = vst [vmem:[#allocation2 + $0x4] sm:$0xf] 0
      %530 = vst [vmem:[#allocation2 + $0x8] sm:$0x1] 0
      %531 = vst [vmem:[#allocation2 + $0xc] sm:$0xf] 0
      %532 = vst [vmem:[#allocation2 + $0x10] sm:$0xf] 0
      %533 = vst [vmem:[#allocation2 + $0x14] sm:$0x1] 0
      %534 = vst [vmem:[#allocation2 + $0x18] sm:$0xf] 0
      %535 = vst [vmem:[#allocation2 + $0x1c] sm:$0xf] 0
      %536 = vst [vmem:[#allocation2 + $0x20] sm:$0x1] 0
      %537 = vst [vmem:[#allocation2 + $0x24] sm:$0xf] 0
      %538 = vst [vmem:[#allocation2 + $0x28] sm:$0xf] 0
      %539 = vst [vmem:[#allocation2 + $0x2c] sm:$0x1] 0
      %540 = vst [vmem:[#allocation2 + $0x30] sm:$0xf] 0
      %541 = vst [vmem:[#allocation2 + $0x34] sm:$0xf] 0
      %542 = vst [vmem:[#allocation2 + $0x38] sm:$0x1] 0
      %543 = vst [vmem:[#allocation2 + $0x3c] sm:$0xf] 0
      %544 = vst [vmem:[#allocation2 + $0x40] sm:$0xf] 0
      %545 = vst [vmem:[#allocation2 + $0x44] sm:$0x1] 0
      %546 = vst [vmem:[#allocation2 + $0x48] sm:$0xf] 0
      %547 = vst [vmem:[#allocation2 + $0x4c] sm:$0xf] 0
      %548 = vst [vmem:[#allocation2 + $0x50] sm:$0x1] 0
      %549 = vst [vmem:[#allocation2 + $0x54] sm:$0xf] 0
      %550 = vst [vmem:[#allocation2 + $0x58] sm:$0xf] 0
      %551 = vst [vmem:[#allocation2 + $0x5c] sm:$0x1] 0
      %552 = vst [vmem:[#allocation2 + $0x60] sm:$0xf] 0
      %553 = vst [vmem:[#allocation2 + $0x64] sm:$0xf] 0
      %554 = vst [vmem:[#allocation2 + $0x68] sm:$0x1] 0
      %555 = vst [vmem:[#allocation2 + $0x6c] sm:$0xf] 0
      %556 = vst [vmem:[#allocation2 + $0x70] sm:$0xf] 0
      %557 = vst [vmem:[#allocation2 + $0x74] sm:$0x1] 0
      %558 = vst [vmem:[#allocation2 + $0x78] sm:$0xf] 0
      %559 = vst [vmem:[#allocation2 + $0x7c] sm:$0xf] 0
      %560 = vst [vmem:[#allocation2 + $0x80] sm:$0x1] 0
      %561 = vst [vmem:[#allocation2 + $0x84] sm:$0xf] 0
      %562 = vst [vmem:[#allocation2 + $0x88] sm:$0xf] 0
      %563 = vst [vmem:[#allocation2 + $0x8c] sm:$0x1] 0
      %564 = vst [vmem:[#allocation2 + $0x90] sm:$0xf] 0
      %565 = vst [vmem:[#allocation2 + $0x94] sm:$0xf] 0
      %566 = vst [vmem:[#allocation2 + $0x98] sm:$0x1] 0
      %567 = vst [vmem:[#allocation2 + $0x9c] sm:$0xf] 0
      %568 = vst [vmem:[#allocation2 + $0xa0] sm:$0xf] 0
      %569 = vst [vmem:[#allocation2 + $0xa4] sm:$0x1] 0
      %570 = vst [vmem:[#allocation2 + $0xa8] sm:$0xf] 0
      %571 = vst [vmem:[#allocation2 + $0xac] sm:$0xf] 0
      %572 = vst [vmem:[#allocation2 + $0xb0] sm:$0x1] 0
      %573 = vst [vmem:[#allocation2 + $0xb4] sm:$0xf] 0
      %574 = vst [vmem:[#allocation2 + $0xb8] sm:$0xf] 0
      %575 = vst [vmem:[#allocation2 + $0xbc] sm:$0x1] 0
      %576 = vst [vmem:[#allocation2 + $0xc0] sm:$0xf] 0
      %577 = vst [vmem:[#allocation2 + $0xc4] sm:$0xf] 0
      %578 = vst [vmem:[#allocation2 + $0xc8] sm:$0x1] 0
      %579 = vst [vmem:[#allocation2 + $0xcc] sm:$0xf] 0
      %580 = vst [vmem:[#allocation2 + $0xd0] sm:$0xf] 0
      %581 = vst [vmem:[#allocation2 + $0xd4] sm:$0x1] 0
      %vm582 = vsmask.f32 256
      %vm583 = vsmask.f32 4368
      %vm584 = vmor %vm582, %vm583
      %v586 = vshrl.u32 %v496, 16
      %v588 = vrot.slane %v586, 7
      %v589 = vshll.u32 %v496, 16
      %v591 = vor.u32 %v588, %v589
      %v592 = vrot.slane %v588, 4
      %v594 = vshrl.u32 %v497, 16
      %v596 = vrot.slane %v594, 7
      %v597 = vshll.u32 %v497, 16
      %v599 = vor.u32 %v596, %v597
      %v600 = vsel %vm584, %v592, %v599
      %v601 = vrot.slane %v596, 4
      %v603 = vshrl.u32 %v498, 16
      %v605 = vrot.slane %v603, 7
      %v606 = vshll.u32 %v498, 16
      %v608 = vor.u32 %v605, %v606
      %v609 = vrot.slane %v605, 4
      %v611 = vshrl.u32 %v499, 16
      %v613 = vrot.slane %v611, 7
      %v614 = vshll.u32 %v499, 16
      %v616 = vor.u32 %v613, %v614
      %v617 = vsel %vm584, %v609, %v616
      %v618 = vrot.slane %v613, 4
      %v620 = vshrl.u32 %v500, 16
      %v622 = vrot.slane %v620, 7
      %v623 = vshll.u32 %v500, 16
      %v625 = vor.u32 %v622, %v623
      %v626 = vrot.slane %v622, 4
      %v628 = vshrl.u32 %v501, 16
      %v630 = vrot.slane %v628, 7
      %v631 = vshll.u32 %v501, 16
      %v633 = vor.u32 %v630, %v631
      %v634 = vsel %vm584, %v626, %v633
      %v635 = vrot.slane %v630, 4
      %v637 = vshrl.u32 %v502, 16
      %v639 = vrot.slane %v637, 7
      %v640 = vshll.u32 %v502, 16
      %v642 = vor.u32 %v639, %v640
      %v643 = vrot.slane %v639, 4
      %v645 = vshrl.u32 %v503, 16
      %v647 = vrot.slane %v645, 7
      %v648 = vshll.u32 %v503, 16
      %v650 = vor.u32 %v647, %v648
      %v651 = vsel %vm584, %v643, %v650
      %v652 = vrot.slane %v647, 4
      %v654 = vshrl.u32 %v504, 16
      %v656 = vrot.slane %v654, 7
      %v657 = vshll.u32 %v504, 16
      %v659 = vor.u32 %v656, %v657
      %v660 = vrot.slane %v656, 4
      %v662 = vshrl.u32 %v505, 16
      %v664 = vrot.slane %v662, 7
      %v665 = vshll.u32 %v505, 16
      %v667 = vor.u32 %v664, %v665
      %v668 = vsel %vm584, %v660, %v667
      %v669 = vrot.slane %v664, 4
      %v671 = vshrl.u32 %v506, 16
      %v673 = vrot.slane %v671, 7
      %v674 = vshll.u32 %v506, 16
      %v676 = vor.u32 %v673, %v674
      %v677 = vrot.slane %v673, 4
      %v679 = vshrl.u32 %v507, 16
      %v681 = vrot.slane %v679, 7
      %v682 = vshll.u32 %v507, 16
      %v684 = vor.u32 %v681, %v682
      %v685 = vsel %vm584, %v677, %v684
      %v686 = vrot.slane %v681, 4
      %v688 = vshrl.u32 %v508, 16
      %v690 = vrot.slane %v688, 7
      %v691 = vshll.u32 %v508, 16
      %v693 = vor.u32 %v690, %v691
      %v694 = vrot.slane %v690, 4
      %v696 = vshrl.u32 %v509, 16
      %v698 = vrot.slane %v696, 7
      %v699 = vshll.u32 %v509, 16
      %v701 = vor.u32 %v698, %v699
      %v702 = vsel %vm584, %v694, %v701
      %v703 = vrot.slane %v698, 4
      %v705 = vshrl.u32 %v510, 16
      %v707 = vrot.slane %v705, 7
      %v708 = vshll.u32 %v510, 16
      %v710 = vor.u32 %v707, %v708
      %v711 = vrot.slane %v707, 4
      %v713 = vshrl.u32 %v511, 16
      %v715 = vrot.slane %v713, 7
      %v716 = vshll.u32 %v511, 16
      %v718 = vor.u32 %v715, %v716
      %v719 = vsel %vm584, %v711, %v718
      %v720 = vrot.slane %v715, 4
      %v722 = vshrl.u32 %v512, 16
      %v724 = vrot.slane %v722, 7
      %v725 = vshll.u32 %v512, 16
      %v727 = vor.u32 %v724, %v725
      %v728 = vrot.slane %v724, 4
      %v730 = vshrl.u32 %v513, 16
      %v732 = vrot.slane %v730, 7
      %v733 = vshll.u32 %v513, 16
      %v735 = vor.u32 %v732, %v733
      %v736 = vsel %vm584, %v728, %v735
      %v737 = vrot.slane %v732, 4
      %v739 = vshrl.u32 %v514, 16
      %v741 = vrot.slane %v739, 7
      %v742 = vshll.u32 %v514, 16
      %v744 = vor.u32 %v741, %v742
      %v745 = vrot.slane %v741, 4
      %v747 = vshrl.u32 %v515, 16
      %v749 = vrot.slane %v747, 7
      %v750 = vshll.u32 %v515, 16
      %v752 = vor.u32 %v749, %v750
      %v753 = vsel %vm584, %v745, %v752
      %v754 = vrot.slane %v749, 4
      %v756 = vshrl.u32 %v516, 16
      %v758 = vrot.slane %v756, 7
      %v759 = vshll.u32 %v516, 16
      %v761 = vor.u32 %v758, %v759
      %v762 = vrot.slane %v758, 4
      %v764 = vshrl.u32 %v517, 16
      %v766 = vrot.slane %v764, 7
      %v767 = vshll.u32 %v517, 16
      %v769 = vor.u32 %v766, %v767
      %v770 = vsel %vm584, %v762, %v769
      %v771 = vrot.slane %v766, 4
      %v773 = vshrl.u32 %v518, 16
      %v775 = vrot.slane %v773, 7
      %v776 = vshll.u32 %v518, 16
      %v778 = vor.u32 %v775, %v776
      %v779 = vrot.slane %v775, 4
      %v781 = vshrl.u32 %v519, 16
      %v783 = vrot.slane %v781, 7
      %v784 = vshll.u32 %v519, 16
      %v786 = vor.u32 %v783, %v784
      %v787 = vsel %vm584, %v779, %v786
      %v788 = vrot.slane %v783, 4
      %v790 = vshrl.u32 %v520, 16
      %v792 = vrot.slane %v790, 7
      %v793 = vshll.u32 %v520, 16
      %v795 = vor.u32 %v792, %v793
      %v796 = vrot.slane %v792, 4
      %v798 = vshrl.u32 %v521, 16
      %v800 = vrot.slane %v798, 7
      %v801 = vshll.u32 %v521, 16
      %v803 = vor.u32 %v800, %v801
      %v804 = vsel %vm584, %v796, %v803
      %v805 = vrot.slane %v800, 4
      %v807 = vshrl.u32 %v522, 16
      %v809 = vrot.slane %v807, 7
      %v810 = vshll.u32 %v522, 16
      %v812 = vor.u32 %v809, %v810
      %v813 = vrot.slane %v809, 4
      %v815 = vshrl.u32 %v523, 16
      %v817 = vrot.slane %v815, 7
      %v818 = vshll.u32 %v523, 16
      %v820 = vor.u32 %v817, %v818
      %v821 = vsel %vm584, %v813, %v820
      %v822 = vrot.slane %v817, 4
      %v824 = vshrl.u32 %v524, 16
      %v826 = vrot.slane %v824, 7
      %v827 = vshll.u32 %v524, 16
      %v829 = vor.u32 %v826, %v827
      %v830 = vrot.slane %v826, 4
      %v832 = vshrl.u32 %v525, 16
      %v834 = vrot.slane %v832, 7
      %v835 = vshll.u32 %v525, 16
      %v837 = vor.u32 %v834, %v835
      %v838 = vsel %vm584, %v830, %v837
      %v839 = vrot.slane %v834, 4
      %v841 = vshrl.u32 %v526, 16
      %v843 = vrot.slane %v841, 7
      %v844 = vshll.u32 %v526, 16
      %v846 = vor.u32 %v843, %v844
      %v847 = vrot.slane %v843, 4
      %v849 = vshrl.u32 %v527, 16
      %v851 = vrot.slane %v849, 7
      %v852 = vshll.u32 %v527, 16
      %v854 = vor.u32 %v851, %v852
      %v855 = vsel %vm584, %v847, %v854
      %v856 = vrot.slane %v851, 4
      %s905 = scalar_lea.vmem [#allocation2], 12
      %vm906 = vcmask 1043456
      %vm907 = vsmask.f32 7938
      %vm908 = vmand %vm906, %vm907
      %v909 = vld [vmem:[%s905] sm:$0xf]
      %v910 = vsel %vm908, %v591, %v909
      %911 = vst [vmem:[%s905] sm:$0xf] %v910
      %912 = vst [vmem:[%s905 + $0x4] sm:$0xf] %v600
      %vm913 = vcmask 1040384
      %vm914 = vmand %vm913, %vm582
      %v915 = vld [vmem:[%s905 + $0x8] sm:$0x1]
      %v916 = vsel %vm914, %v601, %v915
      %917 = vst [vmem:[%s905 + $0x8] sm:$0x1] %v916
      %v918 = vld [vmem:[%s905 + $0xc] sm:$0xf]
      %v919 = vsel %vm908, %v608, %v918
      %920 = vst [vmem:[%s905 + $0xc] sm:$0xf] %v919
      %921 = vst [vmem:[%s905 + $0x10] sm:$0xf] %v617
      %v922 = vld [vmem:[%s905 + $0x14] sm:$0x1]
      %v923 = vsel %vm914, %v618, %v922
      %924 = vst [vmem:[%s905 + $0x14] sm:$0x1] %v923
      %v925 = vld [vmem:[%s905 + $0x18] sm:$0xf]
      %v926 = vsel %vm908, %v625, %v925
      %927 = vst [vmem:[%s905 + $0x18] sm:$0xf] %v926
      %928 = vst [vmem:[%s905 + $0x1c] sm:$0xf] %v634
      %v929 = vld [vmem:[%s905 + $0x20] sm:$0x1]
      %v930 = vsel %vm914, %v635, %v929
      %931 = vst [vmem:[%s905 + $0x20] sm:$0x1] %v930
      %v932 = vld [vmem:[%s905 + $0x24] sm:$0xf]
      %v933 = vsel %vm908, %v642, %v932
      %934 = vst [vmem:[%s905 + $0x24] sm:$0xf] %v933
      %935 = vst [vmem:[%s905 + $0x28] sm:$0xf] %v651
      %v936 = vld [vmem:[%s905 + $0x2c] sm:$0x1]
      %v937 = vsel %vm914, %v652, %v936
      %938 = vst [vmem:[%s905 + $0x2c] sm:$0x1] %v937
      %v939 = vld [vmem:[%s905 + $0x30] sm:$0xf]
      %v940 = vsel %vm908, %v659, %v939
      %941 = vst [vmem:[%s905 + $0x30] sm:$0xf] %v940
      %942 = vst [vmem:[%s905 + $0x34] sm:$0xf] %v668
      %v943 = vld [vmem:[%s905 + $0x38] sm:$0x1]
      %v944 = vsel %vm914, %v669, %v943
      %945 = vst [vmem:[%s905 + $0x38] sm:$0x1] %v944
      %v946 = vld [vmem:[%s905 + $0x3c] sm:$0xf]
      %v947 = vsel %vm908, %v676, %v946
      %948 = vst [vmem:[%s905 + $0x3c] sm:$0xf] %v947
      %949 = vst [vmem:[%s905 + $0x40] sm:$0xf] %v685
      %v950 = vld [vmem:[%s905 + $0x44] sm:$0x1]
      %v951 = vsel %vm914, %v686, %v950
      %952 = vst [vmem:[%s905 + $0x44] sm:$0x1] %v951
      %v953 = vld [vmem:[%s905 + $0x48] sm:$0xf]
      %v954 = vsel %vm908, %v693, %v953
      %955 = vst [vmem:[%s905 + $0x48] sm:$0xf] %v954
      %956 = vst [vmem:[%s905 + $0x4c] sm:$0xf] %v702
      %v957 = vld [vmem:[%s905 + $0x50] sm:$0x1]
      %v958 = vsel %vm914, %v703, %v957
      %959 = vst [vmem:[%s905 + $0x50] sm:$0x1] %v958
      %v960 = vld [vmem:[%s905 + $0x54] sm:$0xf]
      %v961 = vsel %vm908, %v710, %v960
      %962 = vst [vmem:[%s905 + $0x54] sm:$0xf] %v961
      %963 = vst [vmem:[%s905 + $0x58] sm:$0xf] %v719
      %v964 = vld [vmem:[%s905 + $0x5c] sm:$0x1]
      %v965 = vsel %vm914, %v720, %v964
      %966 = vst [vmem:[%s905 + $0x5c] sm:$0x1] %v965
      %v967 = vld [vmem:[%s905 + $0x60] sm:$0xf]
      %v968 = vsel %vm908, %v727, %v967
      %969 = vst [vmem:[%s905 + $0x60] sm:$0xf] %v968
      %970 = vst [vmem:[%s905 + $0x64] sm:$0xf] %v736
      %v971 = vld [vmem:[%s905 + $0x68] sm:$0x1]
      %v972 = vsel %vm914, %v737, %v971
      %973 = vst [vmem:[%s905 + $0x68] sm:$0x1] %v972
      %v974 = vld [vmem:[%s905 + $0x6c] sm:$0xf]
      %v975 = vsel %vm908, %v744, %v974
      %976 = vst [vmem:[%s905 + $0x6c] sm:$0xf] %v975
      %977 = vst [vmem:[%s905 + $0x70] sm:$0xf] %v753
      %v978 = vld [vmem:[%s905 + $0x74] sm:$0x1]
      %v979 = vsel %vm914, %v754, %v978
      %980 = vst [vmem:[%s905 + $0x74] sm:$0x1] %v979
      %v981 = vld [vmem:[%s905 + $0x78] sm:$0xf]
      %v982 = vsel %vm908, %v761, %v981
      %983 = vst [vmem:[%s905 + $0x78] sm:$0xf] %v982
      %984 = vst [vmem:[%s905 + $0x7c] sm:$0xf] %v770
      %v985 = vld [vmem:[%s905 + $0x80] sm:$0x1]
      %v986 = vsel %vm914, %v771, %v985
      %987 = vst [vmem:[%s905 + $0x80] sm:$0x1] %v986
      %v988 = vld [vmem:[%s905 + $0x84] sm:$0xf]
      %v989 = vsel %vm908, %v778, %v988
      %990 = vst [vmem:[%s905 + $0x84] sm:$0xf] %v989
      %991 = vst [vmem:[%s905 + $0x88] sm:$0xf] %v787
      %v992 = vld [vmem:[%s905 + $0x8c] sm:$0x1]
      %v993 = vsel %vm914, %v788, %v992
      %994 = vst [vmem:[%s905 + $0x8c] sm:$0x1] %v993
      %v995 = vld [vmem:[%s905 + $0x90] sm:$0xf]
      %v996 = vsel %vm908, %v795, %v995
      %997 = vst [vmem:[%s905 + $0x90] sm:$0xf] %v996
      %998 = vst [vmem:[%s905 + $0x94] sm:$0xf] %v804
      %v999 = vld [vmem:[%s905 + $0x98] sm:$0x1]
      %v1000 = vsel %vm914, %v805, %v999
      %1001 = vst [vmem:[%s905 + $0x98] sm:$0x1] %v1000
      %v1002 = vld [vmem:[%s905 + $0x9c] sm:$0xf]
      %v1003 = vsel %vm908, %v812, %v1002
      %1004 = vst [vmem:[%s905 + $0x9c] sm:$0xf] %v1003
      %1005 = vst [vmem:[%s905 + $0xa0] sm:$0xf] %v821
      %v1006 = vld [vmem:[%s905 + $0xa4] sm:$0x1]
      %v1007 = vsel %vm914, %v822, %v1006
      %1008 = vst [vmem:[%s905 + $0xa4] sm:$0x1] %v1007
      %v1009 = vld [vmem:[%s905 + $0xa8] sm:$0xf]
      %v1010 = vsel %vm908, %v829, %v1009
      %1011 = vst [vmem:[%s905 + $0xa8] sm:$0xf] %v1010
      %1012 = vst [vmem:[%s905 + $0xac] sm:$0xf] %v838
      %v1013 = vld [vmem:[%s905 + $0xb0] sm:$0x1]
      %v1014 = vsel %vm914, %v839, %v1013
      %1015 = vst [vmem:[%s905 + $0xb0] sm:$0x1] %v1014
      %v1016 = vld [vmem:[%s905 + $0xb4] sm:$0xf]
      %v1017 = vsel %vm908, %v846, %v1016
      %1018 = vst [vmem:[%s905 + $0xb4] sm:$0xf] %v1017
      %1019 = vst [vmem:[%s905 + $0xb8] sm:$0xf] %v855
      %v1020 = vld [vmem:[%s905 + $0xbc] sm:$0x1]
      %v1021 = vsel %vm914, %v856, %v1020
      %1022 = vst [vmem:[%s905 + $0xbc] sm:$0x1] %v1021
      %v1023 = vld [vmem:[#allocation2] sm:$0xf]
      %v1024 = vld [vmem:[#allocation2 + $0x4] sm:$0xf]
      %v1025 = vld [vmem:[#allocation2 + $0xc] sm:$0xf]
      %v1026 = vld [vmem:[#allocation2 + $0x10] sm:$0xf]
      %v1027 = vld [vmem:[#allocation2 + $0x18] sm:$0xf]
      %v1028 = vld [vmem:[#allocation2 + $0x1c] sm:$0xf]
      %v1029 = vld [vmem:[#allocation2 + $0x24] sm:$0xf]
      %v1030 = vld [vmem:[#allocation2 + $0x28] sm:$0xf]
      %v1031 = vld [vmem:[#allocation2 + $0x30] sm:$0xf]
      %v1032 = vld [vmem:[#allocation2 + $0x34] sm:$0xf]
      %v1033 = vld [vmem:[#allocation2 + $0x3c] sm:$0xf]
      %v1034 = vld [vmem:[#allocation2 + $0x40] sm:$0xf]
      %v1035 = vld [vmem:[#allocation2 + $0x48] sm:$0xf]
      %v1036 = vld [vmem:[#allocation2 + $0x4c] sm:$0xf]
      %v1037 = vld [vmem:[#allocation2 + $0x54] sm:$0xf]
      %v1038 = vld [vmem:[#allocation2 + $0x58] sm:$0xf]
      %v1039 = vld [vmem:[#allocation2 + $0x60] sm:$0xf]
      %v1040 = vld [vmem:[#allocation2 + $0x64] sm:$0xf]
      %v1041 = vld [vmem:[#allocation2 + $0x6c] sm:$0xf]
      %v1042 = vld [vmem:[#allocation2 + $0x70] sm:$0xf]
      %v1043 = vld [vmem:[#allocation2 + $0x78] sm:$0xf]
      %v1044 = vld [vmem:[#allocation2 + $0x7c] sm:$0xf]
      %v1045 = vld [vmem:[#allocation2 + $0x84] sm:$0xf]
      %v1046 = vld [vmem:[#allocation2 + $0x88] sm:$0xf]
      %v1047 = vld [vmem:[#allocation2 + $0x90] sm:$0xf]
      %v1048 = vld [vmem:[#allocation2 + $0x94] sm:$0xf]
      %v1049 = vld [vmem:[#allocation2 + $0x9c] sm:$0xf]
      %v1050 = vld [vmem:[#allocation2 + $0xa0] sm:$0xf]
      %v1051 = vld [vmem:[#allocation2 + $0xa8] sm:$0xf]
      %v1052 = vld [vmem:[#allocation2 + $0xac] sm:$0xf]
      %v1053 = vld [vmem:[#allocation2 + $0xb4] sm:$0xf]
      %v1054 = vld [vmem:[#allocation2 + $0xb8] sm:$0xf]
      %1055 = vst [vmem:[#allocation3] sm:$0xf] %v1023
      %1056 = vst [vmem:[#allocation3 + $0x24] sm:$0xf] %v1024
      %1057 = vst [vmem:[#allocation3 + $0x48] sm:$0xf] %v1025
      %1058 = vst [vmem:[#allocation3 + $0x6c] sm:$0xf] %v1026
      %1059 = vst [vmem:[#allocation3 + $0x90] sm:$0xf] %v1027
      %1060 = vst [vmem:[#allocation3 + $0xb4] sm:$0xf] %v1028
      %1061 = vst [vmem:[#allocation3 + $0xd8] sm:$0xf] %v1029
      %1062 = vst [vmem:[#allocation3 + $0xfc] sm:$0xf] %v1030
      %1063 = vst [vmem:[#allocation3 + $0x120] sm:$0xf] %v1031
      %1064 = vst [vmem:[#allocation3 + $0x144] sm:$0xf] %v1032
      %1065 = vst [vmem:[#allocation3 + $0x168] sm:$0xf] %v1033
      %1066 = vst [vmem:[#allocation3 + $0x18c] sm:$0xf] %v1034
      %1067 = vst [vmem:[#allocation3 + $0x1b0] sm:$0xf] %v1035
      %1068 = vst [vmem:[#allocation3 + $0x1d4] sm:$0xf] %v1036
      %1069 = vst [vmem:[#allocation3 + $0x1f8] sm:$0xf] %v1037
      %1070 = vst [vmem:[#allocation3 + $0x21c] sm:$0xf] %v1038
      %1071 = vst [vmem:[#allocation3 + $0x240] sm:$0xf] %v1039
      %1072 = vst [vmem:[#allocation3 + $0x264] sm:$0xf] %v1040
      %1073 = vst [vmem:[#allocation3 + $0x288] sm:$0xf] %v1041
      %1074 = vst [vmem:[#allocation3 + $0x2ac] sm:$0xf] %v1042
      %1075 = vst [vmem:[#allocation3 + $0x2d0] sm:$0xf] %v1043
      %1076 = vst [vmem:[#allocation3 + $0x2f4] sm:$0xf] %v1044
      %1077 = vst [vmem:[#allocation3 + $0x318] sm:$0xf] %v1045
      %1078 = vst [vmem:[#allocation3 + $0x33c] sm:$0xf] %v1046
      %1079 = vst [vmem:[#allocation3 + $0x360] sm:$0xf] %v1047
      %1080 = vst [vmem:[#allocation3 + $0x384] sm:$0xf] %v1048
      %1081 = vst [vmem:[#allocation3 + $0x3a8] sm:$0xf] %v1049
      %1082 = vst [vmem:[#allocation3 + $0x3cc] sm:$0xf] %v1050
      %1083 = vst [vmem:[#allocation3 + $0x3f0] sm:$0xf] %v1051
      %1084 = vst [vmem:[#allocation3 + $0x414] sm:$0xf] %v1052
      %1085 = vst [vmem:[#allocation3 + $0x438] sm:$0xf] %v1053
      %1086 = vst [vmem:[#allocation3 + $0x45c] sm:$0xf] %v1054
      %v1087 = vld [vmem:[#allocation2] sm:$0xf]
      %v1088 = vld [vmem:[#allocation2 + $0x4] sm:$0xf]
      %v1089 = vld [vmem:[#allocation2 + $0x8] sm:$0x1]
      %v1090 = vld [vmem:[#allocation2 + $0xc] sm:$0xf]
      %v1091 = vld [vmem:[#allocation2 + $0x10] sm:$0xf]
      %v1092 = vld [vmem:[#allocation2 + $0x14] sm:$0x1]
      %v1093 = vld [vmem:[#allocation2 + $0x18] sm:$0xf]
      %v1094 = vld [vmem:[#allocation2 + $0x1c] sm:$0xf]
      %v1095 = vld [vmem:[#allocation2 + $0x20] sm:$0x1]
      %v1096 = vld [vmem:[#allocation2 + $0x24] sm:$0xf]
      %v1097 = vld [vmem:[#allocation2 + $0x28] sm:$0xf]
      %v1098 = vld [vmem:[#allocation2 + $0x2c] sm:$0x1]
      %v1099 = vld [vmem:[#allocation2 + $0x30] sm:$0xf]
      %v1100 = vld [vmem:[#allocation2 + $0x34] sm:$0xf]
      %v1101 = vld [vmem:[#allocation2 + $0x38] sm:$0x1]
      %v1102 = vld [vmem:[#allocation2 + $0x3c] sm:$0xf]
      %v1103 = vld [vmem:[#allocation2 + $0x40] sm:$0xf]
      %v1104 = vld [vmem:[#allocation2 + $0x44] sm:$0x1]
      %v1105 = vld [vmem:[#allocation2 + $0x48] sm:$0xf]
      %v1106 = vld [vmem:[#allocation2 + $0x4c] sm:$0xf]
      %v1107 = vld [vmem:[#allocation2 + $0x50] sm:$0x1]
      %v1108 = vld [vmem:[#allocation2 + $0x54] sm:$0xf]
      %v1109 = vld [vmem:[#allocation2 + $0x58] sm:$0xf]
      %v1110 = vld [vmem:[#allocation2 + $0x5c] sm:$0x1]
      %v1111 = vld [vmem:[#allocation2 + $0x60] sm:$0xf]
      %v1112 = vld [vmem:[#allocation2 + $0x64] sm:$0xf]
      %v1113 = vld [vmem:[#allocation2 + $0x68] sm:$0x1]
      %v1114 = vld [vmem:[#allocation2 + $0x6c] sm:$0xf]
      %v1115 = vld [vmem:[#allocation2 + $0x70] sm:$0xf]
      %v1116 = vld [vmem:[#allocation2 + $0x74] sm:$0x1]
      %v1117 = vld [vmem:[#allocation2 + $0x78] sm:$0xf]
      %v1118 = vld [vmem:[#allocation2 + $0x7c] sm:$0xf]
      %v1119 = vld [vmem:[#allocation2 + $0x80] sm:$0x1]
      %v1120 = vld [vmem:[#allocation2 + $0x84] sm:$0xf]
      %v1121 = vld [vmem:[#allocation2 + $0x88] sm:$0xf]
      %v1122 = vld [vmem:[#allocation2 + $0x8c] sm:$0x1]
      %v1123 = vld [vmem:[#allocation2 + $0x90] sm:$0xf]
      %v1124 = vld [vmem:[#allocation2 + $0x94] sm:$0xf]
      %v1125 = vld [vmem:[#allocation2 + $0x98] sm:$0x1]
      %v1126 = vld [vmem:[#allocation2 + $0x9c] sm:$0xf]
      %v1127 = vld [vmem:[#allocation2 + $0xa0] sm:$0xf]
      %v1128 = vld [vmem:[#allocation2 + $0xa4] sm:$0x1]
      %v1129 = vld [vmem:[#allocation2 + $0xa8] sm:$0xf]
      %v1130 = vld [vmem:[#allocation2 + $0xac] sm:$0xf]
      %v1131 = vld [vmem:[#allocation2 + $0xb0] sm:$0x1]
      %v1132 = vld [vmem:[#allocation2 + $0xb4] sm:$0xf]
      %v1133 = vld [vmem:[#allocation2 + $0xb8] sm:$0xf]
      %v1134 = vld [vmem:[#allocation2 + $0xbc] sm:$0x1]
      %vm1135 = vsmask.f32 3328
      %vm1136 = vsmask.f32 7440
      %vm1137 = vmor %vm1135, %vm1136
      %v1139 = vshrl.u32 %v1087, 16
      %v1141 = vrot.slane %v1139, 4
      %v1142 = vshll.u32 %v1087, 16
      %v1144 = vrot.slane %v1142, 5
      %v1145 = vor.u32 %v1141, %v1144
      %v1146 = vrot.slane %v1145, 4
      %v1148 = vshll.u32 %v1088, 16
      %v1150 = vrot.slane %v1148, 5
      %v1151 = vsel %vm1137, %v1146, %v1150
      %v1152 = vshrl.u32 %v1088, 16
      %v1154 = vrot.slane %v1152, 4
      %v1155 = vor.u32 %v1154, %v1150
      %v1156 = vrot.slane %v1155, 4
      %v1158 = vshll.u32 %v1089, 16
      %v1160 = vrot.slane %v1158, 5
      %v1161 = vsel %vm1137, %v1156, %v1160
      %v1163 = vshrl.u32 %v1090, 16
      %v1165 = vrot.slane %v1163, 4
      %v1166 = vshll.u32 %v1090, 16
      %v1168 = vrot.slane %v1166, 5
      %v1169 = vor.u32 %v1165, %v1168
      %v1170 = vrot.slane %v1169, 4
      %v1172 = vshll.u32 %v1091, 16
      %v1174 = vrot.slane %v1172, 5
      %v1175 = vsel %vm1137, %v1170, %v1174
      %v1176 = vshrl.u32 %v1091, 16
      %v1178 = vrot.slane %v1176, 4
      %v1179 = vor.u32 %v1178, %v1174
      %v1180 = vrot.slane %v1179, 4
      %v1182 = vshll.u32 %v1092, 16
      %v1184 = vrot.slane %v1182, 5
      %v1185 = vsel %vm1137, %v1180, %v1184
      %v1187 = vshrl.u32 %v1093, 16
      %v1189 = vrot.slane %v1187, 4
      %v1190 = vshll.u32 %v1093, 16
      %v1192 = vrot.slane %v1190, 5
      %v1193 = vor.u32 %v1189, %v1192
      %v1194 = vrot.slane %v1193, 4
      %v1196 = vshll.u32 %v1094, 16
      %v1198 = vrot.slane %v1196, 5
      %v1199 = vsel %vm1137, %v1194, %v1198
      %v1200 = vshrl.u32 %v1094, 16
      %v1202 = vrot.slane %v1200, 4
      %v1203 = vor.u32 %v1202, %v1198
      %v1204 = vrot.slane %v1203, 4
      %v1206 = vshll.u32 %v1095, 16
      %v1208 = vrot.slane %v1206, 5
      %v1209 = vsel %vm1137, %v1204, %v1208
      %v1211 = vshrl.u32 %v1096, 16
      %v1213 = vrot.slane %v1211, 4
      %v1214 = vshll.u32 %v1096, 16
      %v1216 = vrot.slane %v1214, 5
      %v1217 = vor.u32 %v1213, %v1216
      %v1218 = vrot.slane %v1217, 4
      %v1220 = vshll.u32 %v1097, 16
      %v1222 = vrot.slane %v1220, 5
      %v1223 = vsel %vm1137, %v1218, %v1222
      %v1224 = vshrl.u32 %v1097, 16
      %v1226 = vrot.slane %v1224, 4
      %v1227 = vor.u32 %v1226, %v1222
      %v1228 = vrot.slane %v1227, 4
      %v1230 = vshll.u32 %v1098, 16
      %v1232 = vrot.slane %v1230, 5
      %v1233 = vsel %vm1137, %v1228, %v1232
      %v1235 = vshrl.u32 %v1099, 16
      %v1237 = vrot.slane %v1235, 4
      %v1238 = vshll.u32 %v1099, 16
      %v1240 = vrot.slane %v1238, 5
      %v1241 = vor.u32 %v1237, %v1240
      %v1242 = vrot.slane %v1241, 4
      %v1244 = vshll.u32 %v1100, 16
      %v1246 = vrot.slane %v1244, 5
      %v1247 = vsel %vm1137, %v1242, %v1246
      %v1248 = vshrl.u32 %v1100, 16
      %v1250 = vrot.slane %v1248, 4
      %v1251 = vor.u32 %v1250, %v1246
      %v1252 = vrot.slane %v1251, 4
      %v1254 = vshll.u32 %v1101, 16
      %v1256 = vrot.slane %v1254, 5
      %v1257 = vsel %vm1137, %v1252, %v1256
      %v1259 = vshrl.u32 %v1102, 16
      %v1261 = vrot.slane %v1259, 4
      %v1262 = vshll.u32 %v1102, 16
      %v1264 = vrot.slane %v1262, 5
      %v1265 = vor.u32 %v1261, %v1264
      %v1266 = vrot.slane %v1265, 4
      %v1268 = vshll.u32 %v1103, 16
      %v1270 = vrot.slane %v1268, 5
      %v1271 = vsel %vm1137, %v1266, %v1270
      %v1272 = vshrl.u32 %v1103, 16
      %v1274 = vrot.slane %v1272, 4
      %v1275 = vor.u32 %v1274, %v1270
      %v1276 = vrot.slane %v1275, 4
      %v1278 = vshll.u32 %v1104, 16
      %v1280 = vrot.slane %v1278, 5
      %v1281 = vsel %vm1137, %v1276, %v1280
      %v1283 = vshrl.u32 %v1105, 16
      %v1285 = vrot.slane %v1283, 4
      %v1286 = vshll.u32 %v1105, 16
      %v1288 = vrot.slane %v1286, 5
      %v1289 = vor.u32 %v1285, %v1288
      %v1290 = vrot.slane %v1289, 4
      %v1292 = vshll.u32 %v1106, 16
      %v1294 = vrot.slane %v1292, 5
      %v1295 = vsel %vm1137, %v1290, %v1294
      %v1296 = vshrl.u32 %v1106, 16
      %v1298 = vrot.slane %v1296, 4
      %v1299 = vor.u32 %v1298, %v1294
      %v1300 = vrot.slane %v1299, 4
      %v1302 = vshll.u32 %v1107, 16
      %v1304 = vrot.slane %v1302, 5
      %v1305 = vsel %vm1137, %v1300, %v1304
      %v1307 = vshrl.u32 %v1108, 16
      %v1309 = vrot.slane %v1307, 4
      %v1310 = vshll.u32 %v1108, 16
      %v1312 = vrot.slane %v1310, 5
      %v1313 = vor.u32 %v1309, %v1312
      %v1314 = vrot.slane %v1313, 4
      %v1316 = vshll.u32 %v1109, 16
      %v1318 = vrot.slane %v1316, 5
      %v1319 = vsel %vm1137, %v1314, %v1318
      %v1320 = vshrl.u32 %v1109, 16
      %v1322 = vrot.slane %v1320, 4
      %v1323 = vor.u32 %v1322, %v1318
      %v1324 = vrot.slane %v1323, 4
      %v1326 = vshll.u32 %v1110, 16
      %v1328 = vrot.slane %v1326, 5
      %v1329 = vsel %vm1137, %v1324, %v1328
      %v1331 = vshrl.u32 %v1111, 16
      %v1333 = vrot.slane %v1331, 4
      %v1334 = vshll.u32 %v1111, 16
      %v1336 = vrot.slane %v1334, 5
      %v1337 = vor.u32 %v1333, %v1336
      %v1338 = vrot.slane %v1337, 4
      %v1340 = vshll.u32 %v1112, 16
      %v1342 = vrot.slane %v1340, 5
      %v1343 = vsel %vm1137, %v1338, %v1342
      %v1344 = vshrl.u32 %v1112, 16
      %v1346 = vrot.slane %v1344, 4
      %v1347 = vor.u32 %v1346, %v1342
      %v1348 = vrot.slane %v1347, 4
      %v1350 = vshll.u32 %v1113, 16
      %v1352 = vrot.slane %v1350, 5
      %v1353 = vsel %vm1137, %v1348, %v1352
      %v1355 = vshrl.u32 %v1114, 16
      %v1357 = vrot.slane %v1355, 4
      %v1358 = vshll.u32 %v1114, 16
      %v1360 = vrot.slane %v1358, 5
      %v1361 = vor.u32 %v1357, %v1360
      %v1362 = vrot.slane %v1361, 4
      %v1364 = vshll.u32 %v1115, 16
      %v1366 = vrot.slane %v1364, 5
      %v1367 = vsel %vm1137, %v1362, %v1366
      %v1368 = vshrl.u32 %v1115, 16
      %v1370 = vrot.slane %v1368, 4
      %v1371 = vor.u32 %v1370, %v1366
      %v1372 = vrot.slane %v1371, 4
      %v1374 = vshll.u32 %v1116, 16
      %v1376 = vrot.slane %v1374, 5
      %v1377 = vsel %vm1137, %v1372, %v1376
      %v1379 = vshrl.u32 %v1117, 16
      %v1381 = vrot.slane %v1379, 4
      %v1382 = vshll.u32 %v1117, 16
      %v1384 = vrot.slane %v1382, 5
      %v1385 = vor.u32 %v1381, %v1384
      %v1386 = vrot.slane %v1385, 4
      %v1388 = vshll.u32 %v1118, 16
      %v1390 = vrot.slane %v1388, 5
      %v1391 = vsel %vm1137, %v1386, %v1390
      %v1392 = vshrl.u32 %v1118, 16
      %v1394 = vrot.slane %v1392, 4
      %v1395 = vor.u32 %v1394, %v1390
      %v1396 = vrot.slane %v1395, 4
      %v1398 = vshll.u32 %v1119, 16
      %v1400 = vrot.slane %v1398, 5
      %v1401 = vsel %vm1137, %v1396, %v1400
      %v1403 = vshrl.u32 %v1120, 16
      %v1405 = vrot.slane %v1403, 4
      %v1406 = vshll.u32 %v1120, 16
      %v1408 = vrot.slane %v1406, 5
      %v1409 = vor.u32 %v1405, %v1408
      %v1410 = vrot.slane %v1409, 4
      %v1412 = vshll.u32 %v1121, 16
      %v1414 = vrot.slane %v1412, 5
      %v1415 = vsel %vm1137, %v1410, %v1414
      %v1416 = vshrl.u32 %v1121, 16
      %v1418 = vrot.slane %v1416, 4
      %v1419 = vor.u32 %v1418, %v1414
      %v1420 = vrot.slane %v1419, 4
      %v1422 = vshll.u32 %v1122, 16
      %v1424 = vrot.slane %v1422, 5
      %v1425 = vsel %vm1137, %v1420, %v1424
      %v1427 = vshrl.u32 %v1123, 16
      %v1429 = vrot.slane %v1427, 4
      %v1430 = vshll.u32 %v1123, 16
      %v1432 = vrot.slane %v1430, 5
      %v1433 = vor.u32 %v1429, %v1432
      %v1434 = vrot.slane %v1433, 4
      %v1436 = vshll.u32 %v1124, 16
      %v1438 = vrot.slane %v1436, 5
      %v1439 = vsel %vm1137, %v1434, %v1438
      %v1440 = vshrl.u32 %v1124, 16
      %v1442 = vrot.slane %v1440, 4
      %v1443 = vor.u32 %v1442, %v1438
      %v1444 = vrot.slane %v1443, 4
      %v1446 = vshll.u32 %v1125, 16
      %v1448 = vrot.slane %v1446, 5
      %v1449 = vsel %vm1137, %v1444, %v1448
      %v1451 = vshrl.u32 %v1126, 16
      %v1453 = vrot.slane %v1451, 4
      %v1454 = vshll.u32 %v1126, 16
      %v1456 = vrot.slane %v1454, 5
      %v1457 = vor.u32 %v1453, %v1456
      %v1458 = vrot.slane %v1457, 4
      %v1460 = vshll.u32 %v1127, 16
      %v1462 = vrot.slane %v1460, 5
      %v1463 = vsel %vm1137, %v1458, %v1462
      %v1464 = vshrl.u32 %v1127, 16
      %v1466 = vrot.slane %v1464, 4
      %v1467 = vor.u32 %v1466, %v1462
      %v1468 = vrot.slane %v1467, 4
      %v1470 = vshll.u32 %v1128, 16
      %v1472 = vrot.slane %v1470, 5
      %v1473 = vsel %vm1137, %v1468, %v1472
      %v1475 = vshrl.u32 %v1129, 16
      %v1477 = vrot.slane %v1475, 4
      %v1478 = vshll.u32 %v1129, 16
      %v1480 = vrot.slane %v1478, 5
      %v1481 = vor.u32 %v1477, %v1480
      %v1482 = vrot.slane %v1481, 4
      %v1484 = vshll.u32 %v1130, 16
      %v1486 = vrot.slane %v1484, 5
      %v1487 = vsel %vm1137, %v1482, %v1486
      %v1488 = vshrl.u32 %v1130, 16
      %v1490 = vrot.slane %v1488, 4
      %v1491 = vor.u32 %v1490, %v1486
      %v1492 = vrot.slane %v1491, 4
      %v1494 = vshll.u32 %v1131, 16
      %v1496 = vrot.slane %v1494, 5
      %v1497 = vsel %vm1137, %v1492, %v1496
      %v1499 = vshrl.u32 %v1132, 16
      %v1501 = vrot.slane %v1499, 4
      %v1502 = vshll.u32 %v1132, 16
      %v1504 = vrot.slane %v1502, 5
      %v1505 = vor.u32 %v1501, %v1504
      %v1506 = vrot.slane %v1505, 4
      %v1508 = vshll.u32 %v1133, 16
      %v1510 = vrot.slane %v1508, 5
      %v1511 = vsel %vm1137, %v1506, %v1510
      %v1512 = vshrl.u32 %v1133, 16
      %v1514 = vrot.slane %v1512, 4
      %v1515 = vor.u32 %v1514, %v1510
      %v1516 = vrot.slane %v1515, 4
      %v1518 = vshll.u32 %v1134, 16
      %v1520 = vrot.slane %v1518, 5
      %v1521 = vsel %vm1137, %v1516, %v1520
      %1554 = vst [vmem:[#allocation3 + $0x4] sm:$0xf] %v1151
      %1555 = vst [vmem:[#allocation3 + $0x28] sm:$0xf] %v1161
      %1556 = vst [vmem:[#allocation3 + $0x4c] sm:$0xf] %v1175
      %1557 = vst [vmem:[#allocation3 + $0x70] sm:$0xf] %v1185
      %1558 = vst [vmem:[#allocation3 + $0x94] sm:$0xf] %v1199
      %1559 = vst [vmem:[#allocation3 + $0xb8] sm:$0xf] %v1209
      %1560 = vst [vmem:[#allocation3 + $0xdc] sm:$0xf] %v1223
      %1561 = vst [vmem:[#allocation3 + $0x100] sm:$0xf] %v1233
      %1562 = vst [vmem:[#allocation3 + $0x124] sm:$0xf] %v1247
      %1563 = vst [vmem:[#allocation3 + $0x148] sm:$0xf] %v1257
      %1564 = vst [vmem:[#allocation3 + $0x16c] sm:$0xf] %v1271
      %1565 = vst [vmem:[#allocation3 + $0x190] sm:$0xf] %v1281
      %1566 = vst [vmem:[#allocation3 + $0x1b4] sm:$0xf] %v1295
      %1567 = vst [vmem:[#allocation3 + $0x1d8] sm:$0xf] %v1305
      %1568 = vst [vmem:[#allocation3 + $0x1fc] sm:$0xf] %v1319
      %1569 = vst [vmem:[#allocation3 + $0x220] sm:$0xf] %v1329
      %1570 = vst [vmem:[#allocation3 + $0x244] sm:$0xf] %v1343
      %1571 = vst [vmem:[#allocation3 + $0x268] sm:$0xf] %v1353
      %1572 = vst [vmem:[#allocation3 + $0x28c] sm:$0xf] %v1367
      %1573 = vst [vmem:[#allocation3 + $0x2b0] sm:$0xf] %v1377
      %1574 = vst [vmem:[#allocation3 + $0x2d4] sm:$0xf] %v1391
      %1575 = vst [vmem:[#allocation3 + $0x2f8] sm:$0xf] %v1401
      %1576 = vst [vmem:[#allocation3 + $0x31c] sm:$0xf] %v1415
      %1577 = vst [vmem:[#allocation3 + $0x340] sm:$0xf] %v1425
      %1578 = vst [vmem:[#allocation3 + $0x364] sm:$0xf] %v1439
      %1579 = vst [vmem:[#allocation3 + $0x388] sm:$0xf] %v1449
      %1580 = vst [vmem:[#allocation3 + $0x3ac] sm:$0xf] %v1463
      %1581 = vst [vmem:[#allocation3 + $0x3d0] sm:$0xf] %v1473
      %1582 = vst [vmem:[#allocation3 + $0x3f4] sm:$0xf] %v1487
      %1583 = vst [vmem:[#allocation3 + $0x418] sm:$0xf] %v1497
      %1584 = vst [vmem:[#allocation3 + $0x43c] sm:$0xf] %v1511
      %1585 = vst [vmem:[#allocation3 + $0x460] sm:$0xf] %v1521
      %v1586 = vld [vmem:[#allocation2] sm:$0xe]
      %v1587 = vld [vmem:[#allocation2 + $0x4] sm:$0xf]
      %v1588 = vld [vmem:[#allocation2 + $0x8] sm:$0x1]
      %v1589 = vld [vmem:[#allocation2 + $0xc] sm:$0xe]
      %v1590 = vld [vmem:[#allocation2 + $0x10] sm:$0xf]
      %v1591 = vld [vmem:[#allocation2 + $0x14] sm:$0x1]
      %v1592 = vld [vmem:[#allocation2 + $0x18] sm:$0xe]
      %v1593 = vld [vmem:[#allocation2 + $0x1c] sm:$0xf]
      %v1594 = vld [vmem:[#allocation2 + $0x20] sm:$0x1]
      %v1595 = vld [vmem:[#allocation2 + $0x24] sm:$0xe]
      %v1596 = vld [vmem:[#allocation2 + $0x28] sm:$0xf]
      %v1597 = vld [vmem:[#allocation2 + $0x2c] sm:$0x1]
      %v1598 = vld [vmem:[#allocation2 + $0x30] sm:$0xe]
      %v1599 = vld [vmem:[#allocation2 + $0x34] sm:$0xf]
      %v1600 = vld [vmem:[#allocation2 + $0x38] sm:$0x1]
      %v1601 = vld [vmem:[#allocation2 + $0x3c] sm:$0xe]
      %v1602 = vld [vmem:[#allocation2 + $0x40] sm:$0xf]
      %v1603 = vld [vmem:[#allocation2 + $0x44] sm:$0x1]
      %v1604 = vld [vmem:[#allocation2 + $0x48] sm:$0xe]
      %v1605 = vld [vmem:[#allocation2 + $0x4c] sm:$0xf]
      %v1606 = vld [vmem:[#allocation2 + $0x50] sm:$0x1]
      %v1607 = vld [vmem:[#allocation2 + $0x54] sm:$0xe]
      %v1608 = vld [vmem:[#allocation2 + $0x58] sm:$0xf]
      %v1609 = vld [vmem:[#allocation2 + $0x5c] sm:$0x1]
      %v1610 = vld [vmem:[#allocation2 + $0x60] sm:$0xe]
      %v1611 = vld [vmem:[#allocation2 + $0x64] sm:$0xf]
      %v1612 = vld [vmem:[#allocation2 + $0x68] sm:$0x1]
      %v1613 = vld [vmem:[#allocation2 + $0x6c] sm:$0xe]
      %v1614 = vld [vmem:[#allocation2 + $0x70] sm:$0xf]
      %v1615 = vld [vmem:[#allocation2 + $0x74] sm:$0x1]
      %v1616 = vld [vmem:[#allocation2 + $0x78] sm:$0xe]
      %v1617 = vld [vmem:[#allocation2 + $0x7c] sm:$0xf]
      %v1618 = vld [vmem:[#allocation2 + $0x80] sm:$0x1]
      %v1619 = vld [vmem:[#allocation2 + $0x84] sm:$0xe]
      %v1620 = vld [vmem:[#allocation2 + $0x88] sm:$0xf]
      %v1621 = vld [vmem:[#allocation2 + $0x8c] sm:$0x1]
      %v1622 = vld [vmem:[#allocation2 + $0x90] sm:$0xe]
      %v1623 = vld [vmem:[#allocation2 + $0x94] sm:$0xf]
      %v1624 = vld [vmem:[#allocation2 + $0x98] sm:$0x1]
      %v1625 = vld [vmem:[#allocation2 + $0x9c] sm:$0xe]
      %v1626 = vld [vmem:[#allocation2 + $0xa0] sm:$0xf]
      %v1627 = vld [vmem:[#allocation2 + $0xa4] sm:$0x1]
      %v1628 = vld [vmem:[#allocation2 + $0xa8] sm:$0xe]
      %v1629 = vld [vmem:[#allocation2 + $0xac] sm:$0xf]
      %v1630 = vld [vmem:[#allocation2 + $0xb0] sm:$0x1]
      %v1631 = vld [vmem:[#allocation2 + $0xb4] sm:$0xe]
      %v1632 = vld [vmem:[#allocation2 + $0xb8] sm:$0xf]
      %v1633 = vld [vmem:[#allocation2 + $0xbc] sm:$0x1]
      %vm1682 = vcmask 1042432
      %vm1683 = vcmask 1046532
      %vm1684 = vmor %vm1682, %vm1683
      %v1685 = vrot.slane %v1586, 5
      %v1686 = vrot.slane %v1685, 4
      %v1687 = vrot.slane %v1587, 5
      %v1688 = vsel %vm1684, %v1686, %v1687
      %v1689 = vrot.slane %v1687, 4
      %v1690 = vrot.slane %v1588, 5
      %v1691 = vsel %vm1684, %v1689, %v1690
      %v1692 = vrot.slane %v1589, 5
      %v1693 = vrot.slane %v1692, 4
      %v1694 = vrot.slane %v1590, 5
      %v1695 = vsel %vm1684, %v1693, %v1694
      %v1696 = vrot.slane %v1694, 4
      %v1697 = vrot.slane %v1591, 5
      %v1698 = vsel %vm1684, %v1696, %v1697
      %v1699 = vrot.slane %v1592, 5
      %v1700 = vrot.slane %v1699, 4
      %v1701 = vrot.slane %v1593, 5
      %v1702 = vsel %vm1684, %v1700, %v1701
      %v1703 = vrot.slane %v1701, 4
      %v1704 = vrot.slane %v1594, 5
      %v1705 = vsel %vm1684, %v1703, %v1704
      %v1706 = vrot.slane %v1595, 5
      %v1707 = vrot.slane %v1706, 4
      %v1708 = vrot.slane %v1596, 5
      %v1709 = vsel %vm1684, %v1707, %v1708
      %v1710 = vrot.slane %v1708, 4
      %v1711 = vrot.slane %v1597, 5
      %v1712 = vsel %vm1684, %v1710, %v1711
      %v1713 = vrot.slane %v1598, 5
      %v1714 = vrot.slane %v1713, 4
      %v1715 = vrot.slane %v1599, 5
      %v1716 = vsel %vm1684, %v1714, %v1715
      %v1717 = vrot.slane %v1715, 4
      %v1718 = vrot.slane %v1600, 5
      %v1719 = vsel %vm1684, %v1717, %v1718
      %v1720 = vrot.slane %v1601, 5
      %v1721 = vrot.slane %v1720, 4
      %v1722 = vrot.slane %v1602, 5
      %v1723 = vsel %vm1684, %v1721, %v1722
      %v1724 = vrot.slane %v1722, 4
      %v1725 = vrot.slane %v1603, 5
      %v1726 = vsel %vm1684, %v1724, %v1725
      %v1727 = vrot.slane %v1604, 5
      %v1728 = vrot.slane %v1727, 4
      %v1729 = vrot.slane %v1605, 5
      %v1730 = vsel %vm1684, %v1728, %v1729
      %v1731 = vrot.slane %v1729, 4
      %v1732 = vrot.slane %v1606, 5
      %v1733 = vsel %vm1684, %v1731, %v1732
      %v1734 = vrot.slane %v1607, 5
      %v1735 = vrot.slane %v1734, 4
      %v1736 = vrot.slane %v1608, 5
      %v1737 = vsel %vm1684, %v1735, %v1736
      %v1738 = vrot.slane %v1736, 4
      %v1739 = vrot.slane %v1609, 5
      %v1740 = vsel %vm1684, %v1738, %v1739
      %v1741 = vrot.slane %v1610, 5
      %v1742 = vrot.slane %v1741, 4
      %v1743 = vrot.slane %v1611, 5
      %v1744 = vsel %vm1684, %v1742, %v1743
      %v1745 = vrot.slane %v1743, 4
      %v1746 = vrot.slane %v1612, 5
      %v1747 = vsel %vm1684, %v1745, %v1746
      %v1748 = vrot.slane %v1613, 5
      %v1749 = vrot.slane %v1748, 4
      %v1750 = vrot.slane %v1614, 5
      %v1751 = vsel %vm1684, %v1749, %v1750
      %v1752 = vrot.slane %v1750, 4
      %v1753 = vrot.slane %v1615, 5
      %v1754 = vsel %vm1684, %v1752, %v1753
      %v1755 = vrot.slane %v1616, 5
      %v1756 = vrot.slane %v1755, 4
      %v1757 = vrot.slane %v1617, 5
      %v1758 = vsel %vm1684, %v1756, %v1757
      %v1759 = vrot.slane %v1757, 4
      %v1760 = vrot.slane %v1618, 5
      %v1761 = vsel %vm1684, %v1759, %v1760
      %v1762 = vrot.slane %v1619, 5
      %v1763 = vrot.slane %v1762, 4
      %v1764 = vrot.slane %v1620, 5
      %v1765 = vsel %vm1684, %v1763, %v1764
      %v1766 = vrot.slane %v1764, 4
      %v1767 = vrot.slane %v1621, 5
      %v1768 = vsel %vm1684, %v1766, %v1767
      %v1769 = vrot.slane %v1622, 5
      %v1770 = vrot.slane %v1769, 4
      %v1771 = vrot.slane %v1623, 5
      %v1772 = vsel %vm1684, %v1770, %v1771
      %v1773 = vrot.slane %v1771, 4
      %v1774 = vrot.slane %v1624, 5
      %v1775 = vsel %vm1684, %v1773, %v1774
      %v1776 = vrot.slane %v1625, 5
      %v1777 = vrot.slane %v1776, 4
      %v1778 = vrot.slane %v1626, 5
      %v1779 = vsel %vm1684, %v1777, %v1778
      %v1780 = vrot.slane %v1778, 4
      %v1781 = vrot.slane %v1627, 5
      %v1782 = vsel %vm1684, %v1780, %v1781
      %v1783 = vrot.slane %v1628, 5
      %v1784 = vrot.slane %v1783, 4
      %v1785 = vrot.slane %v1629, 5
      %v1786 = vsel %vm1684, %v1784, %v1785
      %v1787 = vrot.slane %v1785, 4
      %v1788 = vrot.slane %v1630, 5
      %v1789 = vsel %vm1684, %v1787, %v1788
      %v1790 = vrot.slane %v1631, 5
      %v1791 = vrot.slane %v1790, 4
      %v1792 = vrot.slane %v1632, 5
      %v1793 = vsel %vm1684, %v1791, %v1792
      %v1794 = vrot.slane %v1792, 4
      %v1795 = vrot.slane %v1633, 5
      %v1796 = vsel %vm1684, %v1794, %v1795
      %1829 = vst [vmem:[#allocation3 + $0x8] sm:$0xf] %v1688
      %1830 = vst [vmem:[#allocation3 + $0x2c] sm:$0xf] %v1691
      %1831 = vst [vmem:[#allocation3 + $0x50] sm:$0xf] %v1695
      %1832 = vst [vmem:[#allocation3 + $0x74] sm:$0xf] %v1698
      %1833 = vst [vmem:[#allocation3 + $0x98] sm:$0xf] %v1702
      %1834 = vst [vmem:[#allocation3 + $0xbc] sm:$0xf] %v1705
      %1835 = vst [vmem:[#allocation3 + $0xe0] sm:$0xf] %v1709
      %1836 = vst [vmem:[#allocation3 + $0x104] sm:$0xf] %v1712
      %1837 = vst [vmem:[#allocation3 + $0x128] sm:$0xf] %v1716
      %1838 = vst [vmem:[#allocation3 + $0x14c] sm:$0xf] %v1719
      %1839 = vst [vmem:[#allocation3 + $0x170] sm:$0xf] %v1723
      %1840 = vst [vmem:[#allocation3 + $0x194] sm:$0xf] %v1726
      %1841 = vst [vmem:[#allocation3 + $0x1b8] sm:$0xf] %v1730
      %1842 = vst [vmem:[#allocation3 + $0x1dc] sm:$0xf] %v1733
      %1843 = vst [vmem:[#allocation3 + $0x200] sm:$0xf] %v1737
      %1844 = vst [vmem:[#allocation3 + $0x224] sm:$0xf] %v1740
      %1845 = vst [vmem:[#allocation3 + $0x248] sm:$0xf] %v1744
      %1846 = vst [vmem:[#allocation3 + $0x26c] sm:$0xf] %v1747
      %1847 = vst [vmem:[#allocation3 + $0x290] sm:$0xf] %v1751
      %1848 = vst [vmem:[#allocation3 + $0x2b4] sm:$0xf] %v1754
      %1849 = vst [vmem:[#allocation3 + $0x2d8] sm:$0xf] %v1758
      %1850 = vst [vmem:[#allocation3 + $0x2fc] sm:$0xf] %v1761
      %1851 = vst [vmem:[#allocation3 + $0x320] sm:$0xf] %v1765
      %1852 = vst [vmem:[#allocation3 + $0x344] sm:$0xf] %v1768
      %1853 = vst [vmem:[#allocation3 + $0x368] sm:$0xf] %v1772
      %1854 = vst [vmem:[#allocation3 + $0x38c] sm:$0xf] %v1775
      %1855 = vst [vmem:[#allocation3 + $0x3b0] sm:$0xf] %v1779
      %1856 = vst [vmem:[#allocation3 + $0x3d4] sm:$0xf] %v1782
      %1857 = vst [vmem:[#allocation3 + $0x3f8] sm:$0xf] %v1786
      %1858 = vst [vmem:[#allocation3 + $0x41c] sm:$0xf] %v1789
      %1859 = vst [vmem:[#allocation3 + $0x440] sm:$0xf] %v1793
      %1860 = vst [vmem:[#allocation3 + $0x464] sm:$0xf] %v1796
      %v1861 = vld [vmem:[%s905] sm:$0xf]
      %v1862 = vld [vmem:[%s905 + $0x4] sm:$0xf]
      %v1863 = vld [vmem:[%s905 + $0xc] sm:$0xf]
      %v1864 = vld [vmem:[%s905 + $0x10] sm:$0xf]
      %v1865 = vld [vmem:[%s905 + $0x18] sm:$0xf]
      %v1866 = vld [vmem:[%s905 + $0x1c] sm:$0xf]
      %v1867 = vld [vmem:[%s905 + $0x24] sm:$0xf]
      %v1868 = vld [vmem:[%s905 + $0x28] sm:$0xf]
      %v1869 = vld [vmem:[%s905 + $0x30] sm:$0xf]
      %v1870 = vld [vmem:[%s905 + $0x34] sm:$0xf]
      %v1871 = vld [vmem:[%s905 + $0x3c] sm:$0xf]
      %v1872 = vld [vmem:[%s905 + $0x40] sm:$0xf]
      %v1873 = vld [vmem:[%s905 + $0x48] sm:$0xf]
      %v1874 = vld [vmem:[%s905 + $0x4c] sm:$0xf]
      %v1875 = vld [vmem:[%s905 + $0x54] sm:$0xf]
      %v1876 = vld [vmem:[%s905 + $0x58] sm:$0xf]
      %v1877 = vld [vmem:[%s905 + $0x60] sm:$0xf]
      %v1878 = vld [vmem:[%s905 + $0x64] sm:$0xf]
      %v1879 = vld [vmem:[%s905 + $0x6c] sm:$0xf]
      %v1880 = vld [vmem:[%s905 + $0x70] sm:$0xf]
      %v1881 = vld [vmem:[%s905 + $0x78] sm:$0xf]
      %v1882 = vld [vmem:[%s905 + $0x7c] sm:$0xf]
      %v1883 = vld [vmem:[%s905 + $0x84] sm:$0xf]
      %v1884 = vld [vmem:[%s905 + $0x88] sm:$0xf]
      %v1885 = vld [vmem:[%s905 + $0x90] sm:$0xf]
      %v1886 = vld [vmem:[%s905 + $0x94] sm:$0xf]
      %v1887 = vld [vmem:[%s905 + $0x9c] sm:$0xf]
      %v1888 = vld [vmem:[%s905 + $0xa0] sm:$0xf]
      %v1889 = vld [vmem:[%s905 + $0xa8] sm:$0xf]
      %v1890 = vld [vmem:[%s905 + $0xac] sm:$0xf]
      %v1891 = vld [vmem:[%s905 + $0xb4] sm:$0xf]
      %v1892 = vld [vmem:[%s905 + $0xb8] sm:$0xf]
      %1893 = vst [vmem:[#allocation3 + $0xc] sm:$0xf] %v1861
      %1894 = vst [vmem:[#allocation3 + $0x30] sm:$0xf] %v1862
      %1895 = vst [vmem:[#allocation3 + $0x54] sm:$0xf] %v1863
      %1896 = vst [vmem:[#allocation3 + $0x78] sm:$0xf] %v1864
      %1897 = vst [vmem:[#allocation3 + $0x9c] sm:$0xf] %v1865
      %1898 = vst [vmem:[#allocation3 + $0xc0] sm:$0xf] %v1866
      %1899 = vst [vmem:[#allocation3 + $0xe4] sm:$0xf] %v1867
      %1900 = vst [vmem:[#allocation3 + $0x108] sm:$0xf] %v1868
      %1901 = vst [vmem:[#allocation3 + $0x12c] sm:$0xf] %v1869
      %1902 = vst [vmem:[#allocation3 + $0x150] sm:$0xf] %v1870
      %1903 = vst [vmem:[#allocation3 + $0x174] sm:$0xf] %v1871
      %1904 = vst [vmem:[#allocation3 + $0x198] sm:$0xf] %v1872
      %1905 = vst [vmem:[#allocation3 + $0x1bc] sm:$0xf] %v1873
      %1906 = vst [vmem:[#allocation3 + $0x1e0] sm:$0xf] %v1874
      %1907 = vst [vmem:[#allocation3 + $0x204] sm:$0xf] %v1875
      %1908 = vst [vmem:[#allocation3 + $0x228] sm:$0xf] %v1876
      %1909 = vst [vmem:[#allocation3 + $0x24c] sm:$0xf] %v1877
      %1910 = vst [vmem:[#allocation3 + $0x270] sm:$0xf] %v1878
      %1911 = vst [vmem:[#allocation3 + $0x294] sm:$0xf] %v1879
      %1912 = vst [vmem:[#allocation3 + $0x2b8] sm:$0xf] %v1880
      %1913 = vst [vmem:[#allocation3 + $0x2dc] sm:$0xf] %v1881
      %1914 = vst [vmem:[#allocation3 + $0x300] sm:$0xf] %v1882
      %1915 = vst [vmem:[#allocation3 + $0x324] sm:$0xf] %v1883
      %1916 = vst [vmem:[#allocation3 + $0x348] sm:$0xf] %v1884
      %1917 = vst [vmem:[#allocation3 + $0x36c] sm:$0xf] %v1885
      %1918 = vst [vmem:[#allocation3 + $0x390] sm:$0xf] %v1886
      %1919 = vst [vmem:[#allocation3 + $0x3b4] sm:$0xf] %v1887
      %1920 = vst [vmem:[#allocation3 + $0x3d8] sm:$0xf] %v1888
      %1921 = vst [vmem:[#allocation3 + $0x3fc] sm:$0xf] %v1889
      %1922 = vst [vmem:[#allocation3 + $0x420] sm:$0xf] %v1890
      %1923 = vst [vmem:[#allocation3 + $0x444] sm:$0xf] %v1891
      %1924 = vst [vmem:[#allocation3 + $0x468] sm:$0xf] %v1892
      %v1925 = vld [vmem:[%s905] sm:$0xf]
      %v1926 = vld [vmem:[%s905 + $0x4] sm:$0xf]
      %v1927 = vld [vmem:[%s905 + $0x8] sm:$0x1]
      %v1928 = vld [vmem:[%s905 + $0xc] sm:$0xf]
      %v1929 = vld [vmem:[%s905 + $0x10] sm:$0xf]
      %v1930 = vld [vmem:[%s905 + $0x14] sm:$0x1]
      %v1931 = vld [vmem:[%s905 + $0x18] sm:$0xf]
      %v1932 = vld [vmem:[%s905 + $0x1c] sm:$0xf]
      %v1933 = vld [vmem:[%s905 + $0x20] sm:$0x1]
      %v1934 = vld [vmem:[%s905 + $0x24] sm:$0xf]
      %v1935 = vld [vmem:[%s905 + $0x28] sm:$0xf]
      %v1936 = vld [vmem:[%s905 + $0x2c] sm:$0x1]
      %v1937 = vld [vmem:[%s905 + $0x30] sm:$0xf]
      %v1938 = vld [vmem:[%s905 + $0x34] sm:$0xf]
      %v1939 = vld [vmem:[%s905 + $0x38] sm:$0x1]
      %v1940 = vld [vmem:[%s905 + $0x3c] sm:$0xf]
      %v1941 = vld [vmem:[%s905 + $0x40] sm:$0xf]
      %v1942 = vld [vmem:[%s905 + $0x44] sm:$0x1]
      %v1943 = vld [vmem:[%s905 + $0x48] sm:$0xf]
      %v1944 = vld [vmem:[%s905 + $0x4c] sm:$0xf]
      %v1945 = vld [vmem:[%s905 + $0x50] sm:$0x1]
      %v1946 = vld [vmem:[%s905 + $0x54] sm:$0xf]
      %v1947 = vld [vmem:[%s905 + $0x58] sm:$0xf]
      %v1948 = vld [vmem:[%s905 + $0x5c] sm:$0x1]
      %v1949 = vld [vmem:[%s905 + $0x60] sm:$0xf]
      %v1950 = vld [vmem:[%s905 + $0x64] sm:$0xf]
      %v1951 = vld [vmem:[%s905 + $0x68] sm:$0x1]
      %v1952 = vld [vmem:[%s905 + $0x6c] sm:$0xf]
      %v1953 = vld [vmem:[%s905 + $0x70] sm:$0xf]
      %v1954 = vld [vmem:[%s905 + $0x74] sm:$0x1]
      %v1955 = vld [vmem:[%s905 + $0x78] sm:$0xf]
      %v1956 = vld [vmem:[%s905 + $0x7c] sm:$0xf]
      %v1957 = vld [vmem:[%s905 + $0x80] sm:$0x1]
      %v1958 = vld [vmem:[%s905 + $0x84] sm:$0xf]
      %v1959 = vld [vmem:[%s905 + $0x88] sm:$0xf]
      %v1960 = vld [vmem:[%s905 + $0x8c] sm:$0x1]
      %v1961 = vld [vmem:[%s905 + $0x90] sm:$0xf]
      %v1962 = vld [vmem:[%s905 + $0x94] sm:$0xf]
      %v1963 = vld [vmem:[%s905 + $0x98] sm:$0x1]
      %v1964 = vld [vmem:[%s905 + $0x9c] sm:$0xf]
      %v1965 = vld [vmem:[%s905 + $0xa0] sm:$0xf]
      %v1966 = vld [vmem:[%s905 + $0xa4] sm:$0x1]
      %v1967 = vld [vmem:[%s905 + $0xa8] sm:$0xf]
      %v1968 = vld [vmem:[%s905 + $0xac] sm:$0xf]
      %v1969 = vld [vmem:[%s905 + $0xb0] sm:$0x1]
      %v1970 = vld [vmem:[%s905 + $0xb4] sm:$0xf]
      %v1971 = vld [vmem:[%s905 + $0xb8] sm:$0xf]
      %v1972 = vld [vmem:[%s905 + $0xbc] sm:$0x1]
      %v1974 = vshrl.u32 %v1925, 16
      %v1976 = vrot.slane %v1974, 4
      %v1977 = vshll.u32 %v1925, 16
      %v1979 = vrot.slane %v1977, 5
      %v1980 = vor.u32 %v1976, %v1979
      %v1981 = vrot.slane %v1980, 4
      %v1983 = vshll.u32 %v1926, 16
      %v1985 = vrot.slane %v1983, 5
      %v1986 = vsel %vm1137, %v1981, %v1985
      %v1987 = vshrl.u32 %v1926, 16
      %v1989 = vrot.slane %v1987, 4
      %v1990 = vor.u32 %v1989, %v1985
      %v1991 = vrot.slane %v1990, 4
      %v1993 = vshll.u32 %v1927, 16
      %v1995 = vrot.slane %v1993, 5
      %v1996 = vsel %vm1137, %v1991, %v1995
      %v1998 = vshrl.u32 %v1928, 16
      %v2000 = vrot.slane %v1998, 4
      %v2001 = vshll.u32 %v1928, 16
      %v2003 = vrot.slane %v2001, 5
      %v2004 = vor.u32 %v2000, %v2003
      %v2005 = vrot.slane %v2004, 4
      %v2007 = vshll.u32 %v1929, 16
      %v2009 = vrot.slane %v2007, 5
      %v2010 = vsel %vm1137, %v2005, %v2009
      %v2011 = vshrl.u32 %v1929, 16
      %v2013 = vrot.slane %v2011, 4
      %v2014 = vor.u32 %v2013, %v2009
      %v2015 = vrot.slane %v2014, 4
      %v2017 = vshll.u32 %v1930, 16
      %v2019 = vrot.slane %v2017, 5
      %v2020 = vsel %vm1137, %v2015, %v2019
      %v2022 = vshrl.u32 %v1931, 16
      %v2024 = vrot.slane %v2022, 4
      %v2025 = vshll.u32 %v1931, 16
      %v2027 = vrot.slane %v2025, 5
      %v2028 = vor.u32 %v2024, %v2027
      %v2029 = vrot.slane %v2028, 4
      %v2031 = vshll.u32 %v1932, 16
      %v2033 = vrot.slane %v2031, 5
      %v2034 = vsel %vm1137, %v2029, %v2033
      %v2035 = vshrl.u32 %v1932, 16
      %v2037 = vrot.slane %v2035, 4
      %v2038 = vor.u32 %v2037, %v2033
      %v2039 = vrot.slane %v2038, 4
      %v2041 = vshll.u32 %v1933, 16
      %v2043 = vrot.slane %v2041, 5
      %v2044 = vsel %vm1137, %v2039, %v2043
      %v2046 = vshrl.u32 %v1934, 16
      %v2048 = vrot.slane %v2046, 4
      %v2049 = vshll.u32 %v1934, 16
      %v2051 = vrot.slane %v2049, 5
      %v2052 = vor.u32 %v2048, %v2051
      %v2053 = vrot.slane %v2052, 4
      %v2055 = vshll.u32 %v1935, 16
      %v2057 = vrot.slane %v2055, 5
      %v2058 = vsel %vm1137, %v2053, %v2057
      %v2059 = vshrl.u32 %v1935, 16
      %v2061 = vrot.slane %v2059, 4
      %v2062 = vor.u32 %v2061, %v2057
      %v2063 = vrot.slane %v2062, 4
      %v2065 = vshll.u32 %v1936, 16
      %v2067 = vrot.slane %v2065, 5
      %v2068 = vsel %vm1137, %v2063, %v2067
      %v2070 = vshrl.u32 %v1937, 16
      %v2072 = vrot.slane %v2070, 4
      %v2073 = vshll.u32 %v1937, 16
      %v2075 = vrot.slane %v2073, 5
      %v2076 = vor.u32 %v2072, %v2075
      %v2077 = vrot.slane %v2076, 4
      %v2079 = vshll.u32 %v1938, 16
      %v2081 = vrot.slane %v2079, 5
      %v2082 = vsel %vm1137, %v2077, %v2081
      %v2083 = vshrl.u32 %v1938, 16
      %v2085 = vrot.slane %v2083, 4
      %v2086 = vor.u32 %v2085, %v2081
      %v2087 = vrot.slane %v2086, 4
      %v2089 = vshll.u32 %v1939, 16
      %v2091 = vrot.slane %v2089, 5
      %v2092 = vsel %vm1137, %v2087, %v2091
      %v2094 = vshrl.u32 %v1940, 16
      %v2096 = vrot.slane %v2094, 4
      %v2097 = vshll.u32 %v1940, 16
      %v2099 = vrot.slane %v2097, 5
      %v2100 = vor.u32 %v2096, %v2099
      %v2101 = vrot.slane %v2100, 4
      %v2103 = vshll.u32 %v1941, 16
      %v2105 = vrot.slane %v2103, 5
      %v2106 = vsel %vm1137, %v2101, %v2105
      %v2107 = vshrl.u32 %v1941, 16
      %v2109 = vrot.slane %v2107, 4
      %v2110 = vor.u32 %v2109, %v2105
      %v2111 = vrot.slane %v2110, 4
      %v2113 = vshll.u32 %v1942, 16
      %v2115 = vrot.slane %v2113, 5
      %v2116 = vsel %vm1137, %v2111, %v2115
      %v2118 = vshrl.u32 %v1943, 16
      %v2120 = vrot.slane %v2118, 4
      %v2121 = vshll.u32 %v1943, 16
      %v2123 = vrot.slane %v2121, 5
      %v2124 = vor.u32 %v2120, %v2123
      %v2125 = vrot.slane %v2124, 4
      %v2127 = vshll.u32 %v1944, 16
      %v2129 = vrot.slane %v2127, 5
      %v2130 = vsel %vm1137, %v2125, %v2129
      %v2131 = vshrl.u32 %v1944, 16
      %v2133 = vrot.slane %v2131, 4
      %v2134 = vor.u32 %v2133, %v2129
      %v2135 = vrot.slane %v2134, 4
      %v2137 = vshll.u32 %v1945, 16
      %v2139 = vrot.slane %v2137, 5
      %v2140 = vsel %vm1137, %v2135, %v2139
      %v2142 = vshrl.u32 %v1946, 16
      %v2144 = vrot.slane %v2142, 4
      %v2145 = vshll.u32 %v1946, 16
      %v2147 = vrot.slane %v2145, 5
      %v2148 = vor.u32 %v2144, %v2147
      %v2149 = vrot.slane %v2148, 4
      %v2151 = vshll.u32 %v1947, 16
      %v2153 = vrot.slane %v2151, 5
      %v2154 = vsel %vm1137, %v2149, %v2153
      %v2155 = vshrl.u32 %v1947, 16
      %v2157 = vrot.slane %v2155, 4
      %v2158 = vor.u32 %v2157, %v2153
      %v2159 = vrot.slane %v2158, 4
      %v2161 = vshll.u32 %v1948, 16
      %v2163 = vrot.slane %v2161, 5
      %v2164 = vsel %vm1137, %v2159, %v2163
      %v2166 = vshrl.u32 %v1949, 16
      %v2168 = vrot.slane %v2166, 4
      %v2169 = vshll.u32 %v1949, 16
      %v2171 = vrot.slane %v2169, 5
      %v2172 = vor.u32 %v2168, %v2171
      %v2173 = vrot.slane %v2172, 4
      %v2175 = vshll.u32 %v1950, 16
      %v2177 = vrot.slane %v2175, 5
      %v2178 = vsel %vm1137, %v2173, %v2177
      %v2179 = vshrl.u32 %v1950, 16
      %v2181 = vrot.slane %v2179, 4
      %v2182 = vor.u32 %v2181, %v2177
      %v2183 = vrot.slane %v2182, 4
      %v2185 = vshll.u32 %v1951, 16
      %v2187 = vrot.slane %v2185, 5
      %v2188 = vsel %vm1137, %v2183, %v2187
      %v2190 = vshrl.u32 %v1952, 16
      %v2192 = vrot.slane %v2190, 4
      %v2193 = vshll.u32 %v1952, 16
      %v2195 = vrot.slane %v2193, 5
      %v2196 = vor.u32 %v2192, %v2195
      %v2197 = vrot.slane %v2196, 4
      %v2199 = vshll.u32 %v1953, 16
      %v2201 = vrot.slane %v2199, 5
      %v2202 = vsel %vm1137, %v2197, %v2201
      %v2203 = vshrl.u32 %v1953, 16
      %v2205 = vrot.slane %v2203, 4
      %v2206 = vor.u32 %v2205, %v2201
      %v2207 = vrot.slane %v2206, 4
      %v2209 = vshll.u32 %v1954, 16
      %v2211 = vrot.slane %v2209, 5
      %v2212 = vsel %vm1137, %v2207, %v2211
      %v2214 = vshrl.u32 %v1955, 16
      %v2216 = vrot.slane %v2214, 4
      %v2217 = vshll.u32 %v1955, 16
      %v2219 = vrot.slane %v2217, 5
      %v2220 = vor.u32 %v2216, %v2219
      %v2221 = vrot.slane %v2220, 4
      %v2223 = vshll.u32 %v1956, 16
      %v2225 = vrot.slane %v2223, 5
      %v2226 = vsel %vm1137, %v2221, %v2225
      %v2227 = vshrl.u32 %v1956, 16
      %v2229 = vrot.slane %v2227, 4
      %v2230 = vor.u32 %v2229, %v2225
      %v2231 = vrot.slane %v2230, 4
      %v2233 = vshll.u32 %v1957, 16
      %v2235 = vrot.slane %v2233, 5
      %v2236 = vsel %vm1137, %v2231, %v2235
      %v2238 = vshrl.u32 %v1958, 16
      %v2240 = vrot.slane %v2238, 4
      %v2241 = vshll.u32 %v1958, 16
      %v2243 = vrot.slane %v2241, 5
      %v2244 = vor.u32 %v2240, %v2243
      %v2245 = vrot.slane %v2244, 4
      %v2247 = vshll.u32 %v1959, 16
      %v2249 = vrot.slane %v2247, 5
      %v2250 = vsel %vm1137, %v2245, %v2249
      %v2251 = vshrl.u32 %v1959, 16
      %v2253 = vrot.slane %v2251, 4
      %v2254 = vor.u32 %v2253, %v2249
      %v2255 = vrot.slane %v2254, 4
      %v2257 = vshll.u32 %v1960, 16
      %v2259 = vrot.slane %v2257, 5
      %v2260 = vsel %vm1137, %v2255, %v2259
      %v2262 = vshrl.u32 %v1961, 16
      %v2264 = vrot.slane %v2262, 4
      %v2265 = vshll.u32 %v1961, 16
      %v2267 = vrot.slane %v2265, 5
      %v2268 = vor.u32 %v2264, %v2267
      %v2269 = vrot.slane %v2268, 4
      %v2271 = vshll.u32 %v1962, 16
      %v2273 = vrot.slane %v2271, 5
      %v2274 = vsel %vm1137, %v2269, %v2273
      %v2275 = vshrl.u32 %v1962, 16
      %v2277 = vrot.slane %v2275, 4
      %v2278 = vor.u32 %v2277, %v2273
      %v2279 = vrot.slane %v2278, 4
      %v2281 = vshll.u32 %v1963, 16
      %v2283 = vrot.slane %v2281, 5
      %v2284 = vsel %vm1137, %v2279, %v2283
      %v2286 = vshrl.u32 %v1964, 16
      %v2288 = vrot.slane %v2286, 4
      %v2289 = vshll.u32 %v1964, 16
      %v2291 = vrot.slane %v2289, 5
      %v2292 = vor.u32 %v2288, %v2291
      %v2293 = vrot.slane %v2292, 4
      %v2295 = vshll.u32 %v1965, 16
      %v2297 = vrot.slane %v2295, 5
      %v2298 = vsel %vm1137, %v2293, %v2297
      %v2299 = vshrl.u32 %v1965, 16
      %v2301 = vrot.slane %v2299, 4
      %v2302 = vor.u32 %v2301, %v2297
      %v2303 = vrot.slane %v2302, 4
      %v2305 = vshll.u32 %v1966, 16
      %v2307 = vrot.slane %v2305, 5
      %v2308 = vsel %vm1137, %v2303, %v2307
      %v2310 = vshrl.u32 %v1967, 16
      %v2312 = vrot.slane %v2310, 4
      %v2313 = vshll.u32 %v1967, 16
      %v2315 = vrot.slane %v2313, 5
      %v2316 = vor.u32 %v2312, %v2315
      %v2317 = vrot.slane %v2316, 4
      %v2319 = vshll.u32 %v1968, 16
      %v2321 = vrot.slane %v2319, 5
      %v2322 = vsel %vm1137, %v2317, %v2321
      %v2323 = vshrl.u32 %v1968, 16
      %v2325 = vrot.slane %v2323, 4
      %v2326 = vor.u32 %v2325, %v2321
      %v2327 = vrot.slane %v2326, 4
      %v2329 = vshll.u32 %v1969, 16
      %v2331 = vrot.slane %v2329, 5
      %v2332 = vsel %vm1137, %v2327, %v2331
      %v2334 = vshrl.u32 %v1970, 16
      %v2336 = vrot.slane %v2334, 4
      %v2337 = vshll.u32 %v1970, 16
      %v2339 = vrot.slane %v2337, 5
      %v2340 = vor.u32 %v2336, %v2339
      %v2341 = vrot.slane %v2340, 4
      %v2343 = vshll.u32 %v1971, 16
      %v2345 = vrot.slane %v2343, 5
      %v2346 = vsel %vm1137, %v2341, %v2345
      %v2347 = vshrl.u32 %v1971, 16
      %v2349 = vrot.slane %v2347, 4
      %v2350 = vor.u32 %v2349, %v2345
      %v2351 = vrot.slane %v2350, 4
      %v2353 = vshll.u32 %v1972, 16
      %v2355 = vrot.slane %v2353, 5
      %v2356 = vsel %vm1137, %v2351, %v2355
      %2389 = vst [vmem:[#allocation3 + $0x10] sm:$0xf] %v1986
      %2390 = vst [vmem:[#allocation3 + $0x34] sm:$0xf] %v1996
      %2391 = vst [vmem:[#allocation3 + $0x58] sm:$0xf] %v2010
      %2392 = vst [vmem:[#allocation3 + $0x7c] sm:$0xf] %v2020
      %2393 = vst [vmem:[#allocation3 + $0xa0] sm:$0xf] %v2034
      %2394 = vst [vmem:[#allocation3 + $0xc4] sm:$0xf] %v2044
      %2395 = vst [vmem:[#allocation3 + $0xe8] sm:$0xf] %v2058
      %2396 = vst [vmem:[#allocation3 + $0x10c] sm:$0xf] %v2068
      %2397 = vst [vmem:[#allocation3 + $0x130] sm:$0xf] %v2082
      %2398 = vst [vmem:[#allocation3 + $0x154] sm:$0xf] %v2092
      %2399 = vst [vmem:[#allocation3 + $0x178] sm:$0xf] %v2106
      %2400 = vst [vmem:[#allocation3 + $0x19c] sm:$0xf] %v2116
      %2401 = vst [vmem:[#allocation3 + $0x1c0] sm:$0xf] %v2130
      %2402 = vst [vmem:[#allocation3 + $0x1e4] sm:$0xf] %v2140
      %2403 = vst [vmem:[#allocation3 + $0x208] sm:$0xf] %v2154
      %2404 = vst [vmem:[#allocation3 + $0x22c] sm:$0xf] %v2164
      %2405 = vst [vmem:[#allocation3 + $0x250] sm:$0xf] %v2178
      %2406 = vst [vmem:[#allocation3 + $0x274] sm:$0xf] %v2188
      %2407 = vst [vmem:[#allocation3 + $0x298] sm:$0xf] %v2202
      %2408 = vst [vmem:[#allocation3 + $0x2bc] sm:$0xf] %v2212
      %2409 = vst [vmem:[#allocation3 + $0x2e0] sm:$0xf] %v2226
      %2410 = vst [vmem:[#allocation3 + $0x304] sm:$0xf] %v2236
      %2411 = vst [vmem:[#allocation3 + $0x328] sm:$0xf] %v2250
      %2412 = vst [vmem:[#allocation3 + $0x34c] sm:$0xf] %v2260
      %2413 = vst [vmem:[#allocation3 + $0x370] sm:$0xf] %v2274
      %2414 = vst [vmem:[#allocation3 + $0x394] sm:$0xf] %v2284
      %2415 = vst [vmem:[#allocation3 + $0x3b8] sm:$0xf] %v2298
      %2416 = vst [vmem:[#allocation3 + $0x3dc] sm:$0xf] %v2308
      %2417 = vst [vmem:[#allocation3 + $0x400] sm:$0xf] %v2322
      %2418 = vst [vmem:[#allocation3 + $0x424] sm:$0xf] %v2332
      %2419 = vst [vmem:[#allocation3 + $0x448] sm:$0xf] %v2346
      %2420 = vst [vmem:[#allocation3 + $0x46c] sm:$0xf] %v2356
      %v2421 = vld [vmem:[%s905] sm:$0xe]
      %v2422 = vld [vmem:[%s905 + $0x4] sm:$0xf]
      %v2423 = vld [vmem:[%s905 + $0x8] sm:$0x1]
      %v2424 = vld [vmem:[%s905 + $0xc] sm:$0xe]
      %v2425 = vld [vmem:[%s905 + $0x10] sm:$0xf]
      %v2426 = vld [vmem:[%s905 + $0x14] sm:$0x1]
      %v2427 = vld [vmem:[%s905 + $0x18] sm:$0xe]
      %v2428 = vld [vmem:[%s905 + $0x1c] sm:$0xf]
      %v2429 = vld [vmem:[%s905 + $0x20] sm:$0x1]
      %v2430 = vld [vmem:[%s905 + $0x24] sm:$0xe]
      %v2431 = vld [vmem:[%s905 + $0x28] sm:$0xf]
      %v2432 = vld [vmem:[%s905 + $0x2c] sm:$0x1]
      %v2433 = vld [vmem:[%s905 + $0x30] sm:$0xe]
      %v2434 = vld [vmem:[%s905 + $0x34] sm:$0xf]
      %v2435 = vld [vmem:[%s905 + $0x38] sm:$0x1]
      %v2436 = vld [vmem:[%s905 + $0x3c] sm:$0xe]
      %v2437 = vld [vmem:[%s905 + $0x40] sm:$0xf]
      %v2438 = vld [vmem:[%s905 + $0x44] sm:$0x1]
      %v2439 = vld [vmem:[%s905 + $0x48] sm:$0xe]
      %v2440 = vld [vmem:[%s905 + $0x4c] sm:$0xf]
      %v2441 = vld [vmem:[%s905 + $0x50] sm:$0x1]
      %v2442 = vld [vmem:[%s905 + $0x54] sm:$0xe]
      %v2443 = vld [vmem:[%s905 + $0x58] sm:$0xf]
      %v2444 = vld [vmem:[%s905 + $0x5c] sm:$0x1]
      %v2445 = vld [vmem:[%s905 + $0x60] sm:$0xe]
      %v2446 = vld [vmem:[%s905 + $0x64] sm:$0xf]
      %v2447 = vld [vmem:[%s905 + $0x68] sm:$0x1]
      %v2448 = vld [vmem:[%s905 + $0x6c] sm:$0xe]
      %v2449 = vld [vmem:[%s905 + $0x70] sm:$0xf]
      %v2450 = vld [vmem:[%s905 + $0x74] sm:$0x1]
      %v2451 = vld [vmem:[%s905 + $0x78] sm:$0xe]
      %v2452 = vld [vmem:[%s905 + $0x7c] sm:$0xf]
      %v2453 = vld [vmem:[%s905 + $0x80] sm:$0x1]
      %v2454 = vld [vmem:[%s905 + $0x84] sm:$0xe]
      %v2455 = vld [vmem:[%s905 + $0x88] sm:$0xf]
      %v2456 = vld [vmem:[%s905 + $0x8c] sm:$0x1]
      %v2457 = vld [vmem:[%s905 + $0x90] sm:$0xe]
      %v2458 = vld [vmem:[%s905 + $0x94] sm:$0xf]
      %v2459 = vld [vmem:[%s905 + $0x98] sm:$0x1]
      %v2460 = vld [vmem:[%s905 + $0x9c] sm:$0xe]
      %v2461 = vld [vmem:[%s905 + $0xa0] sm:$0xf]
      %v2462 = vld [vmem:[%s905 + $0xa4] sm:$0x1]
      %v2463 = vld [vmem:[%s905 + $0xa8] sm:$0xe]
      %v2464 = vld [vmem:[%s905 + $0xac] sm:$0xf]
      %v2465 = vld [vmem:[%s905 + $0xb0] sm:$0x1]
      %v2466 = vld [vmem:[%s905 + $0xb4] sm:$0xe]
      %v2467 = vld [vmem:[%s905 + $0xb8] sm:$0xf]
      %v2468 = vld [vmem:[%s905 + $0xbc] sm:$0x1]
      %v2517 = vrot.slane %v2421, 5
      %v2518 = vrot.slane %v2517, 4
      %v2519 = vrot.slane %v2422, 5
      %v2520 = vsel %vm1684, %v2518, %v2519
      %v2521 = vrot.slane %v2519, 4
      %v2522 = vrot.slane %v2423, 5
      %v2523 = vsel %vm1684, %v2521, %v2522
      %v2524 = vrot.slane %v2424, 5
      %v2525 = vrot.slane %v2524, 4
      %v2526 = vrot.slane %v2425, 5
      %v2527 = vsel %vm1684, %v2525, %v2526
      %v2528 = vrot.slane %v2526, 4
      %v2529 = vrot.slane %v2426, 5
      %v2530 = vsel %vm1684, %v2528, %v2529
      %v2531 = vrot.slane %v2427, 5
      %v2532 = vrot.slane %v2531, 4
      %v2533 = vrot.slane %v2428, 5
      %v2534 = vsel %vm1684, %v2532, %v2533
      %v2535 = vrot.slane %v2533, 4
      %v2536 = vrot.slane %v2429, 5
      %v2537 = vsel %vm1684, %v2535, %v2536
      %v2538 = vrot.slane %v2430, 5
      %v2539 = vrot.slane %v2538, 4
      %v2540 = vrot.slane %v2431, 5
      %v2541 = vsel %vm1684, %v2539, %v2540
      %v2542 = vrot.slane %v2540, 4
      %v2543 = vrot.slane %v2432, 5
      %v2544 = vsel %vm1684, %v2542, %v2543
      %v2545 = vrot.slane %v2433, 5
      %v2546 = vrot.slane %v2545, 4
      %v2547 = vrot.slane %v2434, 5
      %v2548 = vsel %vm1684, %v2546, %v2547
      %v2549 = vrot.slane %v2547, 4
      %v2550 = vrot.slane %v2435, 5
      %v2551 = vsel %vm1684, %v2549, %v2550
      %v2552 = vrot.slane %v2436, 5
      %v2553 = vrot.slane %v2552, 4
      %v2554 = vrot.slane %v2437, 5
      %v2555 = vsel %vm1684, %v2553, %v2554
      %v2556 = vrot.slane %v2554, 4
      %v2557 = vrot.slane %v2438, 5
      %v2558 = vsel %vm1684, %v2556, %v2557
      %v2559 = vrot.slane %v2439, 5
      %v2560 = vrot.slane %v2559, 4
      %v2561 = vrot.slane %v2440, 5
      %v2562 = vsel %vm1684, %v2560, %v2561
      %v2563 = vrot.slane %v2561, 4
      %v2564 = vrot.slane %v2441, 5
      %v2565 = vsel %vm1684, %v2563, %v2564
      %v2566 = vrot.slane %v2442, 5
      %v2567 = vrot.slane %v2566, 4
      %v2568 = vrot.slane %v2443, 5
      %v2569 = vsel %vm1684, %v2567, %v2568
      %v2570 = vrot.slane %v2568, 4
      %v2571 = vrot.slane %v2444, 5
      %v2572 = vsel %vm1684, %v2570, %v2571
      %v2573 = vrot.slane %v2445, 5
      %v2574 = vrot.slane %v2573, 4
      %v2575 = vrot.slane %v2446, 5
      %v2576 = vsel %vm1684, %v2574, %v2575
      %v2577 = vrot.slane %v2575, 4
      %v2578 = vrot.slane %v2447, 5
      %v2579 = vsel %vm1684, %v2577, %v2578
      %v2580 = vrot.slane %v2448, 5
      %v2581 = vrot.slane %v2580, 4
      %v2582 = vrot.slane %v2449, 5
      %v2583 = vsel %vm1684, %v2581, %v2582
      %v2584 = vrot.slane %v2582, 4
      %v2585 = vrot.slane %v2450, 5
      %v2586 = vsel %vm1684, %v2584, %v2585
      %v2587 = vrot.slane %v2451, 5
      %v2588 = vrot.slane %v2587, 4
      %v2589 = vrot.slane %v2452, 5
      %v2590 = vsel %vm1684, %v2588, %v2589
      %v2591 = vrot.slane %v2589, 4
      %v2592 = vrot.slane %v2453, 5
      %v2593 = vsel %vm1684, %v2591, %v2592
      %v2594 = vrot.slane %v2454, 5
      %v2595 = vrot.slane %v2594, 4
      %v2596 = vrot.slane %v2455, 5
      %v2597 = vsel %vm1684, %v2595, %v2596
      %v2598 = vrot.slane %v2596, 4
      %v2599 = vrot.slane %v2456, 5
      %v2600 = vsel %vm1684, %v2598, %v2599
      %v2601 = vrot.slane %v2457, 5
      %v2602 = vrot.slane %v2601, 4
      %v2603 = vrot.slane %v2458, 5
      %v2604 = vsel %vm1684, %v2602, %v2603
      %v2605 = vrot.slane %v2603, 4
      %v2606 = vrot.slane %v2459, 5
      %v2607 = vsel %vm1684, %v2605, %v2606
      %v2608 = vrot.slane %v2460, 5
      %v2609 = vrot.slane %v2608, 4
      %v2610 = vrot.slane %v2461, 5
      %v2611 = vsel %vm1684, %v2609, %v2610
      %v2612 = vrot.slane %v2610, 4
      %v2613 = vrot.slane %v2462, 5
      %v2614 = vsel %vm1684, %v2612, %v2613
      %v2615 = vrot.slane %v2463, 5
      %v2616 = vrot.slane %v2615, 4
      %v2617 = vrot.slane %v2464, 5
      %v2618 = vsel %vm1684, %v2616, %v2617
      %v2619 = vrot.slane %v2617, 4
      %v2620 = vrot.slane %v2465, 5
      %v2621 = vsel %vm1684, %v2619, %v2620
      %v2622 = vrot.slane %v2466, 5
      %v2623 = vrot.slane %v2622, 4
      %v2624 = vrot.slane %v2467, 5
      %v2625 = vsel %vm1684, %v2623, %v2624
      %v2626 = vrot.slane %v2624, 4
      %v2627 = vrot.slane %v2468, 5
      %v2628 = vsel %vm1684, %v2626, %v2627
      %2661 = vst [vmem:[#allocation3 + $0x14] sm:$0xf] %v2520
      %2662 = vst [vmem:[#allocation3 + $0x38] sm:$0xf] %v2523
      %2663 = vst [vmem:[#allocation3 + $0x5c] sm:$0xf] %v2527
      %2664 = vst [vmem:[#allocation3 + $0x80] sm:$0xf] %v2530
      %2665 = vst [vmem:[#allocation3 + $0xa4] sm:$0xf] %v2534
      %2666 = vst [vmem:[#allocation3 + $0xc8] sm:$0xf] %v2537
      %2667 = vst [vmem:[#allocation3 + $0xec] sm:$0xf] %v2541
      %2668 = vst [vmem:[#allocation3 + $0x110] sm:$0xf] %v2544
      %2669 = vst [vmem:[#allocation3 + $0x134] sm:$0xf] %v2548
      %2670 = vst [vmem:[#allocation3 + $0x158] sm:$0xf] %v2551
      %2671 = vst [vmem:[#allocation3 + $0x17c] sm:$0xf] %v2555
      %2672 = vst [vmem:[#allocation3 + $0x1a0] sm:$0xf] %v2558
      %2673 = vst [vmem:[#allocation3 + $0x1c4] sm:$0xf] %v2562
      %2674 = vst [vmem:[#allocation3 + $0x1e8] sm:$0xf] %v2565
      %2675 = vst [vmem:[#allocation3 + $0x20c] sm:$0xf] %v2569
      %2676 = vst [vmem:[#allocation3 + $0x230] sm:$0xf] %v2572
      %2677 = vst [vmem:[#allocation3 + $0x254] sm:$0xf] %v2576
      %2678 = vst [vmem:[#allocation3 + $0x278] sm:$0xf] %v2579
      %2679 = vst [vmem:[#allocation3 + $0x29c] sm:$0xf] %v2583
      %2680 = vst [vmem:[#allocation3 + $0x2c0] sm:$0xf] %v2586
      %2681 = vst [vmem:[#allocation3 + $0x2e4] sm:$0xf] %v2590
      %2682 = vst [vmem:[#allocation3 + $0x308] sm:$0xf] %v2593
      %2683 = vst [vmem:[#allocation3 + $0x32c] sm:$0xf] %v2597
      %2684 = vst [vmem:[#allocation3 + $0x350] sm:$0xf] %v2600
      %2685 = vst [vmem:[#allocation3 + $0x374] sm:$0xf] %v2604
      %2686 = vst [vmem:[#allocation3 + $0x398] sm:$0xf] %v2607
      %2687 = vst [vmem:[#allocation3 + $0x3bc] sm:$0xf] %v2611
      %2688 = vst [vmem:[#allocation3 + $0x3e0] sm:$0xf] %v2614
      %2689 = vst [vmem:[#allocation3 + $0x404] sm:$0xf] %v2618
      %2690 = vst [vmem:[#allocation3 + $0x428] sm:$0xf] %v2621
      %2691 = vst [vmem:[#allocation3 + $0x44c] sm:$0xf] %v2625
      %2692 = vst [vmem:[#allocation3 + $0x470] sm:$0xf] %v2628
      %s2693 = scalar_lea.vmem [#allocation2], 24
      %v2694 = vld [vmem:[%s2693] sm:$0xf]
      %v2695 = vld [vmem:[%s2693 + $0x4] sm:$0xf]
      %v2696 = vld [vmem:[%s2693 + $0xc] sm:$0xf]
      %v2697 = vld [vmem:[%s2693 + $0x10] sm:$0xf]
      %v2698 = vld [vmem:[%s2693 + $0x18] sm:$0xf]
      %v2699 = vld [vmem:[%s2693 + $0x1c] sm:$0xf]
      %v2700 = vld [vmem:[%s2693 + $0x24] sm:$0xf]
      %v2701 = vld [vmem:[%s2693 + $0x28] sm:$0xf]
      %v2702 = vld [vmem:[%s2693 + $0x30] sm:$0xf]
      %v2703 = vld [vmem:[%s2693 + $0x34] sm:$0xf]
      %v2704 = vld [vmem:[%s2693 + $0x3c] sm:$0xf]
      %v2705 = vld [vmem:[%s2693 + $0x40] sm:$0xf]
      %v2706 = vld [vmem:[%s2693 + $0x48] sm:$0xf]
      %v2707 = vld [vmem:[%s2693 + $0x4c] sm:$0xf]
      %v2708 = vld [vmem:[%s2693 + $0x54] sm:$0xf]
      %v2709 = vld [vmem:[%s2693 + $0x58] sm:$0xf]
      %v2710 = vld [vmem:[%s2693 + $0x60] sm:$0xf]
      %v2711 = vld [vmem:[%s2693 + $0x64] sm:$0xf]
      %v2712 = vld [vmem:[%s2693 + $0x6c] sm:$0xf]
      %v2713 = vld [vmem:[%s2693 + $0x70] sm:$0xf]
      %v2714 = vld [vmem:[%s2693 + $0x78] sm:$0xf]
      %v2715 = vld [vmem:[%s2693 + $0x7c] sm:$0xf]
      %v2716 = vld [vmem:[%s2693 + $0x84] sm:$0xf]
      %v2717 = vld [vmem:[%s2693 + $0x88] sm:$0xf]
      %v2718 = vld [vmem:[%s2693 + $0x90] sm:$0xf]
      %v2719 = vld [vmem:[%s2693 + $0x94] sm:$0xf]
      %v2720 = vld [vmem:[%s2693 + $0x9c] sm:$0xf]
      %v2721 = vld [vmem:[%s2693 + $0xa0] sm:$0xf]
      %v2722 = vld [vmem:[%s2693 + $0xa8] sm:$0xf]
      %v2723 = vld [vmem:[%s2693 + $0xac] sm:$0xf]
      %v2724 = vld [vmem:[%s2693 + $0xb4] sm:$0xf]
      %v2725 = vld [vmem:[%s2693 + $0xb8] sm:$0xf]
      %2726 = vst [vmem:[#allocation3 + $0x18] sm:$0xf] %v2694
      %2727 = vst [vmem:[#allocation3 + $0x3c] sm:$0xf] %v2695
      %2728 = vst [vmem:[#allocation3 + $0x60] sm:$0xf] %v2696
      %2729 = vst [vmem:[#allocation3 + $0x84] sm:$0xf] %v2697
      %2730 = vst [vmem:[#allocation3 + $0xa8] sm:$0xf] %v2698
      %2731 = vst [vmem:[#allocation3 + $0xcc] sm:$0xf] %v2699
      %2732 = vst [vmem:[#allocation3 + $0xf0] sm:$0xf] %v2700
      %2733 = vst [vmem:[#allocation3 + $0x114] sm:$0xf] %v2701
      %2734 = vst [vmem:[#allocation3 + $0x138] sm:$0xf] %v2702
      %2735 = vst [vmem:[#allocation3 + $0x15c] sm:$0xf] %v2703
      %2736 = vst [vmem:[#allocation3 + $0x180] sm:$0xf] %v2704
      %2737 = vst [vmem:[#allocation3 + $0x1a4] sm:$0xf] %v2705
      %2738 = vst [vmem:[#allocation3 + $0x1c8] sm:$0xf] %v2706
      %2739 = vst [vmem:[#allocation3 + $0x1ec] sm:$0xf] %v2707
      %2740 = vst [vmem:[#allocation3 + $0x210] sm:$0xf] %v2708
      %2741 = vst [vmem:[#allocation3 + $0x234] sm:$0xf] %v2709
      %2742 = vst [vmem:[#allocation3 + $0x258] sm:$0xf] %v2710
      %2743 = vst [vmem:[#allocation3 + $0x27c] sm:$0xf] %v2711
      %2744 = vst [vmem:[#allocation3 + $0x2a0] sm:$0xf] %v2712
      %2745 = vst [vmem:[#allocation3 + $0x2c4] sm:$0xf] %v2713
      %2746 = vst [vmem:[#allocation3 + $0x2e8] sm:$0xf] %v2714
      %2747 = vst [vmem:[#allocation3 + $0x30c] sm:$0xf] %v2715
      %2748 = vst [vmem:[#allocation3 + $0x330] sm:$0xf] %v2716
      %2749 = vst [vmem:[#allocation3 + $0x354] sm:$0xf] %v2717
      %2750 = vst [vmem:[#allocation3 + $0x378] sm:$0xf] %v2718
      %2751 = vst [vmem:[#allocation3 + $0x39c] sm:$0xf] %v2719
      %2752 = vst [vmem:[#allocation3 + $0x3c0] sm:$0xf] %v2720
      %2753 = vst [vmem:[#allocation3 + $0x3e4] sm:$0xf] %v2721
      %2754 = vst [vmem:[#allocation3 + $0x408] sm:$0xf] %v2722
      %2755 = vst [vmem:[#allocation3 + $0x42c] sm:$0xf] %v2723
      %2756 = vst [vmem:[#allocation3 + $0x450] sm:$0xf] %v2724
      %2757 = vst [vmem:[#allocation3 + $0x474] sm:$0xf] %v2725
      %v2758 = vld [vmem:[%s2693] sm:$0xf]
      %v2759 = vld [vmem:[%s2693 + $0x4] sm:$0xf]
      %v2760 = vld [vmem:[%s2693 + $0x8] sm:$0x1]
      %v2761 = vld [vmem:[%s2693 + $0xc] sm:$0xf]
      %v2762 = vld [vmem:[%s2693 + $0x10] sm:$0xf]
      %v2763 = vld [vmem:[%s2693 + $0x14] sm:$0x1]
      %v2764 = vld [vmem:[%s2693 + $0x18] sm:$0xf]
      %v2765 = vld [vmem:[%s2693 + $0x1c] sm:$0xf]
      %v2766 = vld [vmem:[%s2693 + $0x20] sm:$0x1]
      %v2767 = vld [vmem:[%s2693 + $0x24] sm:$0xf]
      %v2768 = vld [vmem:[%s2693 + $0x28] sm:$0xf]
      %v2769 = vld [vmem:[%s2693 + $0x2c] sm:$0x1]
      %v2770 = vld [vmem:[%s2693 + $0x30] sm:$0xf]
      %v2771 = vld [vmem:[%s2693 + $0x34] sm:$0xf]
      %v2772 = vld [vmem:[%s2693 + $0x38] sm:$0x1]
      %v2773 = vld [vmem:[%s2693 + $0x3c] sm:$0xf]
      %v2774 = vld [vmem:[%s2693 + $0x40] sm:$0xf]
      %v2775 = vld [vmem:[%s2693 + $0x44] sm:$0x1]
      %v2776 = vld [vmem:[%s2693 + $0x48] sm:$0xf]
      %v2777 = vld [vmem:[%s2693 + $0x4c] sm:$0xf]
      %v2778 = vld [vmem:[%s2693 + $0x50] sm:$0x1]
      %v2779 = vld [vmem:[%s2693 + $0x54] sm:$0xf]
      %v2780 = vld [vmem:[%s2693 + $0x58] sm:$0xf]
      %v2781 = vld [vmem:[%s2693 + $0x5c] sm:$0x1]
      %v2782 = vld [vmem:[%s2693 + $0x60] sm:$0xf]
      %v2783 = vld [vmem:[%s2693 + $0x64] sm:$0xf]
      %v2784 = vld [vmem:[%s2693 + $0x68] sm:$0x1]
      %v2785 = vld [vmem:[%s2693 + $0x6c] sm:$0xf]
      %v2786 = vld [vmem:[%s2693 + $0x70] sm:$0xf]
      %v2787 = vld [vmem:[%s2693 + $0x74] sm:$0x1]
      %v2788 = vld [vmem:[%s2693 + $0x78] sm:$0xf]
      %v2789 = vld [vmem:[%s2693 + $0x7c] sm:$0xf]
      %v2790 = vld [vmem:[%s2693 + $0x80] sm:$0x1]
      %v2791 = vld [vmem:[%s2693 + $0x84] sm:$0xf]
      %v2792 = vld [vmem:[%s2693 + $0x88] sm:$0xf]
      %v2793 = vld [vmem:[%s2693 + $0x8c] sm:$0x1]
      %v2794 = vld [vmem:[%s2693 + $0x90] sm:$0xf]
      %v2795 = vld [vmem:[%s2693 + $0x94] sm:$0xf]
      %v2796 = vld [vmem:[%s2693 + $0x98] sm:$0x1]
      %v2797 = vld [vmem:[%s2693 + $0x9c] sm:$0xf]
      %v2798 = vld [vmem:[%s2693 + $0xa0] sm:$0xf]
      %v2799 = vld [vmem:[%s2693 + $0xa4] sm:$0x1]
      %v2800 = vld [vmem:[%s2693 + $0xa8] sm:$0xf]
      %v2801 = vld [vmem:[%s2693 + $0xac] sm:$0xf]
      %v2802 = vld [vmem:[%s2693 + $0xb0] sm:$0x1]
      %v2803 = vld [vmem:[%s2693 + $0xb4] sm:$0xf]
      %v2804 = vld [vmem:[%s2693 + $0xb8] sm:$0xf]
      %v2805 = vld [vmem:[%s2693 + $0xbc] sm:$0x1]
      %v2807 = vshrl.u32 %v2758, 16
      %v2809 = vrot.slane %v2807, 4
      %v2810 = vshll.u32 %v2758, 16
      %v2812 = vrot.slane %v2810, 5
      %v2813 = vor.u32 %v2809, %v2812
      %v2814 = vrot.slane %v2813, 4
      %v2816 = vshll.u32 %v2759, 16
      %v2818 = vrot.slane %v2816, 5
      %v2819 = vsel %vm1137, %v2814, %v2818
      %v2820 = vshrl.u32 %v2759, 16
      %v2822 = vrot.slane %v2820, 4
      %v2823 = vor.u32 %v2822, %v2818
      %v2824 = vrot.slane %v2823, 4
      %v2826 = vshll.u32 %v2760, 16
      %v2828 = vrot.slane %v2826, 5
      %v2829 = vsel %vm1137, %v2824, %v2828
      %v2831 = vshrl.u32 %v2761, 16
      %v2833 = vrot.slane %v2831, 4
      %v2834 = vshll.u32 %v2761, 16
      %v2836 = vrot.slane %v2834, 5
      %v2837 = vor.u32 %v2833, %v2836
      %v2838 = vrot.slane %v2837, 4
      %v2840 = vshll.u32 %v2762, 16
      %v2842 = vrot.slane %v2840, 5
      %v2843 = vsel %vm1137, %v2838, %v2842
      %v2844 = vshrl.u32 %v2762, 16
      %v2846 = vrot.slane %v2844, 4
      %v2847 = vor.u32 %v2846, %v2842
      %v2848 = vrot.slane %v2847, 4
      %v2850 = vshll.u32 %v2763, 16
      %v2852 = vrot.slane %v2850, 5
      %v2853 = vsel %vm1137, %v2848, %v2852
      %v2855 = vshrl.u32 %v2764, 16
      %v2857 = vrot.slane %v2855, 4
      %v2858 = vshll.u32 %v2764, 16
      %v2860 = vrot.slane %v2858, 5
      %v2861 = vor.u32 %v2857, %v2860
      %v2862 = vrot.slane %v2861, 4
      %v2864 = vshll.u32 %v2765, 16
      %v2866 = vrot.slane %v2864, 5
      %v2867 = vsel %vm1137, %v2862, %v2866
      %v2868 = vshrl.u32 %v2765, 16
      %v2870 = vrot.slane %v2868, 4
      %v2871 = vor.u32 %v2870, %v2866
      %v2872 = vrot.slane %v2871, 4
      %v2874 = vshll.u32 %v2766, 16
      %v2876 = vrot.slane %v2874, 5
      %v2877 = vsel %vm1137, %v2872, %v2876
      %v2879 = vshrl.u32 %v2767, 16
      %v2881 = vrot.slane %v2879, 4
      %v2882 = vshll.u32 %v2767, 16
      %v2884 = vrot.slane %v2882, 5
      %v2885 = vor.u32 %v2881, %v2884
      %v2886 = vrot.slane %v2885, 4
      %v2888 = vshll.u32 %v2768, 16
      %v2890 = vrot.slane %v2888, 5
      %v2891 = vsel %vm1137, %v2886, %v2890
      %v2892 = vshrl.u32 %v2768, 16
      %v2894 = vrot.slane %v2892, 4
      %v2895 = vor.u32 %v2894, %v2890
      %v2896 = vrot.slane %v2895, 4
      %v2898 = vshll.u32 %v2769, 16
      %v2900 = vrot.slane %v2898, 5
      %v2901 = vsel %vm1137, %v2896, %v2900
      %v2903 = vshrl.u32 %v2770, 16
      %v2905 = vrot.slane %v2903, 4
      %v2906 = vshll.u32 %v2770, 16
      %v2908 = vrot.slane %v2906, 5
      %v2909 = vor.u32 %v2905, %v2908
      %v2910 = vrot.slane %v2909, 4
      %v2912 = vshll.u32 %v2771, 16
      %v2914 = vrot.slane %v2912, 5
      %v2915 = vsel %vm1137, %v2910, %v2914
      %v2916 = vshrl.u32 %v2771, 16
      %v2918 = vrot.slane %v2916, 4
      %v2919 = vor.u32 %v2918, %v2914
      %v2920 = vrot.slane %v2919, 4
      %v2922 = vshll.u32 %v2772, 16
      %v2924 = vrot.slane %v2922, 5
      %v2925 = vsel %vm1137, %v2920, %v2924
      %v2927 = vshrl.u32 %v2773, 16
      %v2929 = vrot.slane %v2927, 4
      %v2930 = vshll.u32 %v2773, 16
      %v2932 = vrot.slane %v2930, 5
      %v2933 = vor.u32 %v2929, %v2932
      %v2934 = vrot.slane %v2933, 4
      %v2936 = vshll.u32 %v2774, 16
      %v2938 = vrot.slane %v2936, 5
      %v2939 = vsel %vm1137, %v2934, %v2938
      %v2940 = vshrl.u32 %v2774, 16
      %v2942 = vrot.slane %v2940, 4
      %v2943 = vor.u32 %v2942, %v2938
      %v2944 = vrot.slane %v2943, 4
      %v2946 = vshll.u32 %v2775, 16
      %v2948 = vrot.slane %v2946, 5
      %v2949 = vsel %vm1137, %v2944, %v2948
      %v2951 = vshrl.u32 %v2776, 16
      %v2953 = vrot.slane %v2951, 4
      %v2954 = vshll.u32 %v2776, 16
      %v2956 = vrot.slane %v2954, 5
      %v2957 = vor.u32 %v2953, %v2956
      %v2958 = vrot.slane %v2957, 4
      %v2960 = vshll.u32 %v2777, 16
      %v2962 = vrot.slane %v2960, 5
      %v2963 = vsel %vm1137, %v2958, %v2962
      %v2964 = vshrl.u32 %v2777, 16
      %v2966 = vrot.slane %v2964, 4
      %v2967 = vor.u32 %v2966, %v2962
      %v2968 = vrot.slane %v2967, 4
      %v2970 = vshll.u32 %v2778, 16
      %v2972 = vrot.slane %v2970, 5
      %v2973 = vsel %vm1137, %v2968, %v2972
      %v2975 = vshrl.u32 %v2779, 16
      %v2977 = vrot.slane %v2975, 4
      %v2978 = vshll.u32 %v2779, 16
      %v2980 = vrot.slane %v2978, 5
      %v2981 = vor.u32 %v2977, %v2980
      %v2982 = vrot.slane %v2981, 4
      %v2984 = vshll.u32 %v2780, 16
      %v2986 = vrot.slane %v2984, 5
      %v2987 = vsel %vm1137, %v2982, %v2986
      %v2988 = vshrl.u32 %v2780, 16
      %v2990 = vrot.slane %v2988, 4
      %v2991 = vor.u32 %v2990, %v2986
      %v2992 = vrot.slane %v2991, 4
      %v2994 = vshll.u32 %v2781, 16
      %v2996 = vrot.slane %v2994, 5
      %v2997 = vsel %vm1137, %v2992, %v2996
      %v2999 = vshrl.u32 %v2782, 16
      %v3001 = vrot.slane %v2999, 4
      %v3002 = vshll.u32 %v2782, 16
      %v3004 = vrot.slane %v3002, 5
      %v3005 = vor.u32 %v3001, %v3004
      %v3006 = vrot.slane %v3005, 4
      %v3008 = vshll.u32 %v2783, 16
      %v3010 = vrot.slane %v3008, 5
      %v3011 = vsel %vm1137, %v3006, %v3010
      %v3012 = vshrl.u32 %v2783, 16
      %v3014 = vrot.slane %v3012, 4
      %v3015 = vor.u32 %v3014, %v3010
      %v3016 = vrot.slane %v3015, 4
      %v3018 = vshll.u32 %v2784, 16
      %v3020 = vrot.slane %v3018, 5
      %v3021 = vsel %vm1137, %v3016, %v3020
      %v3023 = vshrl.u32 %v2785, 16
      %v3025 = vrot.slane %v3023, 4
      %v3026 = vshll.u32 %v2785, 16
      %v3028 = vrot.slane %v3026, 5
      %v3029 = vor.u32 %v3025, %v3028
      %v3030 = vrot.slane %v3029, 4
      %v3032 = vshll.u32 %v2786, 16
      %v3034 = vrot.slane %v3032, 5
      %v3035 = vsel %vm1137, %v3030, %v3034
      %v3036 = vshrl.u32 %v2786, 16
      %v3038 = vrot.slane %v3036, 4
      %v3039 = vor.u32 %v3038, %v3034
      %v3040 = vrot.slane %v3039, 4
      %v3042 = vshll.u32 %v2787, 16
      %v3044 = vrot.slane %v3042, 5
      %v3045 = vsel %vm1137, %v3040, %v3044
      %v3047 = vshrl.u32 %v2788, 16
      %v3049 = vrot.slane %v3047, 4
      %v3050 = vshll.u32 %v2788, 16
      %v3052 = vrot.slane %v3050, 5
      %v3053 = vor.u32 %v3049, %v3052
      %v3054 = vrot.slane %v3053, 4
      %v3056 = vshll.u32 %v2789, 16
      %v3058 = vrot.slane %v3056, 5
      %v3059 = vsel %vm1137, %v3054, %v3058
      %v3060 = vshrl.u32 %v2789, 16
      %v3062 = vrot.slane %v3060, 4
      %v3063 = vor.u32 %v3062, %v3058
      %v3064 = vrot.slane %v3063, 4
      %v3066 = vshll.u32 %v2790, 16
      %v3068 = vrot.slane %v3066, 5
      %v3069 = vsel %vm1137, %v3064, %v3068
      %v3071 = vshrl.u32 %v2791, 16
      %v3073 = vrot.slane %v3071, 4
      %v3074 = vshll.u32 %v2791, 16
      %v3076 = vrot.slane %v3074, 5
      %v3077 = vor.u32 %v3073, %v3076
      %v3078 = vrot.slane %v3077, 4
      %v3080 = vshll.u32 %v2792, 16
      %v3082 = vrot.slane %v3080, 5
      %v3083 = vsel %vm1137, %v3078, %v3082
      %v3084 = vshrl.u32 %v2792, 16
      %v3086 = vrot.slane %v3084, 4
      %v3087 = vor.u32 %v3086, %v3082
      %v3088 = vrot.slane %v3087, 4
      %v3090 = vshll.u32 %v2793, 16
      %v3092 = vrot.slane %v3090, 5
      %v3093 = vsel %vm1137, %v3088, %v3092
      %v3095 = vshrl.u32 %v2794, 16
      %v3097 = vrot.slane %v3095, 4
      %v3098 = vshll.u32 %v2794, 16
      %v3100 = vrot.slane %v3098, 5
      %v3101 = vor.u32 %v3097, %v3100
      %v3102 = vrot.slane %v3101, 4
      %v3104 = vshll.u32 %v2795, 16
      %v3106 = vrot.slane %v3104, 5
      %v3107 = vsel %vm1137, %v3102, %v3106
      %v3108 = vshrl.u32 %v2795, 16
      %v3110 = vrot.slane %v3108, 4
      %v3111 = vor.u32 %v3110, %v3106
      %v3112 = vrot.slane %v3111, 4
      %v3114 = vshll.u32 %v2796, 16
      %v3116 = vrot.slane %v3114, 5
      %v3117 = vsel %vm1137, %v3112, %v3116
      %v3119 = vshrl.u32 %v2797, 16
      %v3121 = vrot.slane %v3119, 4
      %v3122 = vshll.u32 %v2797, 16
      %v3124 = vrot.slane %v3122, 5
      %v3125 = vor.u32 %v3121, %v3124
      %v3126 = vrot.slane %v3125, 4
      %v3128 = vshll.u32 %v2798, 16
      %v3130 = vrot.slane %v3128, 5
      %v3131 = vsel %vm1137, %v3126, %v3130
      %v3132 = vshrl.u32 %v2798, 16
      %v3134 = vrot.slane %v3132, 4
      %v3135 = vor.u32 %v3134, %v3130
      %v3136 = vrot.slane %v3135, 4
      %v3138 = vshll.u32 %v2799, 16
      %v3140 = vrot.slane %v3138, 5
      %v3141 = vsel %vm1137, %v3136, %v3140
      %v3143 = vshrl.u32 %v2800, 16
      %v3145 = vrot.slane %v3143, 4
      %v3146 = vshll.u32 %v2800, 16
      %v3148 = vrot.slane %v3146, 5
      %v3149 = vor.u32 %v3145, %v3148
      %v3150 = vrot.slane %v3149, 4
      %v3152 = vshll.u32 %v2801, 16
      %v3154 = vrot.slane %v3152, 5
      %v3155 = vsel %vm1137, %v3150, %v3154
      %v3156 = vshrl.u32 %v2801, 16
      %v3158 = vrot.slane %v3156, 4
      %v3159 = vor.u32 %v3158, %v3154
      %v3160 = vrot.slane %v3159, 4
      %v3162 = vshll.u32 %v2802, 16
      %v3164 = vrot.slane %v3162, 5
      %v3165 = vsel %vm1137, %v3160, %v3164
      %v3167 = vshrl.u32 %v2803, 16
      %v3169 = vrot.slane %v3167, 4
      %v3170 = vshll.u32 %v2803, 16
      %v3172 = vrot.slane %v3170, 5
      %v3173 = vor.u32 %v3169, %v3172
      %v3174 = vrot.slane %v3173, 4
      %v3176 = vshll.u32 %v2804, 16
      %v3178 = vrot.slane %v3176, 5
      %v3179 = vsel %vm1137, %v3174, %v3178
      %v3180 = vshrl.u32 %v2804, 16
      %v3182 = vrot.slane %v3180, 4
      %v3183 = vor.u32 %v3182, %v3178
      %v3184 = vrot.slane %v3183, 4
      %v3186 = vshll.u32 %v2805, 16
      %v3188 = vrot.slane %v3186, 5
      %v3189 = vsel %vm1137, %v3184, %v3188
      %3222 = vst [vmem:[#allocation3 + $0x1c] sm:$0xf] %v2819
      %3223 = vst [vmem:[#allocation3 + $0x40] sm:$0xf] %v2829
      %3224 = vst [vmem:[#allocation3 + $0x64] sm:$0xf] %v2843
      %3225 = vst [vmem:[#allocation3 + $0x88] sm:$0xf] %v2853
      %3226 = vst [vmem:[#allocation3 + $0xac] sm:$0xf] %v2867
      %3227 = vst [vmem:[#allocation3 + $0xd0] sm:$0xf] %v2877
      %3228 = vst [vmem:[#allocation3 + $0xf4] sm:$0xf] %v2891
      %3229 = vst [vmem:[#allocation3 + $0x118] sm:$0xf] %v2901
      %3230 = vst [vmem:[#allocation3 + $0x13c] sm:$0xf] %v2915
      %3231 = vst [vmem:[#allocation3 + $0x160] sm:$0xf] %v2925
      %3232 = vst [vmem:[#allocation3 + $0x184] sm:$0xf] %v2939
      %3233 = vst [vmem:[#allocation3 + $0x1a8] sm:$0xf] %v2949
      %3234 = vst [vmem:[#allocation3 + $0x1cc] sm:$0xf] %v2963
      %3235 = vst [vmem:[#allocation3 + $0x1f0] sm:$0xf] %v2973
      %3236 = vst [vmem:[#allocation3 + $0x214] sm:$0xf] %v2987
      %3237 = vst [vmem:[#allocation3 + $0x238] sm:$0xf] %v2997
      %3238 = vst [vmem:[#allocation3 + $0x25c] sm:$0xf] %v3011
      %3239 = vst [vmem:[#allocation3 + $0x280] sm:$0xf] %v3021
      %3240 = vst [vmem:[#allocation3 + $0x2a4] sm:$0xf] %v3035
      %3241 = vst [vmem:[#allocation3 + $0x2c8] sm:$0xf] %v3045
      %3242 = vst [vmem:[#allocation3 + $0x2ec] sm:$0xf] %v3059
      %3243 = vst [vmem:[#allocation3 + $0x310] sm:$0xf] %v3069
      %3244 = vst [vmem:[#allocation3 + $0x334] sm:$0xf] %v3083
      %3245 = vst [vmem:[#allocation3 + $0x358] sm:$0xf] %v3093
      %3246 = vst [vmem:[#allocation3 + $0x37c] sm:$0xf] %v3107
      %3247 = vst [vmem:[#allocation3 + $0x3a0] sm:$0xf] %v3117
      %3248 = vst [vmem:[#allocation3 + $0x3c4] sm:$0xf] %v3131
      %3249 = vst [vmem:[#allocation3 + $0x3e8] sm:$0xf] %v3141
      %3250 = vst [vmem:[#allocation3 + $0x40c] sm:$0xf] %v3155
      %3251 = vst [vmem:[#allocation3 + $0x430] sm:$0xf] %v3165
      %3252 = vst [vmem:[#allocation3 + $0x454] sm:$0xf] %v3179
      %3253 = vst [vmem:[#allocation3 + $0x478] sm:$0xf] %v3189
      %v3254 = vld [vmem:[%s2693] sm:$0xe]
      %v3255 = vld [vmem:[%s2693 + $0x4] sm:$0xf]
      %v3256 = vld [vmem:[%s2693 + $0x8] sm:$0x1]
      %v3257 = vld [vmem:[%s2693 + $0xc] sm:$0xe]
      %v3258 = vld [vmem:[%s2693 + $0x10] sm:$0xf]
      %v3259 = vld [vmem:[%s2693 + $0x14] sm:$0x1]
      %v3260 = vld [vmem:[%s2693 + $0x18] sm:$0xe]
      %v3261 = vld [vmem:[%s2693 + $0x1c] sm:$0xf]
      %v3262 = vld [vmem:[%s2693 + $0x20] sm:$0x1]
      %v3263 = vld [vmem:[%s2693 + $0x24] sm:$0xe]
      %v3264 = vld [vmem:[%s2693 + $0x28] sm:$0xf]
      %v3265 = vld [vmem:[%s2693 + $0x2c] sm:$0x1]
      %v3266 = vld [vmem:[%s2693 + $0x30] sm:$0xe]
      %v3267 = vld [vmem:[%s2693 + $0x34] sm:$0xf]
      %v3268 = vld [vmem:[%s2693 + $0x38] sm:$0x1]
      %v3269 = vld [vmem:[%s2693 + $0x3c] sm:$0xe]
      %v3270 = vld [vmem:[%s2693 + $0x40] sm:$0xf]
      %v3271 = vld [vmem:[%s2693 + $0x44] sm:$0x1]
      %v3272 = vld [vmem:[%s2693 + $0x48] sm:$0xe]
      %v3273 = vld [vmem:[%s2693 + $0x4c] sm:$0xf]
      %v3274 = vld [vmem:[%s2693 + $0x50] sm:$0x1]
      %v3275 = vld [vmem:[%s2693 + $0x54] sm:$0xe]
      %v3276 = vld [vmem:[%s2693 + $0x58] sm:$0xf]
      %v3277 = vld [vmem:[%s2693 + $0x5c] sm:$0x1]
      %v3278 = vld [vmem:[%s2693 + $0x60] sm:$0xe]
      %v3279 = vld [vmem:[%s2693 + $0x64] sm:$0xf]
      %v3280 = vld [vmem:[%s2693 + $0x68] sm:$0x1]
      %v3281 = vld [vmem:[%s2693 + $0x6c] sm:$0xe]
      %v3282 = vld [vmem:[%s2693 + $0x70] sm:$0xf]
      %v3283 = vld [vmem:[%s2693 + $0x74] sm:$0x1]
      %v3284 = vld [vmem:[%s2693 + $0x78] sm:$0xe]
      %v3285 = vld [vmem:[%s2693 + $0x7c] sm:$0xf]
      %v3286 = vld [vmem:[%s2693 + $0x80] sm:$0x1]
      %v3287 = vld [vmem:[%s2693 + $0x84] sm:$0xe]
      %v3288 = vld [vmem:[%s2693 + $0x88] sm:$0xf]
      %v3289 = vld [vmem:[%s2693 + $0x8c] sm:$0x1]
      %v3290 = vld [vmem:[%s2693 + $0x90] sm:$0xe]
      %v3291 = vld [vmem:[%s2693 + $0x94] sm:$0xf]
      %v3292 = vld [vmem:[%s2693 + $0x98] sm:$0x1]
      %v3293 = vld [vmem:[%s2693 + $0x9c] sm:$0xe]
      %v3294 = vld [vmem:[%s2693 + $0xa0] sm:$0xf]
      %v3295 = vld [vmem:[%s2693 + $0xa4] sm:$0x1]
      %v3296 = vld [vmem:[%s2693 + $0xa8] sm:$0xe]
      %v3297 = vld [vmem:[%s2693 + $0xac] sm:$0xf]
      %v3298 = vld [vmem:[%s2693 + $0xb0] sm:$0x1]
      %v3299 = vld [vmem:[%s2693 + $0xb4] sm:$0xe]
      %v3300 = vld [vmem:[%s2693 + $0xb8] sm:$0xf]
      %v3301 = vld [vmem:[%s2693 + $0xbc] sm:$0x1]
      %v3350 = vrot.slane %v3254, 5
      %v3351 = vrot.slane %v3350, 4
      %v3352 = vrot.slane %v3255, 5
      %v3353 = vsel %vm1684, %v3351, %v3352
      %v3354 = vrot.slane %v3352, 4
      %v3355 = vrot.slane %v3256, 5
      %v3356 = vsel %vm1684, %v3354, %v3355
      %v3357 = vrot.slane %v3257, 5
      %v3358 = vrot.slane %v3357, 4
      %v3359 = vrot.slane %v3258, 5
      %v3360 = vsel %vm1684, %v3358, %v3359
      %v3361 = vrot.slane %v3359, 4
      %v3362 = vrot.slane %v3259, 5
      %v3363 = vsel %vm1684, %v3361, %v3362
      %v3364 = vrot.slane %v3260, 5
      %v3365 = vrot.slane %v3364, 4
      %v3366 = vrot.slane %v3261, 5
      %v3367 = vsel %vm1684, %v3365, %v3366
      %v3368 = vrot.slane %v3366, 4
      %v3369 = vrot.slane %v3262, 5
      %v3370 = vsel %vm1684, %v3368, %v3369
      %v3371 = vrot.slane %v3263, 5
      %v3372 = vrot.slane %v3371, 4
      %v3373 = vrot.slane %v3264, 5
      %v3374 = vsel %vm1684, %v3372, %v3373
      %v3375 = vrot.slane %v3373, 4
      %v3376 = vrot.slane %v3265, 5
      %v3377 = vsel %vm1684, %v3375, %v3376
      %v3378 = vrot.slane %v3266, 5
      %v3379 = vrot.slane %v3378, 4
      %v3380 = vrot.slane %v3267, 5
      %v3381 = vsel %vm1684, %v3379, %v3380
      %v3382 = vrot.slane %v3380, 4
      %v3383 = vrot.slane %v3268, 5
      %v3384 = vsel %vm1684, %v3382, %v3383
      %v3385 = vrot.slane %v3269, 5
      %v3386 = vrot.slane %v3385, 4
      %v3387 = vrot.slane %v3270, 5
      %v3388 = vsel %vm1684, %v3386, %v3387
      %v3389 = vrot.slane %v3387, 4
      %v3390 = vrot.slane %v3271, 5
      %v3391 = vsel %vm1684, %v3389, %v3390
      %v3392 = vrot.slane %v3272, 5
      %v3393 = vrot.slane %v3392, 4
      %v3394 = vrot.slane %v3273, 5
      %v3395 = vsel %vm1684, %v3393, %v3394
      %v3396 = vrot.slane %v3394, 4
      %v3397 = vrot.slane %v3274, 5
      %v3398 = vsel %vm1684, %v3396, %v3397
      %v3399 = vrot.slane %v3275, 5
      %v3400 = vrot.slane %v3399, 4
      %v3401 = vrot.slane %v3276, 5
      %v3402 = vsel %vm1684, %v3400, %v3401
      %v3403 = vrot.slane %v3401, 4
      %v3404 = vrot.slane %v3277, 5
      %v3405 = vsel %vm1684, %v3403, %v3404
      %v3406 = vrot.slane %v3278, 5
      %v3407 = vrot.slane %v3406, 4
      %v3408 = vrot.slane %v3279, 5
      %v3409 = vsel %vm1684, %v3407, %v3408
      %v3410 = vrot.slane %v3408, 4
      %v3411 = vrot.slane %v3280, 5
      %v3412 = vsel %vm1684, %v3410, %v3411
      %v3413 = vrot.slane %v3281, 5
      %v3414 = vrot.slane %v3413, 4
      %v3415 = vrot.slane %v3282, 5
      %v3416 = vsel %vm1684, %v3414, %v3415
      %v3417 = vrot.slane %v3415, 4
      %v3418 = vrot.slane %v3283, 5
      %v3419 = vsel %vm1684, %v3417, %v3418
      %v3420 = vrot.slane %v3284, 5
      %v3421 = vrot.slane %v3420, 4
      %v3422 = vrot.slane %v3285, 5
      %v3423 = vsel %vm1684, %v3421, %v3422
      %v3424 = vrot.slane %v3422, 4
      %v3425 = vrot.slane %v3286, 5
      %v3426 = vsel %vm1684, %v3424, %v3425
      %v3427 = vrot.slane %v3287, 5
      %v3428 = vrot.slane %v3427, 4
      %v3429 = vrot.slane %v3288, 5
      %v3430 = vsel %vm1684, %v3428, %v3429
      %v3431 = vrot.slane %v3429, 4
      %v3432 = vrot.slane %v3289, 5
      %v3433 = vsel %vm1684, %v3431, %v3432
      %v3434 = vrot.slane %v3290, 5
      %v3435 = vrot.slane %v3434, 4
      %v3436 = vrot.slane %v3291, 5
      %v3437 = vsel %vm1684, %v3435, %v3436
      %v3438 = vrot.slane %v3436, 4
      %v3439 = vrot.slane %v3292, 5
      %v3440 = vsel %vm1684, %v3438, %v3439
      %v3441 = vrot.slane %v3293, 5
      %v3442 = vrot.slane %v3441, 4
      %v3443 = vrot.slane %v3294, 5
      %v3444 = vsel %vm1684, %v3442, %v3443
      %v3445 = vrot.slane %v3443, 4
      %v3446 = vrot.slane %v3295, 5
      %v3447 = vsel %vm1684, %v3445, %v3446
      %v3448 = vrot.slane %v3296, 5
      %v3449 = vrot.slane %v3448, 4
      %v3450 = vrot.slane %v3297, 5
      %v3451 = vsel %vm1684, %v3449, %v3450
      %v3452 = vrot.slane %v3450, 4
      %v3453 = vrot.slane %v3298, 5
      %v3454 = vsel %vm1684, %v3452, %v3453
      %v3455 = vrot.slane %v3299, 5
      %v3456 = vrot.slane %v3455, 4
      %v3457 = vrot.slane %v3300, 5
      %v3458 = vsel %vm1684, %v3456, %v3457
      %v3459 = vrot.slane %v3457, 4
      %v3460 = vrot.slane %v3301, 5
      %v3461 = vsel %vm1684, %v3459, %v3460
      %3494 = vst [vmem:[#allocation3 + $0x20] sm:$0xf] %v3353
      %3495 = vst [vmem:[#allocation3 + $0x44] sm:$0xf] %v3356
      %3496 = vst [vmem:[#allocation3 + $0x68] sm:$0xf] %v3360
      %3497 = vst [vmem:[#allocation3 + $0x8c] sm:$0xf] %v3363
      %3498 = vst [vmem:[#allocation3 + $0xb0] sm:$0xf] %v3367
      %3499 = vst [vmem:[#allocation3 + $0xd4] sm:$0xf] %v3370
      %3500 = vst [vmem:[#allocation3 + $0xf8] sm:$0xf] %v3374
      %3501 = vst [vmem:[#allocation3 + $0x11c] sm:$0xf] %v3377
      %3502 = vst [vmem:[#allocation3 + $0x140] sm:$0xf] %v3381
      %3503 = vst [vmem:[#allocation3 + $0x164] sm:$0xf] %v3384
      %3504 = vst [vmem:[#allocation3 + $0x188] sm:$0xf] %v3388
      %3505 = vst [vmem:[#allocation3 + $0x1ac] sm:$0xf] %v3391
      %3506 = vst [vmem:[#allocation3 + $0x1d0] sm:$0xf] %v3395
      %3507 = vst [vmem:[#allocation3 + $0x1f4] sm:$0xf] %v3398
      %3508 = vst [vmem:[#allocation3 + $0x218] sm:$0xf] %v3402
      %3509 = vst [vmem:[#allocation3 + $0x23c] sm:$0xf] %v3405
      %3510 = vst [vmem:[#allocation3 + $0x260] sm:$0xf] %v3409
      %3511 = vst [vmem:[#allocation3 + $0x284] sm:$0xf] %v3412
      %3512 = vst [vmem:[#allocation3 + $0x2a8] sm:$0xf] %v3416
      %3513 = vst [vmem:[#allocation3 + $0x2cc] sm:$0xf] %v3419
      %3514 = vst [vmem:[#allocation3 + $0x2f0] sm:$0xf] %v3423
      %3515 = vst [vmem:[#allocation3 + $0x314] sm:$0xf] %v3426
      %3516 = vst [vmem:[#allocation3 + $0x338] sm:$0xf] %v3430
      %3517 = vst [vmem:[#allocation3 + $0x35c] sm:$0xf] %v3433
      %3518 = vst [vmem:[#allocation3 + $0x380] sm:$0xf] %v3437
      %3519 = vst [vmem:[#allocation3 + $0x3a4] sm:$0xf] %v3440
      %3520 = vst [vmem:[#allocation3 + $0x3c8] sm:$0xf] %v3444
      %3521 = vst [vmem:[#allocation3 + $0x3ec] sm:$0xf] %v3447
      %3522 = vst [vmem:[#allocation3 + $0x410] sm:$0xf] %v3451
      %3523 = vst [vmem:[#allocation3 + $0x434] sm:$0xf] %v3454
      %3524 = vst [vmem:[#allocation3 + $0x458] sm:$0xf] %v3458
      %3525 = vst [vmem:[#allocation3 + $0x47c] sm:$0xf] %v3461
      %v3526 = vld [vmem:[#allocation3] sm:$0xff]
      %v3527 = vld [vmem:[#allocation3 + $0x8] sm:$0xff]
      %v3528 = vld [vmem:[#allocation3 + $0x10] sm:$0xff]
      %v3529 = vld [vmem:[#allocation3 + $0x18] sm:$0xff]
      %v3530 = vld [vmem:[#allocation3 + $0x20] sm:$0xf]
      %v3531 = vld [vmem:[#allocation3 + $0x24] sm:$0xff]
      %v3532 = vld [vmem:[#allocation3 + $0x2c] sm:$0xff]
      %v3533 = vld [vmem:[#allocation3 + $0x34] sm:$0xff]
      %v3534 = vld [vmem:[#allocation3 + $0x3c] sm:$0xff]
      %v3535 = vld [vmem:[#allocation3 + $0x44] sm:$0xf]
      %v3536 = vld [vmem:[#allocation3 + $0x48] sm:$0xff]
      %v3537 = vld [vmem:[#allocation3 + $0x50] sm:$0xff]
      %v3538 = vld [vmem:[#allocation3 + $0x58] sm:$0xff]
      %v3539 = vld [vmem:[#allocation3 + $0x60] sm:$0xff]
      %v3540 = vld [vmem:[#allocation3 + $0x68] sm:$0xf]
      %v3541 = vld [vmem:[#allocation3 + $0x6c] sm:$0xff]
      %v3542 = vld [vmem:[#allocation3 + $0x74] sm:$0xff]
      %v3543 = vld [vmem:[#allocation3 + $0x7c] sm:$0xff]
      %v3544 = vld [vmem:[#allocation3 + $0x84] sm:$0xff]
      %v3545 = vld [vmem:[#allocation3 + $0x8c] sm:$0xf]
      %v3546 = vld [vmem:[#allocation3 + $0x90] sm:$0xff]
      %v3547 = vld [vmem:[#allocation3 + $0x98] sm:$0xff]
      %v3548 = vld [vmem:[#allocation3 + $0xa0] sm:$0xff]
      %v3549 = vld [vmem:[#allocation3 + $0xa8] sm:$0xff]
      %v3550 = vld [vmem:[#allocation3 + $0xb0] sm:$0xf]
      %v3551 = vld [vmem:[#allocation3 + $0xb4] sm:$0xff]
      %v3552 = vld [vmem:[#allocation3 + $0xbc] sm:$0xff]
      %v3553 = vld [vmem:[#allocation3 + $0xc4] sm:$0xff]
      %v3554 = vld [vmem:[#allocation3 + $0xcc] sm:$0xff]
      %v3555 = vld [vmem:[#allocation3 + $0xd4] sm:$0xf]
      %v3556 = vld [vmem:[#allocation3 + $0xd8] sm:$0xff]
      %v3557 = vld [vmem:[#allocation3 + $0xe0] sm:$0xff]
      %v3558 = vld [vmem:[#allocation3 + $0xe8] sm:$0xff]
      %v3559 = vld [vmem:[#allocation3 + $0xf0] sm:$0xff]
      %v3560 = vld [vmem:[#allocation3 + $0xf8] sm:$0xf]
      %v3561 = vld [vmem:[#allocation3 + $0xfc] sm:$0xff]
      %v3562 = vld [vmem:[#allocation3 + $0x104] sm:$0xff]
      %v3563 = vld [vmem:[#allocation3 + $0x10c] sm:$0xff]
      %v3564 = vld [vmem:[#allocation3 + $0x114] sm:$0xff]
      %v3565 = vld [vmem:[#allocation3 + $0x11c] sm:$0xf]
      %v3566 = vld [vmem:[#allocation3 + $0x120] sm:$0xff]
      %v3567 = vld [vmem:[#allocation3 + $0x128] sm:$0xff]
      %v3568 = vld [vmem:[#allocation3 + $0x130] sm:$0xff]
      %v3569 = vld [vmem:[#allocation3 + $0x138] sm:$0xff]
      %v3570 = vld [vmem:[#allocation3 + $0x140] sm:$0xf]
      %v3571 = vld [vmem:[#allocation3 + $0x144] sm:$0xff]
      %v3572 = vld [vmem:[#allocation3 + $0x14c] sm:$0xff]
      %v3573 = vld [vmem:[#allocation3 + $0x154] sm:$0xff]
      %v3574 = vld [vmem:[#allocation3 + $0x15c] sm:$0xff]
      %v3575 = vld [vmem:[#allocation3 + $0x164] sm:$0xf]
      %v3576 = vld [vmem:[#allocation3 + $0x168] sm:$0xff]
      %v3577 = vld [vmem:[#allocation3 + $0x170] sm:$0xff]
      %v3578 = vld [vmem:[#allocation3 + $0x178] sm:$0xff]
      %v3579 = vld [vmem:[#allocation3 + $0x180] sm:$0xff]
      %v3580 = vld [vmem:[#allocation3 + $0x188] sm:$0xf]
      %v3581 = vld [vmem:[#allocation3 + $0x18c] sm:$0xff]
      %v3582 = vld [vmem:[#allocation3 + $0x194] sm:$0xff]
      %v3583 = vld [vmem:[#allocation3 + $0x19c] sm:$0xff]
      %v3584 = vld [vmem:[#allocation3 + $0x1a4] sm:$0xff]
      %v3585 = vld [vmem:[#allocation3 + $0x1ac] sm:$0xf]
      %v3586 = vld [vmem:[#allocation3 + $0x1b0] sm:$0xff]
      %v3587 = vld [vmem:[#allocation3 + $0x1b8] sm:$0xff]
      %v3588 = vld [vmem:[#allocation3 + $0x1c0] sm:$0xff]
      %v3589 = vld [vmem:[#allocation3 + $0x1c8] sm:$0xff]
      %v3590 = vld [vmem:[#allocation3 + $0x1d0] sm:$0xf]
      %v3591 = vld [vmem:[#allocation3 + $0x1d4] sm:$0xff]
      %v3592 = vld [vmem:[#allocation3 + $0x1dc] sm:$0xff]
      %v3593 = vld [vmem:[#allocation3 + $0x1e4] sm:$0xff]
      %v3594 = vld [vmem:[#allocation3 + $0x1ec] sm:$0xff]
      %v3595 = vld [vmem:[#allocation3 + $0x1f4] sm:$0xf]
      %v3596 = vld [vmem:[#allocation3 + $0x1f8] sm:$0xff]
      %v3597 = vld [vmem:[#allocation3 + $0x200] sm:$0xff]
      %v3598 = vld [vmem:[#allocation3 + $0x208] sm:$0xff]
      %v3599 = vld [vmem:[#allocation3 + $0x210] sm:$0xff]
      %v3600 = vld [vmem:[#allocation3 + $0x218] sm:$0xf]
      %v3601 = vld [vmem:[#allocation3 + $0x21c] sm:$0xff]
      %v3602 = vld [vmem:[#allocation3 + $0x224] sm:$0xff]
      %v3603 = vld [vmem:[#allocation3 + $0x22c] sm:$0xff]
      %v3604 = vld [vmem:[#allocation3 + $0x234] sm:$0xff]
      %v3605 = vld [vmem:[#allocation3 + $0x23c] sm:$0xf]
      %v3606 = vld [vmem:[#allocation3 + $0x240] sm:$0xff]
      %v3607 = vld [vmem:[#allocation3 + $0x248] sm:$0xff]
      %v3608 = vld [vmem:[#allocation3 + $0x250] sm:$0xff]
      %v3609 = vld [vmem:[#allocation3 + $0x258] sm:$0xff]
      %v3610 = vld [vmem:[#allocation3 + $0x260] sm:$0xf]
      %v3611 = vld [vmem:[#allocation3 + $0x264] sm:$0xff]
      %v3612 = vld [vmem:[#allocation3 + $0x26c] sm:$0xff]
      %v3613 = vld [vmem:[#allocation3 + $0x274] sm:$0xff]
      %v3614 = vld [vmem:[#allocation3 + $0x27c] sm:$0xff]
      %v3615 = vld [vmem:[#allocation3 + $0x284] sm:$0xf]
      %v3616 = vld [vmem:[#allocation3 + $0x288] sm:$0xff]
      %v3617 = vld [vmem:[#allocation3 + $0x290] sm:$0xff]
      %v3618 = vld [vmem:[#allocation3 + $0x298] sm:$0xff]
      %v3619 = vld [vmem:[#allocation3 + $0x2a0] sm:$0xff]
      %v3620 = vld [vmem:[#allocation3 + $0x2a8] sm:$0xf]
      %v3621 = vld [vmem:[#allocation3 + $0x2ac] sm:$0xff]
      %v3622 = vld [vmem:[#allocation3 + $0x2b4] sm:$0xff]
      %v3623 = vld [vmem:[#allocation3 + $0x2bc] sm:$0xff]
      %v3624 = vld [vmem:[#allocation3 + $0x2c4] sm:$0xff]
      %v3625 = vld [vmem:[#allocation3 + $0x2cc] sm:$0xf]
      %v3626 = vld [vmem:[#allocation3 + $0x2d0] sm:$0xff]
      %v3627 = vld [vmem:[#allocation3 + $0x2d8] sm:$0xff]
      %v3628 = vld [vmem:[#allocation3 + $0x2e0] sm:$0xff]
      %v3629 = vld [vmem:[#allocation3 + $0x2e8] sm:$0xff]
      %v3630 = vld [vmem:[#allocation3 + $0x2f0] sm:$0xf]
      %v3631 = vld [vmem:[#allocation3 + $0x2f4] sm:$0xff]
      %v3632 = vld [vmem:[#allocation3 + $0x2fc] sm:$0xff]
      %v3633 = vld [vmem:[#allocation3 + $0x304] sm:$0xff]
      %v3634 = vld [vmem:[#allocation3 + $0x30c] sm:$0xff]
      %v3635 = vld [vmem:[#allocation3 + $0x314] sm:$0xf]
      %v3636 = vld [vmem:[#allocation3 + $0x318] sm:$0xff]
      %v3637 = vld [vmem:[#allocation3 + $0x320] sm:$0xff]
      %v3638 = vld [vmem:[#allocation3 + $0x328] sm:$0xff]
      %v3639 = vld [vmem:[#allocation3 + $0x330] sm:$0xff]
      %v3640 = vld [vmem:[#allocation3 + $0x338] sm:$0xf]
      %v3641 = vld [vmem:[#allocation3 + $0x33c] sm:$0xff]
      %v3642 = vld [vmem:[#allocation3 + $0x344] sm:$0xff]
      %v3643 = vld [vmem:[#allocation3 + $0x34c] sm:$0xff]
      %v3644 = vld [vmem:[#allocation3 + $0x354] sm:$0xff]
      %v3645 = vld [vmem:[#allocation3 + $0x35c] sm:$0xf]
      %v3646 = vld [vmem:[#allocation3 + $0x360] sm:$0xff]
      %v3647 = vld [vmem:[#allocation3 + $0x368] sm:$0xff]
      %v3648 = vld [vmem:[#allocation3 + $0x370] sm:$0xff]
      %v3649 = vld [vmem:[#allocation3 + $0x378] sm:$0xff]
      %v3650 = vld [vmem:[#allocation3 + $0x380] sm:$0xf]
      %v3651 = vld [vmem:[#allocation3 + $0x384] sm:$0xff]
      %v3652 = vld [vmem:[#allocation3 + $0x38c] sm:$0xff]
      %v3653 = vld [vmem:[#allocation3 + $0x394] sm:$0xff]
      %v3654 = vld [vmem:[#allocation3 + $0x39c] sm:$0xff]
      %v3655 = vld [vmem:[#allocation3 + $0x3a4] sm:$0xf]
      %v3656 = vld [vmem:[#allocation3 + $0x3a8] sm:$0xff]
      %v3657 = vld [vmem:[#allocation3 + $0x3b0] sm:$0xff]
      %v3658 = vld [vmem:[#allocation3 + $0x3b8] sm:$0xff]
      %v3659 = vld [vmem:[#allocation3 + $0x3c0] sm:$0xff]
      %v3660 = vld [vmem:[#allocation3 + $0x3c8] sm:$0xf]
      %v3661 = vld [vmem:[#allocation3 + $0x3cc] sm:$0xff]
      %v3662 = vld [vmem:[#allocation3 + $0x3d4] sm:$0xff]
      %v3663 = vld [vmem:[#allocation3 + $0x3dc] sm:$0xff]
      %v3664 = vld [vmem:[#allocation3 + $0x3e4] sm:$0xff]
      %v3665 = vld [vmem:[#allocation3 + $0x3ec] sm:$0xf]
      %v3666 = vld [vmem:[#allocation3 + $0x3f0] sm:$0xff]
      %v3667 = vld [vmem:[#allocation3 + $0x3f8] sm:$0xff]
      %v3668 = vld [vmem:[#allocation3 + $0x400] sm:$0xff]
      %v3669 = vld [vmem:[#allocation3 + $0x408] sm:$0xff]
      %v3670 = vld [vmem:[#allocation3 + $0x410] sm:$0xf]
      %v3671 = vld [vmem:[#allocation3 + $0x414] sm:$0xff]
      %v3672 = vld [vmem:[#allocation3 + $0x41c] sm:$0xff]
      %v3673 = vld [vmem:[#allocation3 + $0x424] sm:$0xff]
      %v3674 = vld [vmem:[#allocation3 + $0x42c] sm:$0xff]
      %v3675 = vld [vmem:[#allocation3 + $0x434] sm:$0xf]
      %v3676 = vld [vmem:[#allocation3 + $0x438] sm:$0xff]
      %v3677 = vld [vmem:[#allocation3 + $0x440] sm:$0xff]
      %v3678 = vld [vmem:[#allocation3 + $0x448] sm:$0xff]
      %v3679 = vld [vmem:[#allocation3 + $0x450] sm:$0xff]
      %v3680 = vld [vmem:[#allocation3 + $0x458] sm:$0xf]
      %v3681 = vld [vmem:[#allocation3 + $0x45c] sm:$0xff]
      %v3682 = vld [vmem:[#allocation3 + $0x464] sm:$0xff]
      %v3683 = vld [vmem:[#allocation3 + $0x46c] sm:$0xff]
      %v3684 = vld [vmem:[#allocation3 + $0x474] sm:$0xff]
      %v3685 = vld [vmem:[#allocation3 + $0x47c] sm:$0xf]
      %v3686 = vld [vmem:[%s1] sm:$0xf]
      %v3687 = vld [vmem:[%s1 + $0x4] sm:$0xf]
      %v3688 = vld [vmem:[%s1 + $0x8] sm:$0xf]
      %v3689 = vld [vmem:[%s1 + $0xc] sm:$0xf]
      %v3690 = vld [vmem:[%s1 + $0x10] sm:$0xf]
      %v3691 = vld [vmem:[%s1 + $0x14] sm:$0xf]
      %v3692 = vld [vmem:[%s1 + $0x18] sm:$0xf]
      %v3693 = vld [vmem:[%s1 + $0x1c] sm:$0xf]
      %v3694 = vld [vmem:[%s1 + $0x20] sm:$0xf]
      %v3695 = vld [vmem:[%s1 + $0x24] sm:$0xf]
      %v3696 = vld [vmem:[%s1 + $0x28] sm:$0xf]
      %v3697 = vld [vmem:[%s1 + $0x2c] sm:$0xf]
      %v3698 = vld [vmem:[%s1 + $0x30] sm:$0xf]
      %v3699 = vld [vmem:[%s1 + $0x34] sm:$0xf]
      %v3700 = vld [vmem:[%s1 + $0x38] sm:$0xf]
      %v3701 = vld [vmem:[%s1 + $0x3c] sm:$0xf]
      %v3702 = vld [vmem:[%s1 + $0x40] sm:$0xf]
      %v3703 = vld [vmem:[%s1 + $0x44] sm:$0xf]
      %v3704 = vld [vmem:[%s1 + $0x48] sm:$0xf]
      %v3705 = vld [vmem:[%s1 + $0x4c] sm:$0xf]
      %v3706 = vld [vmem:[%s1 + $0x50] sm:$0xf]
      %v3707 = vld [vmem:[%s1 + $0x54] sm:$0xf]
      %v3708 = vld [vmem:[%s1 + $0x58] sm:$0xf]
      %v3709 = vld [vmem:[%s1 + $0x5c] sm:$0xf]
      %v3710 = vld [vmem:[%s1 + $0x60] sm:$0xf]
      %v3711 = vld [vmem:[%s1 + $0x64] sm:$0xf]
      %v3712 = vld [vmem:[%s1 + $0x68] sm:$0xf]
      %v3713 = vld [vmem:[%s1 + $0x6c] sm:$0xf]
      %v3714 = vld [vmem:[%s1 + $0x70] sm:$0xf]
      %v3715 = vld [vmem:[%s1 + $0x74] sm:$0xf]
      %v3716 = vld [vmem:[%s1 + $0x78] sm:$0xf]
      %v3717 = vld [vmem:[%s1 + $0x7c] sm:$0xf]
      %v3718 = vld [vmem:[%s1 + $0x80] sm:$0xf]
      %v3719 = vld [vmem:[%s1 + $0x84] sm:$0xf]
      %v3720 = vld [vmem:[%s1 + $0x88] sm:$0xf]
      %v3721 = vld [vmem:[%s1 + $0x8c] sm:$0xf]
      %v3722 = vld [vmem:[%s1 + $0x90] sm:$0xf]
      %v3723 = vld [vmem:[%s1 + $0x94] sm:$0xf]
      %v3724 = vld [vmem:[%s1 + $0x98] sm:$0xf]
      %v3725 = vld [vmem:[%s1 + $0x9c] sm:$0xf]
      %v3726 = vld [vmem:[%s1 + $0xa0] sm:$0xf]
      %v3727 = vld [vmem:[%s1 + $0xa4] sm:$0xf]
      %v3728 = vld [vmem:[%s1 + $0xa8] sm:$0xf]
      %v3729 = vld [vmem:[%s1 + $0xac] sm:$0xf]
      %v3730 = vld [vmem:[%s1 + $0xb0] sm:$0xf]
      %v3731 = vld [vmem:[%s1 + $0xb4] sm:$0xf]
      %v3732 = vld [vmem:[%s1 + $0xb8] sm:$0xf]
      %v3733 = vld [vmem:[%s1 + $0xbc] sm:$0xf]
      %v3734 = vld [vmem:[%s1 + $0xc0] sm:$0xf]
      %v3735 = vld [vmem:[%s1 + $0xc4] sm:$0xf]
      %v3736 = vld [vmem:[%s1 + $0xc8] sm:$0xf]
      %v3737 = vld [vmem:[%s1 + $0xcc] sm:$0xf]
      %v3738 = vld [vmem:[%s1 + $0xd0] sm:$0xf]
      %v3739 = vld [vmem:[%s1 + $0xd4] sm:$0xf]
      %v3740 = vld [vmem:[%s1 + $0xd8] sm:$0xf]
      %v3741 = vld [vmem:[%s1 + $0xdc] sm:$0xf]
      %v3742 = vld [vmem:[%s1 + $0xe0] sm:$0xf]
      %v3743 = vld [vmem:[%s1 + $0xe4] sm:$0xf]
      %v3744 = vld [vmem:[%s1 + $0xe8] sm:$0xf]
      %v3745 = vld [vmem:[%s1 + $0xec] sm:$0xf]
      %v3746 = vld [vmem:[%s1 + $0xf0] sm:$0xf]
      %v3747 = vld [vmem:[%s1 + $0xf4] sm:$0xf]
      %v3748 = vld [vmem:[%s1 + $0xf8] sm:$0xf]
      %v3749 = vld [vmem:[%s1 + $0xfc] sm:$0xf]
      %v3750 = vld [vmem:[%s1 + $0x100] sm:$0xf]
      %v3751 = vld [vmem:[%s1 + $0x104] sm:$0xf]
      %v3752 = vld [vmem:[%s1 + $0x108] sm:$0xf]
      %v3753 = vld [vmem:[%s1 + $0x10c] sm:$0xf]
      %v3754 = vld [vmem:[%s1 + $0x110] sm:$0xf]
      %v3755 = vld [vmem:[%s1 + $0x114] sm:$0xf]
      %v3756 = vld [vmem:[%s1 + $0x118] sm:$0xf]
      %v3757 = vld [vmem:[%s1 + $0x11c] sm:$0xf]
      %v3758 = vld [vmem:[%s1 + $0x120] sm:$0xf]
      %v3759 = vld [vmem:[%s1 + $0x124] sm:$0xf]
      %v3760 = vld [vmem:[%s1 + $0x128] sm:$0xf]
      %v3761 = vld [vmem:[%s1 + $0x12c] sm:$0xf]
      %v3762 = vld [vmem:[%s1 + $0x130] sm:$0xf]
      %v3763 = vld [vmem:[%s1 + $0x134] sm:$0xf]
      %v3764 = vld [vmem:[%s1 + $0x138] sm:$0xf]
      %v3765 = vld [vmem:[%s1 + $0x13c] sm:$0xf]
      %v3766 = vld [vmem:[%s1 + $0x140] sm:$0xf]
      %v3767 = vld [vmem:[%s1 + $0x144] sm:$0xf]
      %v3768 = vld [vmem:[%s1 + $0x148] sm:$0xf]
      %v3769 = vld [vmem:[%s1 + $0x14c] sm:$0xf]
      %v3770 = vld [vmem:[%s1 + $0x150] sm:$0xf]
      %v3771 = vld [vmem:[%s1 + $0x154] sm:$0xf]
      %v3772 = vld [vmem:[%s1 + $0x158] sm:$0xf]
      %v3773 = vld [vmem:[%s1 + $0x15c] sm:$0xf]
      %v3774 = vld [vmem:[%s1 + $0x160] sm:$0xf]
      %v3775 = vld [vmem:[%s1 + $0x164] sm:$0xf]
      %v3776 = vld [vmem:[%s1 + $0x168] sm:$0xf]
      %v3777 = vld [vmem:[%s1 + $0x16c] sm:$0xf]
      %v3778 = vld [vmem:[%s1 + $0x170] sm:$0xf]
      %v3779 = vld [vmem:[%s1 + $0x174] sm:$0xf]
      %v3780 = vld [vmem:[%s1 + $0x178] sm:$0xf]
      %v3781 = vld [vmem:[%s1 + $0x17c] sm:$0xf]
      %v3782 = vld [vmem:[%s1 + $0x180] sm:$0xf]
      %v3783 = vld [vmem:[%s1 + $0x184] sm:$0xf]
      %v3784 = vld [vmem:[%s1 + $0x188] sm:$0xf]
      %v3785 = vld [vmem:[%s1 + $0x18c] sm:$0xf]
      %v3786 = vld [vmem:[%s1 + $0x190] sm:$0xf]
      %v3787 = vld [vmem:[%s1 + $0x194] sm:$0xf]
      %v3788 = vld [vmem:[%s1 + $0x198] sm:$0xf]
      %v3789 = vld [vmem:[%s1 + $0x19c] sm:$0xf]
      %v3790 = vld [vmem:[%s1 + $0x1a0] sm:$0xf]
      %v3791 = vld [vmem:[%s1 + $0x1a4] sm:$0xf]
      %v3792 = vld [vmem:[%s1 + $0x1a8] sm:$0xf]
      %v3793 = vld [vmem:[%s1 + $0x1ac] sm:$0xf]
      %v3794 = vld [vmem:[%s1 + $0x1b0] sm:$0xf]
      %v3795 = vld [vmem:[%s1 + $0x1b4] sm:$0xf]
      %v3796 = vld [vmem:[%s1 + $0x1b8] sm:$0xf]
      %v3797 = vld [vmem:[%s1 + $0x1bc] sm:$0xf]
      %v3798 = vld [vmem:[%s1 + $0x1c0] sm:$0xf]
      %v3799 = vld [vmem:[%s1 + $0x1c4] sm:$0xf]
      %v3800 = vld [vmem:[%s1 + $0x1c8] sm:$0xf]
      %v3801 = vld [vmem:[%s1 + $0x1cc] sm:$0xf]
      %v3802 = vld [vmem:[%s1 + $0x1d0] sm:$0xf]
      %v3803 = vld [vmem:[%s1 + $0x1d4] sm:$0xf]
      %v3804 = vld [vmem:[%s1 + $0x1d8] sm:$0xf]
      %v3805 = vld [vmem:[%s1 + $0x1dc] sm:$0xf]
      %v3806 = vld [vmem:[%s1 + $0x1e0] sm:$0xf]
      %v3807 = vld [vmem:[%s1 + $0x1e4] sm:$0xf]
      %v3808 = vld [vmem:[%s1 + $0x1e8] sm:$0xf]
      %v3809 = vld [vmem:[%s1 + $0x1ec] sm:$0xf]
      %v3810 = vld [vmem:[%s1 + $0x1f0] sm:$0xf]
      %v3811 = vld [vmem:[%s1 + $0x1f4] sm:$0xf]
      %v3812 = vld [vmem:[%s1 + $0x1f8] sm:$0xf]
      %v3813 = vld [vmem:[%s1 + $0x1fc] sm:$0xf]
      %v3814 = vld [vmem:[%s1 + $0x200] sm:$0xf]
      %v3815 = vld [vmem:[%s1 + $0x204] sm:$0xf]
      %v3816 = vld [vmem:[%s1 + $0x208] sm:$0xf]
      %v3817 = vld [vmem:[%s1 + $0x20c] sm:$0xf]
      %v3818 = vld [vmem:[%s1 + $0x210] sm:$0xf]
      %v3819 = vld [vmem:[%s1 + $0x214] sm:$0xf]
      %v3820 = vld [vmem:[%s1 + $0x218] sm:$0xf]
      %v3821 = vld [vmem:[%s1 + $0x21c] sm:$0xf]
      %v3822 = vld [vmem:[%s1 + $0x220] sm:$0xf]
      %v3823 = vld [vmem:[%s1 + $0x224] sm:$0xf]
      %v3824 = vld [vmem:[%s1 + $0x228] sm:$0xf]
      %v3825 = vld [vmem:[%s1 + $0x22c] sm:$0xf]
      %v3826 = vld [vmem:[%s1 + $0x230] sm:$0xf]
      %v3827 = vld [vmem:[%s1 + $0x234] sm:$0xf]
      %v3828 = vld [vmem:[%s1 + $0x238] sm:$0xf]
      %v3829 = vld [vmem:[%s1 + $0x23c] sm:$0xf]
      %v3830 = vld [vmem:[%s2] sm:$0x1]
      %v3832 = vperm.slane %v3830, 0
      %v3994 = vunpack.c.l.b16 %v3526
      %v3995 = vunpack.c.h.b16 %v3526
      %v3996 = vunpack.c.l.b16 %v3527
      %v3997 = vunpack.c.h.b16 %v3527
      %v3998 = vunpack.c.l.b16 %v3528
      %v3999 = vunpack.c.h.b16 %v3528
      %v4000 = vunpack.c.l.b16 %v3529
      %v4001 = vunpack.c.h.b16 %v3529
      %v4002 = vunpack.c.l.b16 %v3530
      %v4003 = vunpack.c.l.b16 %v3531
      %v4004 = vunpack.c.h.b16 %v3531
      %v4005 = vunpack.c.l.b16 %v3532
      %v4006 = vunpack.c.h.b16 %v3532
      %v4007 = vunpack.c.l.b16 %v3533
      %v4008 = vunpack.c.h.b16 %v3533
      %v4009 = vunpack.c.l.b16 %v3534
      %v4010 = vunpack.c.h.b16 %v3534
      %v4011 = vunpack.c.l.b16 %v3535
      %v4012 = vunpack.c.l.b16 %v3536
      %v4013 = vunpack.c.h.b16 %v3536
      %v4014 = vunpack.c.l.b16 %v3537
      %v4015 = vunpack.c.h.b16 %v3537
      %v4016 = vunpack.c.l.b16 %v3538
      %v4017 = vunpack.c.h.b16 %v3538
      %v4018 = vunpack.c.l.b16 %v3539
      %v4019 = vunpack.c.h.b16 %v3539
      %v4020 = vunpack.c.l.b16 %v3540
      %v4021 = vunpack.c.l.b16 %v3541
      %v4022 = vunpack.c.h.b16 %v3541
      %v4023 = vunpack.c.l.b16 %v3542
      %v4024 = vunpack.c.h.b16 %v3542
      %v4025 = vunpack.c.l.b16 %v3543
      %v4026 = vunpack.c.h.b16 %v3543
      %v4027 = vunpack.c.l.b16 %v3544
      %v4028 = vunpack.c.h.b16 %v3544
      %v4029 = vunpack.c.l.b16 %v3545
      %v4030 = vunpack.c.l.b16 %v3546
      %v4031 = vunpack.c.h.b16 %v3546
      %v4032 = vunpack.c.l.b16 %v3547
      %v4033 = vunpack.c.h.b16 %v3547
      %v4034 = vunpack.c.l.b16 %v3548
      %v4035 = vunpack.c.h.b16 %v3548
      %v4036 = vunpack.c.l.b16 %v3549
      %v4037 = vunpack.c.h.b16 %v3549
      %v4038 = vunpack.c.l.b16 %v3550
      %v4039 = vunpack.c.l.b16 %v3551
      %v4040 = vunpack.c.h.b16 %v3551
      %v4041 = vunpack.c.l.b16 %v3552
      %v4042 = vunpack.c.h.b16 %v3552
      %v4043 = vunpack.c.l.b16 %v3553
      %v4044 = vunpack.c.h.b16 %v3553
      %v4045 = vunpack.c.l.b16 %v3554
      %v4046 = vunpack.c.h.b16 %v3554
      %v4047 = vunpack.c.l.b16 %v3555
      %v4048 = vunpack.c.l.b16 %v3556
      %v4049 = vunpack.c.h.b16 %v3556
      %v4050 = vunpack.c.l.b16 %v3557
      %v4051 = vunpack.c.h.b16 %v3557
      %v4052 = vunpack.c.l.b16 %v3558
      %v4053 = vunpack.c.h.b16 %v3558
      %v4054 = vunpack.c.l.b16 %v3559
      %v4055 = vunpack.c.h.b16 %v3559
      %v4056 = vunpack.c.l.b16 %v3560
      %v4057 = vunpack.c.l.b16 %v3561
      %v4058 = vunpack.c.h.b16 %v3561
      %v4059 = vunpack.c.l.b16 %v3562
      %v4060 = vunpack.c.h.b16 %v3562
      %v4061 = vunpack.c.l.b16 %v3563
      %v4062 = vunpack.c.h.b16 %v3563
      %v4063 = vunpack.c.l.b16 %v3564
      %v4064 = vunpack.c.h.b16 %v3564
      %v4065 = vunpack.c.l.b16 %v3565
      %v4066 = vunpack.c.l.b16 %v3566
      %v4067 = vunpack.c.h.b16 %v3566
      %v4068 = vunpack.c.l.b16 %v3567
      %v4069 = vunpack.c.h.b16 %v3567
      %v4070 = vunpack.c.l.b16 %v3568
      %v4071 = vunpack.c.h.b16 %v3568
      %v4072 = vunpack.c.l.b16 %v3569
      %v4073 = vunpack.c.h.b16 %v3569
      %v4074 = vunpack.c.l.b16 %v3570
      %v4075 = vunpack.c.l.b16 %v3571
      %v4076 = vunpack.c.h.b16 %v3571
      %v4077 = vunpack.c.l.b16 %v3572
      %v4078 = vunpack.c.h.b16 %v3572
      %v4079 = vunpack.c.l.b16 %v3573
      %v4080 = vunpack.c.h.b16 %v3573
      %v4081 = vunpack.c.l.b16 %v3574
      %v4082 = vunpack.c.h.b16 %v3574
      %v4083 = vunpack.c.l.b16 %v3575
      %v4084 = vunpack.c.l.b16 %v3576
      %v4085 = vunpack.c.h.b16 %v3576
      %v4086 = vunpack.c.l.b16 %v3577
      %v4087 = vunpack.c.h.b16 %v3577
      %v4088 = vunpack.c.l.b16 %v3578
      %v4089 = vunpack.c.h.b16 %v3578
      %v4090 = vunpack.c.l.b16 %v3579
      %v4091 = vunpack.c.h.b16 %v3579
      %v4092 = vunpack.c.l.b16 %v3580
      %v4093 = vunpack.c.l.b16 %v3581
      %v4094 = vunpack.c.h.b16 %v3581
      %v4095 = vunpack.c.l.b16 %v3582
      %v4096 = vunpack.c.h.b16 %v3582
      %v4097 = vunpack.c.l.b16 %v3583
      %v4098 = vunpack.c.h.b16 %v3583
      %v4099 = vunpack.c.l.b16 %v3584
      %v4100 = vunpack.c.h.b16 %v3584
      %v4101 = vunpack.c.l.b16 %v3585
      %v4102 = vunpack.c.l.b16 %v3586
      %v4103 = vunpack.c.h.b16 %v3586
      %v4104 = vunpack.c.l.b16 %v3587
      %v4105 = vunpack.c.h.b16 %v3587
      %v4106 = vunpack.c.l.b16 %v3588
      %v4107 = vunpack.c.h.b16 %v3588
      %v4108 = vunpack.c.l.b16 %v3589
      %v4109 = vunpack.c.h.b16 %v3589
      %v4110 = vunpack.c.l.b16 %v3590
      %v4111 = vunpack.c.l.b16 %v3591
      %v4112 = vunpack.c.h.b16 %v3591
      %v4113 = vunpack.c.l.b16 %v3592
      %v4114 = vunpack.c.h.b16 %v3592
      %v4115 = vunpack.c.l.b16 %v3593
      %v4116 = vunpack.c.h.b16 %v3593
      %v4117 = vunpack.c.l.b16 %v3594
      %v4118 = vunpack.c.h.b16 %v3594
      %v4119 = vunpack.c.l.b16 %v3595
      %v4120 = vunpack.c.l.b16 %v3596
      %v4121 = vunpack.c.h.b16 %v3596
      %v4122 = vunpack.c.l.b16 %v3597
      %v4123 = vunpack.c.h.b16 %v3597
      %v4124 = vunpack.c.l.b16 %v3598
      %v4125 = vunpack.c.h.b16 %v3598
      %v4126 = vunpack.c.l.b16 %v3599
      %v4127 = vunpack.c.h.b16 %v3599
      %v4128 = vunpack.c.l.b16 %v3600
      %v4129 = vunpack.c.l.b16 %v3601
      %v4130 = vunpack.c.h.b16 %v3601
      %v4131 = vunpack.c.l.b16 %v3602
      %v4132 = vunpack.c.h.b16 %v3602
      %v4133 = vunpack.c.l.b16 %v3603
      %v4134 = vunpack.c.h.b16 %v3603
      %v4135 = vunpack.c.l.b16 %v3604
      %v4136 = vunpack.c.h.b16 %v3604
      %v4137 = vunpack.c.l.b16 %v3605
      %v4138 = vunpack.c.l.b16 %v3606
      %v4139 = vunpack.c.h.b16 %v3606
      %v4140 = vunpack.c.l.b16 %v3607
      %v4141 = vunpack.c.h.b16 %v3607
      %v4142 = vunpack.c.l.b16 %v3608
      %v4143 = vunpack.c.h.b16 %v3608
      %v4144 = vunpack.c.l.b16 %v3609
      %v4145 = vunpack.c.h.b16 %v3609
      %v4146 = vunpack.c.l.b16 %v3610
      %v4147 = vunpack.c.l.b16 %v3611
      %v4148 = vunpack.c.h.b16 %v3611
      %v4149 = vunpack.c.l.b16 %v3612
      %v4150 = vunpack.c.h.b16 %v3612
      %v4151 = vunpack.c.l.b16 %v3613
      %v4152 = vunpack.c.h.b16 %v3613
      %v4153 = vunpack.c.l.b16 %v3614
      %v4154 = vunpack.c.h.b16 %v3614
      %v4155 = vunpack.c.l.b16 %v3615
      %v4156 = vunpack.c.l.b16 %v3616
      %v4157 = vunpack.c.h.b16 %v3616
      %v4158 = vunpack.c.l.b16 %v3617
      %v4159 = vunpack.c.h.b16 %v3617
      %v4160 = vunpack.c.l.b16 %v3618
      %v4161 = vunpack.c.h.b16 %v3618
      %v4162 = vunpack.c.l.b16 %v3619
      %v4163 = vunpack.c.h.b16 %v3619
      %v4164 = vunpack.c.l.b16 %v3620
      %v4165 = vunpack.c.l.b16 %v3621
      %v4166 = vunpack.c.h.b16 %v3621
      %v4167 = vunpack.c.l.b16 %v3622
      %v4168 = vunpack.c.h.b16 %v3622
      %v4169 = vunpack.c.l.b16 %v3623
      %v4170 = vunpack.c.h.b16 %v3623
      %v4171 = vunpack.c.l.b16 %v3624
      %v4172 = vunpack.c.h.b16 %v3624
      %v4173 = vunpack.c.l.b16 %v3625
      %v4174 = vunpack.c.l.b16 %v3626
      %v4175 = vunpack.c.h.b16 %v3626
      %v4176 = vunpack.c.l.b16 %v3627
      %v4177 = vunpack.c.h.b16 %v3627
      %v4178 = vunpack.c.l.b16 %v3628
      %v4179 = vunpack.c.h.b16 %v3628
      %v4180 = vunpack.c.l.b16 %v3629
      %v4181 = vunpack.c.h.b16 %v3629
      %v4182 = vunpack.c.l.b16 %v3630
      %v4183 = vunpack.c.l.b16 %v3631
      %v4184 = vunpack.c.h.b16 %v3631
      %v4185 = vunpack.c.l.b16 %v3632
      %v4186 = vunpack.c.h.b16 %v3632
      %v4187 = vunpack.c.l.b16 %v3633
      %v4188 = vunpack.c.h.b16 %v3633
      %v4189 = vunpack.c.l.b16 %v3634
      %v4190 = vunpack.c.h.b16 %v3634
      %v4191 = vunpack.c.l.b16 %v3635
      %v4192 = vunpack.c.l.b16 %v3636
      %v4193 = vunpack.c.h.b16 %v3636
      %v4194 = vunpack.c.l.b16 %v3637
      %v4195 = vunpack.c.h.b16 %v3637
      %v4196 = vunpack.c.l.b16 %v3638
      %v4197 = vunpack.c.h.b16 %v3638
      %v4198 = vunpack.c.l.b16 %v3639
      %v4199 = vunpack.c.h.b16 %v3639
      %v4200 = vunpack.c.l.b16 %v3640
      %v4201 = vunpack.c.l.b16 %v3641
      %v4202 = vunpack.c.h.b16 %v3641
      %v4203 = vunpack.c.l.b16 %v3642
      %v4204 = vunpack.c.h.b16 %v3642
      %v4205 = vunpack.c.l.b16 %v3643
      %v4206 = vunpack.c.h.b16 %v3643
      %v4207 = vunpack.c.l.b16 %v3644
      %v4208 = vunpack.c.h.b16 %v3644
      %v4209 = vunpack.c.l.b16 %v3645
      %v4210 = vunpack.c.l.b16 %v3646
      %v4211 = vunpack.c.h.b16 %v3646
      %v4212 = vunpack.c.l.b16 %v3647
      %v4213 = vunpack.c.h.b16 %v3647
      %v4214 = vunpack.c.l.b16 %v3648
      %v4215 = vunpack.c.h.b16 %v3648
      %v4216 = vunpack.c.l.b16 %v3649
      %v4217 = vunpack.c.h.b16 %v3649
      %v4218 = vunpack.c.l.b16 %v3650
      %v4219 = vunpack.c.l.b16 %v3651
      %v4220 = vunpack.c.h.b16 %v3651
      %v4221 = vunpack.c.l.b16 %v3652
      %v4222 = vunpack.c.h.b16 %v3652
      %v4223 = vunpack.c.l.b16 %v3653
      %v4224 = vunpack.c.h.b16 %v3653
      %v4225 = vunpack.c.l.b16 %v3654
      %v4226 = vunpack.c.h.b16 %v3654
      %v4227 = vunpack.c.l.b16 %v3655
      %v4228 = vunpack.c.l.b16 %v3656
      %v4229 = vunpack.c.h.b16 %v3656
      %v4230 = vunpack.c.l.b16 %v3657
      %v4231 = vunpack.c.h.b16 %v3657
      %v4232 = vunpack.c.l.b16 %v3658
      %v4233 = vunpack.c.h.b16 %v3658
      %v4234 = vunpack.c.l.b16 %v3659
      %v4235 = vunpack.c.h.b16 %v3659
      %v4236 = vunpack.c.l.b16 %v3660
      %v4237 = vunpack.c.l.b16 %v3661
      %v4238 = vunpack.c.h.b16 %v3661
      %v4239 = vunpack.c.l.b16 %v3662
      %v4240 = vunpack.c.h.b16 %v3662
      %v4241 = vunpack.c.l.b16 %v3663
      %v4242 = vunpack.c.h.b16 %v3663
      %v4243 = vunpack.c.l.b16 %v3664
      %v4244 = vunpack.c.h.b16 %v3664
      %v4245 = vunpack.c.l.b16 %v3665
      %v4246 = vunpack.c.l.b16 %v3666
      %v4247 = vunpack.c.h.b16 %v3666
      %v4248 = vunpack.c.l.b16 %v3667
      %v4249 = vunpack.c.h.b16 %v3667
      %v4250 = vunpack.c.l.b16 %v3668
      %v4251 = vunpack.c.h.b16 %v3668
      %v4252 = vunpack.c.l.b16 %v3669
      %v4253 = vunpack.c.h.b16 %v3669
      %v4254 = vunpack.c.l.b16 %v3670
      %v4255 = vunpack.c.l.b16 %v3671
      %v4256 = vunpack.c.h.b16 %v3671
      %v4257 = vunpack.c.l.b16 %v3672
      %v4258 = vunpack.c.h.b16 %v3672
      %v4259 = vunpack.c.l.b16 %v3673
      %v4260 = vunpack.c.h.b16 %v3673
      %v4261 = vunpack.c.l.b16 %v3674
      %v4262 = vunpack.c.h.b16 %v3674
      %v4263 = vunpack.c.l.b16 %v3675
      %v4264 = vunpack.c.l.b16 %v3676
      %v4265 = vunpack.c.h.b16 %v3676
      %v4266 = vunpack.c.l.b16 %v3677
      %v4267 = vunpack.c.h.b16 %v3677
      %v4268 = vunpack.c.l.b16 %v3678
      %v4269 = vunpack.c.h.b16 %v3678
      %v4270 = vunpack.c.l.b16 %v3679
      %v4271 = vunpack.c.h.b16 %v3679
      %v4272 = vunpack.c.l.b16 %v3680
      %v4273 = vunpack.c.l.b16 %v3681
      %v4274 = vunpack.c.h.b16 %v3681
      %v4275 = vunpack.c.l.b16 %v3682
      %v4276 = vunpack.c.h.b16 %v3682
      %v4277 = vunpack.c.l.b16 %v3683
      %v4278 = vunpack.c.h.b16 %v3683
      %v4279 = vunpack.c.l.b16 %v3684
      %v4280 = vunpack.c.h.b16 %v3684
      %v4281 = vunpack.c.l.b16 %v3685
      %v4282 = vpack.c.b16 %v4003, %v3994
      %v4283 = vpack.c.b16 %v4004, %v3995
      %v4284 = vpack.c.b16 %v4005, %v3996
      %v4285 = vpack.c.b16 %v4006, %v3997
      %v4286 = vpack.c.b16 %v4007, %v3998
      %v4287 = vpack.c.b16 %v4008, %v3999
      %v4288 = vpack.c.b16 %v4009, %v4000
      %v4289 = vpack.c.b16 %v4010, %v4001
      %v4290 = vpack.c.b16 %v4011, %v4002
      %v4291 = vpack.c.b16 %v4021, %v4012
      %v4292 = vpack.c.b16 %v4022, %v4013
      %v4293 = vpack.c.b16 %v4023, %v4014
      %v4294 = vpack.c.b16 %v4024, %v4015
      %v4295 = vpack.c.b16 %v4025, %v4016
      %v4296 = vpack.c.b16 %v4026, %v4017
      %v4297 = vpack.c.b16 %v4027, %v4018
      %v4298 = vpack.c.b16 %v4028, %v4019
      %v4299 = vpack.c.b16 %v4029, %v4020
      %v4300 = vpack.c.b16 %v4039, %v4030
      %v4301 = vpack.c.b16 %v4040, %v4031
      %v4302 = vpack.c.b16 %v4041, %v4032
      %v4303 = vpack.c.b16 %v4042, %v4033
      %v4304 = vpack.c.b16 %v4043, %v4034
      %v4305 = vpack.c.b16 %v4044, %v4035
      %v4306 = vpack.c.b16 %v4045, %v4036
      %v4307 = vpack.c.b16 %v4046, %v4037
      %v4308 = vpack.c.b16 %v4047, %v4038
      %v4309 = vpack.c.b16 %v4057, %v4048
      %v4310 = vpack.c.b16 %v4058, %v4049
      %v4311 = vpack.c.b16 %v4059, %v4050
      %v4312 = vpack.c.b16 %v4060, %v4051
      %v4313 = vpack.c.b16 %v4061, %v4052
      %v4314 = vpack.c.b16 %v4062, %v4053
      %v4315 = vpack.c.b16 %v4063, %v4054
      %v4316 = vpack.c.b16 %v4064, %v4055
      %v4317 = vpack.c.b16 %v4065, %v4056
      %v4318 = vpack.c.b16 %v4075, %v4066
      %v4319 = vpack.c.b16 %v4076, %v4067
      %v4320 = vpack.c.b16 %v4077, %v4068
      %v4321 = vpack.c.b16 %v4078, %v4069
      %v4322 = vpack.c.b16 %v4079, %v4070
      %v4323 = vpack.c.b16 %v4080, %v4071
      %v4324 = vpack.c.b16 %v4081, %v4072
      %v4325 = vpack.c.b16 %v4082, %v4073
      %v4326 = vpack.c.b16 %v4083, %v4074
      %v4327 = vpack.c.b16 %v4093, %v4084
      %v4328 = vpack.c.b16 %v4094, %v4085
      %v4329 = vpack.c.b16 %v4095, %v4086
      %v4330 = vpack.c.b16 %v4096, %v4087
      %v4331 = vpack.c.b16 %v4097, %v4088
      %v4332 = vpack.c.b16 %v4098, %v4089
      %v4333 = vpack.c.b16 %v4099, %v4090
      %v4334 = vpack.c.b16 %v4100, %v4091
      %v4335 = vpack.c.b16 %v4101, %v4092
      %v4336 = vpack.c.b16 %v4111, %v4102
      %v4337 = vpack.c.b16 %v4112, %v4103
      %v4338 = vpack.c.b16 %v4113, %v4104
      %v4339 = vpack.c.b16 %v4114, %v4105
      %v4340 = vpack.c.b16 %v4115, %v4106
      %v4341 = vpack.c.b16 %v4116, %v4107
      %v4342 = vpack.c.b16 %v4117, %v4108
      %v4343 = vpack.c.b16 %v4118, %v4109
      %v4344 = vpack.c.b16 %v4119, %v4110
      %v4345 = vpack.c.b16 %v4129, %v4120
      %v4346 = vpack.c.b16 %v4130, %v4121
      %v4347 = vpack.c.b16 %v4131, %v4122
      %v4348 = vpack.c.b16 %v4132, %v4123
      %v4349 = vpack.c.b16 %v4133, %v4124
      %v4350 = vpack.c.b16 %v4134, %v4125
      %v4351 = vpack.c.b16 %v4135, %v4126
      %v4352 = vpack.c.b16 %v4136, %v4127
      %v4353 = vpack.c.b16 %v4137, %v4128
      %v4354 = vpack.c.b16 %v4147, %v4138
      %v4355 = vpack.c.b16 %v4148, %v4139
      %v4356 = vpack.c.b16 %v4149, %v4140
      %v4357 = vpack.c.b16 %v4150, %v4141
      %v4358 = vpack.c.b16 %v4151, %v4142
      %v4359 = vpack.c.b16 %v4152, %v4143
      %v4360 = vpack.c.b16 %v4153, %v4144
      %v4361 = vpack.c.b16 %v4154, %v4145
      %v4362 = vpack.c.b16 %v4155, %v4146
      %v4363 = vpack.c.b16 %v4165, %v4156
      %v4364 = vpack.c.b16 %v4166, %v4157
      %v4365 = vpack.c.b16 %v4167, %v4158
      %v4366 = vpack.c.b16 %v4168, %v4159
      %v4367 = vpack.c.b16 %v4169, %v4160
      %v4368 = vpack.c.b16 %v4170, %v4161
      %v4369 = vpack.c.b16 %v4171, %v4162
      %v4370 = vpack.c.b16 %v4172, %v4163
      %v4371 = vpack.c.b16 %v4173, %v4164
      %v4372 = vpack.c.b16 %v4183, %v4174
      %v4373 = vpack.c.b16 %v4184, %v4175
      %v4374 = vpack.c.b16 %v4185, %v4176
      %v4375 = vpack.c.b16 %v4186, %v4177
      %v4376 = vpack.c.b16 %v4187, %v4178
      %v4377 = vpack.c.b16 %v4188, %v4179
      %v4378 = vpack.c.b16 %v4189, %v4180
      %v4379 = vpack.c.b16 %v4190, %v4181
      %v4380 = vpack.c.b16 %v4191, %v4182
      %v4381 = vpack.c.b16 %v4201, %v4192
      %v4382 = vpack.c.b16 %v4202, %v4193
      %v4383 = vpack.c.b16 %v4203, %v4194
      %v4384 = vpack.c.b16 %v4204, %v4195
      %v4385 = vpack.c.b16 %v4205, %v4196
      %v4386 = vpack.c.b16 %v4206, %v4197
      %v4387 = vpack.c.b16 %v4207, %v4198
      %v4388 = vpack.c.b16 %v4208, %v4199
      %v4389 = vpack.c.b16 %v4209, %v4200
      %v4390 = vpack.c.b16 %v4219, %v4210
      %v4391 = vpack.c.b16 %v4220, %v4211
      %v4392 = vpack.c.b16 %v4221, %v4212
      %v4393 = vpack.c.b16 %v4222, %v4213
      %v4394 = vpack.c.b16 %v4223, %v4214
      %v4395 = vpack.c.b16 %v4224, %v4215
      %v4396 = vpack.c.b16 %v4225, %v4216
      %v4397 = vpack.c.b16 %v4226, %v4217
      %v4398 = vpack.c.b16 %v4227, %v4218
      %v4399 = vpack.c.b16 %v4237, %v4228
      %v4400 = vpack.c.b16 %v4238, %v4229
      %v4401 = vpack.c.b16 %v4239, %v4230
      %v4402 = vpack.c.b16 %v4240, %v4231
      %v4403 = vpack.c.b16 %v4241, %v4232
      %v4404 = vpack.c.b16 %v4242, %v4233
      %v4405 = vpack.c.b16 %v4243, %v4234
      %v4406 = vpack.c.b16 %v4244, %v4235
      %v4407 = vpack.c.b16 %v4245, %v4236
      %v4408 = vpack.c.b16 %v4255, %v4246
      %v4409 = vpack.c.b16 %v4256, %v4247
      %v4410 = vpack.c.b16 %v4257, %v4248
      %v4411 = vpack.c.b16 %v4258, %v4249
      %v4412 = vpack.c.b16 %v4259, %v4250
      %v4413 = vpack.c.b16 %v4260, %v4251
      %v4414 = vpack.c.b16 %v4261, %v4252
      %v4415 = vpack.c.b16 %v4262, %v4253
      %v4416 = vpack.c.b16 %v4263, %v4254
      %v4417 = vpack.c.b16 %v4273, %v4264
      %v4418 = vpack.c.b16 %v4274, %v4265
      %v4419 = vpack.c.b16 %v4275, %v4266
      %v4420 = vpack.c.b16 %v4276, %v4267
      %v4421 = vpack.c.b16 %v4277, %v4268
      %v4422 = vpack.c.b16 %v4278, %v4269
      %v4423 = vpack.c.b16 %v4279, %v4270
      %v4424 = vpack.c.b16 %v4280, %v4271
      %v4425 = vpack.c.b16 %v4281, %v4272
      %v4714 = vunpack.c.l.b16 %v3686
      %v4715 = vunpack.c.l.b16 %v3687
      %v4716 = vunpack.c.l.b16 %v3688
      %v4717 = vunpack.c.l.b16 %v3689
      %v4718 = vunpack.c.l.b16 %v3690
      %v4719 = vunpack.c.l.b16 %v3691
      %v4720 = vunpack.c.l.b16 %v3692
      %v4721 = vunpack.c.l.b16 %v3693
      %v4722 = vunpack.c.l.b16 %v3694
      %v4723 = vunpack.c.l.b16 %v3695
      %v4724 = vunpack.c.l.b16 %v3696
      %v4725 = vunpack.c.l.b16 %v3697
      %v4726 = vunpack.c.l.b16 %v3698
      %v4727 = vunpack.c.l.b16 %v3699
      %v4728 = vunpack.c.l.b16 %v3700
      %v4729 = vunpack.c.l.b16 %v3701
      %v4730 = vunpack.c.l.b16 %v3702
      %v4731 = vunpack.c.l.b16 %v3703
      %v4732 = vunpack.c.l.b16 %v3704
      %v4733 = vunpack.c.l.b16 %v3705
      %v4734 = vunpack.c.l.b16 %v3706
      %v4735 = vunpack.c.l.b16 %v3707
      %v4736 = vunpack.c.l.b16 %v3708
      %v4737 = vunpack.c.l.b16 %v3709
      %v4738 = vunpack.c.l.b16 %v3710
      %v4739 = vunpack.c.l.b16 %v3711
      %v4740 = vunpack.c.l.b16 %v3712
      %v4741 = vunpack.c.l.b16 %v3713
      %v4742 = vunpack.c.l.b16 %v3714
      %v4743 = vunpack.c.l.b16 %v3715
      %v4744 = vunpack.c.l.b16 %v3716
      %v4745 = vunpack.c.l.b16 %v3717
      %v4746 = vunpack.c.l.b16 %v3718
      %v4747 = vunpack.c.l.b16 %v3719
      %v4748 = vunpack.c.l.b16 %v3720
      %v4749 = vunpack.c.l.b16 %v3721
      %v4750 = vunpack.c.l.b16 %v3722
      %v4751 = vunpack.c.l.b16 %v3723
      %v4752 = vunpack.c.l.b16 %v3724
      %v4753 = vunpack.c.l.b16 %v3725
      %v4754 = vunpack.c.l.b16 %v3726
      %v4755 = vunpack.c.l.b16 %v3727
      %v4756 = vunpack.c.l.b16 %v3728
      %v4757 = vunpack.c.l.b16 %v3729
      %v4758 = vunpack.c.l.b16 %v3730
      %v4759 = vunpack.c.l.b16 %v3731
      %v4760 = vunpack.c.l.b16 %v3732
      %v4761 = vunpack.c.l.b16 %v3733
      %v4762 = vunpack.c.l.b16 %v3734
      %v4763 = vunpack.c.l.b16 %v3735
      %v4764 = vunpack.c.l.b16 %v3736
      %v4765 = vunpack.c.l.b16 %v3737
      %v4766 = vunpack.c.l.b16 %v3738
      %v4767 = vunpack.c.l.b16 %v3739
      %v4768 = vunpack.c.l.b16 %v3740
      %v4769 = vunpack.c.l.b16 %v3741
      %v4770 = vunpack.c.l.b16 %v3742
      %v4771 = vunpack.c.l.b16 %v3743
      %v4772 = vunpack.c.l.b16 %v3744
      %v4773 = vunpack.c.l.b16 %v3745
      %v4774 = vunpack.c.l.b16 %v3746
      %v4775 = vunpack.c.l.b16 %v3747
      %v4776 = vunpack.c.l.b16 %v3748
      %v4777 = vunpack.c.l.b16 %v3749
      %v4778 = vunpack.c.l.b16 %v3750
      %v4779 = vunpack.c.l.b16 %v3751
      %v4780 = vunpack.c.l.b16 %v3752
      %v4781 = vunpack.c.l.b16 %v3753
      %v4782 = vunpack.c.l.b16 %v3754
      %v4783 = vunpack.c.l.b16 %v3755
      %v4784 = vunpack.c.l.b16 %v3756
      %v4785 = vunpack.c.l.b16 %v3757
      %v4786 = vunpack.c.l.b16 %v3758
      %v4787 = vunpack.c.l.b16 %v3759
      %v4788 = vunpack.c.l.b16 %v3760
      %v4789 = vunpack.c.l.b16 %v3761
      %v4790 = vunpack.c.l.b16 %v3762
      %v4791 = vunpack.c.l.b16 %v3763
      %v4792 = vunpack.c.l.b16 %v3764
      %v4793 = vunpack.c.l.b16 %v3765
      %v4794 = vunpack.c.l.b16 %v3766
      %v4795 = vunpack.c.l.b16 %v3767
      %v4796 = vunpack.c.l.b16 %v3768
      %v4797 = vunpack.c.l.b16 %v3769
      %v4798 = vunpack.c.l.b16 %v3770
      %v4799 = vunpack.c.l.b16 %v3771
      %v4800 = vunpack.c.l.b16 %v3772
      %v4801 = vunpack.c.l.b16 %v3773
      %v4802 = vunpack.c.l.b16 %v3774
      %v4803 = vunpack.c.l.b16 %v3775
      %v4804 = vunpack.c.l.b16 %v3776
      %v4805 = vunpack.c.l.b16 %v3777
      %v4806 = vunpack.c.l.b16 %v3778
      %v4807 = vunpack.c.l.b16 %v3779
      %v4808 = vunpack.c.l.b16 %v3780
      %v4809 = vunpack.c.l.b16 %v3781
      %v4810 = vunpack.c.l.b16 %v3782
      %v4811 = vunpack.c.l.b16 %v3783
      %v4812 = vunpack.c.l.b16 %v3784
      %v4813 = vunpack.c.l.b16 %v3785
      %v4814 = vunpack.c.l.b16 %v3786
      %v4815 = vunpack.c.l.b16 %v3787
      %v4816 = vunpack.c.l.b16 %v3788
      %v4817 = vunpack.c.l.b16 %v3789
      %v4818 = vunpack.c.l.b16 %v3790
      %v4819 = vunpack.c.l.b16 %v3791
      %v4820 = vunpack.c.l.b16 %v3792
      %v4821 = vunpack.c.l.b16 %v3793
      %v4822 = vunpack.c.l.b16 %v3794
      %v4823 = vunpack.c.l.b16 %v3795
      %v4824 = vunpack.c.l.b16 %v3796
      %v4825 = vunpack.c.l.b16 %v3797
      %v4826 = vunpack.c.l.b16 %v3798
      %v4827 = vunpack.c.l.b16 %v3799
      %v4828 = vunpack.c.l.b16 %v3800
      %v4829 = vunpack.c.l.b16 %v3801
      %v4830 = vunpack.c.l.b16 %v3802
      %v4831 = vunpack.c.l.b16 %v3803
      %v4832 = vunpack.c.l.b16 %v3804
      %v4833 = vunpack.c.l.b16 %v3805
      %v4834 = vunpack.c.l.b16 %v3806
      %v4835 = vunpack.c.l.b16 %v3807
      %v4836 = vunpack.c.l.b16 %v3808
      %v4837 = vunpack.c.l.b16 %v3809
      %v4838 = vunpack.c.l.b16 %v3810
      %v4839 = vunpack.c.l.b16 %v3811
      %v4840 = vunpack.c.l.b16 %v3812
      %v4841 = vunpack.c.l.b16 %v3813
      %v4842 = vunpack.c.l.b16 %v3814
      %v4843 = vunpack.c.l.b16 %v3815
      %v4844 = vunpack.c.l.b16 %v3816
      %v4845 = vunpack.c.l.b16 %v3817
      %v4846 = vunpack.c.l.b16 %v3818
      %v4847 = vunpack.c.l.b16 %v3819
      %v4848 = vunpack.c.l.b16 %v3820
      %v4849 = vunpack.c.l.b16 %v3821
      %v4850 = vunpack.c.l.b16 %v3822
      %v4851 = vunpack.c.l.b16 %v3823
      %v4852 = vunpack.c.l.b16 %v3824
      %v4853 = vunpack.c.l.b16 %v3825
      %v4854 = vunpack.c.l.b16 %v3826
      %v4855 = vunpack.c.l.b16 %v3827
      %v4856 = vunpack.c.l.b16 %v3828
      %v4857 = vunpack.c.l.b16 %v3829
      %v4858 = vpack.c.b16 %v4715, %v4714
      %v4859 = vpack.c.b16 %v4717, %v4716
      %v4860 = vpack.c.b16 %v4719, %v4718
      %v4861 = vpack.c.b16 %v4721, %v4720
      %v4862 = vpack.c.b16 %v4723, %v4722
      %v4863 = vpack.c.b16 %v4725, %v4724
      %v4864 = vpack.c.b16 %v4727, %v4726
      %v4865 = vpack.c.b16 %v4729, %v4728
      %v4866 = vpack.c.b16 %v4731, %v4730
      %v4867 = vpack.c.b16 %v4733, %v4732
      %v4868 = vpack.c.b16 %v4735, %v4734
      %v4869 = vpack.c.b16 %v4737, %v4736
      %v4870 = vpack.c.b16 %v4739, %v4738
      %v4871 = vpack.c.b16 %v4741, %v4740
      %v4872 = vpack.c.b16 %v4743, %v4742
      %v4873 = vpack.c.b16 %v4745, %v4744
      %v4874 = vpack.c.b16 %v4747, %v4746
      %v4875 = vpack.c.b16 %v4749, %v4748
      %v4876 = vpack.c.b16 %v4751, %v4750
      %v4877 = vpack.c.b16 %v4753, %v4752
      %v4878 = vpack.c.b16 %v4755, %v4754
      %v4879 = vpack.c.b16 %v4757, %v4756
      %v4880 = vpack.c.b16 %v4759, %v4758
      %v4881 = vpack.c.b16 %v4761, %v4760
      %v4882 = vpack.c.b16 %v4763, %v4762
      %v4883 = vpack.c.b16 %v4765, %v4764
      %v4884 = vpack.c.b16 %v4767, %v4766
      %v4885 = vpack.c.b16 %v4769, %v4768
      %v4886 = vpack.c.b16 %v4771, %v4770
      %v4887 = vpack.c.b16 %v4773, %v4772
      %v4888 = vpack.c.b16 %v4775, %v4774
      %v4889 = vpack.c.b16 %v4777, %v4776
      %v4890 = vpack.c.b16 %v4779, %v4778
      %v4891 = vpack.c.b16 %v4781, %v4780
      %v4892 = vpack.c.b16 %v4783, %v4782
      %v4893 = vpack.c.b16 %v4785, %v4784
      %v4894 = vpack.c.b16 %v4787, %v4786
      %v4895 = vpack.c.b16 %v4789, %v4788
      %v4896 = vpack.c.b16 %v4791, %v4790
      %v4897 = vpack.c.b16 %v4793, %v4792
      %v4898 = vpack.c.b16 %v4795, %v4794
      %v4899 = vpack.c.b16 %v4797, %v4796
      %v4900 = vpack.c.b16 %v4799, %v4798
      %v4901 = vpack.c.b16 %v4801, %v4800
      %v4902 = vpack.c.b16 %v4803, %v4802
      %v4903 = vpack.c.b16 %v4805, %v4804
      %v4904 = vpack.c.b16 %v4807, %v4806
      %v4905 = vpack.c.b16 %v4809, %v4808
      %v4906 = vpack.c.b16 %v4811, %v4810
      %v4907 = vpack.c.b16 %v4813, %v4812
      %v4908 = vpack.c.b16 %v4815, %v4814
      %v4909 = vpack.c.b16 %v4817, %v4816
      %v4910 = vpack.c.b16 %v4819, %v4818
      %v4911 = vpack.c.b16 %v4821, %v4820
      %v4912 = vpack.c.b16 %v4823, %v4822
      %v4913 = vpack.c.b16 %v4825, %v4824
      %v4914 = vpack.c.b16 %v4827, %v4826
      %v4915 = vpack.c.b16 %v4829, %v4828
      %v4916 = vpack.c.b16 %v4831, %v4830
      %v4917 = vpack.c.b16 %v4833, %v4832
      %v4918 = vpack.c.b16 %v4835, %v4834
      %v4919 = vpack.c.b16 %v4837, %v4836
      %v4920 = vpack.c.b16 %v4839, %v4838
      %v4921 = vpack.c.b16 %v4841, %v4840
      %v4922 = vpack.c.b16 %v4843, %v4842
      %v4923 = vpack.c.b16 %v4845, %v4844
      %v4924 = vpack.c.b16 %v4847, %v4846
      %v4925 = vpack.c.b16 %v4849, %v4848
      %v4926 = vpack.c.b16 %v4851, %v4850
      %v4927 = vpack.c.b16 %v4853, %v4852
      %v4928 = vpack.c.b16 %v4855, %v4854
      %v4929 = vpack.c.b16 %v4857, %v4856
      %5002 = vmatpush.bf16.msra.mxu0 %v4865
      %5003 = vmatpush.bf16.msra.mxu0 %v4864
      %5004 = vmatpush.bf16.msra.mxu0 %v4863
      %5005 = vmatpush.bf16.msra.mxu0 %v4862
      %5006 = vmatpush.bf16.msra.mxu0 %v4861
      %5007 = vmatpush.bf16.msra.mxu0 %v4860
      %5008 = vmatpush.bf16.msra.mxu0 %v4859
      %5009 = vmatpush.bf16.msra.mxu0 %v4858
      %5010 = vmatmul.bf16.gmra.mxu0 %v4282
      %v5011 = vpop.f32.mrf.mxu0
      %v5012 = vadd.f32 %v3832, %v5011
      %v5013 = vpop.f32.mrf.mxu0
      %v5014 = vadd.f32 %v3832, %v5013
      %5015 = vmatmul.bf16.gmra.mxu0 %v4291
      %v5016 = vpop.f32.mrf.mxu0
      %v5017 = vadd.f32 %v3832, %v5016
      %v5018 = vpop.f32.mrf.mxu0
      %v5019 = vadd.f32 %v3832, %v5018
      %5020 = vmatmul.bf16.gmra.mxu0 %v4300
      %v5021 = vpop.f32.mrf.mxu0
      %v5022 = vadd.f32 %v3832, %v5021
      %v5023 = vpop.f32.mrf.mxu0
      %v5024 = vadd.f32 %v3832, %v5023
      %5025 = vmatmul.bf16.gmra.mxu0 %v4309
      %v5026 = vpop.f32.mrf.mxu0
      %v5027 = vadd.f32 %v3832, %v5026
      %v5028 = vpop.f32.mrf.mxu0
      %v5029 = vadd.f32 %v3832, %v5028
      %5030 = vmatmul.bf16.gmra.mxu0 %v4318
      %v5031 = vpop.f32.mrf.mxu0
      %v5032 = vadd.f32 %v3832, %v5031
      %v5033 = vpop.f32.mrf.mxu0
      %v5034 = vadd.f32 %v3832, %v5033
      %5035 = vmatmul.bf16.gmra.mxu0 %v4327
      %v5036 = vpop.f32.mrf.mxu0
      %v5037 = vadd.f32 %v3832, %v5036
      %v5038 = vpop.f32.mrf.mxu0
      %v5039 = vadd.f32 %v3832, %v5038
      %5040 = vmatmul.bf16.gmra.mxu0 %v4336
      %v5041 = vpop.f32.mrf.mxu0
      %v5042 = vadd.f32 %v3832, %v5041
      %v5043 = vpop.f32.mrf.mxu0
      %v5044 = vadd.f32 %v3832, %v5043
      %5045 = vmatmul.bf16.gmra.mxu0 %v4345
      %v5046 = vpop.f32.mrf.mxu0
      %v5047 = vadd.f32 %v3832, %v5046
      %v5048 = vpop.f32.mrf.mxu0
      %v5049 = vadd.f32 %v3832, %v5048
      %5050 = vmatmul.bf16.gmra.mxu0 %v4354
      %v5051 = vpop.f32.mrf.mxu0
      %v5052 = vadd.f32 %v3832, %v5051
      %v5053 = vpop.f32.mrf.mxu0
      %v5054 = vadd.f32 %v3832, %v5053
      %5055 = vmatmul.bf16.gmra.mxu0 %v4363
      %v5056 = vpop.f32.mrf.mxu0
      %v5057 = vadd.f32 %v3832, %v5056
      %v5058 = vpop.f32.mrf.mxu0
      %v5059 = vadd.f32 %v3832, %v5058
      %5060 = vmatmul.bf16.gmra.mxu0 %v4372
      %v5061 = vpop.f32.mrf.mxu0
      %v5062 = vadd.f32 %v3832, %v5061
      %v5063 = vpop.f32.mrf.mxu0
      %v5064 = vadd.f32 %v3832, %v5063
      %5065 = vmatmul.bf16.gmra.mxu0 %v4381
      %v5066 = vpop.f32.mrf.mxu0
      %v5067 = vadd.f32 %v3832, %v5066
      %v5068 = vpop.f32.mrf.mxu0
      %v5069 = vadd.f32 %v3832, %v5068
      %5070 = vmatmul.bf16.gmra.mxu0 %v4390
      %v5071 = vpop.f32.mrf.mxu0
      %v5072 = vadd.f32 %v3832, %v5071
      %v5073 = vpop.f32.mrf.mxu0
      %v5074 = vadd.f32 %v3832, %v5073
      %5075 = vmatmul.bf16.gmra.mxu0 %v4399
      %v5076 = vpop.f32.mrf.mxu0
      %v5077 = vadd.f32 %v3832, %v5076
      %v5078 = vpop.f32.mrf.mxu0
      %v5079 = vadd.f32 %v3832, %v5078
      %5080 = vmatmul.bf16.gmra.mxu0 %v4408
      %v5081 = vpop.f32.mrf.mxu0
      %v5082 = vadd.f32 %v3832, %v5081
      %v5083 = vpop.f32.mrf.mxu0
      %v5084 = vadd.f32 %v3832, %v5083
      %5085 = vmatmul.bf16.gmra.mxu0 %v4417
      %v5086 = vpop.f32.mrf.mxu0
      %v5087 = vadd.f32 %v3832, %v5086
      %v5088 = vpop.f32.mrf.mxu0
      %v5089 = vadd.f32 %v3832, %v5088
      %5090 = vdwg.mxu0
      %5091 = vmatpush.bf16.msra.mxu0 %v4873
      %5092 = vmatpush.bf16.msra.mxu0 %v4872
      %5093 = vmatpush.bf16.msra.mxu0 %v4871
      %5094 = vmatpush.bf16.msra.mxu0 %v4870
      %5095 = vmatpush.bf16.msra.mxu0 %v4869
      %5096 = vmatpush.bf16.msra.mxu0 %v4868
      %5097 = vmatpush.bf16.msra.mxu0 %v4867
      %5098 = vmatpush.bf16.msra.mxu0 %v4866
      %5099 = vmatmul.bf16.gmra.mxu0 %v4283
      %v5100 = vpop.f32.mrf.mxu0
      %v5101 = vadd.f32 %v5012, %v5100
      %v5102 = vpop.f32.mrf.mxu0
      %v5103 = vadd.f32 %v5014, %v5102
      %5104 = vmatmul.bf16.gmra.mxu0 %v4292
      %v5105 = vpop.f32.mrf.mxu0
      %v5106 = vadd.f32 %v5017, %v5105
      %v5107 = vpop.f32.mrf.mxu0
      %v5108 = vadd.f32 %v5019, %v5107
      %5109 = vmatmul.bf16.gmra.mxu0 %v4301
      %v5110 = vpop.f32.mrf.mxu0
      %v5111 = vadd.f32 %v5022, %v5110
      %v5112 = vpop.f32.mrf.mxu0
      %v5113 = vadd.f32 %v5024, %v5112
      %5114 = vmatmul.bf16.gmra.mxu0 %v4310
      %v5115 = vpop.f32.mrf.mxu0
      %v5116 = vadd.f32 %v5027, %v5115
      %v5117 = vpop.f32.mrf.mxu0
      %v5118 = vadd.f32 %v5029, %v5117
      %5119 = vmatmul.bf16.gmra.mxu0 %v4319
      %v5120 = vpop.f32.mrf.mxu0
      %v5121 = vadd.f32 %v5032, %v5120
      %v5122 = vpop.f32.mrf.mxu0
      %v5123 = vadd.f32 %v5034, %v5122
      %5124 = vmatmul.bf16.gmra.mxu0 %v4328
      %v5125 = vpop.f32.mrf.mxu0
      %v5126 = vadd.f32 %v5037, %v5125
      %v5127 = vpop.f32.mrf.mxu0
      %v5128 = vadd.f32 %v5039, %v5127
      %5129 = vmatmul.bf16.gmra.mxu0 %v4337
      %v5130 = vpop.f32.mrf.mxu0
      %v5131 = vadd.f32 %v5042, %v5130
      %v5132 = vpop.f32.mrf.mxu0
      %v5133 = vadd.f32 %v5044, %v5132
      %5134 = vmatmul.bf16.gmra.mxu0 %v4346
      %v5135 = vpop.f32.mrf.mxu0
      %v5136 = vadd.f32 %v5047, %v5135
      %v5137 = vpop.f32.mrf.mxu0
      %v5138 = vadd.f32 %v5049, %v5137
      %5139 = vmatmul.bf16.gmra.mxu0 %v4355
      %v5140 = vpop.f32.mrf.mxu0
      %v5141 = vadd.f32 %v5052, %v5140
      %v5142 = vpop.f32.mrf.mxu0
      %v5143 = vadd.f32 %v5054, %v5142
      %5144 = vmatmul.bf16.gmra.mxu0 %v4364
      %v5145 = vpop.f32.mrf.mxu0
      %v5146 = vadd.f32 %v5057, %v5145
      %v5147 = vpop.f32.mrf.mxu0
      %v5148 = vadd.f32 %v5059, %v5147
      %5149 = vmatmul.bf16.gmra.mxu0 %v4373
      %v5150 = vpop.f32.mrf.mxu0
      %v5151 = vadd.f32 %v5062, %v5150
      %v5152 = vpop.f32.mrf.mxu0
      %v5153 = vadd.f32 %v5064, %v5152
      %5154 = vmatmul.bf16.gmra.mxu0 %v4382
      %v5155 = vpop.f32.mrf.mxu0
      %v5156 = vadd.f32 %v5067, %v5155
      %v5157 = vpop.f32.mrf.mxu0
      %v5158 = vadd.f32 %v5069, %v5157
      %5159 = vmatmul.bf16.gmra.mxu0 %v4391
      %v5160 = vpop.f32.mrf.mxu0
      %v5161 = vadd.f32 %v5072, %v5160
      %v5162 = vpop.f32.mrf.mxu0
      %v5163 = vadd.f32 %v5074, %v5162
      %5164 = vmatmul.bf16.gmra.mxu0 %v4400
      %v5165 = vpop.f32.mrf.mxu0
      %v5166 = vadd.f32 %v5077, %v5165
      %v5167 = vpop.f32.mrf.mxu0
      %v5168 = vadd.f32 %v5079, %v5167
      %5169 = vmatmul.bf16.gmra.mxu0 %v4409
      %v5170 = vpop.f32.mrf.mxu0
      %v5171 = vadd.f32 %v5082, %v5170
      %v5172 = vpop.f32.mrf.mxu0
      %v5173 = vadd.f32 %v5084, %v5172
      %5174 = vmatmul.bf16.gmra.mxu0 %v4418
      %v5175 = vpop.f32.mrf.mxu0
      %v5176 = vadd.f32 %v5087, %v5175
      %v5177 = vpop.f32.mrf.mxu0
      %v5178 = vadd.f32 %v5089, %v5177
      %5179 = vdwg.mxu0
      %5180 = vmatpush.bf16.msra.mxu0 %v4881
      %5181 = vmatpush.bf16.msra.mxu0 %v4880
      %5182 = vmatpush.bf16.msra.mxu0 %v4879
      %5183 = vmatpush.bf16.msra.mxu0 %v4878
      %5184 = vmatpush.bf16.msra.mxu0 %v4877
      %5185 = vmatpush.bf16.msra.mxu0 %v4876
      %5186 = vmatpush.bf16.msra.mxu0 %v4875
      %5187 = vmatpush.bf16.msra.mxu0 %v4874
      %5188 = vmatmul.bf16.gmra.mxu0 %v4284
      %v5189 = vpop.f32.mrf.mxu0
      %v5190 = vadd.f32 %v5101, %v5189
      %v5191 = vpop.f32.mrf.mxu0
      %v5192 = vadd.f32 %v5103, %v5191
      %5193 = vmatmul.bf16.gmra.mxu0 %v4293
      %v5194 = vpop.f32.mrf.mxu0
      %v5195 = vadd.f32 %v5106, %v5194
      %v5196 = vpop.f32.mrf.mxu0
      %v5197 = vadd.f32 %v5108, %v5196
      %5198 = vmatmul.bf16.gmra.mxu0 %v4302
      %v5199 = vpop.f32.mrf.mxu0
      %v5200 = vadd.f32 %v5111, %v5199
      %v5201 = vpop.f32.mrf.mxu0
      %v5202 = vadd.f32 %v5113, %v5201
      %5203 = vmatmul.bf16.gmra.mxu0 %v4311
      %v5204 = vpop.f32.mrf.mxu0
      %v5205 = vadd.f32 %v5116, %v5204
      %v5206 = vpop.f32.mrf.mxu0
      %v5207 = vadd.f32 %v5118, %v5206
      %5208 = vmatmul.bf16.gmra.mxu0 %v4320
      %v5209 = vpop.f32.mrf.mxu0
      %v5210 = vadd.f32 %v5121, %v5209
      %v5211 = vpop.f32.mrf.mxu0
      %v5212 = vadd.f32 %v5123, %v5211
      %5213 = vmatmul.bf16.gmra.mxu0 %v4329
      %v5214 = vpop.f32.mrf.mxu0
      %v5215 = vadd.f32 %v5126, %v5214
      %v5216 = vpop.f32.mrf.mxu0
      %v5217 = vadd.f32 %v5128, %v5216
      %5218 = vmatmul.bf16.gmra.mxu0 %v4338
      %v5219 = vpop.f32.mrf.mxu0
      %v5220 = vadd.f32 %v5131, %v5219
      %v5221 = vpop.f32.mrf.mxu0
      %v5222 = vadd.f32 %v5133, %v5221
      %5223 = vmatmul.bf16.gmra.mxu0 %v4347
      %v5224 = vpop.f32.mrf.mxu0
      %v5225 = vadd.f32 %v5136, %v5224
      %v5226 = vpop.f32.mrf.mxu0
      %v5227 = vadd.f32 %v5138, %v5226
      %5228 = vmatmul.bf16.gmra.mxu0 %v4356
      %v5229 = vpop.f32.mrf.mxu0
      %v5230 = vadd.f32 %v5141, %v5229
      %v5231 = vpop.f32.mrf.mxu0
      %v5232 = vadd.f32 %v5143, %v5231
      %5233 = vmatmul.bf16.gmra.mxu0 %v4365
      %v5234 = vpop.f32.mrf.mxu0
      %v5235 = vadd.f32 %v5146, %v5234
      %v5236 = vpop.f32.mrf.mxu0
      %v5237 = vadd.f32 %v5148, %v5236
      %5238 = vmatmul.bf16.gmra.mxu0 %v4374
      %v5239 = vpop.f32.mrf.mxu0
      %v5240 = vadd.f32 %v5151, %v5239
      %v5241 = vpop.f32.mrf.mxu0
      %v5242 = vadd.f32 %v5153, %v5241
      %5243 = vmatmul.bf16.gmra.mxu0 %v4383
      %v5244 = vpop.f32.mrf.mxu0
      %v5245 = vadd.f32 %v5156, %v5244
      %v5246 = vpop.f32.mrf.mxu0
      %v5247 = vadd.f32 %v5158, %v5246
      %5248 = vmatmul.bf16.gmra.mxu0 %v4392
      %v5249 = vpop.f32.mrf.mxu0
      %v5250 = vadd.f32 %v5161, %v5249
      %v5251 = vpop.f32.mrf.mxu0
      %v5252 = vadd.f32 %v5163, %v5251
      %5253 = vmatmul.bf16.gmra.mxu0 %v4401
      %v5254 = vpop.f32.mrf.mxu0
      %v5255 = vadd.f32 %v5166, %v5254
      %v5256 = vpop.f32.mrf.mxu0
      %v5257 = vadd.f32 %v5168, %v5256
      %5258 = vmatmul.bf16.gmra.mxu0 %v4410
      %v5259 = vpop.f32.mrf.mxu0
      %v5260 = vadd.f32 %v5171, %v5259
      %v5261 = vpop.f32.mrf.mxu0
      %v5262 = vadd.f32 %v5173, %v5261
      %5263 = vmatmul.bf16.gmra.mxu0 %v4419
      %v5264 = vpop.f32.mrf.mxu0
      %v5265 = vadd.f32 %v5176, %v5264
      %v5266 = vpop.f32.mrf.mxu0
      %v5267 = vadd.f32 %v5178, %v5266
      %5268 = vdwg.mxu0
      %5269 = vmatpush.bf16.msra.mxu0 %v4889
      %5270 = vmatpush.bf16.msra.mxu0 %v4888
      %5271 = vmatpush.bf16.msra.mxu0 %v4887
      %5272 = vmatpush.bf16.msra.mxu0 %v4886
      %5273 = vmatpush.bf16.msra.mxu0 %v4885
      %5274 = vmatpush.bf16.msra.mxu0 %v4884
      %5275 = vmatpush.bf16.msra.mxu0 %v4883
      %5276 = vmatpush.bf16.msra.mxu0 %v4882
      %5277 = vmatmul.bf16.gmra.mxu0 %v4285
      %v5278 = vpop.f32.mrf.mxu0
      %v5279 = vadd.f32 %v5190, %v5278
      %v5280 = vpop.f32.mrf.mxu0
      %v5281 = vadd.f32 %v5192, %v5280
      %5282 = vmatmul.bf16.gmra.mxu0 %v4294
      %v5283 = vpop.f32.mrf.mxu0
      %v5284 = vadd.f32 %v5195, %v5283
      %v5285 = vpop.f32.mrf.mxu0
      %v5286 = vadd.f32 %v5197, %v5285
      %5287 = vmatmul.bf16.gmra.mxu0 %v4303
      %v5288 = vpop.f32.mrf.mxu0
      %v5289 = vadd.f32 %v5200, %v5288
      %v5290 = vpop.f32.mrf.mxu0
      %v5291 = vadd.f32 %v5202, %v5290
      %5292 = vmatmul.bf16.gmra.mxu0 %v4312
      %v5293 = vpop.f32.mrf.mxu0
      %v5294 = vadd.f32 %v5205, %v5293
      %v5295 = vpop.f32.mrf.mxu0
      %v5296 = vadd.f32 %v5207, %v5295
      %5297 = vmatmul.bf16.gmra.mxu0 %v4321
      %v5298 = vpop.f32.mrf.mxu0
      %v5299 = vadd.f32 %v5210, %v5298
      %v5300 = vpop.f32.mrf.mxu0
      %v5301 = vadd.f32 %v5212, %v5300
      %5302 = vmatmul.bf16.gmra.mxu0 %v4330
      %v5303 = vpop.f32.mrf.mxu0
      %v5304 = vadd.f32 %v5215, %v5303
      %v5305 = vpop.f32.mrf.mxu0
      %v5306 = vadd.f32 %v5217, %v5305
      %5307 = vmatmul.bf16.gmra.mxu0 %v4339
      %v5308 = vpop.f32.mrf.mxu0
      %v5309 = vadd.f32 %v5220, %v5308
      %v5310 = vpop.f32.mrf.mxu0
      %v5311 = vadd.f32 %v5222, %v5310
      %5312 = vmatmul.bf16.gmra.mxu0 %v4348
      %v5313 = vpop.f32.mrf.mxu0
      %v5314 = vadd.f32 %v5225, %v5313
      %v5315 = vpop.f32.mrf.mxu0
      %v5316 = vadd.f32 %v5227, %v5315
      %5317 = vmatmul.bf16.gmra.mxu0 %v4357
      %v5318 = vpop.f32.mrf.mxu0
      %v5319 = vadd.f32 %v5230, %v5318
      %v5320 = vpop.f32.mrf.mxu0
      %v5321 = vadd.f32 %v5232, %v5320
      %5322 = vmatmul.bf16.gmra.mxu0 %v4366
      %v5323 = vpop.f32.mrf.mxu0
      %v5324 = vadd.f32 %v5235, %v5323
      %v5325 = vpop.f32.mrf.mxu0
      %v5326 = vadd.f32 %v5237, %v5325
      %5327 = vmatmul.bf16.gmra.mxu0 %v4375
      %v5328 = vpop.f32.mrf.mxu0
      %v5329 = vadd.f32 %v5240, %v5328
      %v5330 = vpop.f32.mrf.mxu0
      %v5331 = vadd.f32 %v5242, %v5330
      %5332 = vmatmul.bf16.gmra.mxu0 %v4384
      %v5333 = vpop.f32.mrf.mxu0
      %v5334 = vadd.f32 %v5245, %v5333
      %v5335 = vpop.f32.mrf.mxu0
      %v5336 = vadd.f32 %v5247, %v5335
      %5337 = vmatmul.bf16.gmra.mxu0 %v4393
      %v5338 = vpop.f32.mrf.mxu0
      %v5339 = vadd.f32 %v5250, %v5338
      %v5340 = vpop.f32.mrf.mxu0
      %v5341 = vadd.f32 %v5252, %v5340
      %5342 = vmatmul.bf16.gmra.mxu0 %v4402
      %v5343 = vpop.f32.mrf.mxu0
      %v5344 = vadd.f32 %v5255, %v5343
      %v5345 = vpop.f32.mrf.mxu0
      %v5346 = vadd.f32 %v5257, %v5345
      %5347 = vmatmul.bf16.gmra.mxu0 %v4411
      %v5348 = vpop.f32.mrf.mxu0
      %v5349 = vadd.f32 %v5260, %v5348
      %v5350 = vpop.f32.mrf.mxu0
      %v5351 = vadd.f32 %v5262, %v5350
      %5352 = vmatmul.bf16.gmra.mxu0 %v4420
      %v5353 = vpop.f32.mrf.mxu0
      %v5354 = vadd.f32 %v5265, %v5353
      %v5355 = vpop.f32.mrf.mxu0
      %v5356 = vadd.f32 %v5267, %v5355
      %5357 = vdwg.mxu0
      %5358 = vmatpush.bf16.msra.mxu0 %v4897
      %5359 = vmatpush.bf16.msra.mxu0 %v4896
      %5360 = vmatpush.bf16.msra.mxu0 %v4895
      %5361 = vmatpush.bf16.msra.mxu0 %v4894
      %5362 = vmatpush.bf16.msra.mxu0 %v4893
      %5363 = vmatpush.bf16.msra.mxu0 %v4892
      %5364 = vmatpush.bf16.msra.mxu0 %v4891
      %5365 = vmatpush.bf16.msra.mxu0 %v4890
      %5366 = vmatmul.bf16.gmra.mxu0 %v4286
      %v5367 = vpop.f32.mrf.mxu0
      %v5368 = vadd.f32 %v5279, %v5367
      %v5369 = vpop.f32.mrf.mxu0
      %v5370 = vadd.f32 %v5281, %v5369
      %5371 = vmatmul.bf16.gmra.mxu0 %v4295
      %v5372 = vpop.f32.mrf.mxu0
      %v5373 = vadd.f32 %v5284, %v5372
      %v5374 = vpop.f32.mrf.mxu0
      %v5375 = vadd.f32 %v5286, %v5374
      %5376 = vmatmul.bf16.gmra.mxu0 %v4304
      %v5377 = vpop.f32.mrf.mxu0
      %v5378 = vadd.f32 %v5289, %v5377
      %v5379 = vpop.f32.mrf.mxu0
      %v5380 = vadd.f32 %v5291, %v5379
      %5381 = vmatmul.bf16.gmra.mxu0 %v4313
      %v5382 = vpop.f32.mrf.mxu0
      %v5383 = vadd.f32 %v5294, %v5382
      %v5384 = vpop.f32.mrf.mxu0
      %v5385 = vadd.f32 %v5296, %v5384
      %5386 = vmatmul.bf16.gmra.mxu0 %v4322
      %v5387 = vpop.f32.mrf.mxu0
      %v5388 = vadd.f32 %v5299, %v5387
      %v5389 = vpop.f32.mrf.mxu0
      %v5390 = vadd.f32 %v5301, %v5389
      %5391 = vmatmul.bf16.gmra.mxu0 %v4331
      %v5392 = vpop.f32.mrf.mxu0
      %v5393 = vadd.f32 %v5304, %v5392
      %v5394 = vpop.f32.mrf.mxu0
      %v5395 = vadd.f32 %v5306, %v5394
      %5396 = vmatmul.bf16.gmra.mxu0 %v4340
      %v5397 = vpop.f32.mrf.mxu0
      %v5398 = vadd.f32 %v5309, %v5397
      %v5399 = vpop.f32.mrf.mxu0
      %v5400 = vadd.f32 %v5311, %v5399
      %5401 = vmatmul.bf16.gmra.mxu0 %v4349
      %v5402 = vpop.f32.mrf.mxu0
      %v5403 = vadd.f32 %v5314, %v5402
      %v5404 = vpop.f32.mrf.mxu0
      %v5405 = vadd.f32 %v5316, %v5404
      %5406 = vmatmul.bf16.gmra.mxu0 %v4358
      %v5407 = vpop.f32.mrf.mxu0
      %v5408 = vadd.f32 %v5319, %v5407
      %v5409 = vpop.f32.mrf.mxu0
      %v5410 = vadd.f32 %v5321, %v5409
      %5411 = vmatmul.bf16.gmra.mxu0 %v4367
      %v5412 = vpop.f32.mrf.mxu0
      %v5413 = vadd.f32 %v5324, %v5412
      %v5414 = vpop.f32.mrf.mxu0
      %v5415 = vadd.f32 %v5326, %v5414
      %5416 = vmatmul.bf16.gmra.mxu0 %v4376
      %v5417 = vpop.f32.mrf.mxu0
      %v5418 = vadd.f32 %v5329, %v5417
      %v5419 = vpop.f32.mrf.mxu0
      %v5420 = vadd.f32 %v5331, %v5419
      %5421 = vmatmul.bf16.gmra.mxu0 %v4385
      %v5422 = vpop.f32.mrf.mxu0
      %v5423 = vadd.f32 %v5334, %v5422
      %v5424 = vpop.f32.mrf.mxu0
      %v5425 = vadd.f32 %v5336, %v5424
      %5426 = vmatmul.bf16.gmra.mxu0 %v4394
      %v5427 = vpop.f32.mrf.mxu0
      %v5428 = vadd.f32 %v5339, %v5427
      %v5429 = vpop.f32.mrf.mxu0
      %v5430 = vadd.f32 %v5341, %v5429
      %5431 = vmatmul.bf16.gmra.mxu0 %v4403
      %v5432 = vpop.f32.mrf.mxu0
      %v5433 = vadd.f32 %v5344, %v5432
      %v5434 = vpop.f32.mrf.mxu0
      %v5435 = vadd.f32 %v5346, %v5434
      %5436 = vmatmul.bf16.gmra.mxu0 %v4412
      %v5437 = vpop.f32.mrf.mxu0
      %v5438 = vadd.f32 %v5349, %v5437
      %v5439 = vpop.f32.mrf.mxu0
      %v5440 = vadd.f32 %v5351, %v5439
      %5441 = vmatmul.bf16.gmra.mxu0 %v4421
      %v5442 = vpop.f32.mrf.mxu0
      %v5443 = vadd.f32 %v5354, %v5442
      %v5444 = vpop.f32.mrf.mxu0
      %v5445 = vadd.f32 %v5356, %v5444
      %5446 = vdwg.mxu0
      %5447 = vmatpush.bf16.msra.mxu0 %v4905
      %5448 = vmatpush.bf16.msra.mxu0 %v4904
      %5449 = vmatpush.bf16.msra.mxu0 %v4903
      %5450 = vmatpush.bf16.msra.mxu0 %v4902
      %5451 = vmatpush.bf16.msra.mxu0 %v4901
      %5452 = vmatpush.bf16.msra.mxu0 %v4900
      %5453 = vmatpush.bf16.msra.mxu0 %v4899
      %5454 = vmatpush.bf16.msra.mxu0 %v4898
      %5455 = vmatmul.bf16.gmra.mxu0 %v4287
      %v5456 = vpop.f32.mrf.mxu0
      %v5457 = vadd.f32 %v5368, %v5456
      %v5458 = vpop.f32.mrf.mxu0
      %v5459 = vadd.f32 %v5370, %v5458
      %5460 = vmatmul.bf16.gmra.mxu0 %v4296
      %v5461 = vpop.f32.mrf.mxu0
      %v5462 = vadd.f32 %v5373, %v5461
      %v5463 = vpop.f32.mrf.mxu0
      %v5464 = vadd.f32 %v5375, %v5463
      %5465 = vmatmul.bf16.gmra.mxu0 %v4305
      %v5466 = vpop.f32.mrf.mxu0
      %v5467 = vadd.f32 %v5378, %v5466
      %v5468 = vpop.f32.mrf.mxu0
      %v5469 = vadd.f32 %v5380, %v5468
      %5470 = vmatmul.bf16.gmra.mxu0 %v4314
      %v5471 = vpop.f32.mrf.mxu0
      %v5472 = vadd.f32 %v5383, %v5471
      %v5473 = vpop.f32.mrf.mxu0
      %v5474 = vadd.f32 %v5385, %v5473
      %5475 = vmatmul.bf16.gmra.mxu0 %v4323
      %v5476 = vpop.f32.mrf.mxu0
      %v5477 = vadd.f32 %v5388, %v5476
      %v5478 = vpop.f32.mrf.mxu0
      %v5479 = vadd.f32 %v5390, %v5478
      %5480 = vmatmul.bf16.gmra.mxu0 %v4332
      %v5481 = vpop.f32.mrf.mxu0
      %v5482 = vadd.f32 %v5393, %v5481
      %v5483 = vpop.f32.mrf.mxu0
      %v5484 = vadd.f32 %v5395, %v5483
      %5485 = vmatmul.bf16.gmra.mxu0 %v4341
      %v5486 = vpop.f32.mrf.mxu0
      %v5487 = vadd.f32 %v5398, %v5486
      %v5488 = vpop.f32.mrf.mxu0
      %v5489 = vadd.f32 %v5400, %v5488
      %5490 = vmatmul.bf16.gmra.mxu0 %v4350
      %v5491 = vpop.f32.mrf.mxu0
      %v5492 = vadd.f32 %v5403, %v5491
      %v5493 = vpop.f32.mrf.mxu0
      %v5494 = vadd.f32 %v5405, %v5493
      %5495 = vmatmul.bf16.gmra.mxu0 %v4359
      %v5496 = vpop.f32.mrf.mxu0
      %v5497 = vadd.f32 %v5408, %v5496
      %v5498 = vpop.f32.mrf.mxu0
      %v5499 = vadd.f32 %v5410, %v5498
      %5500 = vmatmul.bf16.gmra.mxu0 %v4368
      %v5501 = vpop.f32.mrf.mxu0
      %v5502 = vadd.f32 %v5413, %v5501
      %v5503 = vpop.f32.mrf.mxu0
      %v5504 = vadd.f32 %v5415, %v5503
      %5505 = vmatmul.bf16.gmra.mxu0 %v4377
      %v5506 = vpop.f32.mrf.mxu0
      %v5507 = vadd.f32 %v5418, %v5506
      %v5508 = vpop.f32.mrf.mxu0
      %v5509 = vadd.f32 %v5420, %v5508
      %5510 = vmatmul.bf16.gmra.mxu0 %v4386
      %v5511 = vpop.f32.mrf.mxu0
      %v5512 = vadd.f32 %v5423, %v5511
      %v5513 = vpop.f32.mrf.mxu0
      %v5514 = vadd.f32 %v5425, %v5513
      %5515 = vmatmul.bf16.gmra.mxu0 %v4395
      %v5516 = vpop.f32.mrf.mxu0
      %v5517 = vadd.f32 %v5428, %v5516
      %v5518 = vpop.f32.mrf.mxu0
      %v5519 = vadd.f32 %v5430, %v5518
      %5520 = vmatmul.bf16.gmra.mxu0 %v4404
      %v5521 = vpop.f32.mrf.mxu0
      %v5522 = vadd.f32 %v5433, %v5521
      %v5523 = vpop.f32.mrf.mxu0
      %v5524 = vadd.f32 %v5435, %v5523
      %5525 = vmatmul.bf16.gmra.mxu0 %v4413
      %v5526 = vpop.f32.mrf.mxu0
      %v5527 = vadd.f32 %v5438, %v5526
      %v5528 = vpop.f32.mrf.mxu0
      %v5529 = vadd.f32 %v5440, %v5528
      %5530 = vmatmul.bf16.gmra.mxu0 %v4422
      %v5531 = vpop.f32.mrf.mxu0
      %v5532 = vadd.f32 %v5443, %v5531
      %v5533 = vpop.f32.mrf.mxu0
      %v5534 = vadd.f32 %v5445, %v5533
      %5535 = vdwg.mxu0
      %5536 = vmatpush.bf16.msra.mxu0 %v4913
      %5537 = vmatpush.bf16.msra.mxu0 %v4912
      %5538 = vmatpush.bf16.msra.mxu0 %v4911
      %5539 = vmatpush.bf16.msra.mxu0 %v4910
      %5540 = vmatpush.bf16.msra.mxu0 %v4909
      %5541 = vmatpush.bf16.msra.mxu0 %v4908
      %5542 = vmatpush.bf16.msra.mxu0 %v4907
      %5543 = vmatpush.bf16.msra.mxu0 %v4906
      %5544 = vmatmul.bf16.gmra.mxu0 %v4288
      %v5545 = vpop.f32.mrf.mxu0
      %v5546 = vadd.f32 %v5457, %v5545
      %v5547 = vpop.f32.mrf.mxu0
      %v5548 = vadd.f32 %v5459, %v5547
      %5549 = vmatmul.bf16.gmra.mxu0 %v4297
      %v5550 = vpop.f32.mrf.mxu0
      %v5551 = vadd.f32 %v5462, %v5550
      %v5552 = vpop.f32.mrf.mxu0
      %v5553 = vadd.f32 %v5464, %v5552
      %5554 = vmatmul.bf16.gmra.mxu0 %v4306
      %v5555 = vpop.f32.mrf.mxu0
      %v5556 = vadd.f32 %v5467, %v5555
      %v5557 = vpop.f32.mrf.mxu0
      %v5558 = vadd.f32 %v5469, %v5557
      %5559 = vmatmul.bf16.gmra.mxu0 %v4315
      %v5560 = vpop.f32.mrf.mxu0
      %v5561 = vadd.f32 %v5472, %v5560
      %v5562 = vpop.f32.mrf.mxu0
      %v5563 = vadd.f32 %v5474, %v5562
      %5564 = vmatmul.bf16.gmra.mxu0 %v4324
      %v5565 = vpop.f32.mrf.mxu0
      %v5566 = vadd.f32 %v5477, %v5565
      %v5567 = vpop.f32.mrf.mxu0
      %v5568 = vadd.f32 %v5479, %v5567
      %5569 = vmatmul.bf16.gmra.mxu0 %v4333
      %v5570 = vpop.f32.mrf.mxu0
      %v5571 = vadd.f32 %v5482, %v5570
      %v5572 = vpop.f32.mrf.mxu0
      %v5573 = vadd.f32 %v5484, %v5572
      %5574 = vmatmul.bf16.gmra.mxu0 %v4342
      %v5575 = vpop.f32.mrf.mxu0
      %v5576 = vadd.f32 %v5487, %v5575
      %v5577 = vpop.f32.mrf.mxu0
      %v5578 = vadd.f32 %v5489, %v5577
      %5579 = vmatmul.bf16.gmra.mxu0 %v4351
      %v5580 = vpop.f32.mrf.mxu0
      %v5581 = vadd.f32 %v5492, %v5580
      %v5582 = vpop.f32.mrf.mxu0
      %v5583 = vadd.f32 %v5494, %v5582
      %5584 = vmatmul.bf16.gmra.mxu0 %v4360
      %v5585 = vpop.f32.mrf.mxu0
      %v5586 = vadd.f32 %v5497, %v5585
      %v5587 = vpop.f32.mrf.mxu0
      %v5588 = vadd.f32 %v5499, %v5587
      %5589 = vmatmul.bf16.gmra.mxu0 %v4369
      %v5590 = vpop.f32.mrf.mxu0
      %v5591 = vadd.f32 %v5502, %v5590
      %v5592 = vpop.f32.mrf.mxu0
      %v5593 = vadd.f32 %v5504, %v5592
      %5594 = vmatmul.bf16.gmra.mxu0 %v4378
      %v5595 = vpop.f32.mrf.mxu0
      %v5596 = vadd.f32 %v5507, %v5595
      %v5597 = vpop.f32.mrf.mxu0
      %v5598 = vadd.f32 %v5509, %v5597
      %5599 = vmatmul.bf16.gmra.mxu0 %v4387
      %v5600 = vpop.f32.mrf.mxu0
      %v5601 = vadd.f32 %v5512, %v5600
      %v5602 = vpop.f32.mrf.mxu0
      %v5603 = vadd.f32 %v5514, %v5602
      %5604 = vmatmul.bf16.gmra.mxu0 %v4396
      %v5605 = vpop.f32.mrf.mxu0
      %v5606 = vadd.f32 %v5517, %v5605
      %v5607 = vpop.f32.mrf.mxu0
      %v5608 = vadd.f32 %v5519, %v5607
      %5609 = vmatmul.bf16.gmra.mxu0 %v4405
      %v5610 = vpop.f32.mrf.mxu0
      %v5611 = vadd.f32 %v5522, %v5610
      %v5612 = vpop.f32.mrf.mxu0
      %v5613 = vadd.f32 %v5524, %v5612
      %5614 = vmatmul.bf16.gmra.mxu0 %v4414
      %v5615 = vpop.f32.mrf.mxu0
      %v5616 = vadd.f32 %v5527, %v5615
      %v5617 = vpop.f32.mrf.mxu0
      %v5618 = vadd.f32 %v5529, %v5617
      %5619 = vmatmul.bf16.gmra.mxu0 %v4423
      %v5620 = vpop.f32.mrf.mxu0
      %v5621 = vadd.f32 %v5532, %v5620
      %v5622 = vpop.f32.mrf.mxu0
      %v5623 = vadd.f32 %v5534, %v5622
      %5624 = vdwg.mxu0
      %5625 = vmatpush.bf16.msra.mxu0 %v4921
      %5626 = vmatpush.bf16.msra.mxu0 %v4920
      %5627 = vmatpush.bf16.msra.mxu0 %v4919
      %5628 = vmatpush.bf16.msra.mxu0 %v4918
      %5629 = vmatpush.bf16.msra.mxu0 %v4917
      %5630 = vmatpush.bf16.msra.mxu0 %v4916
      %5631 = vmatpush.bf16.msra.mxu0 %v4915
      %5632 = vmatpush.bf16.msra.mxu0 %v4914
      %5633 = vmatmul.bf16.gmra.mxu0 %v4289
      %v5634 = vpop.f32.mrf.mxu0
      %v5635 = vadd.f32 %v5546, %v5634
      %v5636 = vpop.f32.mrf.mxu0
      %v5637 = vadd.f32 %v5548, %v5636
      %5638 = vmatmul.bf16.gmra.mxu0 %v4298
      %v5639 = vpop.f32.mrf.mxu0
      %v5640 = vadd.f32 %v5551, %v5639
      %v5641 = vpop.f32.mrf.mxu0
      %v5642 = vadd.f32 %v5553, %v5641
      %5643 = vmatmul.bf16.gmra.mxu0 %v4307
      %v5644 = vpop.f32.mrf.mxu0
      %v5645 = vadd.f32 %v5556, %v5644
      %v5646 = vpop.f32.mrf.mxu0
      %v5647 = vadd.f32 %v5558, %v5646
      %5648 = vmatmul.bf16.gmra.mxu0 %v4316
      %v5649 = vpop.f32.mrf.mxu0
      %v5650 = vadd.f32 %v5561, %v5649
      %v5651 = vpop.f32.mrf.mxu0
      %v5652 = vadd.f32 %v5563, %v5651
      %5653 = vmatmul.bf16.gmra.mxu0 %v4325
      %v5654 = vpop.f32.mrf.mxu0
      %v5655 = vadd.f32 %v5566, %v5654
      %v5656 = vpop.f32.mrf.mxu0
      %v5657 = vadd.f32 %v5568, %v5656
      %5658 = vmatmul.bf16.gmra.mxu0 %v4334
      %v5659 = vpop.f32.mrf.mxu0
      %v5660 = vadd.f32 %v5571, %v5659
      %v5661 = vpop.f32.mrf.mxu0
      %v5662 = vadd.f32 %v5573, %v5661
      %5663 = vmatmul.bf16.gmra.mxu0 %v4343
      %v5664 = vpop.f32.mrf.mxu0
      %v5665 = vadd.f32 %v5576, %v5664
      %v5666 = vpop.f32.mrf.mxu0
      %v5667 = vadd.f32 %v5578, %v5666
      %5668 = vmatmul.bf16.gmra.mxu0 %v4352
      %v5669 = vpop.f32.mrf.mxu0
      %v5670 = vadd.f32 %v5581, %v5669
      %v5671 = vpop.f32.mrf.mxu0
      %v5672 = vadd.f32 %v5583, %v5671
      %5673 = vmatmul.bf16.gmra.mxu0 %v4361
      %v5674 = vpop.f32.mrf.mxu0
      %v5675 = vadd.f32 %v5586, %v5674
      %v5676 = vpop.f32.mrf.mxu0
      %v5677 = vadd.f32 %v5588, %v5676
      %5678 = vmatmul.bf16.gmra.mxu0 %v4370
      %v5679 = vpop.f32.mrf.mxu0
      %v5680 = vadd.f32 %v5591, %v5679
      %v5681 = vpop.f32.mrf.mxu0
      %v5682 = vadd.f32 %v5593, %v5681
      %5683 = vmatmul.bf16.gmra.mxu0 %v4379
      %v5684 = vpop.f32.mrf.mxu0
      %v5685 = vadd.f32 %v5596, %v5684
      %v5686 = vpop.f32.mrf.mxu0
      %v5687 = vadd.f32 %v5598, %v5686
      %5688 = vmatmul.bf16.gmra.mxu0 %v4388
      %v5689 = vpop.f32.mrf.mxu0
      %v5690 = vadd.f32 %v5601, %v5689
      %v5691 = vpop.f32.mrf.mxu0
      %v5692 = vadd.f32 %v5603, %v5691
      %5693 = vmatmul.bf16.gmra.mxu0 %v4397
      %v5694 = vpop.f32.mrf.mxu0
      %v5695 = vadd.f32 %v5606, %v5694
      %v5696 = vpop.f32.mrf.mxu0
      %v5697 = vadd.f32 %v5608, %v5696
      %5698 = vmatmul.bf16.gmra.mxu0 %v4406
      %v5699 = vpop.f32.mrf.mxu0
      %v5700 = vadd.f32 %v5611, %v5699
      %v5701 = vpop.f32.mrf.mxu0
      %v5702 = vadd.f32 %v5613, %v5701
      %5703 = vmatmul.bf16.gmra.mxu0 %v4415
      %v5704 = vpop.f32.mrf.mxu0
      %v5705 = vadd.f32 %v5616, %v5704
      %v5706 = vpop.f32.mrf.mxu0
      %v5707 = vadd.f32 %v5618, %v5706
      %5708 = vmatmul.bf16.gmra.mxu0 %v4424
      %v5709 = vpop.f32.mrf.mxu0
      %v5710 = vadd.f32 %v5621, %v5709
      %v5711 = vpop.f32.mrf.mxu0
      %v5712 = vadd.f32 %v5623, %v5711
      %5713 = vdwg.mxu0
      %5714 = vmatpush.bf16.msra.mxu0 %v4929
      %5715 = vmatpush.bf16.msra.mxu0 %v4928
      %5716 = vmatpush.bf16.msra.mxu0 %v4927
      %5717 = vmatpush.bf16.msra.mxu0 %v4926
      %5718 = vmatpush.bf16.msra.mxu0 %v4925
      %5719 = vmatpush.bf16.msra.mxu0 %v4924
      %5720 = vmatpush.bf16.msra.mxu0 %v4923
      %5721 = vmatpush.bf16.msra.mxu0 %v4922
      %5722 = vmatmul.bf16.gmra.mxu0 %v4290
      %v5723 = vpop.f32.mrf.mxu0
      %v5724 = vadd.f32 %v5635, %v5723
      %v5725 = vpop.f32.mrf.mxu0
      %v5726 = vadd.f32 %v5637, %v5725
      %5727 = vmatmul.bf16.gmra.mxu0 %v4299
      %v5728 = vpop.f32.mrf.mxu0
      %v5729 = vadd.f32 %v5640, %v5728
      %v5730 = vpop.f32.mrf.mxu0
      %v5731 = vadd.f32 %v5642, %v5730
      %5732 = vmatmul.bf16.gmra.mxu0 %v4308
      %v5733 = vpop.f32.mrf.mxu0
      %v5734 = vadd.f32 %v5645, %v5733
      %v5735 = vpop.f32.mrf.mxu0
      %v5736 = vadd.f32 %v5647, %v5735
      %5737 = vmatmul.bf16.gmra.mxu0 %v4317
      %v5738 = vpop.f32.mrf.mxu0
      %v5739 = vadd.f32 %v5650, %v5738
      %v5740 = vpop.f32.mrf.mxu0
      %v5741 = vadd.f32 %v5652, %v5740
      %5742 = vmatmul.bf16.gmra.mxu0 %v4326
      %v5743 = vpop.f32.mrf.mxu0
      %v5744 = vadd.f32 %v5655, %v5743
      %v5745 = vpop.f32.mrf.mxu0
      %v5746 = vadd.f32 %v5657, %v5745
      %5747 = vmatmul.bf16.gmra.mxu0 %v4335
      %v5748 = vpop.f32.mrf.mxu0
      %v5749 = vadd.f32 %v5660, %v5748
      %v5750 = vpop.f32.mrf.mxu0
      %v5751 = vadd.f32 %v5662, %v5750
      %5752 = vmatmul.bf16.gmra.mxu0 %v4344
      %v5753 = vpop.f32.mrf.mxu0
      %v5754 = vadd.f32 %v5665, %v5753
      %v5755 = vpop.f32.mrf.mxu0
      %v5756 = vadd.f32 %v5667, %v5755
      %5757 = vmatmul.bf16.gmra.mxu0 %v4353
      %v5758 = vpop.f32.mrf.mxu0
      %v5759 = vadd.f32 %v5670, %v5758
      %v5760 = vpop.f32.mrf.mxu0
      %v5761 = vadd.f32 %v5672, %v5760
      %5762 = vmatmul.bf16.gmra.mxu0 %v4362
      %v5763 = vpop.f32.mrf.mxu0
      %v5764 = vadd.f32 %v5675, %v5763
      %v5765 = vpop.f32.mrf.mxu0
      %v5766 = vadd.f32 %v5677, %v5765
      %5767 = vmatmul.bf16.gmra.mxu0 %v4371
      %v5768 = vpop.f32.mrf.mxu0
      %v5769 = vadd.f32 %v5680, %v5768
      %v5770 = vpop.f32.mrf.mxu0
      %v5771 = vadd.f32 %v5682, %v5770
      %5772 = vmatmul.bf16.gmra.mxu0 %v4380
      %v5773 = vpop.f32.mrf.mxu0
      %v5774 = vadd.f32 %v5685, %v5773
      %v5775 = vpop.f32.mrf.mxu0
      %v5776 = vadd.f32 %v5687, %v5775
      %5777 = vmatmul.bf16.gmra.mxu0 %v4389
      %v5778 = vpop.f32.mrf.mxu0
      %v5779 = vadd.f32 %v5690, %v5778
      %v5780 = vpop.f32.mrf.mxu0
      %v5781 = vadd.f32 %v5692, %v5780
      %5782 = vmatmul.bf16.gmra.mxu0 %v4398
      %v5783 = vpop.f32.mrf.mxu0
      %v5784 = vadd.f32 %v5695, %v5783
      %v5785 = vpop.f32.mrf.mxu0
      %v5786 = vadd.f32 %v5697, %v5785
      %5787 = vmatmul.bf16.gmra.mxu0 %v4407
      %v5788 = vpop.f32.mrf.mxu0
      %v5789 = vadd.f32 %v5700, %v5788
      %v5790 = vpop.f32.mrf.mxu0
      %v5791 = vadd.f32 %v5702, %v5790
      %5792 = vmatmul.bf16.gmra.mxu0 %v4416
      %v5793 = vpop.f32.mrf.mxu0
      %v5794 = vadd.f32 %v5705, %v5793
      %v5795 = vpop.f32.mrf.mxu0
      %v5796 = vadd.f32 %v5707, %v5795
      %5797 = vmatmul.bf16.gmra.mxu0 %v4425
      %v5798 = vpop.f32.mrf.mxu0
      %v5799 = vadd.f32 %v5710, %v5798
      %v5800 = vpop.f32.mrf.mxu0
      %v5801 = vadd.f32 %v5712, %v5800
      %5802 = vdwg.mxu0
      %v5803 = vpack.c.bf16 %v5724, %v5724
      %v5804 = vpack.c.bf16 %v5726, %v5726
      %v5805 = vpack.c.bf16 %v5729, %v5729
      %v5806 = vpack.c.bf16 %v5731, %v5731
      %v5807 = vpack.c.bf16 %v5734, %v5734
      %v5808 = vpack.c.bf16 %v5736, %v5736
      %v5809 = vpack.c.bf16 %v5739, %v5739
      %v5810 = vpack.c.bf16 %v5741, %v5741
      %v5811 = vpack.c.bf16 %v5744, %v5744
      %v5812 = vpack.c.bf16 %v5746, %v5746
      %v5813 = vpack.c.bf16 %v5749, %v5749
      %v5814 = vpack.c.bf16 %v5751, %v5751
      %v5815 = vpack.c.bf16 %v5754, %v5754
      %v5816 = vpack.c.bf16 %v5756, %v5756
      %v5817 = vpack.c.bf16 %v5759, %v5759
      %v5818 = vpack.c.bf16 %v5761, %v5761
      %v5819 = vpack.c.bf16 %v5764, %v5764
      %v5820 = vpack.c.bf16 %v5766, %v5766
      %v5821 = vpack.c.bf16 %v5769, %v5769
      %v5822 = vpack.c.bf16 %v5771, %v5771
      %v5823 = vpack.c.bf16 %v5774, %v5774
      %v5824 = vpack.c.bf16 %v5776, %v5776
      %v5825 = vpack.c.bf16 %v5779, %v5779
      %v5826 = vpack.c.bf16 %v5781, %v5781
      %v5827 = vpack.c.bf16 %v5784, %v5784
      %v5828 = vpack.c.bf16 %v5786, %v5786
      %v5829 = vpack.c.bf16 %v5789, %v5789
      %v5830 = vpack.c.bf16 %v5791, %v5791
      %v5831 = vpack.c.bf16 %v5794, %v5794
      %v5832 = vpack.c.bf16 %v5796, %v5796
      %v5833 = vpack.c.bf16 %v5799, %v5799
      %v5834 = vpack.c.bf16 %v5801, %v5801
      %5835 = vst [vmem:[%s258] sm:$0xf] %v5803
      %5836 = vst [vmem:[%s258 + $0x4] sm:$0xf] %v5804
      %5837 = vst [vmem:[%s258 + $0x8] sm:$0xf] %v5805
      %5838 = vst [vmem:[%s258 + $0xc] sm:$0xf] %v5806
      %5839 = vst [vmem:[%s258 + $0x10] sm:$0xf] %v5807
      %5840 = vst [vmem:[%s258 + $0x14] sm:$0xf] %v5808
      %5841 = vst [vmem:[%s258 + $0x18] sm:$0xf] %v5809
      %5842 = vst [vmem:[%s258 + $0x1c] sm:$0xf] %v5810
      %5843 = vst [vmem:[%s258 + $0x20] sm:$0xf] %v5811
      %5844 = vst [vmem:[%s258 + $0x24] sm:$0xf] %v5812
      %5845 = vst [vmem:[%s258 + $0x28] sm:$0xf] %v5813
      %5846 = vst [vmem:[%s258 + $0x2c] sm:$0xf] %v5814
      %5847 = vst [vmem:[%s258 + $0x30] sm:$0xf] %v5815
      %5848 = vst [vmem:[%s258 + $0x34] sm:$0xf] %v5816
      %5849 = vst [vmem:[%s258 + $0x38] sm:$0xf] %v5817
      %5850 = vst [vmem:[%s258 + $0x3c] sm:$0xf] %v5818
      %5851 = vst [vmem:[%s258 + $0x40] sm:$0xf] %v5819
      %5852 = vst [vmem:[%s258 + $0x44] sm:$0xf] %v5820
      %5853 = vst [vmem:[%s258 + $0x48] sm:$0xf] %v5821
      %5854 = vst [vmem:[%s258 + $0x4c] sm:$0xf] %v5822
      %5855 = vst [vmem:[%s258 + $0x50] sm:$0xf] %v5823
      %5856 = vst [vmem:[%s258 + $0x54] sm:$0xf] %v5824
      %5857 = vst [vmem:[%s258 + $0x58] sm:$0xf] %v5825
      %5858 = vst [vmem:[%s258 + $0x5c] sm:$0xf] %v5826
      %5859 = vst [vmem:[%s258 + $0x60] sm:$0xf] %v5827
      %5860 = vst [vmem:[%s258 + $0x64] sm:$0xf] %v5828
      %5861 = vst [vmem:[%s258 + $0x68] sm:$0xf] %v5829
      %5862 = vst [vmem:[%s258 + $0x6c] sm:$0xf] %v5830
      %5863 = vst [vmem:[%s258 + $0x70] sm:$0xf] %v5831
      %5864 = vst [vmem:[%s258 + $0x74] sm:$0xf] %v5832
      %5865 = vst [vmem:[%s258 + $0x78] sm:$0xf] %v5833
      %5866 = vst [vmem:[%s258 + $0x7c] sm:$0xf] %v5834
      %v5867 = vunpack.c.l.bf16 %v5803
      %v5868 = vunpack.c.l.bf16 %v5804
      %v5869 = vunpack.c.l.bf16 %v5805
      %v5870 = vunpack.c.l.bf16 %v5806
      %v5871 = vunpack.c.l.bf16 %v5807
      %v5872 = vunpack.c.l.bf16 %v5808
      %v5873 = vunpack.c.l.bf16 %v5809
      %v5874 = vunpack.c.l.bf16 %v5810
      %v5875 = vunpack.c.l.bf16 %v5811
      %v5876 = vunpack.c.l.bf16 %v5812
      %v5877 = vunpack.c.l.bf16 %v5813
      %v5878 = vunpack.c.l.bf16 %v5814
      %v5879 = vunpack.c.l.bf16 %v5815
      %v5880 = vunpack.c.l.bf16 %v5816
      %v5881 = vunpack.c.l.bf16 %v5817
      %v5882 = vunpack.c.l.bf16 %v5818
      %v5883 = vunpack.c.l.bf16 %v5819
      %v5884 = vunpack.c.l.bf16 %v5820
      %v5885 = vunpack.c.l.bf16 %v5821
      %v5886 = vunpack.c.l.bf16 %v5822
      %v5887 = vunpack.c.l.bf16 %v5823
      %v5888 = vunpack.c.l.bf16 %v5824
      %v5889 = vunpack.c.l.bf16 %v5825
      %v5890 = vunpack.c.l.bf16 %v5826
      %v5891 = vunpack.c.l.bf16 %v5827
      %v5892 = vunpack.c.l.bf16 %v5828
      %v5893 = vunpack.c.l.bf16 %v5829
      %v5894 = vunpack.c.l.bf16 %v5830
      %v5895 = vunpack.c.l.bf16 %v5831
      %v5896 = vunpack.c.l.bf16 %v5832
      %v5897 = vunpack.c.l.bf16 %v5833
      %v5898 = vunpack.c.l.bf16 %v5834
      %v5899 = vadd.f32 %v5867, %v5868
      %v5900 = vadd.f32 %v5899, %v5869
      %v5901 = vadd.f32 %v5900, %v5870
      %v5902 = vadd.f32 %v5901, %v5871
      %v5903 = vadd.f32 %v5902, %v5872
      %v5904 = vadd.f32 %v5903, %v5873
      %v5905 = vadd.f32 %v5904, %v5874
      %v5906 = vadd.f32 %v5905, %v5875
      %v5907 = vadd.f32 %v5906, %v5876
      %v5908 = vadd.f32 %v5907, %v5877
      %v5909 = vadd.f32 %v5908, %v5878
      %v5910 = vadd.f32 %v5909, %v5879
      %v5911 = vadd.f32 %v5910, %v5880
      %v5912 = vadd.f32 %v5911, %v5881
      %v5913 = vadd.f32 %v5912, %v5882
      %v5914 = vadd.f32 %v5913, %v5883
      %v5915 = vadd.f32 %v5914, %v5884
      %v5916 = vadd.f32 %v5915, %v5885
      %v5917 = vadd.f32 %v5916, %v5886
      %v5918 = vadd.f32 %v5917, %v5887
      %v5919 = vadd.f32 %v5918, %v5888
      %v5920 = vadd.f32 %v5919, %v5889
      %v5921 = vadd.f32 %v5920, %v5890
      %v5922 = vadd.f32 %v5921, %v5891
      %v5923 = vadd.f32 %v5922, %v5892
      %v5924 = vadd.f32 %v5923, %v5893
      %v5925 = vadd.f32 %v5924, %v5894
      %v5926 = vadd.f32 %v5925, %v5895
      %v5927 = vadd.f32 %v5926, %v5896
      %v5928 = vadd.f32 %v5927, %v5897
      %v5929 = vadd.f32 %v5928, %v5898
      %v5930 = vrot.slane %v5929, 4
      %v5931 = vadd.f32 %v5929, %v5930
      %v5932 = vrot.slane %v5931, 2
      %v5933 = vadd.f32 %v5931, %v5932
      %v5934 = vrot.slane %v5933, 1
      %v5935 = vadd.f32 %v5933, %v5934
      %v5936 = vrcp.pop 256.0
      %v5937 = vmul.f32 256.0, %v5936
      %v5938 = vsub.f32 1.0, %v5937
      %v5939 = vmul.f32 %v5936, %v5938
      %v5940 = vadd.f32 %v5936, %v5939
      %vm5941 = vweird.f32 %v5936
      %v5942 = vsel %vm5941, %v5936, %v5940
      %v5943 = vmul.f32 %v5935, %v5942
      %v5944 = vsub.f32 %v5867, %v5943
      %v5945 = vsub.f32 %v5868, %v5943
      %v5946 = vsub.f32 %v5869, %v5943
      %v5947 = vsub.f32 %v5870, %v5943
      %v5948 = vsub.f32 %v5871, %v5943
      %v5949 = vsub.f32 %v5872, %v5943
      %v5950 = vsub.f32 %v5873, %v5943
      %v5951 = vsub.f32 %v5874, %v5943
      %v5952 = vsub.f32 %v5875, %v5943
      %v5953 = vsub.f32 %v5876, %v5943
      %v5954 = vsub.f32 %v5877, %v5943
      %v5955 = vsub.f32 %v5878, %v5943
      %v5956 = vsub.f32 %v5879, %v5943
      %v5957 = vsub.f32 %v5880, %v5943
      %v5958 = vsub.f32 %v5881, %v5943
      %v5959 = vsub.f32 %v5882, %v5943
      %v5960 = vsub.f32 %v5883, %v5943
      %v5961 = vsub.f32 %v5884, %v5943
      %v5962 = vsub.f32 %v5885, %v5943
      %v5963 = vsub.f32 %v5886, %v5943
      %v5964 = vsub.f32 %v5887, %v5943
      %v5965 = vsub.f32 %v5888, %v5943
      %v5966 = vsub.f32 %v5889, %v5943
      %v5967 = vsub.f32 %v5890, %v5943
      %v5968 = vsub.f32 %v5891, %v5943
      %v5969 = vsub.f32 %v5892, %v5943
      %v5970 = vsub.f32 %v5893, %v5943
      %v5971 = vsub.f32 %v5894, %v5943
      %v5972 = vsub.f32 %v5895, %v5943
      %v5973 = vsub.f32 %v5896, %v5943
      %v5974 = vsub.f32 %v5897, %v5943
      %v5975 = vsub.f32 %v5898, %v5943
      %v5976 = vmul.f32 %v5944, %v5944
      %v5977 = vmul.f32 %v5945, %v5945
      %v5978 = vmul.f32 %v5946, %v5946
      %v5979 = vmul.f32 %v5947, %v5947
      %v5980 = vmul.f32 %v5948, %v5948
      %v5981 = vmul.f32 %v5949, %v5949
      %v5982 = vmul.f32 %v5950, %v5950
      %v5983 = vmul.f32 %v5951, %v5951
      %v5984 = vmul.f32 %v5952, %v5952
      %v5985 = vmul.f32 %v5953, %v5953
      %v5986 = vmul.f32 %v5954, %v5954
      %v5987 = vmul.f32 %v5955, %v5955
      %v5988 = vmul.f32 %v5956, %v5956
      %v5989 = vmul.f32 %v5957, %v5957
      %v5990 = vmul.f32 %v5958, %v5958
      %v5991 = vmul.f32 %v5959, %v5959
      %v5992 = vmul.f32 %v5960, %v5960
      %v5993 = vmul.f32 %v5961, %v5961
      %v5994 = vmul.f32 %v5962, %v5962
      %v5995 = vmul.f32 %v5963, %v5963
      %v5996 = vmul.f32 %v5964, %v5964
      %v5997 = vmul.f32 %v5965, %v5965
      %v5998 = vmul.f32 %v5966, %v5966
      %v5999 = vmul.f32 %v5967, %v5967
      %v6000 = vmul.f32 %v5968, %v5968
      %v6001 = vmul.f32 %v5969, %v5969
      %v6002 = vmul.f32 %v5970, %v5970
      %v6003 = vmul.f32 %v5971, %v5971
      %v6004 = vmul.f32 %v5972, %v5972
      %v6005 = vmul.f32 %v5973, %v5973
      %v6006 = vmul.f32 %v5974, %v5974
      %v6007 = vmul.f32 %v5975, %v5975
      %v6008 = vadd.f32 %v5976, %v5977
      %v6009 = vadd.f32 %v6008, %v5978
      %v6010 = vadd.f32 %v6009, %v5979
      %v6011 = vadd.f32 %v6010, %v5980
      %v6012 = vadd.f32 %v6011, %v5981
      %v6013 = vadd.f32 %v6012, %v5982
      %v6014 = vadd.f32 %v6013, %v5983
      %v6015 = vadd.f32 %v6014, %v5984
      %v6016 = vadd.f32 %v6015, %v5985
      %v6017 = vadd.f32 %v6016, %v5986
      %v6018 = vadd.f32 %v6017, %v5987
      %v6019 = vadd.f32 %v6018, %v5988
      %v6020 = vadd.f32 %v6019, %v5989
      %v6021 = vadd.f32 %v6020, %v5990
      %v6022 = vadd.f32 %v6021, %v5991
      %v6023 = vadd.f32 %v6022, %v5992
      %v6024 = vadd.f32 %v6023, %v5993
      %v6025 = vadd.f32 %v6024, %v5994
      %v6026 = vadd.f32 %v6025, %v5995
      %v6027 = vadd.f32 %v6026, %v5996
      %v6028 = vadd.f32 %v6027, %v5997
      %v6029 = vadd.f32 %v6028, %v5998
      %v6030 = vadd.f32 %v6029, %v5999
      %v6031 = vadd.f32 %v6030, %v6000
      %v6032 = vadd.f32 %v6031, %v6001
      %v6033 = vadd.f32 %v6032, %v6002
      %v6034 = vadd.f32 %v6033, %v6003
      %v6035 = vadd.f32 %v6034, %v6004
      %v6036 = vadd.f32 %v6035, %v6005
      %v6037 = vadd.f32 %v6036, %v6006
      %v6038 = vadd.f32 %v6037, %v6007
      %v6039 = vrot.slane %v6038, 4
      %v6040 = vadd.f32 %v6038, %v6039
      %v6041 = vrot.slane %v6040, 2
      %v6042 = vadd.f32 %v6040, %v6041
      %v6043 = vrot.slane %v6042, 1
      %v6044 = vadd.f32 %v6042, %v6043
      %vm6045 = vcmask 1040384
      %v6046 = vsel %vm6045, %v5935, %v6044
      %6047 = vst [vmem:[%s262] sm:$0x3] %v6046
      %p6048 = scmp.lt.s32.totalorder %s18, 1
      %s6049 = scalar_select %p6048, %s18, 1
      %s6050 = smul.addr %s6049, 32
      %s6051 = smul.addr %s6050, 4
      %s6052 = scalar_lea.vmem %s5, %s6051
      %p6053 = scmp.lt.s32.totalorder %s18, 1
      %s6054 = scalar_select %p6053, %s18, 1
      %s6055 = smul.addr %s6054, 2
      %s6056 = scalar_lea.vmem %s6, %s6055
      // Predicated region
      $region41: #{double_conv_pallas.4} parent=39 // pred_check
        %p6057 = pneg %p146
      $region42: #{double_conv_pallas.4} parent=39 // pred_check_branch
        %6059 = sbr.rel (%p6057) target = $region44
      $region43: #{double_conv_pallas.4} parent=39 // pred_region
        _
      $region44: #{double_conv_pallas.4} parent=39 // pred_fallthru
        _
      // Predicated region
      $region45: #{double_conv_pallas.4} parent=39 // pred_check
        %p6060 = pneg %p172
      $region46: #{double_conv_pallas.4} parent=39 // pred_check_branch
        %6062 = sbr.rel (%p6060) target = $region48
      $region47: #{double_conv_pallas.4} parent=39 // pred_region
        _
      $region48: #{double_conv_pallas.4} parent=39 // pred_fallthru
        _
    $region40: #{double_conv_pallas.4} parent=5 // pred_fallthru
      _
    %p6063 = scmp.le.s32.totalorder 2, %s13
    // Predicated region
    $region49: #{double_conv_pallas.4} parent=5 // pred_check
      %p6064 = pneg %p6063
    $region50: #{double_conv_pallas.4} parent=5 // pred_check_branch
      %6066 = sbr.rel (%p6064) target = $region52
    $region51: #{double_conv_pallas.4} parent=5 // pred_region
      %s6067 = ssub.s32 %s13, 2
      // Predicated region
      $region53: #{double_conv_pallas.4} parent=51 // pred_check
        %p6068 = pneg %p152
      $region54: #{double_conv_pallas.4} parent=51 // pred_check_branch
        %6070 = sbr.rel (%p6068) target = $region56
      $region55: #{double_conv_pallas.4} parent=51 // pred_region
        %p6071 = scmp.lt.s32.totalorder %s19, 1
        %s6072 = scalar_select %p6071, %s19, 1
        %s6073 = smul.addr %s6072, 32
        %s6074 = smul.addr %s6073, 4
        %s6075 = scalar_lea.vmem %s5, %s6074
      $region56: #{double_conv_pallas.4} parent=51 // pred_fallthru
        _
      // Predicated region
      $region57: #{double_conv_pallas.4} parent=51 // pred_check
        %p6076 = pneg %p178
      $region58: #{double_conv_pallas.4} parent=51 // pred_check_branch
        %6078 = sbr.rel (%p6076) target = $region60
      $region59: #{double_conv_pallas.4} parent=51 // pred_region
        %p6079 = scmp.lt.s32.totalorder %s19, 1
        %s6080 = scalar_select %p6079, %s19, 1
        %s6081 = smul.addr %s6080, 2
        %s6082 = scalar_lea.vmem %s6, %s6081
      $region60: #{double_conv_pallas.4} parent=51 // pred_fallthru
        _
    $region52: #{double_conv_pallas.4} parent=5 // pred_fallthru
      _
  $region6: #{double_conv_pallas.4} parent=0 // loop_footer
    %s17 = sadd.s32 1, %s13
  $region7: #{double_conv_pallas.4} parent=0 // loop_footer_branch
    %12 = sbr.rel target = $region3
  $region8: #{double_conv_pallas.4} parent=0 // loop_exit
    _

</llo_original>
